<compile_context>
chip_gen: v5e
topology: v5e:2x2
jax: 0.10.0
libtpu: 0.0.40
codegen_flags: <defaults>
</compile_context>

<pallas_src>
import functools

import jax
import jax.numpy as jnp
from jax.experimental import pallas as pl
from jax.experimental.pallas import tpu as pltpu


def fourd_rnn_fused_kernel(x_ref, wih_ref, whh_ref, b_ref,
                           gamma_ref, beta_ref, wfc_ref, bfc_ref, mask_ref,
                           out_ref, xp_sc, feat_sc, *, num_valid):
    """Fully fused forward.

    x_ref     : (seq*B_pad, C) f32   time-major rows (row index = t*B_pad + b)
    wih_ref   : (C, 4*Hp)     bf16   LSTM input weights, gate order (i,f,o,g)
    whh_ref   : (Hp, 4*Hp)    bf16   LSTM recurrent weights, same gate order
    b_ref     : (1, 4*Hp)     f32    b_ih + b_hh, same gate order
    gamma_ref : (1, seq*Hp)   f32    BN scale, kernel feature order (t*Hp + h)
    beta_ref  : (1, seq*Hp)   f32    BN shift, kernel feature order
    wfc_ref   : (seq*Hp, n_cls) f32  FC weight, kernel feature order, pre-transposed
    bfc_ref   : (1, n_cls)    f32
    mask_ref  : (B_pad, 1)    f32    1.0 for real batch rows, 0.0 for padding
    out_ref   : (B_pad, n_cls) f32
    xp_sc     : VMEM (seq*B_pad, 4*Hp) f32   staged input projection
    feat_sc   : VMEM (B_pad, seq*Hp)   f32   relu(h_t) for every step
    """
    Hp = whh_ref.shape[0]
    B_pad, F_pad = feat_sc.shape
    seq = F_pad // Hp

    # Hoisted input projection + bias: one small bf16 MXU matmul for all
    # timesteps, taken off the serial h->h chain, then spilled to VMEM so the
    # unrolled loop only holds h/c live.
    x_bf = x_ref[...].astype(jnp.bfloat16)
    xp_sc[...] = (jnp.dot(x_bf, wih_ref[...],
                          preferred_element_type=jnp.float32)
                  + b_ref[...])                                     # (seq*B_pad, 4Hp)

    whh = whh_ref[...]                                              # bf16, loaded once
    h = jnp.zeros((B_pad, Hp), jnp.bfloat16)
    c = jnp.zeros((B_pad, Hp), jnp.float32)

    # seq is a static Python int -> fully unrolled; every slice is static,
    # 8-sublane / 128-lane aligned.
    for t in range(seq):
        gates = (xp_sc[t * B_pad:(t + 1) * B_pad, :]
                 + jnp.dot(h, whh, preferred_element_type=jnp.float32))  # (B_pad, 4Hp)
        sig = jax.nn.sigmoid(gates[:, :3 * Hp])      # gate order (i, f, o)
        i_g = sig[:, 0 * Hp:1 * Hp]
        f_g = sig[:, 1 * Hp:2 * Hp]
        o_g = sig[:, 2 * Hp:3 * Hp]
        g_g = jnp.tanh(gates[:, 3 * Hp:])            # gate g
        c = f_g * c + i_g * g_g
        h_f32 = o_g * jnp.tanh(c)
        # Fused ReLU + full-vreg feature write (kernel feature index = t*Hp + h).
        feat_sc[:, t * Hp:(t + 1) * Hp] = jnp.maximum(h_f32, 0.0)
        h = h_f32.astype(jnp.bfloat16)

    feat = feat_sc[...]                                             # (B_pad, F_pad)
    # BatchNorm1d training mode: per-feature statistics over the REAL batch
    # rows only (padded rows masked out), biased variance.
    mask = mask_ref[...]                                            # (B_pad, 1)
    inv_b = jnp.float32(1.0 / num_valid)
    mean = jnp.sum(feat * mask, axis=0, keepdims=True) * inv_b
    centered = (feat - mean) * mask
    var = jnp.sum(centered * centered, axis=0, keepdims=True) * inv_b
    y = (feat - mean) * jax.lax.rsqrt(var + 1e-5) * gamma_ref[...] + beta_ref[...]
    y = jnp.maximum(y, 0.0)
    # TODO(synk): nn.Dropout(0.5) is stochastic in train mode; treated as identity here.
    logits = jnp.dot(y, wfc_ref[...], preferred_element_type=jnp.float32)
    out_ref[...] = logits + bfc_ref[...]


def init_params(key, input_channels, n_classes, patch_size=5, hidden=64):
    """PyTorch-convention parameters (default nn.LSTM / nn.Linear init)."""
    P2 = patch_size ** 2
    F = hidden * P2
    keys = jax.random.split(key, 6)
    kh = 1.0 / jnp.sqrt(jnp.float32(hidden))
    w_ih = jax.random.uniform(keys[0], (4 * hidden, input_channels), minval=-kh, maxval=kh)
    w_hh = jax.random.uniform(keys[1], (4 * hidden, hidden), minval=-kh, maxval=kh)
    b_ih = jax.random.uniform(keys[2], (4 * hidden,), minval=-kh, maxval=kh)
    b_hh = jax.random.uniform(keys[3], (4 * hidden,), minval=-kh, maxval=kh)
    kf = 1.0 / jnp.sqrt(jnp.float32(F))
    fc_w = jax.random.uniform(keys[4], (n_classes, F), minval=-kf, maxval=kf)
    fc_b = jax.random.uniform(keys[5], (n_classes,), minval=-kf, maxval=kf)
    return {
        "w_ih": w_ih.astype(jnp.float32),            # (4H, C), gate rows (i,f,g,o)
        "w_hh": w_hh.astype(jnp.float32),            # (4H, H)
        "b_ih": b_ih.astype(jnp.float32),
        "b_hh": b_hh.astype(jnp.float32),
        "bn_gamma": jnp.ones((F,), jnp.float32),     # torch feature order h*seq + t
        "bn_beta": jnp.zeros((F,), jnp.float32),
        "fc_w": fc_w.astype(jnp.float32),            # (n_classes, F), torch order
        "fc_b": fc_b.astype(jnp.float32),
    }


def pack_params(params, patch_size=5, hidden=64, hidden_pad=128):
    """One-time repack (outside jit) into the layouts the fused kernel expects.

    * Gate blocks reordered (i,f,g,o) -> (i,f,o,g), each zero-padded H -> Hp.
    * BN / FC parameters permuted from torch feature order (h*seq + t) to the
      kernel's (t*Hp + h) order, zero-padded in the h dimension.
    * LSTM matmul weights cast to bf16 (f32 accumulate in-kernel).
    """
    seq = patch_size ** 2
    H, Hp = hidden, hidden_pad
    n_classes = params["fc_b"].shape[0]
    new_to_old = (0, 1, 3, 2)   # kernel gate order (i, f, o, g)

    def pack_gate_matrix(w, in_dim, in_dim_pad):
        # w: (4H, in_dim) torch layout -> kernel (in_dim_pad, 4*Hp), zero-padded.
        out = jnp.zeros((in_dim_pad, 4 * Hp), jnp.float32)
        for g_new, g_old in enumerate(new_to_old):
            block = w[g_old * H:(g_old + 1) * H, :]              # (H, in_dim)
            out = out.at[:in_dim, g_new * Hp:g_new * Hp + H].set(block.T)
        return out

    C = params["w_ih"].shape[1]
    wih = pack_gate_matrix(params["w_ih"], C, C)                 # (C, 4Hp)
    whh = pack_gate_matrix(params["w_hh"], H, Hp)                # (Hp, 4Hp)

    b = params["b_ih"] + params["b_hh"]
    b_packed = jnp.zeros((4 * Hp,), jnp.float32)
    for g_new, g_old in enumerate(new_to_old):
        b_packed = b_packed.at[g_new * Hp:g_new * Hp + H].set(
            b[g_old * H:(g_old + 1) * H])

    def to_kernel_features(v):
        # torch feature index f = h*seq + t -> kernel index k = t*Hp + h,
        # zero for padded h >= H.
        lead = v.shape[:-1]
        v = v.reshape(*lead, H, seq)
        v = jnp.swapaxes(v, -1, -2)                              # (..., seq, H)
        pad = [(0, 0)] * (v.ndim - 1) + [(0, Hp - H)]
        v = jnp.pad(v, pad)                                      # (..., seq, Hp)
        return v.reshape(*lead, seq * Hp)

    return {
        "w_ih": wih.astype(jnp.bfloat16),                        # (C, 4Hp) bf16
        "w_hh": whh.astype(jnp.bfloat16),                        # (Hp, 4Hp) bf16
        "b_lstm": b_packed.reshape(1, 4 * Hp),
        "bn_gamma": to_kernel_features(params["bn_gamma"]).reshape(1, seq * Hp),
        "bn_beta": to_kernel_features(params["bn_beta"]).reshape(1, seq * Hp),
        "fc_w": jnp.transpose(to_kernel_features(params["fc_w"])),  # (seq*Hp, n_cls)
        "fc_b": params["fc_b"].reshape(1, n_classes),
    }


@jax.jit
def four_d_rnn_forward(x, packed):
    # x: (B, 1, C, P, P) float32.  Reproduce squeeze(1) -> transpose(2,3)
    # -> reshape(B, C, P*P) -> permute(2,0,1), pad batch to a multiple of 8
    # sublanes, then flatten to (seq*B_pad, C) time-major rows.
    x = jnp.squeeze(x, axis=1)                              # (B, C, P, P)
    x3 = jnp.swapaxes(x, 2, 3)                              # torch.transpose(x1, 2, 3)
    B, C, P, _ = x3.shape
    seq = P * P
    x_seq = jnp.transpose(x3.reshape(B, C, seq), (2, 0, 1))  # (seq, B, C)

    B_pad = max(8, ((B + 7) // 8) * 8)
    x_seq = jnp.pad(x_seq, ((0, 0), (0, B_pad - B), (0, 0)))  # zero-pad batch rows
    x2d = x_seq.reshape(seq * B_pad, C)                       # row index = t*B_pad + b

    Hp = packed["w_hh"].shape[0]
    F_pad = seq * Hp
    n_classes = packed["fc_b"].shape[-1]
    row_mask = (jnp.arange(B_pad) < B).astype(jnp.float32).reshape(B_pad, 1)

    kernel = functools.partial(fourd_rnn_fused_kernel, num_valid=B)
    out = pl.pallas_call(
        kernel,
        out_shape=jax.ShapeDtypeStruct((B_pad, n_classes), jnp.float32),
        grid=(1,),
        in_specs=[
            pl.BlockSpec((seq * B_pad, C), lambda i: (0, 0)),
            pl.BlockSpec((C, 4 * Hp), lambda i: (0, 0)),
            pl.BlockSpec((Hp, 4 * Hp), lambda i: (0, 0)),
            pl.BlockSpec((1, 4 * Hp), lambda i: (0, 0)),
            pl.BlockSpec((1, F_pad), lambda i: (0, 0)),
            pl.BlockSpec((1, F_pad), lambda i: (0, 0)),
            pl.BlockSpec((F_pad, n_classes), lambda i: (0, 0)),
            pl.BlockSpec((1, n_classes), lambda i: (0, 0)),
            pl.BlockSpec((B_pad, 1), lambda i: (0, 0)),
        ],
        out_specs=pl.BlockSpec((B_pad, n_classes), lambda i: (0, 0)),
        scratch_shapes=[
            pltpu.VMEM((seq * B_pad, 4 * Hp), jnp.float32),   # staged x_proj
            pltpu.VMEM((B_pad, F_pad), jnp.float32),          # relu(h_t) features
        ],
        compiler_params=pltpu.CompilerParams(dimension_semantics=("arbitrary",)),
    )(x2d, packed["w_ih"], packed["w_hh"], packed["b_lstm"],
      packed["bn_gamma"], packed["bn_beta"], packed["fc_w"], packed["fc_b"],
      row_mask)
    return out[:B]


if __name__ == "__main__":
    B, C, P = 2, 4, 5            # batch, input_channels, patch_size
    n_classes = 10
    hidden = 64

    key = jax.random.PRNGKey(0)
    k_x, k_p = jax.random.split(key)

    x = jax.random.normal(k_x, (B, 1, C, P, P), dtype=jnp.float32)
    params = init_params(k_p, input_channels=C, n_classes=n_classes,
                         patch_size=P, hidden=hidden)
    packed = pack_params(params, patch_size=P, hidden=hidden, hidden_pad=128)

    logits = four_d_rnn_forward(x, packed)
    jax.block_until_ready(logits)
    assert logits.shape == (B, n_classes) and logits.dtype == jnp.float32
    print("KERNEL_OK")
</pallas_src>

<mosaic_0001>
module attributes {stable_mosaic.version = 11 : i64} {
  func.func @fourd_rnn_fused_kernel(%arg0: i32, %arg1: memref<200x4xf32, #tpu.memory_space<vmem>>, %arg2: memref<4x512xbf16, #tpu.memory_space<vmem>>, %arg3: memref<128x512xbf16, #tpu.memory_space<vmem>>, %arg4: memref<1x512xf32, #tpu.memory_space<vmem>>, %arg5: memref<1x3200xf32, #tpu.memory_space<vmem>>, %arg6: memref<1x3200xf32, #tpu.memory_space<vmem>>, %arg7: memref<3200x10xf32, #tpu.memory_space<vmem>>, %arg8: memref<1x10xf32, #tpu.memory_space<vmem>>, %arg9: memref<8x1xf32, #tpu.memory_space<vmem>>, %arg10: memref<8x10xf32, #tpu.memory_space<vmem>>, %arg11: memref<200x512xf32, #tpu.memory_space<vmem>>, %arg12: memref<8x3200xf32, #tpu.memory_space<vmem>>) attributes {dimension_semantics = [#tpu.dimension_semantics<arbitrary>], iteration_bounds = array<i64: 1>, scalar_prefetch = 0 : i64, scratch_operands = 2 : i64, tpu.core_type = #tpu.core_type<tc>, window_params = [{pipeline_mode = #tpu.pipeline_mode<synchronous>, transform_indices = @transform_0, window_bounds = array<i64: 200, 4>}, {pipeline_mode = #tpu.pipeline_mode<synchronous>, transform_indices = @transform_1, window_bounds = array<i64: 4, 512>}, {pipeline_mode = #tpu.pipeline_mode<synchronous>, transform_indices = @transform_2, window_bounds = array<i64: 128, 512>}, {pipeline_mode = #tpu.pipeline_mode<synchronous>, transform_indices = @transform_3, window_bounds = array<i64: 1, 512>}, {pipeline_mode = #tpu.pipeline_mode<synchronous>, transform_indices = @transform_4, window_bounds = array<i64: 1, 3200>}, {pipeline_mode = #tpu.pipeline_mode<synchronous>, transform_indices = @transform_5, window_bounds = array<i64: 1, 3200>}, {pipeline_mode = #tpu.pipeline_mode<synchronous>, transform_indices = @transform_6, window_bounds = array<i64: 3200, 10>}, {pipeline_mode = #tpu.pipeline_mode<synchronous>, transform_indices = @transform_7, window_bounds = array<i64: 1, 10>}, {pipeline_mode = #tpu.pipeline_mode<synchronous>, transform_indices = @transform_8, window_bounds = array<i64: 8, 1>}, {pipeline_mode = #tpu.pipeline_mode<synchronous>, transform_indices = @transform_9, window_bounds = array<i64: 8, 10>}]} {
    %c0 = arith.constant 0 : index
    %c0_0 = arith.constant 0 : index
    %0 = vector.load %arg1[%c0, %c0_0] : memref<200x4xf32, #tpu.memory_space<vmem>>, vector<200x4xf32>
    %1 = arith.truncf %0 : vector<200x4xf32> to vector<200x4xbf16>
    %c0_1 = arith.constant 0 : index
    %c0_2 = arith.constant 0 : index
    %2 = vector.load %arg2[%c0_1, %c0_2] : memref<4x512xbf16, #tpu.memory_space<vmem>>, vector<4x512xbf16>
    %cst = arith.constant dense<0.000000e+00> : vector<200x512xf32>
    %3 = tpu.matmul %1, %2, %cst {dimension_numbers = #tpu.dot_dimension_numbers<[1], [0], [0], [1], [0, 0, 1, 1], [], []>} : vector<200x4xbf16>, vector<4x512xbf16>, vector<200x512xf32> -> vector<200x512xf32>
    %c0_3 = arith.constant 0 : index
    %c0_4 = arith.constant 0 : index
    %4 = vector.load %arg4[%c0_3, %c0_4] : memref<1x512xf32, #tpu.memory_space<vmem>>, vector<1x512xf32>
    %5 = vector.broadcast %4 : vector<1x512xf32> to vector<200x512xf32>
    %6 = arith.addf %3, %5 : vector<200x512xf32>
    %c0_5 = arith.constant 0 : index
    %c0_6 = arith.constant 0 : index
    %7 = vector.load %arg11[%c0_5, %c0_6] : memref<200x512xf32, #tpu.memory_space<vmem>>, vector<200x512xf32>
    tpu.vector_store %arg11[%c0_5, %c0_6], %6 {strides = array<i32>} : memref<200x512xf32, #tpu.memory_space<vmem>>, vector<200x512xf32>,
    %c0_7 = arith.constant 0 : index
    %c0_8 = arith.constant 0 : index
    %8 = vector.load %arg3[%c0_7, %c0_8] : memref<128x512xbf16, #tpu.memory_space<vmem>>, vector<128x512xbf16>
    %cst_9 = arith.constant 0.000000e+00 : bf16
    %9 = vector.broadcast %cst_9 : bf16 to vector<8x128xbf16>
    %cst_10 = arith.constant 0.000000e+00 : f32
    %10 = vector.broadcast %cst_10 : f32 to vector<8x128xf32>
    %c0_11 = arith.constant 0 : index
    %c0_12 = arith.constant 0 : index
    %11 = vector.load %arg11[%c0_11, %c0_12] : memref<200x512xf32, #tpu.memory_space<vmem>>, vector<8x512xf32>
    %cst_13 = arith.constant dense<0.000000e+00> : vector<8x512xf32>
    %12 = tpu.matmul %9, %8, %cst_13 {dimension_numbers = #tpu.dot_dimension_numbers<[1], [0], [0], [1], [0, 0, 1, 1], [], []>} : vector<8x128xbf16>, vector<128x512xbf16>, vector<8x512xf32> -> vector<8x512xf32>
    %13 = arith.addf %11, %12 : vector<8x512xf32>
    %14 = vector.extract_strided_slice %13 {offsets = [0, 0], sizes = [8, 384], strides = [1, 1]} : vector<8x512xf32> to vector<8x384xf32>
    %15 = arith.negf %14 : vector<8x384xf32>
    %16 = math.exp %15 : vector<8x384xf32>
    %cst_14 = arith.constant 1.000000e+00 : f32
    %17 = vector.broadcast %cst_14 : f32 to vector<8x384xf32>
    %18 = arith.addf %17, %16 : vector<8x384xf32>
    %19 = arith.divf %17, %18 : vector<8x384xf32>
    %20 = vector.extract_strided_slice %19 {offsets = [0, 0], sizes = [8, 128], strides = [1, 1]} : vector<8x384xf32> to vector<8x128xf32>
    %21 = vector.extract_strided_slice %19 {offsets = [0, 128], sizes = [8, 128], strides = [1, 1]} : vector<8x384xf32> to vector<8x128xf32>
    %22 = vector.extract_strided_slice %19 {offsets = [0, 256], sizes = [8, 128], strides = [1, 1]} : vector<8x384xf32> to vector<8x128xf32>
    %23 = vector.extract_strided_slice %13 {offsets = [0, 384], sizes = [8, 128], strides = [1, 1]} : vector<8x512xf32> to vector<8x128xf32>
    %24 = math.tanh %23 : vector<8x128xf32>
    %25 = arith.mulf %21, %10 : vector<8x128xf32>
    %26 = arith.mulf %20, %24 : vector<8x128xf32>
    %27 = arith.addf %25, %26 : vector<8x128xf32>
    %28 = math.tanh %27 : vector<8x128xf32>
    %29 = arith.mulf %22, %28 : vector<8x128xf32>
    %cst_15 = arith.constant 0.000000e+00 : f32
    %30 = vector.broadcast %cst_15 : f32 to vector<8x128xf32>
    %31 = arith.maximumf %29, %30 : vector<8x128xf32>
    %c0_16 = arith.constant 0 : index
    %c0_17 = arith.constant 0 : index
    %32 = vector.load %arg12[%c0_16, %c0_17] : memref<8x3200xf32, #tpu.memory_space<vmem>>, vector<8x128xf32>
    tpu.vector_store %arg12[%c0_16, %c0_17], %31 {strides = array<i32>} : memref<8x3200xf32, #tpu.memory_space<vmem>>, vector<8x128xf32>,
    %33 = arith.truncf %29 : vector<8x128xf32> to vector<8x128xbf16>
    %c8 = arith.constant 8 : index
    %c0_18 = arith.constant 0 : index
    %34 = vector.load %arg11[%c8, %c0_18] : memref<200x512xf32, #tpu.memory_space<vmem>>, vector<8x512xf32>
    %cst_19 = arith.constant dense<0.000000e+00> : vector<8x512xf32>
    %35 = tpu.matmul %33, %8, %cst_19 {dimension_numbers = #tpu.dot_dimension_numbers<[1], [0], [0], [1], [0, 0, 1, 1], [], []>} : vector<8x128xbf16>, vector<128x512xbf16>, vector<8x512xf32> -> vector<8x512xf32>
    %36 = arith.addf %34, %35 : vector<8x512xf32>
    %37 = vector.extract_strided_slice %36 {offsets = [0, 0], sizes = [8, 384], strides = [1, 1]} : vector<8x512xf32> to vector<8x384xf32>
    %38 = arith.negf %37 : vector<8x384xf32>
    %39 = math.exp %38 : vector<8x384xf32>
    %cst_20 = arith.constant 1.000000e+00 : f32
    %40 = vector.broadcast %cst_20 : f32 to vector<8x384xf32>
    %41 = arith.addf %40, %39 : vector<8x384xf32>
    %42 = arith.divf %40, %41 : vector<8x384xf32>
    %43 = vector.extract_strided_slice %42 {offsets = [0, 0], sizes = [8, 128], strides = [1, 1]} : vector<8x384xf32> to vector<8x128xf32>
    %44 = vector.extract_strided_slice %42 {offsets = [0, 128], sizes = [8, 128], strides = [1, 1]} : vector<8x384xf32> to vector<8x128xf32>
    %45 = vector.extract_strided_slice %42 {offsets = [0, 256], sizes = [8, 128], strides = [1, 1]} : vector<8x384xf32> to vector<8x128xf32>
    %46 = vector.extract_strided_slice %36 {offsets = [0, 384], sizes = [8, 128], strides = [1, 1]} : vector<8x512xf32> to vector<8x128xf32>
    %47 = math.tanh %46 : vector<8x128xf32>
    %48 = arith.mulf %44, %27 : vector<8x128xf32>
    %49 = arith.mulf %43, %47 : vector<8x128xf32>
    %50 = arith.addf %48, %49 : vector<8x128xf32>
    %51 = math.tanh %50 : vector<8x128xf32>
    %52 = arith.mulf %45, %51 : vector<8x128xf32>
    %cst_21 = arith.constant 0.000000e+00 : f32
    %53 = vector.broadcast %cst_21 : f32 to vector<8x128xf32>
    %54 = arith.maximumf %52, %53 : vector<8x128xf32>
    %c0_22 = arith.constant 0 : index
    %c128 = arith.constant 128 : index
    %55 = vector.load %arg12[%c0_22, %c128] : memref<8x3200xf32, #tpu.memory_space<vmem>>, vector<8x128xf32>
    tpu.vector_store %arg12[%c0_22, %c128], %54 {strides = array<i32>} : memref<8x3200xf32, #tpu.memory_space<vmem>>, vector<8x128xf32>,
    %56 = arith.truncf %52 : vector<8x128xf32> to vector<8x128xbf16>
    %c16 = arith.constant 16 : index
    %c0_23 = arith.constant 0 : index
    %57 = vector.load %arg11[%c16, %c0_23] : memref<200x512xf32, #tpu.memory_space<vmem>>, vector<8x512xf32>
    %cst_24 = arith.constant dense<0.000000e+00> : vector<8x512xf32>
    %58 = tpu.matmul %56, %8, %cst_24 {dimension_numbers = #tpu.dot_dimension_numbers<[1], [0], [0], [1], [0, 0, 1, 1], [], []>} : vector<8x128xbf16>, vector<128x512xbf16>, vector<8x512xf32> -> vector<8x512xf32>
    %59 = arith.addf %57, %58 : vector<8x512xf32>
    %60 = vector.extract_strided_slice %59 {offsets = [0, 0], sizes = [8, 384], strides = [1, 1]} : vector<8x512xf32> to vector<8x384xf32>
    %61 = arith.negf %60 : vector<8x384xf32>
    %62 = math.exp %61 : vector<8x384xf32>
    %cst_25 = arith.constant 1.000000e+00 : f32
    %63 = vector.broadcast %cst_25 : f32 to vector<8x384xf32>
    %64 = arith.addf %63, %62 : vector<8x384xf32>
    %65 = arith.divf %63, %64 : vector<8x384xf32>
    %66 = vector.extract_strided_slice %65 {offsets = [0, 0], sizes = [8, 128], strides = [1, 1]} : vector<8x384xf32> to vector<8x128xf32>
    %67 = vector.extract_strided_slice %65 {offsets = [0, 128], sizes = [8, 128], strides = [1, 1]} : vector<8x384xf32> to vector<8x128xf32>
    %68 = vector.extract_strided_slice %65 {offsets = [0, 256], sizes = [8, 128], strides = [1, 1]} : vector<8x384xf32> to vector<8x128xf32>
    %69 = vector.extract_strided_slice %59 {offsets = [0, 384], sizes = [8, 128], strides = [1, 1]} : vector<8x512xf32> to vector<8x128xf32>
    %70 = math.tanh %69 : vector<8x128xf32>
    %71 = arith.mulf %67, %50 : vector<8x128xf32>
    %72 = arith.mulf %66, %70 : vector<8x128xf32>
    %73 = arith.addf %71, %72 : vector<8x128xf32>
    %74 = math.tanh %73 : vector<8x128xf32>
    %75 = arith.mulf %68, %74 : vector<8x128xf32>
    %cst_26 = arith.constant 0.000000e+00 : f32
    %76 = vector.broadcast %cst_26 : f32 to vector<8x128xf32>
    %77 = arith.maximumf %75, %76 : vector<8x128xf32>
    %c0_27 = arith.constant 0 : index
    %c256 = arith.constant 256 : index
    %78 = vector.load %arg12[%c0_27, %c256] : memref<8x3200xf32, #tpu.memory_space<vmem>>, vector<8x128xf32>
    tpu.vector_store %arg12[%c0_27, %c256], %77 {strides = array<i32>} : memref<8x3200xf32, #tpu.memory_space<vmem>>, vector<8x128xf32>,
    %79 = arith.truncf %75 : vector<8x128xf32> to vector<8x128xbf16>
    %c24 = arith.constant 24 : index
    %c0_28 = arith.constant 0 : index
    %80 = vector.load %arg11[%c24, %c0_28] : memref<200x512xf32, #tpu.memory_space<vmem>>, vector<8x512xf32>
    %cst_29 = arith.constant dense<0.000000e+00> : vector<8x512xf32>
    %81 = tpu.matmul %79, %8, %cst_29 {dimension_numbers = #tpu.dot_dimension_numbers<[1], [0], [0], [1], [0, 0, 1, 1], [], []>} : vector<8x128xbf16>, vector<128x512xbf16>, vector<8x512xf32> -> vector<8x512xf32>
    %82 = arith.addf %80, %81 : vector<8x512xf32>
    %83 = vector.extract_strided_slice %82 {offsets = [0, 0], sizes = [8, 384], strides = [1, 1]} : vector<8x512xf32> to vector<8x384xf32>
    %84 = arith.negf %83 : vector<8x384xf32>
    %85 = math.exp %84 : vector<8x384xf32>
    %cst_30 = arith.constant 1.000000e+00 : f32
    %86 = vector.broadcast %cst_30 : f32 to vector<8x384xf32>
    %87 = arith.addf %86, %85 : vector<8x384xf32>
    %88 = arith.divf %86, %87 : vector<8x384xf32>
    %89 = vector.extract_strided_slice %88 {offsets = [0, 0], sizes = [8, 128], strides = [1, 1]} : vector<8x384xf32> to vector<8x128xf32>
    %90 = vector.extract_strided_slice %88 {offsets = [0, 128], sizes = [8, 128], strides = [1, 1]} : vector<8x384xf32> to vector<8x128xf32>
    %91 = vector.extract_strided_slice %88 {offsets = [0, 256], sizes = [8, 128], strides = [1, 1]} : vector<8x384xf32> to vector<8x128xf32>
    %92 = vector.extract_strided_slice %82 {offsets = [0, 384], sizes = [8, 128], strides = [1, 1]} : vector<8x512xf32> to vector<8x128xf32>
    %93 = math.tanh %92 : vector<8x128xf32>
    %94 = arith.mulf %90, %73 : vector<8x128xf32>
    %95 = arith.mulf %89, %93 : vector<8x128xf32>
    %96 = arith.addf %94, %95 : vector<8x128xf32>
    %97 = math.tanh %96 : vector<8x128xf32>
    %98 = arith.mulf %91, %97 : vector<8x128xf32>
    %cst_31 = arith.constant 0.000000e+00 : f32
    %99 = vector.broadcast %cst_31 : f32 to vector<8x128xf32>
    %100 = arith.maximumf %98, %99 : vector<8x128xf32>
    %c0_32 = arith.constant 0 : index
    %c384 = arith.constant 384 : index
    %101 = vector.load %arg12[%c0_32, %c384] : memref<8x3200xf32, #tpu.memory_space<vmem>>, vector<8x128xf32>
    tpu.vector_store %arg12[%c0_32, %c384], %100 {strides = array<i32>} : memref<8x3200xf32, #tpu.memory_space<vmem>>, vector<8x128xf32>,
    %102 = arith.truncf %98 : vector<8x128xf32> to vector<8x128xbf16>
    %c32 = arith.constant 32 : index
    %c0_33 = arith.constant 0 : index
    %103 = vector.load %arg11[%c32, %c0_33] : memref<200x512xf32, #tpu.memory_space<vmem>>, vector<8x512xf32>
    %cst_34 = arith.constant dense<0.000000e+00> : vector<8x512xf32>
    %104 = tpu.matmul %102, %8, %cst_34 {dimension_numbers = #tpu.dot_dimension_numbers<[1], [0], [0], [1], [0, 0, 1, 1], [], []>} : vector<8x128xbf16>, vector<128x512xbf16>, vector<8x512xf32> -> vector<8x512xf32>
    %105 = arith.addf %103, %104 : vector<8x512xf32>
    %106 = vector.extract_strided_slice %105 {offsets = [0, 0], sizes = [8, 384], strides = [1, 1]} : vector<8x512xf32> to vector<8x384xf32>
    %107 = arith.negf %106 : vector<8x384xf32>
    %108 = math.exp %107 : vector<8x384xf32>
    %cst_35 = arith.constant 1.000000e+00 : f32
    %109 = vector.broadcast %cst_35 : f32 to vector<8x384xf32>
    %110 = arith.addf %109, %108 : vector<8x384xf32>
    %111 = arith.divf %109, %110 : vector<8x384xf32>
    %112 = vector.extract_strided_slice %111 {offsets = [0, 0], sizes = [8, 128], strides = [1, 1]} : vector<8x384xf32> to vector<8x128xf32>
    %113 = vector.extract_strided_slice %111 {offsets = [0, 128], sizes = [8, 128], strides = [1, 1]} : vector<8x384xf32> to vector<8x128xf32>
    %114 = vector.extract_strided_slice %111 {offsets = [0, 256], sizes = [8, 128], strides = [1, 1]} : vector<8x384xf32> to vector<8x128xf32>
    %115 = vector.extract_strided_slice %105 {offsets = [0, 384], sizes = [8, 128], strides = [1, 1]} : vector<8x512xf32> to vector<8x128xf32>
    %116 = math.tanh %115 : vector<8x128xf32>
    %117 = arith.mulf %113, %96 : vector<8x128xf32>
    %118 = arith.mulf %112, %116 : vector<8x128xf32>
    %119 = arith.addf %117, %118 : vector<8x128xf32>
    %120 = math.tanh %119 : vector<8x128xf32>
    %121 = arith.mulf %114, %120 : vector<8x128xf32>
    %cst_36 = arith.constant 0.000000e+00 : f32
    %122 = vector.broadcast %cst_36 : f32 to vector<8x128xf32>
    %123 = arith.maximumf %121, %122 : vector<8x128xf32>
    %c0_37 = arith.constant 0 : index
    %c512 = arith.constant 512 : index
    %124 = vector.load %arg12[%c0_37, %c512] : memref<8x3200xf32, #tpu.memory_space<vmem>>, vector<8x128xf32>
    tpu.vector_store %arg12[%c0_37, %c512], %123 {strides = array<i32>} : memref<8x3200xf32, #tpu.memory_space<vmem>>, vector<8x128xf32>,
    %125 = arith.truncf %121 : vector<8x128xf32> to vector<8x128xbf16>
    %c40 = arith.constant 40 : index
    %c0_38 = arith.constant 0 : index
    %126 = vector.load %arg11[%c40, %c0_38] : memref<200x512xf32, #tpu.memory_space<vmem>>, vector<8x512xf32>
    %cst_39 = arith.constant dense<0.000000e+00> : vector<8x512xf32>
    %127 = tpu.matmul %125, %8, %cst_39 {dimension_numbers = #tpu.dot_dimension_numbers<[1], [0], [0], [1], [0, 0, 1, 1], [], []>} : vector<8x128xbf16>, vector<128x512xbf16>, vector<8x512xf32> -> vector<8x512xf32>
    %128 = arith.addf %126, %127 : vector<8x512xf32>
    %129 = vector.extract_strided_slice %128 {offsets = [0, 0], sizes = [8, 384], strides = [1, 1]} : vector<8x512xf32> to vector<8x384xf32>
    %130 = arith.negf %129 : vector<8x384xf32>
    %131 = math.exp %130 : vector<8x384xf32>
    %cst_40 = arith.constant 1.000000e+00 : f32
    %132 = vector.broadcast %cst_40 : f32 to vector<8x384xf32>
    %133 = arith.addf %132, %131 : vector<8x384xf32>
    %134 = arith.divf %132, %133 : vector<8x384xf32>
    %135 = vector.extract_strided_slice %134 {offsets = [0, 0], sizes = [8, 128], strides = [1, 1]} : vector<8x384xf32> to vector<8x128xf32>
    %136 = vector.extract_strided_slice %134 {offsets = [0, 128], sizes = [8, 128], strides = [1, 1]} : vector<8x384xf32> to vector<8x128xf32>
    %137 = vector.extract_strided_slice %134 {offsets = [0, 256], sizes = [8, 128], strides = [1, 1]} : vector<8x384xf32> to vector<8x128xf32>
    %138 = vector.extract_strided_slice %128 {offsets = [0, 384], sizes = [8, 128], strides = [1, 1]} : vector<8x512xf32> to vector<8x128xf32>
    %139 = math.tanh %138 : vector<8x128xf32>
    %140 = arith.mulf %136, %119 : vector<8x128xf32>
    %141 = arith.mulf %135, %139 : vector<8x128xf32>
    %142 = arith.addf %140, %141 : vector<8x128xf32>
    %143 = math.tanh %142 : vector<8x128xf32>
    %144 = arith.mulf %137, %143 : vector<8x128xf32>
    %cst_41 = arith.constant 0.000000e+00 : f32
    %145 = vector.broadcast %cst_41 : f32 to vector<8x128xf32>
    %146 = arith.maximumf %144, %145 : vector<8x128xf32>
    %c0_42 = arith.constant 0 : index
    %c640 = arith.constant 640 : index
    %147 = vector.load %arg12[%c0_42, %c640] : memref<8x3200xf32, #tpu.memory_space<vmem>>, vector<8x128xf32>
    tpu.vector_store %arg12[%c0_42, %c640], %146 {strides = array<i32>} : memref<8x3200xf32, #tpu.memory_space<vmem>>, vector<8x128xf32>,
    %148 = arith.truncf %144 : vector<8x128xf32> to vector<8x128xbf16>
    %c48 = arith.constant 48 : index
    %c0_43 = arith.constant 0 : index
    %149 = vector.load %arg11[%c48, %c0_43] : memref<200x512xf32, #tpu.memory_space<vmem>>, vector<8x512xf32>
    %cst_44 = arith.constant dense<0.000000e+00> : vector<8x512xf32>
    %150 = tpu.matmul %148, %8, %cst_44 {dimension_numbers = #tpu.dot_dimension_numbers<[1], [0], [0], [1], [0, 0, 1, 1], [], []>} : vector<8x128xbf16>, vector<128x512xbf16>, vector<8x512xf32> -> vector<8x512xf32>
    %151 = arith.addf %149, %150 : vector<8x512xf32>
    %152 = vector.extract_strided_slice %151 {offsets = [0, 0], sizes = [8, 384], strides = [1, 1]} : vector<8x512xf32> to vector<8x384xf32>
    %153 = arith.negf %152 : vector<8x384xf32>
    %154 = math.exp %153 : vector<8x384xf32>
    %cst_45 = arith.constant 1.000000e+00 : f32
    %155 = vector.broadcast %cst_45 : f32 to vector<8x384xf32>
    %156 = arith.addf %155, %154 : vector<8x384xf32>
    %157 = arith.divf %155, %156 : vector<8x384xf32>
    %158 = vector.extract_strided_slice %157 {offsets = [0, 0], sizes = [8, 128], strides = [1, 1]} : vector<8x384xf32> to vector<8x128xf32>
    %159 = vector.extract_strided_slice %157 {offsets = [0, 128], sizes = [8, 128], strides = [1, 1]} : vector<8x384xf32> to vector<8x128xf32>
    %160 = vector.extract_strided_slice %157 {offsets = [0, 256], sizes = [8, 128], strides = [1, 1]} : vector<8x384xf32> to vector<8x128xf32>
    %161 = vector.extract_strided_slice %151 {offsets = [0, 384], sizes = [8, 128], strides = [1, 1]} : vector<8x512xf32> to vector<8x128xf32>
    %162 = math.tanh %161 : vector<8x128xf32>
    %163 = arith.mulf %159, %142 : vector<8x128xf32>
    %164 = arith.mulf %158, %162 : vector<8x128xf32>
    %165 = arith.addf %163, %164 : vector<8x128xf32>
    %166 = math.tanh %165 : vector<8x128xf32>
    %167 = arith.mulf %160, %166 : vector<8x128xf32>
    %cst_46 = arith.constant 0.000000e+00 : f32
    %168 = vector.broadcast %cst_46 : f32 to vector<8x128xf32>
    %169 = arith.maximumf %167, %168 : vector<8x128xf32>
    %c0_47 = arith.constant 0 : index
    %c768 = arith.constant 768 : index
    %170 = vector.load %arg12[%c0_47, %c768] : memref<8x3200xf32, #tpu.memory_space<vmem>>, vector<8x128xf32>
    tpu.vector_store %arg12[%c0_47, %c768], %169 {strides = array<i32>} : memref<8x3200xf32, #tpu.memory_space<vmem>>, vector<8x128xf32>,
    %171 = arith.truncf %167 : vector<8x128xf32> to vector<8x128xbf16>
    %c56 = arith.constant 56 : index
    %c0_48 = arith.constant 0 : index
    %172 = vector.load %arg11[%c56, %c0_48] : memref<200x512xf32, #tpu.memory_space<vmem>>, vector<8x512xf32>
    %cst_49 = arith.constant dense<0.000000e+00> : vector<8x512xf32>
    %173 = tpu.matmul %171, %8, %cst_49 {dimension_numbers = #tpu.dot_dimension_numbers<[1], [0], [0], [1], [0, 0, 1, 1], [], []>} : vector<8x128xbf16>, vector<128x512xbf16>, vector<8x512xf32> -> vector<8x512xf32>
    %174 = arith.addf %172, %173 : vector<8x512xf32>
    %175 = vector.extract_strided_slice %174 {offsets = [0, 0], sizes = [8, 384], strides = [1, 1]} : vector<8x512xf32> to vector<8x384xf32>
    %176 = arith.negf %175 : vector<8x384xf32>
    %177 = math.exp %176 : vector<8x384xf32>
    %cst_50 = arith.constant 1.000000e+00 : f32
    %178 = vector.broadcast %cst_50 : f32 to vector<8x384xf32>
    %179 = arith.addf %178, %177 : vector<8x384xf32>
    %180 = arith.divf %178, %179 : vector<8x384xf32>
    %181 = vector.extract_strided_slice %180 {offsets = [0, 0], sizes = [8, 128], strides = [1, 1]} : vector<8x384xf32> to vector<8x128xf32>
    %182 = vector.extract_strided_slice %180 {offsets = [0, 128], sizes = [8, 128], strides = [1, 1]} : vector<8x384xf32> to vector<8x128xf32>
    %183 = vector.extract_strided_slice %180 {offsets = [0, 256], sizes = [8, 128], strides = [1, 1]} : vector<8x384xf32> to vector<8x128xf32>
    %184 = vector.extract_strided_slice %174 {offsets = [0, 384], sizes = [8, 128], strides = [1, 1]} : vector<8x512xf32> to vector<8x128xf32>
    %185 = math.tanh %184 : vector<8x128xf32>
    %186 = arith.mulf %182, %165 : vector<8x128xf32>
    %187 = arith.mulf %181, %185 : vector<8x128xf32>
    %188 = arith.addf %186, %187 : vector<8x128xf32>
    %189 = math.tanh %188 : vector<8x128xf32>
    %190 = arith.mulf %183, %189 : vector<8x128xf32>
    %cst_51 = arith.constant 0.000000e+00 : f32
    %191 = vector.broadcast %cst_51 : f32 to vector<8x128xf32>
    %192 = arith.maximumf %190, %191 : vector<8x128xf32>
    %c0_52 = arith.constant 0 : index
    %c896 = arith.constant 896 : index
    %193 = vector.load %arg12[%c0_52, %c896] : memref<8x3200xf32, #tpu.memory_space<vmem>>, vector<8x128xf32>
    tpu.vector_store %arg12[%c0_52, %c896], %192 {strides = array<i32>} : memref<8x3200xf32, #tpu.memory_space<vmem>>, vector<8x128xf32>,
    %194 = arith.truncf %190 : vector<8x128xf32> to vector<8x128xbf16>
    %c64 = arith.constant 64 : index
    %c0_53 = arith.constant 0 : index
    %195 = vector.load %arg11[%c64, %c0_53] : memref<200x512xf32, #tpu.memory_space<vmem>>, vector<8x512xf32>
    %cst_54 = arith.constant dense<0.000000e+00> : vector<8x512xf32>
    %196 = tpu.matmul %194, %8, %cst_54 {dimension_numbers = #tpu.dot_dimension_numbers<[1], [0], [0], [1], [0, 0, 1, 1], [], []>} : vector<8x128xbf16>, vector<128x512xbf16>, vector<8x512xf32> -> vector<8x512xf32>
    %197 = arith.addf %195, %196 : vector<8x512xf32>
    %198 = vector.extract_strided_slice %197 {offsets = [0, 0], sizes = [8, 384], strides = [1, 1]} : vector<8x512xf32> to vector<8x384xf32>
    %199 = arith.negf %198 : vector<8x384xf32>
    %200 = math.exp %199 : vector<8x384xf32>
    %cst_55 = arith.constant 1.000000e+00 : f32
    %201 = vector.broadcast %cst_55 : f32 to vector<8x384xf32>
    %202 = arith.addf %201, %200 : vector<8x384xf32>
    %203 = arith.divf %201, %202 : vector<8x384xf32>
    %204 = vector.extract_strided_slice %203 {offsets = [0, 0], sizes = [8, 128], strides = [1, 1]} : vector<8x384xf32> to vector<8x128xf32>
    %205 = vector.extract_strided_slice %203 {offsets = [0, 128], sizes = [8, 128], strides = [1, 1]} : vector<8x384xf32> to vector<8x128xf32>
    %206 = vector.extract_strided_slice %203 {offsets = [0, 256], sizes = [8, 128], strides = [1, 1]} : vector<8x384xf32> to vector<8x128xf32>
    %207 = vector.extract_strided_slice %197 {offsets = [0, 384], sizes = [8, 128], strides = [1, 1]} : vector<8x512xf32> to vector<8x128xf32>
    %208 = math.tanh %207 : vector<8x128xf32>
    %209 = arith.mulf %205, %188 : vector<8x128xf32>
    %210 = arith.mulf %204, %208 : vector<8x128xf32>
    %211 = arith.addf %209, %210 : vector<8x128xf32>
    %212 = math.tanh %211 : vector<8x128xf32>
    %213 = arith.mulf %206, %212 : vector<8x128xf32>
    %cst_56 = arith.constant 0.000000e+00 : f32
    %214 = vector.broadcast %cst_56 : f32 to vector<8x128xf32>
    %215 = arith.maximumf %213, %214 : vector<8x128xf32>
    %c0_57 = arith.constant 0 : index
    %c1024 = arith.constant 1024 : index
    %216 = vector.load %arg12[%c0_57, %c1024] : memref<8x3200xf32, #tpu.memory_space<vmem>>, vector<8x128xf32>
    tpu.vector_store %arg12[%c0_57, %c1024], %215 {strides = array<i32>} : memref<8x3200xf32, #tpu.memory_space<vmem>>, vector<8x128xf32>,
    %217 = arith.truncf %213 : vector<8x128xf32> to vector<8x128xbf16>
    %c72 = arith.constant 72 : index
    %c0_58 = arith.constant 0 : index
    %218 = vector.load %arg11[%c72, %c0_58] : memref<200x512xf32, #tpu.memory_space<vmem>>, vector<8x512xf32>
    %cst_59 = arith.constant dense<0.000000e+00> : vector<8x512xf32>
    %219 = tpu.matmul %217, %8, %cst_59 {dimension_numbers = #tpu.dot_dimension_numbers<[1], [0], [0], [1], [0, 0, 1, 1], [], []>} : vector<8x128xbf16>, vector<128x512xbf16>, vector<8x512xf32> -> vector<8x512xf32>
    %220 = arith.addf %218, %219 : vector<8x512xf32>
    %221 = vector.extract_strided_slice %220 {offsets = [0, 0], sizes = [8, 384], strides = [1, 1]} : vector<8x512xf32> to vector<8x384xf32>
    %222 = arith.negf %221 : vector<8x384xf32>
    %223 = math.exp %222 : vector<8x384xf32>
    %cst_60 = arith.constant 1.000000e+00 : f32
    %224 = vector.broadcast %cst_60 : f32 to vector<8x384xf32>
    %225 = arith.addf %224, %223 : vector<8x384xf32>
    %226 = arith.divf %224, %225 : vector<8x384xf32>
    %227 = vector.extract_strided_slice %226 {offsets = [0, 0], sizes = [8, 128], strides = [1, 1]} : vector<8x384xf32> to vector<8x128xf32>
    %228 = vector.extract_strided_slice %226 {offsets = [0, 128], sizes = [8, 128], strides = [1, 1]} : vector<8x384xf32> to vector<8x128xf32>
    %229 = vector.extract_strided_slice %226 {offsets = [0, 256], sizes = [8, 128], strides = [1, 1]} : vector<8x384xf32> to vector<8x128xf32>
    %230 = vector.extract_strided_slice %220 {offsets = [0, 384], sizes = [8, 128], strides = [1, 1]} : vector<8x512xf32> to vector<8x128xf32>
    %231 = math.tanh %230 : vector<8x128xf32>
    %232 = arith.mulf %228, %211 : vector<8x128xf32>
    %233 = arith.mulf %227, %231 : vector<8x128xf32>
    %234 = arith.addf %232, %233 : vector<8x128xf32>
    %235 = math.tanh %234 : vector<8x128xf32>
    %236 = arith.mulf %229, %235 : vector<8x128xf32>
    %cst_61 = arith.constant 0.000000e+00 : f32
    %237 = vector.broadcast %cst_61 : f32 to vector<8x128xf32>
    %238 = arith.maximumf %236, %237 : vector<8x128xf32>
    %c0_62 = arith.constant 0 : index
    %c1152 = arith.constant 1152 : index
    %239 = vector.load %arg12[%c0_62, %c1152] : memref<8x3200xf32, #tpu.memory_space<vmem>>, vector<8x128xf32>
    tpu.vector_store %arg12[%c0_62, %c1152], %238 {strides = array<i32>} : memref<8x3200xf32, #tpu.memory_space<vmem>>, vector<8x128xf32>,
    %240 = arith.truncf %236 : vector<8x128xf32> to vector<8x128xbf16>
    %c80 = arith.constant 80 : index
    %c0_63 = arith.constant 0 : index
    %241 = vector.load %arg11[%c80, %c0_63] : memref<200x512xf32, #tpu.memory_space<vmem>>, vector<8x512xf32>
    %cst_64 = arith.constant dense<0.000000e+00> : vector<8x512xf32>
    %242 = tpu.matmul %240, %8, %cst_64 {dimension_numbers = #tpu.dot_dimension_numbers<[1], [0], [0], [1], [0, 0, 1, 1], [], []>} : vector<8x128xbf16>, vector<128x512xbf16>, vector<8x512xf32> -> vector<8x512xf32>
    %243 = arith.addf %241, %242 : vector<8x512xf32>
    %244 = vector.extract_strided_slice %243 {offsets = [0, 0], sizes = [8, 384], strides = [1, 1]} : vector<8x512xf32> to vector<8x384xf32>
    %245 = arith.negf %244 : vector<8x384xf32>
    %246 = math.exp %245 : vector<8x384xf32>
    %cst_65 = arith.constant 1.000000e+00 : f32
    %247 = vector.broadcast %cst_65 : f32 to vector<8x384xf32>
    %248 = arith.addf %247, %246 : vector<8x384xf32>
    %249 = arith.divf %247, %248 : vector<8x384xf32>
    %250 = vector.extract_strided_slice %249 {offsets = [0, 0], sizes = [8, 128], strides = [1, 1]} : vector<8x384xf32> to vector<8x128xf32>
    %251 = vector.extract_strided_slice %249 {offsets = [0, 128], sizes = [8, 128], strides = [1, 1]} : vector<8x384xf32> to vector<8x128xf32>
    %252 = vector.extract_strided_slice %249 {offsets = [0, 256], sizes = [8, 128], strides = [1, 1]} : vector<8x384xf32> to vector<8x128xf32>
    %253 = vector.extract_strided_slice %243 {offsets = [0, 384], sizes = [8, 128], strides = [1, 1]} : vector<8x512xf32> to vector<8x128xf32>
    %254 = math.tanh %253 : vector<8x128xf32>
    %255 = arith.mulf %251, %234 : vector<8x128xf32>
    %256 = arith.mulf %250, %254 : vector<8x128xf32>
    %257 = arith.addf %255, %256 : vector<8x128xf32>
    %258 = math.tanh %257 : vector<8x128xf32>
    %259 = arith.mulf %252, %258 : vector<8x128xf32>
    %cst_66 = arith.constant 0.000000e+00 : f32
    %260 = vector.broadcast %cst_66 : f32 to vector<8x128xf32>
    %261 = arith.maximumf %259, %260 : vector<8x128xf32>
    %c0_67 = arith.constant 0 : index
    %c1280 = arith.constant 1280 : index
    %262 = vector.load %arg12[%c0_67, %c1280] : memref<8x3200xf32, #tpu.memory_space<vmem>>, vector<8x128xf32>
    tpu.vector_store %arg12[%c0_67, %c1280], %261 {strides = array<i32>} : memref<8x3200xf32, #tpu.memory_space<vmem>>, vector<8x128xf32>,
    %263 = arith.truncf %259 : vector<8x128xf32> to vector<8x128xbf16>
    %c88 = arith.constant 88 : index
    %c0_68 = arith.constant 0 : index
    %264 = vector.load %arg11[%c88, %c0_68] : memref<200x512xf32, #tpu.memory_space<vmem>>, vector<8x512xf32>
    %cst_69 = arith.constant dense<0.000000e+00> : vector<8x512xf32>
    %265 = tpu.matmul %263, %8, %cst_69 {dimension_numbers = #tpu.dot_dimension_numbers<[1], [0], [0], [1], [0, 0, 1, 1], [], []>} : vector<8x128xbf16>, vector<128x512xbf16>, vector<8x512xf32> -> vector<8x512xf32>
    %266 = arith.addf %264, %265 : vector<8x512xf32>
    %267 = vector.extract_strided_slice %266 {offsets = [0, 0], sizes = [8, 384], strides = [1, 1]} : vector<8x512xf32> to vector<8x384xf32>
    %268 = arith.negf %267 : vector<8x384xf32>
    %269 = math.exp %268 : vector<8x384xf32>
    %cst_70 = arith.constant 1.000000e+00 : f32
    %270 = vector.broadcast %cst_70 : f32 to vector<8x384xf32>
    %271 = arith.addf %270, %269 : vector<8x384xf32>
    %272 = arith.divf %270, %271 : vector<8x384xf32>
    %273 = vector.extract_strided_slice %272 {offsets = [0, 0], sizes = [8, 128], strides = [1, 1]} : vector<8x384xf32> to vector<8x128xf32>
    %274 = vector.extract_strided_slice %272 {offsets = [0, 128], sizes = [8, 128], strides = [1, 1]} : vector<8x384xf32> to vector<8x128xf32>
    %275 = vector.extract_strided_slice %272 {offsets = [0, 256], sizes = [8, 128], strides = [1, 1]} : vector<8x384xf32> to vector<8x128xf32>
    %276 = vector.extract_strided_slice %266 {offsets = [0, 384], sizes = [8, 128], strides = [1, 1]} : vector<8x512xf32> to vector<8x128xf32>
    %277 = math.tanh %276 : vector<8x128xf32>
    %278 = arith.mulf %274, %257 : vector<8x128xf32>
    %279 = arith.mulf %273, %277 : vector<8x128xf32>
    %280 = arith.addf %278, %279 : vector<8x128xf32>
    %281 = math.tanh %280 : vector<8x128xf32>
    %282 = arith.mulf %275, %281 : vector<8x128xf32>
    %cst_71 = arith.constant 0.000000e+00 : f32
    %283 = vector.broadcast %cst_71 : f32 to vector<8x128xf32>
    %284 = arith.maximumf %282, %283 : vector<8x128xf32>
    %c0_72 = arith.constant 0 : index
    %c1408 = arith.constant 1408 : index
    %285 = vector.load %arg12[%c0_72, %c1408] : memref<8x3200xf32, #tpu.memory_space<vmem>>, vector<8x128xf32>
    tpu.vector_store %arg12[%c0_72, %c1408], %284 {strides = array<i32>} : memref<8x3200xf32, #tpu.memory_space<vmem>>, vector<8x128xf32>,
    %286 = arith.truncf %282 : vector<8x128xf32> to vector<8x128xbf16>
    %c96 = arith.constant 96 : index
    %c0_73 = arith.constant 0 : index
    %287 = vector.load %arg11[%c96, %c0_73] : memref<200x512xf32, #tpu.memory_space<vmem>>, vector<8x512xf32>
    %cst_74 = arith.constant dense<0.000000e+00> : vector<8x512xf32>
    %288 = tpu.matmul %286, %8, %cst_74 {dimension_numbers = #tpu.dot_dimension_numbers<[1], [0], [0], [1], [0, 0, 1, 1], [], []>} : vector<8x128xbf16>, vector<128x512xbf16>, vector<8x512xf32> -> vector<8x512xf32>
    %289 = arith.addf %287, %288 : vector<8x512xf32>
    %290 = vector.extract_strided_slice %289 {offsets = [0, 0], sizes = [8, 384], strides = [1, 1]} : vector<8x512xf32> to vector<8x384xf32>
    %291 = arith.negf %290 : vector<8x384xf32>
    %292 = math.exp %291 : vector<8x384xf32>
    %cst_75 = arith.constant 1.000000e+00 : f32
    %293 = vector.broadcast %cst_75 : f32 to vector<8x384xf32>
    %294 = arith.addf %293, %292 : vector<8x384xf32>
    %295 = arith.divf %293, %294 : vector<8x384xf32>
    %296 = vector.extract_strided_slice %295 {offsets = [0, 0], sizes = [8, 128], strides = [1, 1]} : vector<8x384xf32> to vector<8x128xf32>
    %297 = vector.extract_strided_slice %295 {offsets = [0, 128], sizes = [8, 128], strides = [1, 1]} : vector<8x384xf32> to vector<8x128xf32>
    %298 = vector.extract_strided_slice %295 {offsets = [0, 256], sizes = [8, 128], strides = [1, 1]} : vector<8x384xf32> to vector<8x128xf32>
    %299 = vector.extract_strided_slice %289 {offsets = [0, 384], sizes = [8, 128], strides = [1, 1]} : vector<8x512xf32> to vector<8x128xf32>
    %300 = math.tanh %299 : vector<8x128xf32>
    %301 = arith.mulf %297, %280 : vector<8x128xf32>
    %302 = arith.mulf %296, %300 : vector<8x128xf32>
    %303 = arith.addf %301, %302 : vector<8x128xf32>
    %304 = math.tanh %303 : vector<8x128xf32>
    %305 = arith.mulf %298, %304 : vector<8x128xf32>
    %cst_76 = arith.constant 0.000000e+00 : f32
    %306 = vector.broadcast %cst_76 : f32 to vector<8x128xf32>
    %307 = arith.maximumf %305, %306 : vector<8x128xf32>
    %c0_77 = arith.constant 0 : index
    %c1536 = arith.constant 1536 : index
    %308 = vector.load %arg12[%c0_77, %c1536] : memref<8x3200xf32, #tpu.memory_space<vmem>>, vector<8x128xf32>
    tpu.vector_store %arg12[%c0_77, %c1536], %307 {strides = array<i32>} : memref<8x3200xf32, #tpu.memory_space<vmem>>, vector<8x128xf32>,
    %309 = arith.truncf %305 : vector<8x128xf32> to vector<8x128xbf16>
    %c104 = arith.constant 104 : index
    %c0_78 = arith.constant 0 : index
    %310 = vector.load %arg11[%c104, %c0_78] : memref<200x512xf32, #tpu.memory_space<vmem>>, vector<8x512xf32>
    %cst_79 = arith.constant dense<0.000000e+00> : vector<8x512xf32>
    %311 = tpu.matmul %309, %8, %cst_79 {dimension_numbers = #tpu.dot_dimension_numbers<[1], [0], [0], [1], [0, 0, 1, 1], [], []>} : vector<8x128xbf16>, vector<128x512xbf16>, vector<8x512xf32> -> vector<8x512xf32>
    %312 = arith.addf %310, %311 : vector<8x512xf32>
    %313 = vector.extract_strided_slice %312 {offsets = [0, 0], sizes = [8, 384], strides = [1, 1]} : vector<8x512xf32> to vector<8x384xf32>
    %314 = arith.negf %313 : vector<8x384xf32>
    %315 = math.exp %314 : vector<8x384xf32>
    %cst_80 = arith.constant 1.000000e+00 : f32
    %316 = vector.broadcast %cst_80 : f32 to vector<8x384xf32>
    %317 = arith.addf %316, %315 : vector<8x384xf32>
    %318 = arith.divf %316, %317 : vector<8x384xf32>
    %319 = vector.extract_strided_slice %318 {offsets = [0, 0], sizes = [8, 128], strides = [1, 1]} : vector<8x384xf32> to vector<8x128xf32>
    %320 = vector.extract_strided_slice %318 {offsets = [0, 128], sizes = [8, 128], strides = [1, 1]} : vector<8x384xf32> to vector<8x128xf32>
    %321 = vector.extract_strided_slice %318 {offsets = [0, 256], sizes = [8, 128], strides = [1, 1]} : vector<8x384xf32> to vector<8x128xf32>
    %322 = vector.extract_strided_slice %312 {offsets = [0, 384], sizes = [8, 128], strides = [1, 1]} : vector<8x512xf32> to vector<8x128xf32>
    %323 = math.tanh %322 : vector<8x128xf32>
    %324 = arith.mulf %320, %303 : vector<8x128xf32>
    %325 = arith.mulf %319, %323 : vector<8x128xf32>
    %326 = arith.addf %324, %325 : vector<8x128xf32>
    %327 = math.tanh %326 : vector<8x128xf32>
    %328 = arith.mulf %321, %327 : vector<8x128xf32>
    %cst_81 = arith.constant 0.000000e+00 : f32
    %329 = vector.broadcast %cst_81 : f32 to vector<8x128xf32>
    %330 = arith.maximumf %328, %329 : vector<8x128xf32>
    %c0_82 = arith.constant 0 : index
    %c1664 = arith.constant 1664 : index
    %331 = vector.load %arg12[%c0_82, %c1664] : memref<8x3200xf32, #tpu.memory_space<vmem>>, vector<8x128xf32>
    tpu.vector_store %arg12[%c0_82, %c1664], %330 {strides = array<i32>} : memref<8x3200xf32, #tpu.memory_space<vmem>>, vector<8x128xf32>,
    %332 = arith.truncf %328 : vector<8x128xf32> to vector<8x128xbf16>
    %c112 = arith.constant 112 : index
    %c0_83 = arith.constant 0 : index
    %333 = vector.load %arg11[%c112, %c0_83] : memref<200x512xf32, #tpu.memory_space<vmem>>, vector<8x512xf32>
    %cst_84 = arith.constant dense<0.000000e+00> : vector<8x512xf32>
    %334 = tpu.matmul %332, %8, %cst_84 {dimension_numbers = #tpu.dot_dimension_numbers<[1], [0], [0], [1], [0, 0, 1, 1], [], []>} : vector<8x128xbf16>, vector<128x512xbf16>, vector<8x512xf32> -> vector<8x512xf32>
    %335 = arith.addf %333, %334 : vector<8x512xf32>
    %336 = vector.extract_strided_slice %335 {offsets = [0, 0], sizes = [8, 384], strides = [1, 1]} : vector<8x512xf32> to vector<8x384xf32>
    %337 = arith.negf %336 : vector<8x384xf32>
    %338 = math.exp %337 : vector<8x384xf32>
    %cst_85 = arith.constant 1.000000e+00 : f32
    %339 = vector.broadcast %cst_85 : f32 to vector<8x384xf32>
    %340 = arith.addf %339, %338 : vector<8x384xf32>
    %341 = arith.divf %339, %340 : vector<8x384xf32>
    %342 = vector.extract_strided_slice %341 {offsets = [0, 0], sizes = [8, 128], strides = [1, 1]} : vector<8x384xf32> to vector<8x128xf32>
    %343 = vector.extract_strided_slice %341 {offsets = [0, 128], sizes = [8, 128], strides = [1, 1]} : vector<8x384xf32> to vector<8x128xf32>
    %344 = vector.extract_strided_slice %341 {offsets = [0, 256], sizes = [8, 128], strides = [1, 1]} : vector<8x384xf32> to vector<8x128xf32>
    %345 = vector.extract_strided_slice %335 {offsets = [0, 384], sizes = [8, 128], strides = [1, 1]} : vector<8x512xf32> to vector<8x128xf32>
    %346 = math.tanh %345 : vector<8x128xf32>
    %347 = arith.mulf %343, %326 : vector<8x128xf32>
    %348 = arith.mulf %342, %346 : vector<8x128xf32>
    %349 = arith.addf %347, %348 : vector<8x128xf32>
    %350 = math.tanh %349 : vector<8x128xf32>
    %351 = arith.mulf %344, %350 : vector<8x128xf32>
    %cst_86 = arith.constant 0.000000e+00 : f32
    %352 = vector.broadcast %cst_86 : f32 to vector<8x128xf32>
    %353 = arith.maximumf %351, %352 : vector<8x128xf32>
    %c0_87 = arith.constant 0 : index
    %c1792 = arith.constant 1792 : index
    %354 = vector.load %arg12[%c0_87, %c1792] : memref<8x3200xf32, #tpu.memory_space<vmem>>, vector<8x128xf32>
    tpu.vector_store %arg12[%c0_87, %c1792], %353 {strides = array<i32>} : memref<8x3200xf32, #tpu.memory_space<vmem>>, vector<8x128xf32>,
    %355 = arith.truncf %351 : vector<8x128xf32> to vector<8x128xbf16>
    %c120 = arith.constant 120 : index
    %c0_88 = arith.constant 0 : index
    %356 = vector.load %arg11[%c120, %c0_88] : memref<200x512xf32, #tpu.memory_space<vmem>>, vector<8x512xf32>
    %cst_89 = arith.constant dense<0.000000e+00> : vector<8x512xf32>
    %357 = tpu.matmul %355, %8, %cst_89 {dimension_numbers = #tpu.dot_dimension_numbers<[1], [0], [0], [1], [0, 0, 1, 1], [], []>} : vector<8x128xbf16>, vector<128x512xbf16>, vector<8x512xf32> -> vector<8x512xf32>
    %358 = arith.addf %356, %357 : vector<8x512xf32>
    %359 = vector.extract_strided_slice %358 {offsets = [0, 0], sizes = [8, 384], strides = [1, 1]} : vector<8x512xf32> to vector<8x384xf32>
    %360 = arith.negf %359 : vector<8x384xf32>
    %361 = math.exp %360 : vector<8x384xf32>
    %cst_90 = arith.constant 1.000000e+00 : f32
    %362 = vector.broadcast %cst_90 : f32 to vector<8x384xf32>
    %363 = arith.addf %362, %361 : vector<8x384xf32>
    %364 = arith.divf %362, %363 : vector<8x384xf32>
    %365 = vector.extract_strided_slice %364 {offsets = [0, 0], sizes = [8, 128], strides = [1, 1]} : vector<8x384xf32> to vector<8x128xf32>
    %366 = vector.extract_strided_slice %364 {offsets = [0, 128], sizes = [8, 128], strides = [1, 1]} : vector<8x384xf32> to vector<8x128xf32>
    %367 = vector.extract_strided_slice %364 {offsets = [0, 256], sizes = [8, 128], strides = [1, 1]} : vector<8x384xf32> to vector<8x128xf32>
    %368 = vector.extract_strided_slice %358 {offsets = [0, 384], sizes = [8, 128], strides = [1, 1]} : vector<8x512xf32> to vector<8x128xf32>
    %369 = math.tanh %368 : vector<8x128xf32>
    %370 = arith.mulf %366, %349 : vector<8x128xf32>
    %371 = arith.mulf %365, %369 : vector<8x128xf32>
    %372 = arith.addf %370, %371 : vector<8x128xf32>
    %373 = math.tanh %372 : vector<8x128xf32>
    %374 = arith.mulf %367, %373 : vector<8x128xf32>
    %cst_91 = arith.constant 0.000000e+00 : f32
    %375 = vector.broadcast %cst_91 : f32 to vector<8x128xf32>
    %376 = arith.maximumf %374, %375 : vector<8x128xf32>
    %c0_92 = arith.constant 0 : index
    %c1920 = arith.constant 1920 : index
    %377 = vector.load %arg12[%c0_92, %c1920] : memref<8x3200xf32, #tpu.memory_space<vmem>>, vector<8x128xf32>
    tpu.vector_store %arg12[%c0_92, %c1920], %376 {strides = array<i32>} : memref<8x3200xf32, #tpu.memory_space<vmem>>, vector<8x128xf32>,
    %378 = arith.truncf %374 : vector<8x128xf32> to vector<8x128xbf16>
    %c128_93 = arith.constant 128 : index
    %c0_94 = arith.constant 0 : index
    %379 = vector.load %arg11[%c128_93, %c0_94] : memref<200x512xf32, #tpu.memory_space<vmem>>, vector<8x512xf32>
    %cst_95 = arith.constant dense<0.000000e+00> : vector<8x512xf32>
    %380 = tpu.matmul %378, %8, %cst_95 {dimension_numbers = #tpu.dot_dimension_numbers<[1], [0], [0], [1], [0, 0, 1, 1], [], []>} : vector<8x128xbf16>, vector<128x512xbf16>, vector<8x512xf32> -> vector<8x512xf32>
    %381 = arith.addf %379, %380 : vector<8x512xf32>
    %382 = vector.extract_strided_slice %381 {offsets = [0, 0], sizes = [8, 384], strides = [1, 1]} : vector<8x512xf32> to vector<8x384xf32>
    %383 = arith.negf %382 : vector<8x384xf32>
    %384 = math.exp %383 : vector<8x384xf32>
    %cst_96 = arith.constant 1.000000e+00 : f32
    %385 = vector.broadcast %cst_96 : f32 to vector<8x384xf32>
    %386 = arith.addf %385, %384 : vector<8x384xf32>
    %387 = arith.divf %385, %386 : vector<8x384xf32>
    %388 = vector.extract_strided_slice %387 {offsets = [0, 0], sizes = [8, 128], strides = [1, 1]} : vector<8x384xf32> to vector<8x128xf32>
    %389 = vector.extract_strided_slice %387 {offsets = [0, 128], sizes = [8, 128], strides = [1, 1]} : vector<8x384xf32> to vector<8x128xf32>
    %390 = vector.extract_strided_slice %387 {offsets = [0, 256], sizes = [8, 128], strides = [1, 1]} : vector<8x384xf32> to vector<8x128xf32>
    %391 = vector.extract_strided_slice %381 {offsets = [0, 384], sizes = [8, 128], strides = [1, 1]} : vector<8x512xf32> to vector<8x128xf32>
    %392 = math.tanh %391 : vector<8x128xf32>
    %393 = arith.mulf %389, %372 : vector<8x128xf32>
    %394 = arith.mulf %388, %392 : vector<8x128xf32>
    %395 = arith.addf %393, %394 : vector<8x128xf32>
    %396 = math.tanh %395 : vector<8x128xf32>
    %397 = arith.mulf %390, %396 : vector<8x128xf32>
    %cst_97 = arith.constant 0.000000e+00 : f32
    %398 = vector.broadcast %cst_97 : f32 to vector<8x128xf32>
    %399 = arith.maximumf %397, %398 : vector<8x128xf32>
    %c0_98 = arith.constant 0 : index
    %c2048 = arith.constant 2048 : index
    %400 = vector.load %arg12[%c0_98, %c2048] : memref<8x3200xf32, #tpu.memory_space<vmem>>, vector<8x128xf32>
    tpu.vector_store %arg12[%c0_98, %c2048], %399 {strides = array<i32>} : memref<8x3200xf32, #tpu.memory_space<vmem>>, vector<8x128xf32>,
    %401 = arith.truncf %397 : vector<8x128xf32> to vector<8x128xbf16>
    %c136 = arith.constant 136 : index
    %c0_99 = arith.constant 0 : index
    %402 = vector.load %arg11[%c136, %c0_99] : memref<200x512xf32, #tpu.memory_space<vmem>>, vector<8x512xf32>
    %cst_100 = arith.constant dense<0.000000e+00> : vector<8x512xf32>
    %403 = tpu.matmul %401, %8, %cst_100 {dimension_numbers = #tpu.dot_dimension_numbers<[1], [0], [0], [1], [0, 0, 1, 1], [], []>} : vector<8x128xbf16>, vector<128x512xbf16>, vector<8x512xf32> -> vector<8x512xf32>
    %404 = arith.addf %402, %403 : vector<8x512xf32>
    %405 = vector.extract_strided_slice %404 {offsets = [0, 0], sizes = [8, 384], strides = [1, 1]} : vector<8x512xf32> to vector<8x384xf32>
    %406 = arith.negf %405 : vector<8x384xf32>
    %407 = math.exp %406 : vector<8x384xf32>
    %cst_101 = arith.constant 1.000000e+00 : f32
    %408 = vector.broadcast %cst_101 : f32 to vector<8x384xf32>
    %409 = arith.addf %408, %407 : vector<8x384xf32>
    %410 = arith.divf %408, %409 : vector<8x384xf32>
    %411 = vector.extract_strided_slice %410 {offsets = [0, 0], sizes = [8, 128], strides = [1, 1]} : vector<8x384xf32> to vector<8x128xf32>
    %412 = vector.extract_strided_slice %410 {offsets = [0, 128], sizes = [8, 128], strides = [1, 1]} : vector<8x384xf32> to vector<8x128xf32>
    %413 = vector.extract_strided_slice %410 {offsets = [0, 256], sizes = [8, 128], strides = [1, 1]} : vector<8x384xf32> to vector<8x128xf32>
    %414 = vector.extract_strided_slice %404 {offsets = [0, 384], sizes = [8, 128], strides = [1, 1]} : vector<8x512xf32> to vector<8x128xf32>
    %415 = math.tanh %414 : vector<8x128xf32>
    %416 = arith.mulf %412, %395 : vector<8x128xf32>
    %417 = arith.mulf %411, %415 : vector<8x128xf32>
    %418 = arith.addf %416, %417 : vector<8x128xf32>
    %419 = math.tanh %418 : vector<8x128xf32>
    %420 = arith.mulf %413, %419 : vector<8x128xf32>
    %cst_102 = arith.constant 0.000000e+00 : f32
    %421 = vector.broadcast %cst_102 : f32 to vector<8x128xf32>
    %422 = arith.maximumf %420, %421 : vector<8x128xf32>
    %c0_103 = arith.constant 0 : index
    %c2176 = arith.constant 2176 : index
    %423 = vector.load %arg12[%c0_103, %c2176] : memref<8x3200xf32, #tpu.memory_space<vmem>>, vector<8x128xf32>
    tpu.vector_store %arg12[%c0_103, %c2176], %422 {strides = array<i32>} : memref<8x3200xf32, #tpu.memory_space<vmem>>, vector<8x128xf32>,
    %424 = arith.truncf %420 : vector<8x128xf32> to vector<8x128xbf16>
    %c144 = arith.constant 144 : index
    %c0_104 = arith.constant 0 : index
    %425 = vector.load %arg11[%c144, %c0_104] : memref<200x512xf32, #tpu.memory_space<vmem>>, vector<8x512xf32>
    %cst_105 = arith.constant dense<0.000000e+00> : vector<8x512xf32>
    %426 = tpu.matmul %424, %8, %cst_105 {dimension_numbers = #tpu.dot_dimension_numbers<[1], [0], [0], [1], [0, 0, 1, 1], [], []>} : vector<8x128xbf16>, vector<128x512xbf16>, vector<8x512xf32> -> vector<8x512xf32>
    %427 = arith.addf %425, %426 : vector<8x512xf32>
    %428 = vector.extract_strided_slice %427 {offsets = [0, 0], sizes = [8, 384], strides = [1, 1]} : vector<8x512xf32> to vector<8x384xf32>
    %429 = arith.negf %428 : vector<8x384xf32>
    %430 = math.exp %429 : vector<8x384xf32>
    %cst_106 = arith.constant 1.000000e+00 : f32
    %431 = vector.broadcast %cst_106 : f32 to vector<8x384xf32>
    %432 = arith.addf %431, %430 : vector<8x384xf32>
    %433 = arith.divf %431, %432 : vector<8x384xf32>
    %434 = vector.extract_strided_slice %433 {offsets = [0, 0], sizes = [8, 128], strides = [1, 1]} : vector<8x384xf32> to vector<8x128xf32>
    %435 = vector.extract_strided_slice %433 {offsets = [0, 128], sizes = [8, 128], strides = [1, 1]} : vector<8x384xf32> to vector<8x128xf32>
    %436 = vector.extract_strided_slice %433 {offsets = [0, 256], sizes = [8, 128], strides = [1, 1]} : vector<8x384xf32> to vector<8x128xf32>
    %437 = vector.extract_strided_slice %427 {offsets = [0, 384], sizes = [8, 128], strides = [1, 1]} : vector<8x512xf32> to vector<8x128xf32>
    %438 = math.tanh %437 : vector<8x128xf32>
    %439 = arith.mulf %435, %418 : vector<8x128xf32>
    %440 = arith.mulf %434, %438 : vector<8x128xf32>
    %441 = arith.addf %439, %440 : vector<8x128xf32>
    %442 = math.tanh %441 : vector<8x128xf32>
    %443 = arith.mulf %436, %442 : vector<8x128xf32>
    %cst_107 = arith.constant 0.000000e+00 : f32
    %444 = vector.broadcast %cst_107 : f32 to vector<8x128xf32>
    %445 = arith.maximumf %443, %444 : vector<8x128xf32>
    %c0_108 = arith.constant 0 : index
    %c2304 = arith.constant 2304 : index
    %446 = vector.load %arg12[%c0_108, %c2304] : memref<8x3200xf32, #tpu.memory_space<vmem>>, vector<8x128xf32>
    tpu.vector_store %arg12[%c0_108, %c2304], %445 {strides = array<i32>} : memref<8x3200xf32, #tpu.memory_space<vmem>>, vector<8x128xf32>,
    %447 = arith.truncf %443 : vector<8x128xf32> to vector<8x128xbf16>
    %c152 = arith.constant 152 : index
    %c0_109 = arith.constant 0 : index
    %448 = vector.load %arg11[%c152, %c0_109] : memref<200x512xf32, #tpu.memory_space<vmem>>, vector<8x512xf32>
    %cst_110 = arith.constant dense<0.000000e+00> : vector<8x512xf32>
    %449 = tpu.matmul %447, %8, %cst_110 {dimension_numbers = #tpu.dot_dimension_numbers<[1], [0], [0], [1], [0, 0, 1, 1], [], []>} : vector<8x128xbf16>, vector<128x512xbf16>, vector<8x512xf32> -> vector<8x512xf32>
    %450 = arith.addf %448, %449 : vector<8x512xf32>
    %451 = vector.extract_strided_slice %450 {offsets = [0, 0], sizes = [8, 384], strides = [1, 1]} : vector<8x512xf32> to vector<8x384xf32>
    %452 = arith.negf %451 : vector<8x384xf32>
    %453 = math.exp %452 : vector<8x384xf32>
    %cst_111 = arith.constant 1.000000e+00 : f32
    %454 = vector.broadcast %cst_111 : f32 to vector<8x384xf32>
    %455 = arith.addf %454, %453 : vector<8x384xf32>
    %456 = arith.divf %454, %455 : vector<8x384xf32>
    %457 = vector.extract_strided_slice %456 {offsets = [0, 0], sizes = [8, 128], strides = [1, 1]} : vector<8x384xf32> to vector<8x128xf32>
    %458 = vector.extract_strided_slice %456 {offsets = [0, 128], sizes = [8, 128], strides = [1, 1]} : vector<8x384xf32> to vector<8x128xf32>
    %459 = vector.extract_strided_slice %456 {offsets = [0, 256], sizes = [8, 128], strides = [1, 1]} : vector<8x384xf32> to vector<8x128xf32>
    %460 = vector.extract_strided_slice %450 {offsets = [0, 384], sizes = [8, 128], strides = [1, 1]} : vector<8x512xf32> to vector<8x128xf32>
    %461 = math.tanh %460 : vector<8x128xf32>
    %462 = arith.mulf %458, %441 : vector<8x128xf32>
    %463 = arith.mulf %457, %461 : vector<8x128xf32>
    %464 = arith.addf %462, %463 : vector<8x128xf32>
    %465 = math.tanh %464 : vector<8x128xf32>
    %466 = arith.mulf %459, %465 : vector<8x128xf32>
    %cst_112 = arith.constant 0.000000e+00 : f32
    %467 = vector.broadcast %cst_112 : f32 to vector<8x128xf32>
    %468 = arith.maximumf %466, %467 : vector<8x128xf32>
    %c0_113 = arith.constant 0 : index
    %c2432 = arith.constant 2432 : index
    %469 = vector.load %arg12[%c0_113, %c2432] : memref<8x3200xf32, #tpu.memory_space<vmem>>, vector<8x128xf32>
    tpu.vector_store %arg12[%c0_113, %c2432], %468 {strides = array<i32>} : memref<8x3200xf32, #tpu.memory_space<vmem>>, vector<8x128xf32>,
    %470 = arith.truncf %466 : vector<8x128xf32> to vector<8x128xbf16>
    %c160 = arith.constant 160 : index
    %c0_114 = arith.constant 0 : index
    %471 = vector.load %arg11[%c160, %c0_114] : memref<200x512xf32, #tpu.memory_space<vmem>>, vector<8x512xf32>
    %cst_115 = arith.constant dense<0.000000e+00> : vector<8x512xf32>
    %472 = tpu.matmul %470, %8, %cst_115 {dimension_numbers = #tpu.dot_dimension_numbers<[1], [0], [0], [1], [0, 0, 1, 1], [], []>} : vector<8x128xbf16>, vector<128x512xbf16>, vector<8x512xf32> -> vector<8x512xf32>
    %473 = arith.addf %471, %472 : vector<8x512xf32>
    %474 = vector.extract_strided_slice %473 {offsets = [0, 0], sizes = [8, 384], strides = [1, 1]} : vector<8x512xf32> to vector<8x384xf32>
    %475 = arith.negf %474 : vector<8x384xf32>
    %476 = math.exp %475 : vector<8x384xf32>
    %cst_116 = arith.constant 1.000000e+00 : f32
    %477 = vector.broadcast %cst_116 : f32 to vector<8x384xf32>
    %478 = arith.addf %477, %476 : vector<8x384xf32>
    %479 = arith.divf %477, %478 : vector<8x384xf32>
    %480 = vector.extract_strided_slice %479 {offsets = [0, 0], sizes = [8, 128], strides = [1, 1]} : vector<8x384xf32> to vector<8x128xf32>
    %481 = vector.extract_strided_slice %479 {offsets = [0, 128], sizes = [8, 128], strides = [1, 1]} : vector<8x384xf32> to vector<8x128xf32>
    %482 = vector.extract_strided_slice %479 {offsets = [0, 256], sizes = [8, 128], strides = [1, 1]} : vector<8x384xf32> to vector<8x128xf32>
    %483 = vector.extract_strided_slice %473 {offsets = [0, 384], sizes = [8, 128], strides = [1, 1]} : vector<8x512xf32> to vector<8x128xf32>
    %484 = math.tanh %483 : vector<8x128xf32>
    %485 = arith.mulf %481, %464 : vector<8x128xf32>
    %486 = arith.mulf %480, %484 : vector<8x128xf32>
    %487 = arith.addf %485, %486 : vector<8x128xf32>
    %488 = math.tanh %487 : vector<8x128xf32>
    %489 = arith.mulf %482, %488 : vector<8x128xf32>
    %cst_117 = arith.constant 0.000000e+00 : f32
    %490 = vector.broadcast %cst_117 : f32 to vector<8x128xf32>
    %491 = arith.maximumf %489, %490 : vector<8x128xf32>
    %c0_118 = arith.constant 0 : index
    %c2560 = arith.constant 2560 : index
    %492 = vector.load %arg12[%c0_118, %c2560] : memref<8x3200xf32, #tpu.memory_space<vmem>>, vector<8x128xf32>
    tpu.vector_store %arg12[%c0_118, %c2560], %491 {strides = array<i32>} : memref<8x3200xf32, #tpu.memory_space<vmem>>, vector<8x128xf32>,
    %493 = arith.truncf %489 : vector<8x128xf32> to vector<8x128xbf16>
    %c168 = arith.constant 168 : index
    %c0_119 = arith.constant 0 : index
    %494 = vector.load %arg11[%c168, %c0_119] : memref<200x512xf32, #tpu.memory_space<vmem>>, vector<8x512xf32>
    %cst_120 = arith.constant dense<0.000000e+00> : vector<8x512xf32>
    %495 = tpu.matmul %493, %8, %cst_120 {dimension_numbers = #tpu.dot_dimension_numbers<[1], [0], [0], [1], [0, 0, 1, 1], [], []>} : vector<8x128xbf16>, vector<128x512xbf16>, vector<8x512xf32> -> vector<8x512xf32>
    %496 = arith.addf %494, %495 : vector<8x512xf32>
    %497 = vector.extract_strided_slice %496 {offsets = [0, 0], sizes = [8, 384], strides = [1, 1]} : vector<8x512xf32> to vector<8x384xf32>
    %498 = arith.negf %497 : vector<8x384xf32>
    %499 = math.exp %498 : vector<8x384xf32>
    %cst_121 = arith.constant 1.000000e+00 : f32
    %500 = vector.broadcast %cst_121 : f32 to vector<8x384xf32>
    %501 = arith.addf %500, %499 : vector<8x384xf32>
    %502 = arith.divf %500, %501 : vector<8x384xf32>
    %503 = vector.extract_strided_slice %502 {offsets = [0, 0], sizes = [8, 128], strides = [1, 1]} : vector<8x384xf32> to vector<8x128xf32>
    %504 = vector.extract_strided_slice %502 {offsets = [0, 128], sizes = [8, 128], strides = [1, 1]} : vector<8x384xf32> to vector<8x128xf32>
    %505 = vector.extract_strided_slice %502 {offsets = [0, 256], sizes = [8, 128], strides = [1, 1]} : vector<8x384xf32> to vector<8x128xf32>
    %506 = vector.extract_strided_slice %496 {offsets = [0, 384], sizes = [8, 128], strides = [1, 1]} : vector<8x512xf32> to vector<8x128xf32>
    %507 = math.tanh %506 : vector<8x128xf32>
    %508 = arith.mulf %504, %487 : vector<8x128xf32>
    %509 = arith.mulf %503, %507 : vector<8x128xf32>
    %510 = arith.addf %508, %509 : vector<8x128xf32>
    %511 = math.tanh %510 : vector<8x128xf32>
    %512 = arith.mulf %505, %511 : vector<8x128xf32>
    %cst_122 = arith.constant 0.000000e+00 : f32
    %513 = vector.broadcast %cst_122 : f32 to vector<8x128xf32>
    %514 = arith.maximumf %512, %513 : vector<8x128xf32>
    %c0_123 = arith.constant 0 : index
    %c2688 = arith.constant 2688 : index
    %515 = vector.load %arg12[%c0_123, %c2688] : memref<8x3200xf32, #tpu.memory_space<vmem>>, vector<8x128xf32>
    tpu.vector_store %arg12[%c0_123, %c2688], %514 {strides = array<i32>} : memref<8x3200xf32, #tpu.memory_space<vmem>>, vector<8x128xf32>,
    %516 = arith.truncf %512 : vector<8x128xf32> to vector<8x128xbf16>
    %c176 = arith.constant 176 : index
    %c0_124 = arith.constant 0 : index
    %517 = vector.load %arg11[%c176, %c0_124] : memref<200x512xf32, #tpu.memory_space<vmem>>, vector<8x512xf32>
    %cst_125 = arith.constant dense<0.000000e+00> : vector<8x512xf32>
    %518 = tpu.matmul %516, %8, %cst_125 {dimension_numbers = #tpu.dot_dimension_numbers<[1], [0], [0], [1], [0, 0, 1, 1], [], []>} : vector<8x128xbf16>, vector<128x512xbf16>, vector<8x512xf32> -> vector<8x512xf32>
    %519 = arith.addf %517, %518 : vector<8x512xf32>
    %520 = vector.extract_strided_slice %519 {offsets = [0, 0], sizes = [8, 384], strides = [1, 1]} : vector<8x512xf32> to vector<8x384xf32>
    %521 = arith.negf %520 : vector<8x384xf32>
    %522 = math.exp %521 : vector<8x384xf32>
    %cst_126 = arith.constant 1.000000e+00 : f32
    %523 = vector.broadcast %cst_126 : f32 to vector<8x384xf32>
    %524 = arith.addf %523, %522 : vector<8x384xf32>
    %525 = arith.divf %523, %524 : vector<8x384xf32>
    %526 = vector.extract_strided_slice %525 {offsets = [0, 0], sizes = [8, 128], strides = [1, 1]} : vector<8x384xf32> to vector<8x128xf32>
    %527 = vector.extract_strided_slice %525 {offsets = [0, 128], sizes = [8, 128], strides = [1, 1]} : vector<8x384xf32> to vector<8x128xf32>
    %528 = vector.extract_strided_slice %525 {offsets = [0, 256], sizes = [8, 128], strides = [1, 1]} : vector<8x384xf32> to vector<8x128xf32>
    %529 = vector.extract_strided_slice %519 {offsets = [0, 384], sizes = [8, 128], strides = [1, 1]} : vector<8x512xf32> to vector<8x128xf32>
    %530 = math.tanh %529 : vector<8x128xf32>
    %531 = arith.mulf %527, %510 : vector<8x128xf32>
    %532 = arith.mulf %526, %530 : vector<8x128xf32>
    %533 = arith.addf %531, %532 : vector<8x128xf32>
    %534 = math.tanh %533 : vector<8x128xf32>
    %535 = arith.mulf %528, %534 : vector<8x128xf32>
    %cst_127 = arith.constant 0.000000e+00 : f32
    %536 = vector.broadcast %cst_127 : f32 to vector<8x128xf32>
    %537 = arith.maximumf %535, %536 : vector<8x128xf32>
    %c0_128 = arith.constant 0 : index
    %c2816 = arith.constant 2816 : index
    %538 = vector.load %arg12[%c0_128, %c2816] : memref<8x3200xf32, #tpu.memory_space<vmem>>, vector<8x128xf32>
    tpu.vector_store %arg12[%c0_128, %c2816], %537 {strides = array<i32>} : memref<8x3200xf32, #tpu.memory_space<vmem>>, vector<8x128xf32>,
    %539 = arith.truncf %535 : vector<8x128xf32> to vector<8x128xbf16>
    %c184 = arith.constant 184 : index
    %c0_129 = arith.constant 0 : index
    %540 = vector.load %arg11[%c184, %c0_129] : memref<200x512xf32, #tpu.memory_space<vmem>>, vector<8x512xf32>
    %cst_130 = arith.constant dense<0.000000e+00> : vector<8x512xf32>
    %541 = tpu.matmul %539, %8, %cst_130 {dimension_numbers = #tpu.dot_dimension_numbers<[1], [0], [0], [1], [0, 0, 1, 1], [], []>} : vector<8x128xbf16>, vector<128x512xbf16>, vector<8x512xf32> -> vector<8x512xf32>
    %542 = arith.addf %540, %541 : vector<8x512xf32>
    %543 = vector.extract_strided_slice %542 {offsets = [0, 0], sizes = [8, 384], strides = [1, 1]} : vector<8x512xf32> to vector<8x384xf32>
    %544 = arith.negf %543 : vector<8x384xf32>
    %545 = math.exp %544 : vector<8x384xf32>
    %cst_131 = arith.constant 1.000000e+00 : f32
    %546 = vector.broadcast %cst_131 : f32 to vector<8x384xf32>
    %547 = arith.addf %546, %545 : vector<8x384xf32>
    %548 = arith.divf %546, %547 : vector<8x384xf32>
    %549 = vector.extract_strided_slice %548 {offsets = [0, 0], sizes = [8, 128], strides = [1, 1]} : vector<8x384xf32> to vector<8x128xf32>
    %550 = vector.extract_strided_slice %548 {offsets = [0, 128], sizes = [8, 128], strides = [1, 1]} : vector<8x384xf32> to vector<8x128xf32>
    %551 = vector.extract_strided_slice %548 {offsets = [0, 256], sizes = [8, 128], strides = [1, 1]} : vector<8x384xf32> to vector<8x128xf32>
    %552 = vector.extract_strided_slice %542 {offsets = [0, 384], sizes = [8, 128], strides = [1, 1]} : vector<8x512xf32> to vector<8x128xf32>
    %553 = math.tanh %552 : vector<8x128xf32>
    %554 = arith.mulf %550, %533 : vector<8x128xf32>
    %555 = arith.mulf %549, %553 : vector<8x128xf32>
    %556 = arith.addf %554, %555 : vector<8x128xf32>
    %557 = math.tanh %556 : vector<8x128xf32>
    %558 = arith.mulf %551, %557 : vector<8x128xf32>
    %cst_132 = arith.constant 0.000000e+00 : f32
    %559 = vector.broadcast %cst_132 : f32 to vector<8x128xf32>
    %560 = arith.maximumf %558, %559 : vector<8x128xf32>
    %c0_133 = arith.constant 0 : index
    %c2944 = arith.constant 2944 : index
    %561 = vector.load %arg12[%c0_133, %c2944] : memref<8x3200xf32, #tpu.memory_space<vmem>>, vector<8x128xf32>
    tpu.vector_store %arg12[%c0_133, %c2944], %560 {strides = array<i32>} : memref<8x3200xf32, #tpu.memory_space<vmem>>, vector<8x128xf32>,
    %562 = arith.truncf %558 : vector<8x128xf32> to vector<8x128xbf16>
    %c192 = arith.constant 192 : index
    %c0_134 = arith.constant 0 : index
    %563 = vector.load %arg11[%c192, %c0_134] : memref<200x512xf32, #tpu.memory_space<vmem>>, vector<8x512xf32>
    %cst_135 = arith.constant dense<0.000000e+00> : vector<8x512xf32>
    %564 = tpu.matmul %562, %8, %cst_135 {dimension_numbers = #tpu.dot_dimension_numbers<[1], [0], [0], [1], [0, 0, 1, 1], [], []>} : vector<8x128xbf16>, vector<128x512xbf16>, vector<8x512xf32> -> vector<8x512xf32>
    %565 = arith.addf %563, %564 : vector<8x512xf32>
    %566 = vector.extract_strided_slice %565 {offsets = [0, 0], sizes = [8, 384], strides = [1, 1]} : vector<8x512xf32> to vector<8x384xf32>
    %567 = arith.negf %566 : vector<8x384xf32>
    %568 = math.exp %567 : vector<8x384xf32>
    %cst_136 = arith.constant 1.000000e+00 : f32
    %569 = vector.broadcast %cst_136 : f32 to vector<8x384xf32>
    %570 = arith.addf %569, %568 : vector<8x384xf32>
    %571 = arith.divf %569, %570 : vector<8x384xf32>
    %572 = vector.extract_strided_slice %571 {offsets = [0, 0], sizes = [8, 128], strides = [1, 1]} : vector<8x384xf32> to vector<8x128xf32>
    %573 = vector.extract_strided_slice %571 {offsets = [0, 128], sizes = [8, 128], strides = [1, 1]} : vector<8x384xf32> to vector<8x128xf32>
    %574 = vector.extract_strided_slice %571 {offsets = [0, 256], sizes = [8, 128], strides = [1, 1]} : vector<8x384xf32> to vector<8x128xf32>
    %575 = vector.extract_strided_slice %565 {offsets = [0, 384], sizes = [8, 128], strides = [1, 1]} : vector<8x512xf32> to vector<8x128xf32>
    %576 = math.tanh %575 : vector<8x128xf32>
    %577 = arith.mulf %573, %556 : vector<8x128xf32>
    %578 = arith.mulf %572, %576 : vector<8x128xf32>
    %579 = arith.addf %577, %578 : vector<8x128xf32>
    %580 = math.tanh %579 : vector<8x128xf32>
    %581 = arith.mulf %574, %580 : vector<8x128xf32>
    %cst_137 = arith.constant 0.000000e+00 : f32
    %582 = vector.broadcast %cst_137 : f32 to vector<8x128xf32>
    %583 = arith.maximumf %581, %582 : vector<8x128xf32>
    %c0_138 = arith.constant 0 : index
    %c3072 = arith.constant 3072 : index
    %584 = vector.load %arg12[%c0_138, %c3072] : memref<8x3200xf32, #tpu.memory_space<vmem>>, vector<8x128xf32>
    tpu.vector_store %arg12[%c0_138, %c3072], %583 {strides = array<i32>} : memref<8x3200xf32, #tpu.memory_space<vmem>>, vector<8x128xf32>,
    %c0_139 = arith.constant 0 : index
    %c0_140 = arith.constant 0 : index
    %585 = vector.load %arg12[%c0_139, %c0_140] : memref<8x3200xf32, #tpu.memory_space<vmem>>, vector<8x3200xf32>
    %c0_141 = arith.constant 0 : index
    %c0_142 = arith.constant 0 : index
    %586 = vector.load %arg9[%c0_141, %c0_142] : memref<8x1xf32, #tpu.memory_space<vmem>>, vector<8x1xf32>
    %587 = vector.broadcast %586 : vector<8x1xf32> to vector<8x3200xf32>
    %588 = arith.mulf %585, %587 : vector<8x3200xf32>
    %cst_143 = arith.constant dense<0.000000e+00> : vector<3200xf32>
    %589 = vector.multi_reduction <add>, %588, %cst_143 [0] : vector<8x3200xf32> to vector<3200xf32>
    %590 = vector.shape_cast %589 : vector<3200xf32> to vector<1x3200xf32>
    %cst_144 = arith.constant 5.000000e-01 : f32
    %591 = vector.broadcast %cst_144 : f32 to vector<1x3200xf32>
    %592 = arith.mulf %590, %591 : vector<1x3200xf32>
    %593 = vector.broadcast %592 : vector<1x3200xf32> to vector<8x3200xf32>
    %594 = arith.subf %585, %593 : vector<8x3200xf32>
    %595 = vector.broadcast %586 : vector<8x1xf32> to vector<8x3200xf32>
    %596 = arith.mulf %594, %595 : vector<8x3200xf32>
    %597 = arith.mulf %596, %596 : vector<8x3200xf32>
    %cst_145 = arith.constant dense<0.000000e+00> : vector<3200xf32>
    %598 = vector.multi_reduction <add>, %597, %cst_145 [0] : vector<8x3200xf32> to vector<3200xf32>
    %599 = vector.shape_cast %598 : vector<3200xf32> to vector<1x3200xf32>
    %cst_146 = arith.constant 5.000000e-01 : f32
    %600 = vector.broadcast %cst_146 : f32 to vector<1x3200xf32>
    %601 = arith.mulf %599, %600 : vector<1x3200xf32>
    %602 = vector.broadcast %592 : vector<1x3200xf32> to vector<8x3200xf32>
    %603 = arith.subf %585, %602 : vector<8x3200xf32>
    %cst_147 = arith.constant 9.99999974E-6 : f32
    %604 = vector.broadcast %cst_147 : f32 to vector<1x3200xf32>
    %605 = arith.addf %601, %604 : vector<1x3200xf32>
    %606 = math.rsqrt %605 : vector<1x3200xf32>
    %607 = vector.broadcast %606 : vector<1x3200xf32> to vector<8x3200xf32>
    %608 = arith.mulf %603, %607 : vector<8x3200xf32>
    %c0_148 = arith.constant 0 : index
    %c0_149 = arith.constant 0 : index
    %609 = vector.load %arg5[%c0_148, %c0_149] : memref<1x3200xf32, #tpu.memory_space<vmem>>, vector<1x3200xf32>
    %610 = vector.broadcast %609 : vector<1x3200xf32> to vector<8x3200xf32>
    %611 = arith.mulf %608, %610 : vector<8x3200xf32>
    %c0_150 = arith.constant 0 : index
    %c0_151 = arith.constant 0 : index
    %612 = vector.load %arg6[%c0_150, %c0_151] : memref<1x3200xf32, #tpu.memory_space<vmem>>, vector<1x3200xf32>
    %613 = vector.broadcast %612 : vector<1x3200xf32> to vector<8x3200xf32>
    %614 = arith.addf %611, %613 : vector<8x3200xf32>
    %cst_152 = arith.constant 0.000000e+00 : f32
    %615 = vector.broadcast %cst_152 : f32 to vector<8x3200xf32>
    %616 = arith.maximumf %614, %615 : vector<8x3200xf32>
    %c0_153 = arith.constant 0 : index
    %c0_154 = arith.constant 0 : index
    %617 = vector.load %arg7[%c0_153, %c0_154] : memref<3200x10xf32, #tpu.memory_space<vmem>>, vector<3200x10xf32>
    %cst_155 = arith.constant dense<0.000000e+00> : vector<8x10xf32>
    %618 = tpu.matmul %616, %617, %cst_155 {dimension_numbers = #tpu.dot_dimension_numbers<[1], [0], [0], [1], [0, 0, 1, 1], [], []>} : vector<8x3200xf32>, vector<3200x10xf32>, vector<8x10xf32> -> vector<8x10xf32>
    %c0_156 = arith.constant 0 : index
    %c0_157 = arith.constant 0 : index
    %619 = vector.load %arg8[%c0_156, %c0_157] : memref<1x10xf32, #tpu.memory_space<vmem>>, vector<1x10xf32>
    %620 = vector.broadcast %619 : vector<1x10xf32> to vector<8x10xf32>
    %621 = arith.addf %618, %620 : vector<8x10xf32>
    %c0_158 = arith.constant 0 : index
    %c0_159 = arith.constant 0 : index
    %622 = vector.load %arg10[%c0_158, %c0_159] : memref<8x10xf32, #tpu.memory_space<vmem>>, vector<8x10xf32>
    tpu.vector_store %arg10[%c0_158, %c0_159], %621 {strides = array<i32>} : memref<8x10xf32, #tpu.memory_space<vmem>>, vector<8x10xf32>,
    return
  }
  func.func @transform_0(%arg0: i32) -> (i32, i32) {
    %c0_i32 = arith.constant 0 : i32
    %c0_i32_0 = arith.constant 0 : i32
    %c0_i32_1 = arith.constant 0 : i32
    return %c0_i32, %c0_i32_0 : i32, i32
  }
  func.func @transform_1(%arg0: i32) -> (i32, i32) {
    %c0_i32 = arith.constant 0 : i32
    %c0_i32_0 = arith.constant 0 : i32
    %c0_i32_1 = arith.constant 0 : i32
    return %c0_i32, %c0_i32_0 : i32, i32
  }
  func.func @transform_2(%arg0: i32) -> (i32, i32) {
    %c0_i32 = arith.constant 0 : i32
    %c0_i32_0 = arith.constant 0 : i32
    %c0_i32_1 = arith.constant 0 : i32
    return %c0_i32, %c0_i32_0 : i32, i32
  }
  func.func @transform_3(%arg0: i32) -> (i32, i32) {
    %c0_i32 = arith.constant 0 : i32
    %c0_i32_0 = arith.constant 0 : i32
    %c0_i32_1 = arith.constant 0 : i32
    return %c0_i32, %c0_i32_0 : i32, i32
  }
  func.func @transform_4(%arg0: i32) -> (i32, i32) {
    %c0_i32 = arith.constant 0 : i32
    %c0_i32_0 = arith.constant 0 : i32
    %c0_i32_1 = arith.constant 0 : i32
    return %c0_i32, %c0_i32_0 : i32, i32
  }
  func.func @transform_5(%arg0: i32) -> (i32, i32) {
    %c0_i32 = arith.constant 0 : i32
    %c0_i32_0 = arith.constant 0 : i32
    %c0_i32_1 = arith.constant 0 : i32
    return %c0_i32, %c0_i32_0 : i32, i32
  }
  func.func @transform_6(%arg0: i32) -> (i32, i32) {
    %c0_i32 = arith.constant 0 : i32
    %c0_i32_0 = arith.constant 0 : i32
    %c0_i32_1 = arith.constant 0 : i32
    return %c0_i32, %c0_i32_0 : i32, i32
  }
  func.func @transform_7(%arg0: i32) -> (i32, i32) {
    %c0_i32 = arith.constant 0 : i32
    %c0_i32_0 = arith.constant 0 : i32
    %c0_i32_1 = arith.constant 0 : i32
    return %c0_i32, %c0_i32_0 : i32, i32
  }
  func.func @transform_8(%arg0: i32) -> (i32, i32) {
    %c0_i32 = arith.constant 0 : i32
    %c0_i32_0 = arith.constant 0 : i32
    %c0_i32_1 = arith.constant 0 : i32
    return %c0_i32, %c0_i32_0 : i32, i32
  }
  func.func @transform_9(%arg0: i32) -> (i32, i32) {
    %c0_i32 = arith.constant 0 : i32
    %c0_i32_0 = arith.constant 0 : i32
    %c0_i32_1 = arith.constant 0 : i32
    return %c0_i32, %c0_i32_0 : i32, i32
  }
}

</mosaic_0001>

<llo_original>
// kernel: four_d_rnn_forward.1
$region0: #{four_d_rnn_forward.1}
  #allocation0 [shape = 'u32[]', space=smem, size = 0x4, offset = 0x4, fixed_abs, tag = 'smem constant byte address 0x4 - core index']
  #allocation1 [shape = 'u32[72,128]{1,0:T(1,128)}', space=vmem, size = 0x9000, scoped, tag = 'internal scratch']
  #allocation2 [shape = 'f32[200,512]{1,0:T(8,128)}', space=vmem, size = 0x64000, scoped, tag = 'scratch operand']
  #allocation3 [shape = 'f32[8,3200]{1,0:T(8,128)}', space=vmem, size = 0x19000, scoped, tag = 'scratch operand']
  %s0 = inlined_call_operand.vmem [shape: f32[200,4], index: 0, kind: input, shape index: {}]
  %s1 = inlined_call_operand.vmem [shape: bf16[4,512], index: 1, kind: input, shape index: {}]
  %s2 = inlined_call_operand.vmem [shape: bf16[128,512], index: 2, kind: input, shape index: {}]
  %s3 = inlined_call_operand.vmem [shape: f32[1,512], index: 3, kind: input, shape index: {}]
  %s4 = inlined_call_operand.vmem [shape: f32[1,3200], index: 4, kind: input, shape index: {}]
  %s5 = inlined_call_operand.vmem [shape: f32[1,3200], index: 5, kind: input, shape index: {}]
  %s6 = inlined_call_operand.vmem [shape: f32[3200,10], index: 6, kind: input, shape index: {}]
  %s7 = inlined_call_operand.vmem [shape: f32[1,10], index: 7, kind: input, shape index: {}]
  %s8 = inlined_call_operand.vmem [shape: f32[8,1], index: 8, kind: input, shape index: {}]
  %s9 = inlined_call_operand.vmem [shape: f32[8,10], index: 9, kind: output, shape index: {}]
  %s10 = sld [smem:[#allocation0]]
  $region46: #{four_d_rnn_forward.1} parent=0
    _
  %s12 = ssub.s32 1, %s10
  %s13 = scalar_select 0, %s12, %s10
  // Predicated region
  $region2: #{four_d_rnn_forward.1} parent=0 // pred_check
    _
  $region3: #{four_d_rnn_forward.1} parent=0 // pred_check_branch
    %15 = sbr.rel (0) target = $region5
  $region4: #{four_d_rnn_forward.1} parent=0 // pred_region
    _
  $region5: #{four_d_rnn_forward.1} parent=0 // pred_fallthru
    _
  // Predicated region
  $region6: #{four_d_rnn_forward.1} parent=0 // pred_check
    _
  $region7: #{four_d_rnn_forward.1} parent=0 // pred_check_branch
    %17 = sbr.rel (0) target = $region9
  $region8: #{four_d_rnn_forward.1} parent=0 // pred_region
    _
  $region9: #{four_d_rnn_forward.1} parent=0 // pred_fallthru
    _
  // Predicated region
  $region10: #{four_d_rnn_forward.1} parent=0 // pred_check
    _
  $region11: #{four_d_rnn_forward.1} parent=0 // pred_check_branch
    %19 = sbr.rel (0) target = $region13
  $region12: #{four_d_rnn_forward.1} parent=0 // pred_region
    _
  $region13: #{four_d_rnn_forward.1} parent=0 // pred_fallthru
    _
  // Predicated region
  $region14: #{four_d_rnn_forward.1} parent=0 // pred_check
    _
  $region15: #{four_d_rnn_forward.1} parent=0 // pred_check_branch
    %21 = sbr.rel (0) target = $region17
  $region16: #{four_d_rnn_forward.1} parent=0 // pred_region
    _
  $region17: #{four_d_rnn_forward.1} parent=0 // pred_fallthru
    _
  // Predicated region
  $region18: #{four_d_rnn_forward.1} parent=0 // pred_check
    _
  $region19: #{four_d_rnn_forward.1} parent=0 // pred_check_branch
    %23 = sbr.rel (0) target = $region21
  $region20: #{four_d_rnn_forward.1} parent=0 // pred_region
    _
  $region21: #{four_d_rnn_forward.1} parent=0 // pred_fallthru
    _
  // Predicated region
  $region22: #{four_d_rnn_forward.1} parent=0 // pred_check
    _
  $region23: #{four_d_rnn_forward.1} parent=0 // pred_check_branch
    %25 = sbr.rel (0) target = $region25
  $region24: #{four_d_rnn_forward.1} parent=0 // pred_region
    _
  $region25: #{four_d_rnn_forward.1} parent=0 // pred_fallthru
    _
  // Predicated region
  $region26: #{four_d_rnn_forward.1} parent=0 // pred_check
    _
  $region27: #{four_d_rnn_forward.1} parent=0 // pred_check_branch
    %27 = sbr.rel (0) target = $region29
  $region28: #{four_d_rnn_forward.1} parent=0 // pred_region
    _
  $region29: #{four_d_rnn_forward.1} parent=0 // pred_fallthru
    _
  // Predicated region
  $region30: #{four_d_rnn_forward.1} parent=0 // pred_check
    _
  $region31: #{four_d_rnn_forward.1} parent=0 // pred_check_branch
    %29 = sbr.rel (0) target = $region33
  $region32: #{four_d_rnn_forward.1} parent=0 // pred_region
    _
  $region33: #{four_d_rnn_forward.1} parent=0 // pred_fallthru
    _
  // Predicated region
  $region34: #{four_d_rnn_forward.1} parent=0 // pred_check
    _
  $region35: #{four_d_rnn_forward.1} parent=0 // pred_check_branch
    %31 = sbr.rel (0) target = $region37
  $region36: #{four_d_rnn_forward.1} parent=0 // pred_region
    _
  $region37: #{four_d_rnn_forward.1} parent=0 // pred_fallthru
    _
  %v33 = vld [vmem:[%s0] sm:$0xff]
  %v34 = vld [vmem:[%s0 + $0x8] sm:$0xff]
  %v35 = vld [vmem:[%s0 + $0x10] sm:$0xff]
  %v36 = vld [vmem:[%s0 + $0x18] sm:$0xff]
  %v37 = vld [vmem:[%s0 + $0x20] sm:$0xff]
  %v38 = vld [vmem:[%s0 + $0x28] sm:$0xff]
  %v39 = vld [vmem:[%s0 + $0x30] sm:$0xff]
  %v40 = vld [vmem:[%s0 + $0x38] sm:$0xff]
  %v41 = vld [vmem:[%s0 + $0x40] sm:$0xff]
  %v42 = vld [vmem:[%s0 + $0x48] sm:$0xff]
  %v43 = vld [vmem:[%s0 + $0x50] sm:$0xff]
  %v44 = vld [vmem:[%s0 + $0x58] sm:$0xff]
  %v45 = vld [vmem:[%s0 + $0x60] sm:$0xff]
  %v46 = vld [vmem:[%s0 + $0x68] sm:$0xff]
  %v47 = vld [vmem:[%s0 + $0x70] sm:$0xff]
  %v48 = vld [vmem:[%s0 + $0x78] sm:$0xff]
  %v49 = vld [vmem:[%s0 + $0x80] sm:$0xff]
  %v50 = vld [vmem:[%s0 + $0x88] sm:$0xff]
  %v51 = vld [vmem:[%s0 + $0x90] sm:$0xff]
  %v52 = vld [vmem:[%s0 + $0x98] sm:$0xff]
  %v53 = vld [vmem:[%s0 + $0xa0] sm:$0xff]
  %v54 = vld [vmem:[%s0 + $0xa8] sm:$0xff]
  %v55 = vld [vmem:[%s0 + $0xb0] sm:$0xff]
  %v56 = vld [vmem:[%s0 + $0xb8] sm:$0xff]
  %v57 = vld [vmem:[%s0 + $0xc0] sm:$0xff]
  %v58 = vpack.c.bf16 %v34, %v33
  %v59 = vpack.c.bf16 %v36, %v35
  %v60 = vpack.c.bf16 %v38, %v37
  %v61 = vpack.c.bf16 %v40, %v39
  %v62 = vpack.c.bf16 %v42, %v41
  %v63 = vpack.c.bf16 %v44, %v43
  %v64 = vpack.c.bf16 %v46, %v45
  %v65 = vpack.c.bf16 %v48, %v47
  %v66 = vpack.c.bf16 %v50, %v49
  %v67 = vpack.c.bf16 %v52, %v51
  %v68 = vpack.c.bf16 %v54, %v53
  %v69 = vpack.c.bf16 %v56, %v55
  %v70 = vpack.c.bf16 %v57, %v57
  %v71 = vld [vmem:[%s1] sm:$0xff]
  %v72 = vld [vmem:[%s3] sm:$0xf]
  %v74 = vperm.slane %v72, 0
  %v75 = vperm.slane %v72, 1
  %v76 = vperm.slane %v72, 2
  %v77 = vperm.slane %v72, 3
  %83 = vst [vmem:[#allocation1] ss:$4 sm:$0xff] %v71
  %v84 = vld.sshfl [vmem:[#allocation1] sm:$0xff pattern:$0x73625140]
  %v85 = vld.sshfl [vmem:[#allocation1 + $0x8] sm:$0xff pattern:$0x73625140]
  %v86 = vld.sshfl [vmem:[#allocation1 + $0x10] sm:$0xff pattern:$0x73625140]
  %v87 = vld.sshfl [vmem:[#allocation1 + $0x18] sm:$0xff pattern:$0x73625140]
  %vm88 = vcmask 31744
  %v90 = vsel %vm88, %v58, 0
  %v93 = vsel %vm88, %v59, 0
  %v96 = vsel %vm88, %v60, 0
  %v99 = vsel %vm88, %v61, 0
  %v102 = vsel %vm88, %v62, 0
  %v105 = vsel %vm88, %v63, 0
  %v108 = vsel %vm88, %v64, 0
  %v111 = vsel %vm88, %v65, 0
  %v114 = vsel %vm88, %v66, 0
  %v117 = vsel %vm88, %v67, 0
  %v120 = vsel %vm88, %v68, 0
  %v123 = vsel %vm88, %v69, 0
  %v126 = vsel %vm88, %v70, 0
  %vm128 = vcmask 1041408
  %v129 = vsel %vm128, %v84, 0
  %v131 = vsel %vm128, %v85, 0
  %v133 = vsel %vm128, %v86, 0
  %v135 = vsel %vm128, %v87, 0
  %137 = vmatpush.bf16.msra.mxu0 0
  %138 = vmatpush.bf16.msra.mxu0 0
  %139 = vmatpush.bf16.msra.mxu0 0
  %140 = vmatpush.bf16.msra.mxu0 0
  %141 = vmatpush.bf16.msra.mxu0 0
  %142 = vmatpush.bf16.msra.mxu0 0
  %143 = vmatpush.bf16.msra.mxu0 0
  %144 = vmatpush.bf16.msra.mxu0 %v129
  %145 = vmatmul.bf16.gmra.mxu0 %v90
  %v146 = vpop.f32.mrf.mxu0
  %v147 = vadd.f32 %v74, %v146
  %v148 = vpop.f32.mrf.mxu0
  %v149 = vadd.f32 %v74, %v148
  %150 = vmatmul.bf16.gmra.mxu0 %v93
  %v151 = vpop.f32.mrf.mxu0
  %v152 = vadd.f32 %v74, %v151
  %v153 = vpop.f32.mrf.mxu0
  %v154 = vadd.f32 %v74, %v153
  %155 = vmatmul.bf16.gmra.mxu0 %v96
  %v156 = vpop.f32.mrf.mxu0
  %v157 = vadd.f32 %v74, %v156
  %v158 = vpop.f32.mrf.mxu0
  %v159 = vadd.f32 %v74, %v158
  %160 = vmatmul.bf16.gmra.mxu0 %v99
  %v161 = vpop.f32.mrf.mxu0
  %v162 = vadd.f32 %v74, %v161
  %v163 = vpop.f32.mrf.mxu0
  %v164 = vadd.f32 %v74, %v163
  %165 = vmatmul.bf16.gmra.mxu0 %v102
  %v166 = vpop.f32.mrf.mxu0
  %v167 = vadd.f32 %v74, %v166
  %v168 = vpop.f32.mrf.mxu0
  %v169 = vadd.f32 %v74, %v168
  %170 = vmatmul.bf16.gmra.mxu0 %v105
  %v171 = vpop.f32.mrf.mxu0
  %v172 = vadd.f32 %v74, %v171
  %v173 = vpop.f32.mrf.mxu0
  %v174 = vadd.f32 %v74, %v173
  %175 = vmatmul.bf16.gmra.mxu0 %v108
  %v176 = vpop.f32.mrf.mxu0
  %v177 = vadd.f32 %v74, %v176
  %v178 = vpop.f32.mrf.mxu0
  %v179 = vadd.f32 %v74, %v178
  %180 = vmatmul.bf16.gmra.mxu0 %v111
  %v181 = vpop.f32.mrf.mxu0
  %v182 = vadd.f32 %v74, %v181
  %v183 = vpop.f32.mrf.mxu0
  %v184 = vadd.f32 %v74, %v183
  %185 = vmatmul.bf16.gmra.mxu0 %v114
  %v186 = vpop.f32.mrf.mxu0
  %v187 = vadd.f32 %v74, %v186
  %v188 = vpop.f32.mrf.mxu0
  %v189 = vadd.f32 %v74, %v188
  %190 = vmatmul.bf16.gmra.mxu0 %v117
  %v191 = vpop.f32.mrf.mxu0
  %v192 = vadd.f32 %v74, %v191
  %v193 = vpop.f32.mrf.mxu0
  %v194 = vadd.f32 %v74, %v193
  %195 = vmatmul.bf16.gmra.mxu0 %v120
  %v196 = vpop.f32.mrf.mxu0
  %v197 = vadd.f32 %v74, %v196
  %v198 = vpop.f32.mrf.mxu0
  %v199 = vadd.f32 %v74, %v198
  %200 = vmatmul.bf16.gmra.mxu0 %v123
  %v201 = vpop.f32.mrf.mxu0
  %v202 = vadd.f32 %v74, %v201
  %v203 = vpop.f32.mrf.mxu0
  %v204 = vadd.f32 %v74, %v203
  %205 = vmatmul.bf16.gmra.mxu0 %v126
  %v206 = vpop.f32.mrf.mxu0
  %v207 = vadd.f32 %v74, %v206
  %v208 = vpop.f32.mrf.mxu0
  %209 = vdwg.mxu0
  %210 = vmatpush.bf16.msra.mxu0 0
  %211 = vmatpush.bf16.msra.mxu0 0
  %212 = vmatpush.bf16.msra.mxu0 0
  %213 = vmatpush.bf16.msra.mxu0 0
  %214 = vmatpush.bf16.msra.mxu0 0
  %215 = vmatpush.bf16.msra.mxu0 0
  %216 = vmatpush.bf16.msra.mxu0 0
  %217 = vmatpush.bf16.msra.mxu0 %v131
  %218 = vmatmul.bf16.gmra.mxu0 %v90
  %v219 = vpop.f32.mrf.mxu0
  %v220 = vadd.f32 %v75, %v219
  %v221 = vpop.f32.mrf.mxu0
  %v222 = vadd.f32 %v75, %v221
  %223 = vmatmul.bf16.gmra.mxu0 %v93
  %v224 = vpop.f32.mrf.mxu0
  %v225 = vadd.f32 %v75, %v224
  %v226 = vpop.f32.mrf.mxu0
  %v227 = vadd.f32 %v75, %v226
  %228 = vmatmul.bf16.gmra.mxu0 %v96
  %v229 = vpop.f32.mrf.mxu0
  %v230 = vadd.f32 %v75, %v229
  %v231 = vpop.f32.mrf.mxu0
  %v232 = vadd.f32 %v75, %v231
  %233 = vmatmul.bf16.gmra.mxu0 %v99
  %v234 = vpop.f32.mrf.mxu0
  %v235 = vadd.f32 %v75, %v234
  %v236 = vpop.f32.mrf.mxu0
  %v237 = vadd.f32 %v75, %v236
  %238 = vmatmul.bf16.gmra.mxu0 %v102
  %v239 = vpop.f32.mrf.mxu0
  %v240 = vadd.f32 %v75, %v239
  %v241 = vpop.f32.mrf.mxu0
  %v242 = vadd.f32 %v75, %v241
  %243 = vmatmul.bf16.gmra.mxu0 %v105
  %v244 = vpop.f32.mrf.mxu0
  %v245 = vadd.f32 %v75, %v244
  %v246 = vpop.f32.mrf.mxu0
  %v247 = vadd.f32 %v75, %v246
  %248 = vmatmul.bf16.gmra.mxu0 %v108
  %v249 = vpop.f32.mrf.mxu0
  %v250 = vadd.f32 %v75, %v249
  %v251 = vpop.f32.mrf.mxu0
  %v252 = vadd.f32 %v75, %v251
  %253 = vmatmul.bf16.gmra.mxu0 %v111
  %v254 = vpop.f32.mrf.mxu0
  %v255 = vadd.f32 %v75, %v254
  %v256 = vpop.f32.mrf.mxu0
  %v257 = vadd.f32 %v75, %v256
  %258 = vmatmul.bf16.gmra.mxu0 %v114
  %v259 = vpop.f32.mrf.mxu0
  %v260 = vadd.f32 %v75, %v259
  %v261 = vpop.f32.mrf.mxu0
  %v262 = vadd.f32 %v75, %v261
  %263 = vmatmul.bf16.gmra.mxu0 %v117
  %v264 = vpop.f32.mrf.mxu0
  %v265 = vadd.f32 %v75, %v264
  %v266 = vpop.f32.mrf.mxu0
  %v267 = vadd.f32 %v75, %v266
  %268 = vmatmul.bf16.gmra.mxu0 %v120
  %v269 = vpop.f32.mrf.mxu0
  %v270 = vadd.f32 %v75, %v269
  %v271 = vpop.f32.mrf.mxu0
  %v272 = vadd.f32 %v75, %v271
  %273 = vmatmul.bf16.gmra.mxu0 %v123
  %v274 = vpop.f32.mrf.mxu0
  %v275 = vadd.f32 %v75, %v274
  %v276 = vpop.f32.mrf.mxu0
  %v277 = vadd.f32 %v75, %v276
  %278 = vmatmul.bf16.gmra.mxu0 %v126
  %v279 = vpop.f32.mrf.mxu0
  %v280 = vadd.f32 %v75, %v279
  %v281 = vpop.f32.mrf.mxu0
  %282 = vdwg.mxu0
  %283 = vmatpush.bf16.msra.mxu0 0
  %284 = vmatpush.bf16.msra.mxu0 0
  %285 = vmatpush.bf16.msra.mxu0 0
  %286 = vmatpush.bf16.msra.mxu0 0
  %287 = vmatpush.bf16.msra.mxu0 0
  %288 = vmatpush.bf16.msra.mxu0 0
  %289 = vmatpush.bf16.msra.mxu0 0
  %290 = vmatpush.bf16.msra.mxu0 %v133
  %291 = vmatmul.bf16.gmra.mxu0 %v90
  %v292 = vpop.f32.mrf.mxu0
  %v293 = vadd.f32 %v76, %v292
  %v294 = vpop.f32.mrf.mxu0
  %v295 = vadd.f32 %v76, %v294
  %296 = vmatmul.bf16.gmra.mxu0 %v93
  %v297 = vpop.f32.mrf.mxu0
  %v298 = vadd.f32 %v76, %v297
  %v299 = vpop.f32.mrf.mxu0
  %v300 = vadd.f32 %v76, %v299
  %301 = vmatmul.bf16.gmra.mxu0 %v96
  %v302 = vpop.f32.mrf.mxu0
  %v303 = vadd.f32 %v76, %v302
  %v304 = vpop.f32.mrf.mxu0
  %v305 = vadd.f32 %v76, %v304
  %306 = vmatmul.bf16.gmra.mxu0 %v99
  %v307 = vpop.f32.mrf.mxu0
  %v308 = vadd.f32 %v76, %v307
  %v309 = vpop.f32.mrf.mxu0
  %v310 = vadd.f32 %v76, %v309
  %311 = vmatmul.bf16.gmra.mxu0 %v102
  %v312 = vpop.f32.mrf.mxu0
  %v313 = vadd.f32 %v76, %v312
  %v314 = vpop.f32.mrf.mxu0
  %v315 = vadd.f32 %v76, %v314
  %316 = vmatmul.bf16.gmra.mxu0 %v105
  %v317 = vpop.f32.mrf.mxu0
  %v318 = vadd.f32 %v76, %v317
  %v319 = vpop.f32.mrf.mxu0
  %v320 = vadd.f32 %v76, %v319
  %321 = vmatmul.bf16.gmra.mxu0 %v108
  %v322 = vpop.f32.mrf.mxu0
  %v323 = vadd.f32 %v76, %v322
  %v324 = vpop.f32.mrf.mxu0
  %v325 = vadd.f32 %v76, %v324
  %326 = vmatmul.bf16.gmra.mxu0 %v111
  %v327 = vpop.f32.mrf.mxu0
  %v328 = vadd.f32 %v76, %v327
  %v329 = vpop.f32.mrf.mxu0
  %v330 = vadd.f32 %v76, %v329
  %331 = vmatmul.bf16.gmra.mxu0 %v114
  %v332 = vpop.f32.mrf.mxu0
  %v333 = vadd.f32 %v76, %v332
  %v334 = vpop.f32.mrf.mxu0
  %v335 = vadd.f32 %v76, %v334
  %336 = vmatmul.bf16.gmra.mxu0 %v117
  %v337 = vpop.f32.mrf.mxu0
  %v338 = vadd.f32 %v76, %v337
  %v339 = vpop.f32.mrf.mxu0
  %v340 = vadd.f32 %v76, %v339
  %341 = vmatmul.bf16.gmra.mxu0 %v120
  %v342 = vpop.f32.mrf.mxu0
  %v343 = vadd.f32 %v76, %v342
  %v344 = vpop.f32.mrf.mxu0
  %v345 = vadd.f32 %v76, %v344
  %346 = vmatmul.bf16.gmra.mxu0 %v123
  %v347 = vpop.f32.mrf.mxu0
  %v348 = vadd.f32 %v76, %v347
  %v349 = vpop.f32.mrf.mxu0
  %v350 = vadd.f32 %v76, %v349
  %351 = vmatmul.bf16.gmra.mxu0 %v126
  %v352 = vpop.f32.mrf.mxu0
  %v353 = vadd.f32 %v76, %v352
  %v354 = vpop.f32.mrf.mxu0
  %355 = vdwg.mxu0
  %356 = vmatpush.bf16.msra.mxu0 0
  %357 = vmatpush.bf16.msra.mxu0 0
  %358 = vmatpush.bf16.msra.mxu0 0
  %359 = vmatpush.bf16.msra.mxu0 0
  %360 = vmatpush.bf16.msra.mxu0 0
  %361 = vmatpush.bf16.msra.mxu0 0
  %362 = vmatpush.bf16.msra.mxu0 0
  %363 = vmatpush.bf16.msra.mxu0 %v135
  %364 = vmatmul.bf16.gmra.mxu0 %v90
  %v365 = vpop.f32.mrf.mxu0
  %v366 = vadd.f32 %v77, %v365
  %v367 = vpop.f32.mrf.mxu0
  %v368 = vadd.f32 %v77, %v367
  %369 = vmatmul.bf16.gmra.mxu0 %v93
  %v370 = vpop.f32.mrf.mxu0
  %v371 = vadd.f32 %v77, %v370
  %v372 = vpop.f32.mrf.mxu0
  %v373 = vadd.f32 %v77, %v372
  %374 = vmatmul.bf16.gmra.mxu0 %v96
  %v375 = vpop.f32.mrf.mxu0
  %v376 = vadd.f32 %v77, %v375
  %v377 = vpop.f32.mrf.mxu0
  %v378 = vadd.f32 %v77, %v377
  %379 = vmatmul.bf16.gmra.mxu0 %v99
  %v380 = vpop.f32.mrf.mxu0
  %v381 = vadd.f32 %v77, %v380
  %v382 = vpop.f32.mrf.mxu0
  %v383 = vadd.f32 %v77, %v382
  %384 = vmatmul.bf16.gmra.mxu0 %v102
  %v385 = vpop.f32.mrf.mxu0
  %v386 = vadd.f32 %v77, %v385
  %v387 = vpop.f32.mrf.mxu0
  %v388 = vadd.f32 %v77, %v387
  %389 = vmatmul.bf16.gmra.mxu0 %v105
  %v390 = vpop.f32.mrf.mxu0
  %v391 = vadd.f32 %v77, %v390
  %v392 = vpop.f32.mrf.mxu0
  %v393 = vadd.f32 %v77, %v392
  %394 = vmatmul.bf16.gmra.mxu0 %v108
  %v395 = vpop.f32.mrf.mxu0
  %v396 = vadd.f32 %v77, %v395
  %v397 = vpop.f32.mrf.mxu0
  %v398 = vadd.f32 %v77, %v397
  %399 = vmatmul.bf16.gmra.mxu0 %v111
  %v400 = vpop.f32.mrf.mxu0
  %v401 = vadd.f32 %v77, %v400
  %v402 = vpop.f32.mrf.mxu0
  %v403 = vadd.f32 %v77, %v402
  %404 = vmatmul.bf16.gmra.mxu0 %v114
  %v405 = vpop.f32.mrf.mxu0
  %v406 = vadd.f32 %v77, %v405
  %v407 = vpop.f32.mrf.mxu0
  %v408 = vadd.f32 %v77, %v407
  %409 = vmatmul.bf16.gmra.mxu0 %v117
  %v410 = vpop.f32.mrf.mxu0
  %v411 = vadd.f32 %v77, %v410
  %v412 = vpop.f32.mrf.mxu0
  %v413 = vadd.f32 %v77, %v412
  %414 = vmatmul.bf16.gmra.mxu0 %v120
  %v415 = vpop.f32.mrf.mxu0
  %v416 = vadd.f32 %v77, %v415
  %v417 = vpop.f32.mrf.mxu0
  %v418 = vadd.f32 %v77, %v417
  %419 = vmatmul.bf16.gmra.mxu0 %v123
  %v420 = vpop.f32.mrf.mxu0
  %v421 = vadd.f32 %v77, %v420
  %v422 = vpop.f32.mrf.mxu0
  %v423 = vadd.f32 %v77, %v422
  %424 = vmatmul.bf16.gmra.mxu0 %v126
  %v425 = vpop.f32.mrf.mxu0
  %v426 = vadd.f32 %v77, %v425
  %v427 = vpop.f32.mrf.mxu0
  %428 = vdwg.mxu0
  %429 = vst [vmem:[#allocation2] sm:$0xff] %v147
  %430 = vst [vmem:[#allocation2 + $0x8] sm:$0xff] %v220
  %431 = vst [vmem:[#allocation2 + $0x10] sm:$0xff] %v293
  %432 = vst [vmem:[#allocation2 + $0x18] sm:$0xff] %v366
  %433 = vst [vmem:[#allocation2 + $0x20] sm:$0xff] %v149
  %434 = vst [vmem:[#allocation2 + $0x28] sm:$0xff] %v222
  %435 = vst [vmem:[#allocation2 + $0x30] sm:$0xff] %v295
  %436 = vst [vmem:[#allocation2 + $0x38] sm:$0xff] %v368
  %437 = vst [vmem:[#allocation2 + $0x40] sm:$0xff] %v152
  %438 = vst [vmem:[#allocation2 + $0x48] sm:$0xff] %v225
  %439 = vst [vmem:[#allocation2 + $0x50] sm:$0xff] %v298
  %440 = vst [vmem:[#allocation2 + $0x58] sm:$0xff] %v371
  %441 = vst [vmem:[#allocation2 + $0x60] sm:$0xff] %v154
  %442 = vst [vmem:[#allocation2 + $0x68] sm:$0xff] %v227
  %443 = vst [vmem:[#allocation2 + $0x70] sm:$0xff] %v300
  %444 = vst [vmem:[#allocation2 + $0x78] sm:$0xff] %v373
  %445 = vst [vmem:[#allocation2 + $0x80] sm:$0xff] %v157
  %446 = vst [vmem:[#allocation2 + $0x88] sm:$0xff] %v230
  %447 = vst [vmem:[#allocation2 + $0x90] sm:$0xff] %v303
  %448 = vst [vmem:[#allocation2 + $0x98] sm:$0xff] %v376
  %449 = vst [vmem:[#allocation2 + $0xa0] sm:$0xff] %v159
  %450 = vst [vmem:[#allocation2 + $0xa8] sm:$0xff] %v232
  %451 = vst [vmem:[#allocation2 + $0xb0] sm:$0xff] %v305
  %452 = vst [vmem:[#allocation2 + $0xb8] sm:$0xff] %v378
  %453 = vst [vmem:[#allocation2 + $0xc0] sm:$0xff] %v162
  %454 = vst [vmem:[#allocation2 + $0xc8] sm:$0xff] %v235
  %455 = vst [vmem:[#allocation2 + $0xd0] sm:$0xff] %v308
  %456 = vst [vmem:[#allocation2 + $0xd8] sm:$0xff] %v381
  %457 = vst [vmem:[#allocation2 + $0xe0] sm:$0xff] %v164
  %458 = vst [vmem:[#allocation2 + $0xe8] sm:$0xff] %v237
  %459 = vst [vmem:[#allocation2 + $0xf0] sm:$0xff] %v310
  %460 = vst [vmem:[#allocation2 + $0xf8] sm:$0xff] %v383
  %461 = vst [vmem:[#allocation2 + $0x100] sm:$0xff] %v167
  %462 = vst [vmem:[#allocation2 + $0x108] sm:$0xff] %v240
  %463 = vst [vmem:[#allocation2 + $0x110] sm:$0xff] %v313
  %464 = vst [vmem:[#allocation2 + $0x118] sm:$0xff] %v386
  %465 = vst [vmem:[#allocation2 + $0x120] sm:$0xff] %v169
  %466 = vst [vmem:[#allocation2 + $0x128] sm:$0xff] %v242
  %467 = vst [vmem:[#allocation2 + $0x130] sm:$0xff] %v315
  %468 = vst [vmem:[#allocation2 + $0x138] sm:$0xff] %v388
  %469 = vst [vmem:[#allocation2 + $0x140] sm:$0xff] %v172
  %470 = vst [vmem:[#allocation2 + $0x148] sm:$0xff] %v245
  %471 = vst [vmem:[#allocation2 + $0x150] sm:$0xff] %v318
  %472 = vst [vmem:[#allocation2 + $0x158] sm:$0xff] %v391
  %473 = vst [vmem:[#allocation2 + $0x160] sm:$0xff] %v174
  %474 = vst [vmem:[#allocation2 + $0x168] sm:$0xff] %v247
  %475 = vst [vmem:[#allocation2 + $0x170] sm:$0xff] %v320
  %476 = vst [vmem:[#allocation2 + $0x178] sm:$0xff] %v393
  %477 = vst [vmem:[#allocation2 + $0x180] sm:$0xff] %v177
  %478 = vst [vmem:[#allocation2 + $0x188] sm:$0xff] %v250
  %479 = vst [vmem:[#allocation2 + $0x190] sm:$0xff] %v323
  %480 = vst [vmem:[#allocation2 + $0x198] sm:$0xff] %v396
  %481 = vst [vmem:[#allocation2 + $0x1a0] sm:$0xff] %v179
  %482 = vst [vmem:[#allocation2 + $0x1a8] sm:$0xff] %v252
  %483 = vst [vmem:[#allocation2 + $0x1b0] sm:$0xff] %v325
  %484 = vst [vmem:[#allocation2 + $0x1b8] sm:$0xff] %v398
  %485 = vst [vmem:[#allocation2 + $0x1c0] sm:$0xff] %v182
  %486 = vst [vmem:[#allocation2 + $0x1c8] sm:$0xff] %v255
  %487 = vst [vmem:[#allocation2 + $0x1d0] sm:$0xff] %v328
  %488 = vst [vmem:[#allocation2 + $0x1d8] sm:$0xff] %v401
  %489 = vst [vmem:[#allocation2 + $0x1e0] sm:$0xff] %v184
  %490 = vst [vmem:[#allocation2 + $0x1e8] sm:$0xff] %v257
  %491 = vst [vmem:[#allocation2 + $0x1f0] sm:$0xff] %v330
  %492 = vst [vmem:[#allocation2 + $0x1f8] sm:$0xff] %v403
  %493 = vst [vmem:[#allocation2 + $0x200] sm:$0xff] %v187
  %494 = vst [vmem:[#allocation2 + $0x208] sm:$0xff] %v260
  %495 = vst [vmem:[#allocation2 + $0x210] sm:$0xff] %v333
  %496 = vst [vmem:[#allocation2 + $0x218] sm:$0xff] %v406
  %497 = vst [vmem:[#allocation2 + $0x220] sm:$0xff] %v189
  %498 = vst [vmem:[#allocation2 + $0x228] sm:$0xff] %v262
  %499 = vst [vmem:[#allocation2 + $0x230] sm:$0xff] %v335
  %500 = vst [vmem:[#allocation2 + $0x238] sm:$0xff] %v408
  %501 = vst [vmem:[#allocation2 + $0x240] sm:$0xff] %v192
  %502 = vst [vmem:[#allocation2 + $0x248] sm:$0xff] %v265
  %503 = vst [vmem:[#allocation2 + $0x250] sm:$0xff] %v338
  %504 = vst [vmem:[#allocation2 + $0x258] sm:$0xff] %v411
  %505 = vst [vmem:[#allocation2 + $0x260] sm:$0xff] %v194
  %506 = vst [vmem:[#allocation2 + $0x268] sm:$0xff] %v267
  %507 = vst [vmem:[#allocation2 + $0x270] sm:$0xff] %v340
  %508 = vst [vmem:[#allocation2 + $0x278] sm:$0xff] %v413
  %509 = vst [vmem:[#allocation2 + $0x280] sm:$0xff] %v197
  %510 = vst [vmem:[#allocation2 + $0x288] sm:$0xff] %v270
  %511 = vst [vmem:[#allocation2 + $0x290] sm:$0xff] %v343
  %512 = vst [vmem:[#allocation2 + $0x298] sm:$0xff] %v416
  %513 = vst [vmem:[#allocation2 + $0x2a0] sm:$0xff] %v199
  %514 = vst [vmem:[#allocation2 + $0x2a8] sm:$0xff] %v272
  %515 = vst [vmem:[#allocation2 + $0x2b0] sm:$0xff] %v345
  %516 = vst [vmem:[#allocation2 + $0x2b8] sm:$0xff] %v418
  %517 = vst [vmem:[#allocation2 + $0x2c0] sm:$0xff] %v202
  %518 = vst [vmem:[#allocation2 + $0x2c8] sm:$0xff] %v275
  %519 = vst [vmem:[#allocation2 + $0x2d0] sm:$0xff] %v348
  %520 = vst [vmem:[#allocation2 + $0x2d8] sm:$0xff] %v421
  %521 = vst [vmem:[#allocation2 + $0x2e0] sm:$0xff] %v204
  %522 = vst [vmem:[#allocation2 + $0x2e8] sm:$0xff] %v277
  %523 = vst [vmem:[#allocation2 + $0x2f0] sm:$0xff] %v350
  %524 = vst [vmem:[#allocation2 + $0x2f8] sm:$0xff] %v423
  %525 = vst [vmem:[#allocation2 + $0x300] sm:$0xff] %v207
  %526 = vst [vmem:[#allocation2 + $0x308] sm:$0xff] %v280
  %527 = vst [vmem:[#allocation2 + $0x310] sm:$0xff] %v353
  %528 = vst [vmem:[#allocation2 + $0x318] sm:$0xff] %v426
  %v529 = vld [vmem:[%s2] sm:$0xff]
  %v530 = vld [vmem:[%s2 + $0x8] sm:$0xff]
  %v531 = vld [vmem:[%s2 + $0x10] sm:$0xff]
  %v532 = vld [vmem:[%s2 + $0x18] sm:$0xff]
  %v533 = vld [vmem:[%s2 + $0x20] sm:$0xff]
  %v534 = vld [vmem:[%s2 + $0x28] sm:$0xff]
  %v535 = vld [vmem:[%s2 + $0x30] sm:$0xff]
  %v536 = vld [vmem:[%s2 + $0x38] sm:$0xff]
  %v537 = vld [vmem:[%s2 + $0x40] sm:$0xff]
  %v538 = vld [vmem:[%s2 + $0x48] sm:$0xff]
  %v539 = vld [vmem:[%s2 + $0x50] sm:$0xff]
  %v540 = vld [vmem:[%s2 + $0x58] sm:$0xff]
  %v541 = vld [vmem:[%s2 + $0x60] sm:$0xff]
  %v542 = vld [vmem:[%s2 + $0x68] sm:$0xff]
  %v543 = vld [vmem:[%s2 + $0x70] sm:$0xff]
  %v544 = vld [vmem:[%s2 + $0x78] sm:$0xff]
  %v545 = vld [vmem:[%s2 + $0x80] sm:$0xff]
  %v546 = vld [vmem:[%s2 + $0x88] sm:$0xff]
  %v547 = vld [vmem:[%s2 + $0x90] sm:$0xff]
  %v548 = vld [vmem:[%s2 + $0x98] sm:$0xff]
  %v549 = vld [vmem:[%s2 + $0xa0] sm:$0xff]
  %v550 = vld [vmem:[%s2 + $0xa8] sm:$0xff]
  %v551 = vld [vmem:[%s2 + $0xb0] sm:$0xff]
  %v552 = vld [vmem:[%s2 + $0xb8] sm:$0xff]
  %v553 = vld [vmem:[%s2 + $0xc0] sm:$0xff]
  %v554 = vld [vmem:[%s2 + $0xc8] sm:$0xff]
  %v555 = vld [vmem:[%s2 + $0xd0] sm:$0xff]
  %v556 = vld [vmem:[%s2 + $0xd8] sm:$0xff]
  %v557 = vld [vmem:[%s2 + $0xe0] sm:$0xff]
  %v558 = vld [vmem:[%s2 + $0xe8] sm:$0xff]
  %v559 = vld [vmem:[%s2 + $0xf0] sm:$0xff]
  %v560 = vld [vmem:[%s2 + $0xf8] sm:$0xff]
  %v561 = vld [vmem:[#allocation2] sm:$0xff]
  %v562 = vld [vmem:[#allocation2 + $0x8] sm:$0xff]
  %v563 = vld [vmem:[#allocation2 + $0x10] sm:$0xff]
  %v564 = vld [vmem:[#allocation2 + $0x18] sm:$0xff]
  %v597 = vunpack.c.l.b16 %v529
  %v598 = vunpack.c.h.b16 %v529
  %v599 = vunpack.c.l.b16 %v530
  %v600 = vunpack.c.h.b16 %v530
  %v601 = vunpack.c.l.b16 %v531
  %v602 = vunpack.c.h.b16 %v531
  %v603 = vunpack.c.l.b16 %v532
  %v604 = vunpack.c.h.b16 %v532
  %v605 = vunpack.c.l.b16 %v533
  %v606 = vunpack.c.h.b16 %v533
  %v607 = vunpack.c.l.b16 %v534
  %v608 = vunpack.c.h.b16 %v534
  %v609 = vunpack.c.l.b16 %v535
  %v610 = vunpack.c.h.b16 %v535
  %v611 = vunpack.c.l.b16 %v536
  %v612 = vunpack.c.h.b16 %v536
  %v613 = vunpack.c.l.b16 %v537
  %v614 = vunpack.c.h.b16 %v537
  %v615 = vunpack.c.l.b16 %v538
  %v616 = vunpack.c.h.b16 %v538
  %v617 = vunpack.c.l.b16 %v539
  %v618 = vunpack.c.h.b16 %v539
  %v619 = vunpack.c.l.b16 %v540
  %v620 = vunpack.c.h.b16 %v540
  %v621 = vunpack.c.l.b16 %v541
  %v622 = vunpack.c.h.b16 %v541
  %v623 = vunpack.c.l.b16 %v542
  %v624 = vunpack.c.h.b16 %v542
  %v625 = vunpack.c.l.b16 %v543
  %v626 = vunpack.c.h.b16 %v543
  %v627 = vunpack.c.l.b16 %v544
  %v628 = vunpack.c.h.b16 %v544
  %v629 = vunpack.c.l.b16 %v545
  %v630 = vunpack.c.h.b16 %v545
  %v631 = vunpack.c.l.b16 %v546
  %v632 = vunpack.c.h.b16 %v546
  %v633 = vunpack.c.l.b16 %v547
  %v634 = vunpack.c.h.b16 %v547
  %v635 = vunpack.c.l.b16 %v548
  %v636 = vunpack.c.h.b16 %v548
  %v637 = vunpack.c.l.b16 %v549
  %v638 = vunpack.c.h.b16 %v549
  %v639 = vunpack.c.l.b16 %v550
  %v640 = vunpack.c.h.b16 %v550
  %v641 = vunpack.c.l.b16 %v551
  %v642 = vunpack.c.h.b16 %v551
  %v643 = vunpack.c.l.b16 %v552
  %v644 = vunpack.c.h.b16 %v552
  %v645 = vunpack.c.l.b16 %v553
  %v646 = vunpack.c.h.b16 %v553
  %v647 = vunpack.c.l.b16 %v554
  %v648 = vunpack.c.h.b16 %v554
  %v649 = vunpack.c.l.b16 %v555
  %v650 = vunpack.c.h.b16 %v555
  %v651 = vunpack.c.l.b16 %v556
  %v652 = vunpack.c.h.b16 %v556
  %v653 = vunpack.c.l.b16 %v557
  %v654 = vunpack.c.h.b16 %v557
  %v655 = vunpack.c.l.b16 %v558
  %v656 = vunpack.c.h.b16 %v558
  %v657 = vunpack.c.l.b16 %v559
  %v658 = vunpack.c.h.b16 %v559
  %v659 = vunpack.c.l.b16 %v560
  %v660 = vunpack.c.h.b16 %v560
  %v661 = vpack.c.b16 %v601, %v597
  %v662 = vpack.c.b16 %v602, %v598
  %v663 = vpack.c.b16 %v603, %v599
  %v664 = vpack.c.b16 %v604, %v600
  %v665 = vpack.c.b16 %v609, %v605
  %v666 = vpack.c.b16 %v610, %v606
  %v667 = vpack.c.b16 %v611, %v607
  %v668 = vpack.c.b16 %v612, %v608
  %v669 = vpack.c.b16 %v617, %v613
  %v670 = vpack.c.b16 %v618, %v614
  %v671 = vpack.c.b16 %v619, %v615
  %v672 = vpack.c.b16 %v620, %v616
  %v673 = vpack.c.b16 %v625, %v621
  %v674 = vpack.c.b16 %v626, %v622
  %v675 = vpack.c.b16 %v627, %v623
  %v676 = vpack.c.b16 %v628, %v624
  %v677 = vpack.c.b16 %v633, %v629
  %v678 = vpack.c.b16 %v634, %v630
  %v679 = vpack.c.b16 %v635, %v631
  %v680 = vpack.c.b16 %v636, %v632
  %v681 = vpack.c.b16 %v641, %v637
  %v682 = vpack.c.b16 %v642, %v638
  %v683 = vpack.c.b16 %v643, %v639
  %v684 = vpack.c.b16 %v644, %v640
  %v685 = vpack.c.b16 %v649, %v645
  %v686 = vpack.c.b16 %v650, %v646
  %v687 = vpack.c.b16 %v651, %v647
  %v688 = vpack.c.b16 %v652, %v648
  %v689 = vpack.c.b16 %v657, %v653
  %v690 = vpack.c.b16 %v658, %v654
  %v691 = vpack.c.b16 %v659, %v655
  %v692 = vpack.c.b16 %v660, %v656
  %725 = vmatpush.bf16.msra.mxu0 %v689
  %726 = vmatpush.bf16.msra.mxu0 %v685
  %727 = vmatpush.bf16.msra.mxu0 %v681
  %728 = vmatpush.bf16.msra.mxu0 %v677
  %729 = vmatpush.bf16.msra.mxu0 %v673
  %730 = vmatpush.bf16.msra.mxu0 %v669
  %731 = vmatpush.bf16.msra.mxu0 %v665
  %732 = vmatpush.bf16.msra.mxu0 %v661
  %733 = vmatmul.bf16.gmra.mxu0 0
  %v734 = vpop.f32.mrf.mxu0
  %v735 = vadd.f32 0.0, %v734
  %v736 = vpop.f32.mrf.mxu0
  %737 = vdwg.mxu0
  %738 = vmatpush.bf16.msra.mxu0 %v690
  %739 = vmatpush.bf16.msra.mxu0 %v686
  %740 = vmatpush.bf16.msra.mxu0 %v682
  %741 = vmatpush.bf16.msra.mxu0 %v678
  %742 = vmatpush.bf16.msra.mxu0 %v674
  %743 = vmatpush.bf16.msra.mxu0 %v670
  %744 = vmatpush.bf16.msra.mxu0 %v666
  %745 = vmatpush.bf16.msra.mxu0 %v662
  %746 = vmatmul.bf16.gmra.mxu0 0
  %v747 = vpop.f32.mrf.mxu0
  %v748 = vadd.f32 0.0, %v747
  %v749 = vpop.f32.mrf.mxu0
  %750 = vdwg.mxu0
  %751 = vmatpush.bf16.msra.mxu0 %v691
  %752 = vmatpush.bf16.msra.mxu0 %v687
  %753 = vmatpush.bf16.msra.mxu0 %v683
  %754 = vmatpush.bf16.msra.mxu0 %v679
  %755 = vmatpush.bf16.msra.mxu0 %v675
  %756 = vmatpush.bf16.msra.mxu0 %v671
  %757 = vmatpush.bf16.msra.mxu0 %v667
  %758 = vmatpush.bf16.msra.mxu0 %v663
  %759 = vmatmul.bf16.gmra.mxu0 0
  %v760 = vpop.f32.mrf.mxu0
  %v761 = vadd.f32 0.0, %v760
  %v762 = vpop.f32.mrf.mxu0
  %763 = vdwg.mxu0
  %764 = vmatpush.bf16.msra.mxu0 %v692
  %765 = vmatpush.bf16.msra.mxu0 %v688
  %766 = vmatpush.bf16.msra.mxu0 %v684
  %767 = vmatpush.bf16.msra.mxu0 %v680
  %768 = vmatpush.bf16.msra.mxu0 %v676
  %769 = vmatpush.bf16.msra.mxu0 %v672
  %770 = vmatpush.bf16.msra.mxu0 %v668
  %771 = vmatpush.bf16.msra.mxu0 %v664
  %772 = vmatmul.bf16.gmra.mxu0 0
  %v773 = vpop.f32.mrf.mxu0
  %v774 = vadd.f32 0.0, %v773
  %v775 = vpop.f32.mrf.mxu0
  %776 = vdwg.mxu0
  %v777 = vadd.f32 %v561, %v735
  %v778 = vadd.f32 %v562, %v748
  %v779 = vadd.f32 %v563, %v761
  %v780 = vadd.f32 %v564, %v774
  %v781 = vxor.u32 %v777, 2147483648
  %v782 = vxor.u32 %v778, 2147483648
  %v783 = vxor.u32 %v779, 2147483648
  %v784 = vmul.f32 %v781, 1.442695
  %v785 = vpow.pop %v784
  %v786 = vmul.f32 %v782, 1.442695
  %v787 = vpow.pop %v786
  %v788 = vmul.f32 %v783, 1.442695
  %v789 = vpow.pop %v788
  %v790 = vadd.f32 %v785, 1.0
  %v791 = vadd.f32 %v787, 1.0
  %v792 = vadd.f32 %v789, 1.0
  %v793 = vrcp.pop %v790
  %v794 = vmul.f32 %v790, %v793
  %v795 = vsub.f32 1.0, %v794
  %v796 = vmul.f32 %v793, %v795
  %v797 = vadd.f32 %v793, %v796
  %vm798 = vweird.f32 %v790
  %vm799 = vweird.f32 %v793
  %vm800 = vmor %vm798, %vm799
  %v801 = vsel %vm800, %v793, %v797
  %v802 = vand.u32 2147483647, %v790
  %vm803 = vcmp.eq.f32.partialorder %v802, 8.507059e+37
  %v804 = vand.u32 %v790, 2147483648
  %v805 = vor.u32 1.1754944e-38, %v804
  %v806 = vsel %vm803, %v805, %v801
  %v807 = vmul.f32 1.0, %v806
  %v808 = vrcp.pop %v791
  %v809 = vmul.f32 %v791, %v808
  %v810 = vsub.f32 1.0, %v809
  %v811 = vmul.f32 %v808, %v810
  %v812 = vadd.f32 %v808, %v811
  %vm813 = vweird.f32 %v791
  %vm814 = vweird.f32 %v808
  %vm815 = vmor %vm813, %vm814
  %v816 = vsel %vm815, %v808, %v812
  %v817 = vand.u32 2147483647, %v791
  %vm818 = vcmp.eq.f32.partialorder %v817, 8.507059e+37
  %v819 = vand.u32 %v791, 2147483648
  %v820 = vor.u32 1.1754944e-38, %v819
  %v821 = vsel %vm818, %v820, %v816
  %v822 = vmul.f32 1.0, %v821
  %v823 = vrcp.pop %v792
  %v824 = vmul.f32 %v792, %v823
  %v825 = vsub.f32 1.0, %v824
  %v826 = vmul.f32 %v823, %v825
  %v827 = vadd.f32 %v823, %v826
  %vm828 = vweird.f32 %v792
  %vm829 = vweird.f32 %v823
  %vm830 = vmor %vm828, %vm829
  %v831 = vsel %vm830, %v823, %v827
  %v832 = vand.u32 2147483647, %v792
  %vm833 = vcmp.eq.f32.partialorder %v832, 8.507059e+37
  %v834 = vand.u32 %v792, 2147483648
  %v835 = vor.u32 1.1754944e-38, %v834
  %v836 = vsel %vm833, %v835, %v831
  %v837 = vmul.f32 1.0, %v836
  %v838 = vtanh.pop %v780
  %v839 = vmul.f32 %v822, 0.0
  %v840 = vmul.f32 %v807, %v838
  %v841 = vadd.f32 %v839, %v840
  %v842 = vtanh.pop %v841
  %v843 = vmul.f32 %v837, %v842
  %v844 = vmax.f32 %v843, 0.0
  %845 = vst [vmem:[#allocation3] sm:$0xff] %v844
  %v846 = vpack.c.bf16 %v843, %v843
  %v847 = vld [vmem:[#allocation2 + $0x20] sm:$0xff]
  %v848 = vld [vmem:[#allocation2 + $0x28] sm:$0xff]
  %v849 = vld [vmem:[#allocation2 + $0x30] sm:$0xff]
  %v850 = vld [vmem:[#allocation2 + $0x38] sm:$0xff]
  %851 = vmatpush.bf16.msra.mxu0 %v689
  %852 = vmatpush.bf16.msra.mxu0 %v685
  %853 = vmatpush.bf16.msra.mxu0 %v681
  %854 = vmatpush.bf16.msra.mxu0 %v677
  %855 = vmatpush.bf16.msra.mxu0 %v673
  %856 = vmatpush.bf16.msra.mxu0 %v669
  %857 = vmatpush.bf16.msra.mxu0 %v665
  %858 = vmatpush.bf16.msra.mxu0 %v661
  %859 = vmatmul.bf16.gmra.mxu0 %v846
  %v860 = vpop.f32.mrf.mxu0
  %v861 = vadd.f32 0.0, %v860
  %v862 = vpop.f32.mrf.mxu0
  %863 = vdwg.mxu0
  %864 = vmatpush.bf16.msra.mxu0 %v690
  %865 = vmatpush.bf16.msra.mxu0 %v686
  %866 = vmatpush.bf16.msra.mxu0 %v682
  %867 = vmatpush.bf16.msra.mxu0 %v678
  %868 = vmatpush.bf16.msra.mxu0 %v674
  %869 = vmatpush.bf16.msra.mxu0 %v670
  %870 = vmatpush.bf16.msra.mxu0 %v666
  %871 = vmatpush.bf16.msra.mxu0 %v662
  %872 = vmatmul.bf16.gmra.mxu0 %v846
  %v873 = vpop.f32.mrf.mxu0
  %v874 = vadd.f32 0.0, %v873
  %v875 = vpop.f32.mrf.mxu0
  %876 = vdwg.mxu0
  %877 = vmatpush.bf16.msra.mxu0 %v691
  %878 = vmatpush.bf16.msra.mxu0 %v687
  %879 = vmatpush.bf16.msra.mxu0 %v683
  %880 = vmatpush.bf16.msra.mxu0 %v679
  %881 = vmatpush.bf16.msra.mxu0 %v675
  %882 = vmatpush.bf16.msra.mxu0 %v671
  %883 = vmatpush.bf16.msra.mxu0 %v667
  %884 = vmatpush.bf16.msra.mxu0 %v663
  %885 = vmatmul.bf16.gmra.mxu0 %v846
  %v886 = vpop.f32.mrf.mxu0
  %v887 = vadd.f32 0.0, %v886
  %v888 = vpop.f32.mrf.mxu0
  %889 = vdwg.mxu0
  %890 = vmatpush.bf16.msra.mxu0 %v692
  %891 = vmatpush.bf16.msra.mxu0 %v688
  %892 = vmatpush.bf16.msra.mxu0 %v684
  %893 = vmatpush.bf16.msra.mxu0 %v680
  %894 = vmatpush.bf16.msra.mxu0 %v676
  %895 = vmatpush.bf16.msra.mxu0 %v672
  %896 = vmatpush.bf16.msra.mxu0 %v668
  %897 = vmatpush.bf16.msra.mxu0 %v664
  %898 = vmatmul.bf16.gmra.mxu0 %v846
  %v899 = vpop.f32.mrf.mxu0
  %v900 = vadd.f32 0.0, %v899
  %v901 = vpop.f32.mrf.mxu0
  %902 = vdwg.mxu0
  %v903 = vadd.f32 %v847, %v861
  %v904 = vadd.f32 %v848, %v874
  %v905 = vadd.f32 %v849, %v887
  %v906 = vadd.f32 %v850, %v900
  %v907 = vxor.u32 %v903, 2147483648
  %v908 = vxor.u32 %v904, 2147483648
  %v909 = vxor.u32 %v905, 2147483648
  %v910 = vmul.f32 %v907, 1.442695
  %v911 = vpow.pop %v910
  %v912 = vmul.f32 %v908, 1.442695
  %v913 = vpow.pop %v912
  %v914 = vmul.f32 %v909, 1.442695
  %v915 = vpow.pop %v914
  %v916 = vadd.f32 %v911, 1.0
  %v917 = vadd.f32 %v913, 1.0
  %v918 = vadd.f32 %v915, 1.0
  %v919 = vrcp.pop %v916
  %v920 = vmul.f32 %v916, %v919
  %v921 = vsub.f32 1.0, %v920
  %v922 = vmul.f32 %v919, %v921
  %v923 = vadd.f32 %v919, %v922
  %vm924 = vweird.f32 %v916
  %vm925 = vweird.f32 %v919
  %vm926 = vmor %vm924, %vm925
  %v927 = vsel %vm926, %v919, %v923
  %v928 = vand.u32 2147483647, %v916
  %vm929 = vcmp.eq.f32.partialorder %v928, 8.507059e+37
  %v930 = vand.u32 %v916, 2147483648
  %v931 = vor.u32 1.1754944e-38, %v930
  %v932 = vsel %vm929, %v931, %v927
  %v933 = vmul.f32 1.0, %v932
  %v934 = vrcp.pop %v917
  %v935 = vmul.f32 %v917, %v934
  %v936 = vsub.f32 1.0, %v935
  %v937 = vmul.f32 %v934, %v936
  %v938 = vadd.f32 %v934, %v937
  %vm939 = vweird.f32 %v917
  %vm940 = vweird.f32 %v934
  %vm941 = vmor %vm939, %vm940
  %v942 = vsel %vm941, %v934, %v938
  %v943 = vand.u32 2147483647, %v917
  %vm944 = vcmp.eq.f32.partialorder %v943, 8.507059e+37
  %v945 = vand.u32 %v917, 2147483648
  %v946 = vor.u32 1.1754944e-38, %v945
  %v947 = vsel %vm944, %v946, %v942
  %v948 = vmul.f32 1.0, %v947
  %v949 = vrcp.pop %v918
  %v950 = vmul.f32 %v918, %v949
  %v951 = vsub.f32 1.0, %v950
  %v952 = vmul.f32 %v949, %v951
  %v953 = vadd.f32 %v949, %v952
  %vm954 = vweird.f32 %v918
  %vm955 = vweird.f32 %v949
  %vm956 = vmor %vm954, %vm955
  %v957 = vsel %vm956, %v949, %v953
  %v958 = vand.u32 2147483647, %v918
  %vm959 = vcmp.eq.f32.partialorder %v958, 8.507059e+37
  %v960 = vand.u32 %v918, 2147483648
  %v961 = vor.u32 1.1754944e-38, %v960
  %v962 = vsel %vm959, %v961, %v957
  %v963 = vmul.f32 1.0, %v962
  %v964 = vtanh.pop %v906
  %v965 = vmul.f32 %v948, %v841
  %v966 = vmul.f32 %v933, %v964
  %v967 = vadd.f32 %v965, %v966
  %v968 = vtanh.pop %v967
  %v969 = vmul.f32 %v963, %v968
  %v970 = vmax.f32 %v969, 0.0
  %971 = vst [vmem:[#allocation3 + $0x8] sm:$0xff] %v970
  %v972 = vpack.c.bf16 %v969, %v969
  %v973 = vld [vmem:[#allocation2 + $0x40] sm:$0xff]
  %v974 = vld [vmem:[#allocation2 + $0x48] sm:$0xff]
  %v975 = vld [vmem:[#allocation2 + $0x50] sm:$0xff]
  %v976 = vld [vmem:[#allocation2 + $0x58] sm:$0xff]
  %977 = vmatpush.bf16.msra.mxu0 %v689
  %978 = vmatpush.bf16.msra.mxu0 %v685
  %979 = vmatpush.bf16.msra.mxu0 %v681
  %980 = vmatpush.bf16.msra.mxu0 %v677
  %981 = vmatpush.bf16.msra.mxu0 %v673
  %982 = vmatpush.bf16.msra.mxu0 %v669
  %983 = vmatpush.bf16.msra.mxu0 %v665
  %984 = vmatpush.bf16.msra.mxu0 %v661
  %985 = vmatmul.bf16.gmra.mxu0 %v972
  %v986 = vpop.f32.mrf.mxu0
  %v987 = vadd.f32 0.0, %v986
  %v988 = vpop.f32.mrf.mxu0
  %989 = vdwg.mxu0
  %990 = vmatpush.bf16.msra.mxu0 %v690
  %991 = vmatpush.bf16.msra.mxu0 %v686
  %992 = vmatpush.bf16.msra.mxu0 %v682
  %993 = vmatpush.bf16.msra.mxu0 %v678
  %994 = vmatpush.bf16.msra.mxu0 %v674
  %995 = vmatpush.bf16.msra.mxu0 %v670
  %996 = vmatpush.bf16.msra.mxu0 %v666
  %997 = vmatpush.bf16.msra.mxu0 %v662
  %998 = vmatmul.bf16.gmra.mxu0 %v972
  %v999 = vpop.f32.mrf.mxu0
  %v1000 = vadd.f32 0.0, %v999
  %v1001 = vpop.f32.mrf.mxu0
  %1002 = vdwg.mxu0
  %1003 = vmatpush.bf16.msra.mxu0 %v691
  %1004 = vmatpush.bf16.msra.mxu0 %v687
  %1005 = vmatpush.bf16.msra.mxu0 %v683
  %1006 = vmatpush.bf16.msra.mxu0 %v679
  %1007 = vmatpush.bf16.msra.mxu0 %v675
  %1008 = vmatpush.bf16.msra.mxu0 %v671
  %1009 = vmatpush.bf16.msra.mxu0 %v667
  %1010 = vmatpush.bf16.msra.mxu0 %v663
  %1011 = vmatmul.bf16.gmra.mxu0 %v972
  %v1012 = vpop.f32.mrf.mxu0
  %v1013 = vadd.f32 0.0, %v1012
  %v1014 = vpop.f32.mrf.mxu0
  %1015 = vdwg.mxu0
  %1016 = vmatpush.bf16.msra.mxu0 %v692
  %1017 = vmatpush.bf16.msra.mxu0 %v688
  %1018 = vmatpush.bf16.msra.mxu0 %v684
  %1019 = vmatpush.bf16.msra.mxu0 %v680
  %1020 = vmatpush.bf16.msra.mxu0 %v676
  %1021 = vmatpush.bf16.msra.mxu0 %v672
  %1022 = vmatpush.bf16.msra.mxu0 %v668
  %1023 = vmatpush.bf16.msra.mxu0 %v664
  %1024 = vmatmul.bf16.gmra.mxu0 %v972
  %v1025 = vpop.f32.mrf.mxu0
  %v1026 = vadd.f32 0.0, %v1025
  %v1027 = vpop.f32.mrf.mxu0
  %1028 = vdwg.mxu0
  %v1029 = vadd.f32 %v973, %v987
  %v1030 = vadd.f32 %v974, %v1000
  %v1031 = vadd.f32 %v975, %v1013
  %v1032 = vadd.f32 %v976, %v1026
  %v1033 = vxor.u32 %v1029, 2147483648
  %v1034 = vxor.u32 %v1030, 2147483648
  %v1035 = vxor.u32 %v1031, 2147483648
  %v1036 = vmul.f32 %v1033, 1.442695
  %v1037 = vpow.pop %v1036
  %v1038 = vmul.f32 %v1034, 1.442695
  %v1039 = vpow.pop %v1038
  %v1040 = vmul.f32 %v1035, 1.442695
  %v1041 = vpow.pop %v1040
  %v1042 = vadd.f32 %v1037, 1.0
  %v1043 = vadd.f32 %v1039, 1.0
  %v1044 = vadd.f32 %v1041, 1.0
  %v1045 = vrcp.pop %v1042
  %v1046 = vmul.f32 %v1042, %v1045
  %v1047 = vsub.f32 1.0, %v1046
  %v1048 = vmul.f32 %v1045, %v1047
  %v1049 = vadd.f32 %v1045, %v1048
  %vm1050 = vweird.f32 %v1042
  %vm1051 = vweird.f32 %v1045
  %vm1052 = vmor %vm1050, %vm1051
  %v1053 = vsel %vm1052, %v1045, %v1049
  %v1054 = vand.u32 2147483647, %v1042
  %vm1055 = vcmp.eq.f32.partialorder %v1054, 8.507059e+37
  %v1056 = vand.u32 %v1042, 2147483648
  %v1057 = vor.u32 1.1754944e-38, %v1056
  %v1058 = vsel %vm1055, %v1057, %v1053
  %v1059 = vmul.f32 1.0, %v1058
  %v1060 = vrcp.pop %v1043
  %v1061 = vmul.f32 %v1043, %v1060
  %v1062 = vsub.f32 1.0, %v1061
  %v1063 = vmul.f32 %v1060, %v1062
  %v1064 = vadd.f32 %v1060, %v1063
  %vm1065 = vweird.f32 %v1043
  %vm1066 = vweird.f32 %v1060
  %vm1067 = vmor %vm1065, %vm1066
  %v1068 = vsel %vm1067, %v1060, %v1064
  %v1069 = vand.u32 2147483647, %v1043
  %vm1070 = vcmp.eq.f32.partialorder %v1069, 8.507059e+37
  %v1071 = vand.u32 %v1043, 2147483648
  %v1072 = vor.u32 1.1754944e-38, %v1071
  %v1073 = vsel %vm1070, %v1072, %v1068
  %v1074 = vmul.f32 1.0, %v1073
  %v1075 = vrcp.pop %v1044
  %v1076 = vmul.f32 %v1044, %v1075
  %v1077 = vsub.f32 1.0, %v1076
  %v1078 = vmul.f32 %v1075, %v1077
  %v1079 = vadd.f32 %v1075, %v1078
  %vm1080 = vweird.f32 %v1044
  %vm1081 = vweird.f32 %v1075
  %vm1082 = vmor %vm1080, %vm1081
  %v1083 = vsel %vm1082, %v1075, %v1079
  %v1084 = vand.u32 2147483647, %v1044
  %vm1085 = vcmp.eq.f32.partialorder %v1084, 8.507059e+37
  %v1086 = vand.u32 %v1044, 2147483648
  %v1087 = vor.u32 1.1754944e-38, %v1086
  %v1088 = vsel %vm1085, %v1087, %v1083
  %v1089 = vmul.f32 1.0, %v1088
  %v1090 = vtanh.pop %v1032
  %v1091 = vmul.f32 %v1074, %v967
  %v1092 = vmul.f32 %v1059, %v1090
  %v1093 = vadd.f32 %v1091, %v1092
  %v1094 = vtanh.pop %v1093
  %v1095 = vmul.f32 %v1089, %v1094
  %v1096 = vmax.f32 %v1095, 0.0
  %1097 = vst [vmem:[#allocation3 + $0x10] sm:$0xff] %v1096
  %v1098 = vpack.c.bf16 %v1095, %v1095
  %v1099 = vld [vmem:[#allocation2 + $0x60] sm:$0xff]
  %v1100 = vld [vmem:[#allocation2 + $0x68] sm:$0xff]
  %v1101 = vld [vmem:[#allocation2 + $0x70] sm:$0xff]
  %v1102 = vld [vmem:[#allocation2 + $0x78] sm:$0xff]
  %1103 = vmatpush.bf16.msra.mxu0 %v689
  %1104 = vmatpush.bf16.msra.mxu0 %v685
  %1105 = vmatpush.bf16.msra.mxu0 %v681
  %1106 = vmatpush.bf16.msra.mxu0 %v677
  %1107 = vmatpush.bf16.msra.mxu0 %v673
  %1108 = vmatpush.bf16.msra.mxu0 %v669
  %1109 = vmatpush.bf16.msra.mxu0 %v665
  %1110 = vmatpush.bf16.msra.mxu0 %v661
  %1111 = vmatmul.bf16.gmra.mxu0 %v1098
  %v1112 = vpop.f32.mrf.mxu0
  %v1113 = vadd.f32 0.0, %v1112
  %v1114 = vpop.f32.mrf.mxu0
  %1115 = vdwg.mxu0
  %1116 = vmatpush.bf16.msra.mxu0 %v690
  %1117 = vmatpush.bf16.msra.mxu0 %v686
  %1118 = vmatpush.bf16.msra.mxu0 %v682
  %1119 = vmatpush.bf16.msra.mxu0 %v678
  %1120 = vmatpush.bf16.msra.mxu0 %v674
  %1121 = vmatpush.bf16.msra.mxu0 %v670
  %1122 = vmatpush.bf16.msra.mxu0 %v666
  %1123 = vmatpush.bf16.msra.mxu0 %v662
  %1124 = vmatmul.bf16.gmra.mxu0 %v1098
  %v1125 = vpop.f32.mrf.mxu0
  %v1126 = vadd.f32 0.0, %v1125
  %v1127 = vpop.f32.mrf.mxu0
  %1128 = vdwg.mxu0
  %1129 = vmatpush.bf16.msra.mxu0 %v691
  %1130 = vmatpush.bf16.msra.mxu0 %v687
  %1131 = vmatpush.bf16.msra.mxu0 %v683
  %1132 = vmatpush.bf16.msra.mxu0 %v679
  %1133 = vmatpush.bf16.msra.mxu0 %v675
  %1134 = vmatpush.bf16.msra.mxu0 %v671
  %1135 = vmatpush.bf16.msra.mxu0 %v667
  %1136 = vmatpush.bf16.msra.mxu0 %v663
  %1137 = vmatmul.bf16.gmra.mxu0 %v1098
  %v1138 = vpop.f32.mrf.mxu0
  %v1139 = vadd.f32 0.0, %v1138
  %v1140 = vpop.f32.mrf.mxu0
  %1141 = vdwg.mxu0
  %1142 = vmatpush.bf16.msra.mxu0 %v692
  %1143 = vmatpush.bf16.msra.mxu0 %v688
  %1144 = vmatpush.bf16.msra.mxu0 %v684
  %1145 = vmatpush.bf16.msra.mxu0 %v680
  %1146 = vmatpush.bf16.msra.mxu0 %v676
  %1147 = vmatpush.bf16.msra.mxu0 %v672
  %1148 = vmatpush.bf16.msra.mxu0 %v668
  %1149 = vmatpush.bf16.msra.mxu0 %v664
  %1150 = vmatmul.bf16.gmra.mxu0 %v1098
  %v1151 = vpop.f32.mrf.mxu0
  %v1152 = vadd.f32 0.0, %v1151
  %v1153 = vpop.f32.mrf.mxu0
  %1154 = vdwg.mxu0
  %v1155 = vadd.f32 %v1099, %v1113
  %v1156 = vadd.f32 %v1100, %v1126
  %v1157 = vadd.f32 %v1101, %v1139
  %v1158 = vadd.f32 %v1102, %v1152
  %v1159 = vxor.u32 %v1155, 2147483648
  %v1160 = vxor.u32 %v1156, 2147483648
  %v1161 = vxor.u32 %v1157, 2147483648
  %v1162 = vmul.f32 %v1159, 1.442695
  %v1163 = vpow.pop %v1162
  %v1164 = vmul.f32 %v1160, 1.442695
  %v1165 = vpow.pop %v1164
  %v1166 = vmul.f32 %v1161, 1.442695
  %v1167 = vpow.pop %v1166
  %v1168 = vadd.f32 %v1163, 1.0
  %v1169 = vadd.f32 %v1165, 1.0
  %v1170 = vadd.f32 %v1167, 1.0
  %v1171 = vrcp.pop %v1168
  %v1172 = vmul.f32 %v1168, %v1171
  %v1173 = vsub.f32 1.0, %v1172
  %v1174 = vmul.f32 %v1171, %v1173
  %v1175 = vadd.f32 %v1171, %v1174
  %vm1176 = vweird.f32 %v1168
  %vm1177 = vweird.f32 %v1171
  %vm1178 = vmor %vm1176, %vm1177
  %v1179 = vsel %vm1178, %v1171, %v1175
  %v1180 = vand.u32 2147483647, %v1168
  %vm1181 = vcmp.eq.f32.partialorder %v1180, 8.507059e+37
  %v1182 = vand.u32 %v1168, 2147483648
  %v1183 = vor.u32 1.1754944e-38, %v1182
  %v1184 = vsel %vm1181, %v1183, %v1179
  %v1185 = vmul.f32 1.0, %v1184
  %v1186 = vrcp.pop %v1169
  %v1187 = vmul.f32 %v1169, %v1186
  %v1188 = vsub.f32 1.0, %v1187
  %v1189 = vmul.f32 %v1186, %v1188
  %v1190 = vadd.f32 %v1186, %v1189
  %vm1191 = vweird.f32 %v1169
  %vm1192 = vweird.f32 %v1186
  %vm1193 = vmor %vm1191, %vm1192
  %v1194 = vsel %vm1193, %v1186, %v1190
  %v1195 = vand.u32 2147483647, %v1169
  %vm1196 = vcmp.eq.f32.partialorder %v1195, 8.507059e+37
  %v1197 = vand.u32 %v1169, 2147483648
  %v1198 = vor.u32 1.1754944e-38, %v1197
  %v1199 = vsel %vm1196, %v1198, %v1194
  %v1200 = vmul.f32 1.0, %v1199
  %v1201 = vrcp.pop %v1170
  %v1202 = vmul.f32 %v1170, %v1201
  %v1203 = vsub.f32 1.0, %v1202
  %v1204 = vmul.f32 %v1201, %v1203
  %v1205 = vadd.f32 %v1201, %v1204
  %vm1206 = vweird.f32 %v1170
  %vm1207 = vweird.f32 %v1201
  %vm1208 = vmor %vm1206, %vm1207
  %v1209 = vsel %vm1208, %v1201, %v1205
  %v1210 = vand.u32 2147483647, %v1170
  %vm1211 = vcmp.eq.f32.partialorder %v1210, 8.507059e+37
  %v1212 = vand.u32 %v1170, 2147483648
  %v1213 = vor.u32 1.1754944e-38, %v1212
  %v1214 = vsel %vm1211, %v1213, %v1209
  %v1215 = vmul.f32 1.0, %v1214
  %v1216 = vtanh.pop %v1158
  %v1217 = vmul.f32 %v1200, %v1093
  %v1218 = vmul.f32 %v1185, %v1216
  %v1219 = vadd.f32 %v1217, %v1218
  %v1220 = vtanh.pop %v1219
  %v1221 = vmul.f32 %v1215, %v1220
  %v1222 = vmax.f32 %v1221, 0.0
  %1223 = vst [vmem:[#allocation3 + $0x18] sm:$0xff] %v1222
  %v1224 = vpack.c.bf16 %v1221, %v1221
  %v1225 = vld [vmem:[#allocation2 + $0x80] sm:$0xff]
  %v1226 = vld [vmem:[#allocation2 + $0x88] sm:$0xff]
  %v1227 = vld [vmem:[#allocation2 + $0x90] sm:$0xff]
  %v1228 = vld [vmem:[#allocation2 + $0x98] sm:$0xff]
  %1229 = vmatpush.bf16.msra.mxu0 %v689
  %1230 = vmatpush.bf16.msra.mxu0 %v685
  %1231 = vmatpush.bf16.msra.mxu0 %v681
  %1232 = vmatpush.bf16.msra.mxu0 %v677
  %1233 = vmatpush.bf16.msra.mxu0 %v673
  %1234 = vmatpush.bf16.msra.mxu0 %v669
  %1235 = vmatpush.bf16.msra.mxu0 %v665
  %1236 = vmatpush.bf16.msra.mxu0 %v661
  %1237 = vmatmul.bf16.gmra.mxu0 %v1224
  %v1238 = vpop.f32.mrf.mxu0
  %v1239 = vadd.f32 0.0, %v1238
  %v1240 = vpop.f32.mrf.mxu0
  %1241 = vdwg.mxu0
  %1242 = vmatpush.bf16.msra.mxu0 %v690
  %1243 = vmatpush.bf16.msra.mxu0 %v686
  %1244 = vmatpush.bf16.msra.mxu0 %v682
  %1245 = vmatpush.bf16.msra.mxu0 %v678
  %1246 = vmatpush.bf16.msra.mxu0 %v674
  %1247 = vmatpush.bf16.msra.mxu0 %v670
  %1248 = vmatpush.bf16.msra.mxu0 %v666
  %1249 = vmatpush.bf16.msra.mxu0 %v662
  %1250 = vmatmul.bf16.gmra.mxu0 %v1224
  %v1251 = vpop.f32.mrf.mxu0
  %v1252 = vadd.f32 0.0, %v1251
  %v1253 = vpop.f32.mrf.mxu0
  %1254 = vdwg.mxu0
  %1255 = vmatpush.bf16.msra.mxu0 %v691
  %1256 = vmatpush.bf16.msra.mxu0 %v687
  %1257 = vmatpush.bf16.msra.mxu0 %v683
  %1258 = vmatpush.bf16.msra.mxu0 %v679
  %1259 = vmatpush.bf16.msra.mxu0 %v675
  %1260 = vmatpush.bf16.msra.mxu0 %v671
  %1261 = vmatpush.bf16.msra.mxu0 %v667
  %1262 = vmatpush.bf16.msra.mxu0 %v663
  %1263 = vmatmul.bf16.gmra.mxu0 %v1224
  %v1264 = vpop.f32.mrf.mxu0
  %v1265 = vadd.f32 0.0, %v1264
  %v1266 = vpop.f32.mrf.mxu0
  %1267 = vdwg.mxu0
  %1268 = vmatpush.bf16.msra.mxu0 %v692
  %1269 = vmatpush.bf16.msra.mxu0 %v688
  %1270 = vmatpush.bf16.msra.mxu0 %v684
  %1271 = vmatpush.bf16.msra.mxu0 %v680
  %1272 = vmatpush.bf16.msra.mxu0 %v676
  %1273 = vmatpush.bf16.msra.mxu0 %v672
  %1274 = vmatpush.bf16.msra.mxu0 %v668
  %1275 = vmatpush.bf16.msra.mxu0 %v664
  %1276 = vmatmul.bf16.gmra.mxu0 %v1224
  %v1277 = vpop.f32.mrf.mxu0
  %v1278 = vadd.f32 0.0, %v1277
  %v1279 = vpop.f32.mrf.mxu0
  %1280 = vdwg.mxu0
  %v1281 = vadd.f32 %v1225, %v1239
  %v1282 = vadd.f32 %v1226, %v1252
  %v1283 = vadd.f32 %v1227, %v1265
  %v1284 = vadd.f32 %v1228, %v1278
  %v1285 = vxor.u32 %v1281, 2147483648
  %v1286 = vxor.u32 %v1282, 2147483648
  %v1287 = vxor.u32 %v1283, 2147483648
  %v1288 = vmul.f32 %v1285, 1.442695
  %v1289 = vpow.pop %v1288
  %v1290 = vmul.f32 %v1286, 1.442695
  %v1291 = vpow.pop %v1290
  %v1292 = vmul.f32 %v1287, 1.442695
  %v1293 = vpow.pop %v1292
  %v1294 = vadd.f32 %v1289, 1.0
  %v1295 = vadd.f32 %v1291, 1.0
  %v1296 = vadd.f32 %v1293, 1.0
  %v1297 = vrcp.pop %v1294
  %v1298 = vmul.f32 %v1294, %v1297
  %v1299 = vsub.f32 1.0, %v1298
  %v1300 = vmul.f32 %v1297, %v1299
  %v1301 = vadd.f32 %v1297, %v1300
  %vm1302 = vweird.f32 %v1294
  %vm1303 = vweird.f32 %v1297
  %vm1304 = vmor %vm1302, %vm1303
  %v1305 = vsel %vm1304, %v1297, %v1301
  %v1306 = vand.u32 2147483647, %v1294
  %vm1307 = vcmp.eq.f32.partialorder %v1306, 8.507059e+37
  %v1308 = vand.u32 %v1294, 2147483648
  %v1309 = vor.u32 1.1754944e-38, %v1308
  %v1310 = vsel %vm1307, %v1309, %v1305
  %v1311 = vmul.f32 1.0, %v1310
  %v1312 = vrcp.pop %v1295
  %v1313 = vmul.f32 %v1295, %v1312
  %v1314 = vsub.f32 1.0, %v1313
  %v1315 = vmul.f32 %v1312, %v1314
  %v1316 = vadd.f32 %v1312, %v1315
  %vm1317 = vweird.f32 %v1295
  %vm1318 = vweird.f32 %v1312
  %vm1319 = vmor %vm1317, %vm1318
  %v1320 = vsel %vm1319, %v1312, %v1316
  %v1321 = vand.u32 2147483647, %v1295
  %vm1322 = vcmp.eq.f32.partialorder %v1321, 8.507059e+37
  %v1323 = vand.u32 %v1295, 2147483648
  %v1324 = vor.u32 1.1754944e-38, %v1323
  %v1325 = vsel %vm1322, %v1324, %v1320
  %v1326 = vmul.f32 1.0, %v1325
  %v1327 = vrcp.pop %v1296
  %v1328 = vmul.f32 %v1296, %v1327
  %v1329 = vsub.f32 1.0, %v1328
  %v1330 = vmul.f32 %v1327, %v1329
  %v1331 = vadd.f32 %v1327, %v1330
  %vm1332 = vweird.f32 %v1296
  %vm1333 = vweird.f32 %v1327
  %vm1334 = vmor %vm1332, %vm1333
  %v1335 = vsel %vm1334, %v1327, %v1331
  %v1336 = vand.u32 2147483647, %v1296
  %vm1337 = vcmp.eq.f32.partialorder %v1336, 8.507059e+37
  %v1338 = vand.u32 %v1296, 2147483648
  %v1339 = vor.u32 1.1754944e-38, %v1338
  %v1340 = vsel %vm1337, %v1339, %v1335
  %v1341 = vmul.f32 1.0, %v1340
  %v1342 = vtanh.pop %v1284
  %v1343 = vmul.f32 %v1326, %v1219
  %v1344 = vmul.f32 %v1311, %v1342
  %v1345 = vadd.f32 %v1343, %v1344
  %v1346 = vtanh.pop %v1345
  %v1347 = vmul.f32 %v1341, %v1346
  %v1348 = vmax.f32 %v1347, 0.0
  %1349 = vst [vmem:[#allocation3 + $0x20] sm:$0xff] %v1348
  %v1350 = vpack.c.bf16 %v1347, %v1347
  %v1351 = vld [vmem:[#allocation2 + $0xa0] sm:$0xff]
  %v1352 = vld [vmem:[#allocation2 + $0xa8] sm:$0xff]
  %v1353 = vld [vmem:[#allocation2 + $0xb0] sm:$0xff]
  %v1354 = vld [vmem:[#allocation2 + $0xb8] sm:$0xff]
  %1355 = vmatpush.bf16.msra.mxu0 %v689
  %1356 = vmatpush.bf16.msra.mxu0 %v685
  %1357 = vmatpush.bf16.msra.mxu0 %v681
  %1358 = vmatpush.bf16.msra.mxu0 %v677
  %1359 = vmatpush.bf16.msra.mxu0 %v673
  %1360 = vmatpush.bf16.msra.mxu0 %v669
  %1361 = vmatpush.bf16.msra.mxu0 %v665
  %1362 = vmatpush.bf16.msra.mxu0 %v661
  %1363 = vmatmul.bf16.gmra.mxu0 %v1350
  %v1364 = vpop.f32.mrf.mxu0
  %v1365 = vadd.f32 0.0, %v1364
  %v1366 = vpop.f32.mrf.mxu0
  %1367 = vdwg.mxu0
  %1368 = vmatpush.bf16.msra.mxu0 %v690
  %1369 = vmatpush.bf16.msra.mxu0 %v686
  %1370 = vmatpush.bf16.msra.mxu0 %v682
  %1371 = vmatpush.bf16.msra.mxu0 %v678
  %1372 = vmatpush.bf16.msra.mxu0 %v674
  %1373 = vmatpush.bf16.msra.mxu0 %v670
  %1374 = vmatpush.bf16.msra.mxu0 %v666
  %1375 = vmatpush.bf16.msra.mxu0 %v662
  %1376 = vmatmul.bf16.gmra.mxu0 %v1350
  %v1377 = vpop.f32.mrf.mxu0
  %v1378 = vadd.f32 0.0, %v1377
  %v1379 = vpop.f32.mrf.mxu0
  %1380 = vdwg.mxu0
  %1381 = vmatpush.bf16.msra.mxu0 %v691
  %1382 = vmatpush.bf16.msra.mxu0 %v687
  %1383 = vmatpush.bf16.msra.mxu0 %v683
  %1384 = vmatpush.bf16.msra.mxu0 %v679
  %1385 = vmatpush.bf16.msra.mxu0 %v675
  %1386 = vmatpush.bf16.msra.mxu0 %v671
  %1387 = vmatpush.bf16.msra.mxu0 %v667
  %1388 = vmatpush.bf16.msra.mxu0 %v663
  %1389 = vmatmul.bf16.gmra.mxu0 %v1350
  %v1390 = vpop.f32.mrf.mxu0
  %v1391 = vadd.f32 0.0, %v1390
  %v1392 = vpop.f32.mrf.mxu0
  %1393 = vdwg.mxu0
  %1394 = vmatpush.bf16.msra.mxu0 %v692
  %1395 = vmatpush.bf16.msra.mxu0 %v688
  %1396 = vmatpush.bf16.msra.mxu0 %v684
  %1397 = vmatpush.bf16.msra.mxu0 %v680
  %1398 = vmatpush.bf16.msra.mxu0 %v676
  %1399 = vmatpush.bf16.msra.mxu0 %v672
  %1400 = vmatpush.bf16.msra.mxu0 %v668
  %1401 = vmatpush.bf16.msra.mxu0 %v664
  %1402 = vmatmul.bf16.gmra.mxu0 %v1350
  %v1403 = vpop.f32.mrf.mxu0
  %v1404 = vadd.f32 0.0, %v1403
  %v1405 = vpop.f32.mrf.mxu0
  %1406 = vdwg.mxu0
  %v1407 = vadd.f32 %v1351, %v1365
  %v1408 = vadd.f32 %v1352, %v1378
  %v1409 = vadd.f32 %v1353, %v1391
  %v1410 = vadd.f32 %v1354, %v1404
  %v1411 = vxor.u32 %v1407, 2147483648
  %v1412 = vxor.u32 %v1408, 2147483648
  %v1413 = vxor.u32 %v1409, 2147483648
  %v1414 = vmul.f32 %v1411, 1.442695
  %v1415 = vpow.pop %v1414
  %v1416 = vmul.f32 %v1412, 1.442695
  %v1417 = vpow.pop %v1416
  %v1418 = vmul.f32 %v1413, 1.442695
  %v1419 = vpow.pop %v1418
  %v1420 = vadd.f32 %v1415, 1.0
  %v1421 = vadd.f32 %v1417, 1.0
  %v1422 = vadd.f32 %v1419, 1.0
  %v1423 = vrcp.pop %v1420
  %v1424 = vmul.f32 %v1420, %v1423
  %v1425 = vsub.f32 1.0, %v1424
  %v1426 = vmul.f32 %v1423, %v1425
  %v1427 = vadd.f32 %v1423, %v1426
  %vm1428 = vweird.f32 %v1420
  %vm1429 = vweird.f32 %v1423
  %vm1430 = vmor %vm1428, %vm1429
  %v1431 = vsel %vm1430, %v1423, %v1427
  %v1432 = vand.u32 2147483647, %v1420
  %vm1433 = vcmp.eq.f32.partialorder %v1432, 8.507059e+37
  %v1434 = vand.u32 %v1420, 2147483648
  %v1435 = vor.u32 1.1754944e-38, %v1434
  %v1436 = vsel %vm1433, %v1435, %v1431
  %v1437 = vmul.f32 1.0, %v1436
  %v1438 = vrcp.pop %v1421
  %v1439 = vmul.f32 %v1421, %v1438
  %v1440 = vsub.f32 1.0, %v1439
  %v1441 = vmul.f32 %v1438, %v1440
  %v1442 = vadd.f32 %v1438, %v1441
  %vm1443 = vweird.f32 %v1421
  %vm1444 = vweird.f32 %v1438
  %vm1445 = vmor %vm1443, %vm1444
  %v1446 = vsel %vm1445, %v1438, %v1442
  %v1447 = vand.u32 2147483647, %v1421
  %vm1448 = vcmp.eq.f32.partialorder %v1447, 8.507059e+37
  %v1449 = vand.u32 %v1421, 2147483648
  %v1450 = vor.u32 1.1754944e-38, %v1449
  %v1451 = vsel %vm1448, %v1450, %v1446
  %v1452 = vmul.f32 1.0, %v1451
  %v1453 = vrcp.pop %v1422
  %v1454 = vmul.f32 %v1422, %v1453
  %v1455 = vsub.f32 1.0, %v1454
  %v1456 = vmul.f32 %v1453, %v1455
  %v1457 = vadd.f32 %v1453, %v1456
  %vm1458 = vweird.f32 %v1422
  %vm1459 = vweird.f32 %v1453
  %vm1460 = vmor %vm1458, %vm1459
  %v1461 = vsel %vm1460, %v1453, %v1457
  %v1462 = vand.u32 2147483647, %v1422
  %vm1463 = vcmp.eq.f32.partialorder %v1462, 8.507059e+37
  %v1464 = vand.u32 %v1422, 2147483648
  %v1465 = vor.u32 1.1754944e-38, %v1464
  %v1466 = vsel %vm1463, %v1465, %v1461
  %v1467 = vmul.f32 1.0, %v1466
  %v1468 = vtanh.pop %v1410
  %v1469 = vmul.f32 %v1452, %v1345
  %v1470 = vmul.f32 %v1437, %v1468
  %v1471 = vadd.f32 %v1469, %v1470
  %v1472 = vtanh.pop %v1471
  %v1473 = vmul.f32 %v1467, %v1472
  %v1474 = vmax.f32 %v1473, 0.0
  %1475 = vst [vmem:[#allocation3 + $0x28] sm:$0xff] %v1474
  %v1476 = vpack.c.bf16 %v1473, %v1473
  %v1477 = vld [vmem:[#allocation2 + $0xc0] sm:$0xff]
  %v1478 = vld [vmem:[#allocation2 + $0xc8] sm:$0xff]
  %v1479 = vld [vmem:[#allocation2 + $0xd0] sm:$0xff]
  %v1480 = vld [vmem:[#allocation2 + $0xd8] sm:$0xff]
  %1481 = vmatpush.bf16.msra.mxu0 %v689
  %1482 = vmatpush.bf16.msra.mxu0 %v685
  %1483 = vmatpush.bf16.msra.mxu0 %v681
  %1484 = vmatpush.bf16.msra.mxu0 %v677
  %1485 = vmatpush.bf16.msra.mxu0 %v673
  %1486 = vmatpush.bf16.msra.mxu0 %v669
  %1487 = vmatpush.bf16.msra.mxu0 %v665
  %1488 = vmatpush.bf16.msra.mxu0 %v661
  %1489 = vmatmul.bf16.gmra.mxu0 %v1476
  %v1490 = vpop.f32.mrf.mxu0
  %v1491 = vadd.f32 0.0, %v1490
  %v1492 = vpop.f32.mrf.mxu0
  %1493 = vdwg.mxu0
  %1494 = vmatpush.bf16.msra.mxu0 %v690
  %1495 = vmatpush.bf16.msra.mxu0 %v686
  %1496 = vmatpush.bf16.msra.mxu0 %v682
  %1497 = vmatpush.bf16.msra.mxu0 %v678
  %1498 = vmatpush.bf16.msra.mxu0 %v674
  %1499 = vmatpush.bf16.msra.mxu0 %v670
  %1500 = vmatpush.bf16.msra.mxu0 %v666
  %1501 = vmatpush.bf16.msra.mxu0 %v662
  %1502 = vmatmul.bf16.gmra.mxu0 %v1476
  %v1503 = vpop.f32.mrf.mxu0
  %v1504 = vadd.f32 0.0, %v1503
  %v1505 = vpop.f32.mrf.mxu0
  %1506 = vdwg.mxu0
  %1507 = vmatpush.bf16.msra.mxu0 %v691
  %1508 = vmatpush.bf16.msra.mxu0 %v687
  %1509 = vmatpush.bf16.msra.mxu0 %v683
  %1510 = vmatpush.bf16.msra.mxu0 %v679
  %1511 = vmatpush.bf16.msra.mxu0 %v675
  %1512 = vmatpush.bf16.msra.mxu0 %v671
  %1513 = vmatpush.bf16.msra.mxu0 %v667
  %1514 = vmatpush.bf16.msra.mxu0 %v663
  %1515 = vmatmul.bf16.gmra.mxu0 %v1476
  %v1516 = vpop.f32.mrf.mxu0
  %v1517 = vadd.f32 0.0, %v1516
  %v1518 = vpop.f32.mrf.mxu0
  %1519 = vdwg.mxu0
  %1520 = vmatpush.bf16.msra.mxu0 %v692
  %1521 = vmatpush.bf16.msra.mxu0 %v688
  %1522 = vmatpush.bf16.msra.mxu0 %v684
  %1523 = vmatpush.bf16.msra.mxu0 %v680
  %1524 = vmatpush.bf16.msra.mxu0 %v676
  %1525 = vmatpush.bf16.msra.mxu0 %v672
  %1526 = vmatpush.bf16.msra.mxu0 %v668
  %1527 = vmatpush.bf16.msra.mxu0 %v664
  %1528 = vmatmul.bf16.gmra.mxu0 %v1476
  %v1529 = vpop.f32.mrf.mxu0
  %v1530 = vadd.f32 0.0, %v1529
  %v1531 = vpop.f32.mrf.mxu0
  %1532 = vdwg.mxu0
  %v1533 = vadd.f32 %v1477, %v1491
  %v1534 = vadd.f32 %v1478, %v1504
  %v1535 = vadd.f32 %v1479, %v1517
  %v1536 = vadd.f32 %v1480, %v1530
  %v1537 = vxor.u32 %v1533, 2147483648
  %v1538 = vxor.u32 %v1534, 2147483648
  %v1539 = vxor.u32 %v1535, 2147483648
  %v1540 = vmul.f32 %v1537, 1.442695
  %v1541 = vpow.pop %v1540
  %v1542 = vmul.f32 %v1538, 1.442695
  %v1543 = vpow.pop %v1542
  %v1544 = vmul.f32 %v1539, 1.442695
  %v1545 = vpow.pop %v1544
  %v1546 = vadd.f32 %v1541, 1.0
  %v1547 = vadd.f32 %v1543, 1.0
  %v1548 = vadd.f32 %v1545, 1.0
  %v1549 = vrcp.pop %v1546
  %v1550 = vmul.f32 %v1546, %v1549
  %v1551 = vsub.f32 1.0, %v1550
  %v1552 = vmul.f32 %v1549, %v1551
  %v1553 = vadd.f32 %v1549, %v1552
  %vm1554 = vweird.f32 %v1546
  %vm1555 = vweird.f32 %v1549
  %vm1556 = vmor %vm1554, %vm1555
  %v1557 = vsel %vm1556, %v1549, %v1553
  %v1558 = vand.u32 2147483647, %v1546
  %vm1559 = vcmp.eq.f32.partialorder %v1558, 8.507059e+37
  %v1560 = vand.u32 %v1546, 2147483648
  %v1561 = vor.u32 1.1754944e-38, %v1560
  %v1562 = vsel %vm1559, %v1561, %v1557
  %v1563 = vmul.f32 1.0, %v1562
  %v1564 = vrcp.pop %v1547
  %v1565 = vmul.f32 %v1547, %v1564
  %v1566 = vsub.f32 1.0, %v1565
  %v1567 = vmul.f32 %v1564, %v1566
  %v1568 = vadd.f32 %v1564, %v1567
  %vm1569 = vweird.f32 %v1547
  %vm1570 = vweird.f32 %v1564
  %vm1571 = vmor %vm1569, %vm1570
  %v1572 = vsel %vm1571, %v1564, %v1568
  %v1573 = vand.u32 2147483647, %v1547
  %vm1574 = vcmp.eq.f32.partialorder %v1573, 8.507059e+37
  %v1575 = vand.u32 %v1547, 2147483648
  %v1576 = vor.u32 1.1754944e-38, %v1575
  %v1577 = vsel %vm1574, %v1576, %v1572
  %v1578 = vmul.f32 1.0, %v1577
  %v1579 = vrcp.pop %v1548
  %v1580 = vmul.f32 %v1548, %v1579
  %v1581 = vsub.f32 1.0, %v1580
  %v1582 = vmul.f32 %v1579, %v1581
  %v1583 = vadd.f32 %v1579, %v1582
  %vm1584 = vweird.f32 %v1548
  %vm1585 = vweird.f32 %v1579
  %vm1586 = vmor %vm1584, %vm1585
  %v1587 = vsel %vm1586, %v1579, %v1583
  %v1588 = vand.u32 2147483647, %v1548
  %vm1589 = vcmp.eq.f32.partialorder %v1588, 8.507059e+37
  %v1590 = vand.u32 %v1548, 2147483648
  %v1591 = vor.u32 1.1754944e-38, %v1590
  %v1592 = vsel %vm1589, %v1591, %v1587
  %v1593 = vmul.f32 1.0, %v1592
  %v1594 = vtanh.pop %v1536
  %v1595 = vmul.f32 %v1578, %v1471
  %v1596 = vmul.f32 %v1563, %v1594
  %v1597 = vadd.f32 %v1595, %v1596
  %v1598 = vtanh.pop %v1597
  %v1599 = vmul.f32 %v1593, %v1598
  %v1600 = vmax.f32 %v1599, 0.0
  %1601 = vst [vmem:[#allocation3 + $0x30] sm:$0xff] %v1600
  %v1602 = vpack.c.bf16 %v1599, %v1599
  %v1603 = vld [vmem:[#allocation2 + $0xe0] sm:$0xff]
  %v1604 = vld [vmem:[#allocation2 + $0xe8] sm:$0xff]
  %v1605 = vld [vmem:[#allocation2 + $0xf0] sm:$0xff]
  %v1606 = vld [vmem:[#allocation2 + $0xf8] sm:$0xff]
  %1607 = vmatpush.bf16.msra.mxu0 %v689
  %1608 = vmatpush.bf16.msra.mxu0 %v685
  %1609 = vmatpush.bf16.msra.mxu0 %v681
  %1610 = vmatpush.bf16.msra.mxu0 %v677
  %1611 = vmatpush.bf16.msra.mxu0 %v673
  %1612 = vmatpush.bf16.msra.mxu0 %v669
  %1613 = vmatpush.bf16.msra.mxu0 %v665
  %1614 = vmatpush.bf16.msra.mxu0 %v661
  %1615 = vmatmul.bf16.gmra.mxu0 %v1602
  %v1616 = vpop.f32.mrf.mxu0
  %v1617 = vadd.f32 0.0, %v1616
  %v1618 = vpop.f32.mrf.mxu0
  %1619 = vdwg.mxu0
  %1620 = vmatpush.bf16.msra.mxu0 %v690
  %1621 = vmatpush.bf16.msra.mxu0 %v686
  %1622 = vmatpush.bf16.msra.mxu0 %v682
  %1623 = vmatpush.bf16.msra.mxu0 %v678
  %1624 = vmatpush.bf16.msra.mxu0 %v674
  %1625 = vmatpush.bf16.msra.mxu0 %v670
  %1626 = vmatpush.bf16.msra.mxu0 %v666
  %1627 = vmatpush.bf16.msra.mxu0 %v662
  %1628 = vmatmul.bf16.gmra.mxu0 %v1602
  %v1629 = vpop.f32.mrf.mxu0
  %v1630 = vadd.f32 0.0, %v1629
  %v1631 = vpop.f32.mrf.mxu0
  %1632 = vdwg.mxu0
  %1633 = vmatpush.bf16.msra.mxu0 %v691
  %1634 = vmatpush.bf16.msra.mxu0 %v687
  %1635 = vmatpush.bf16.msra.mxu0 %v683
  %1636 = vmatpush.bf16.msra.mxu0 %v679
  %1637 = vmatpush.bf16.msra.mxu0 %v675
  %1638 = vmatpush.bf16.msra.mxu0 %v671
  %1639 = vmatpush.bf16.msra.mxu0 %v667
  %1640 = vmatpush.bf16.msra.mxu0 %v663
  %1641 = vmatmul.bf16.gmra.mxu0 %v1602
  %v1642 = vpop.f32.mrf.mxu0
  %v1643 = vadd.f32 0.0, %v1642
  %v1644 = vpop.f32.mrf.mxu0
  %1645 = vdwg.mxu0
  %1646 = vmatpush.bf16.msra.mxu0 %v692
  %1647 = vmatpush.bf16.msra.mxu0 %v688
  %1648 = vmatpush.bf16.msra.mxu0 %v684
  %1649 = vmatpush.bf16.msra.mxu0 %v680
  %1650 = vmatpush.bf16.msra.mxu0 %v676
  %1651 = vmatpush.bf16.msra.mxu0 %v672
  %1652 = vmatpush.bf16.msra.mxu0 %v668
  %1653 = vmatpush.bf16.msra.mxu0 %v664
  %1654 = vmatmul.bf16.gmra.mxu0 %v1602
  %v1655 = vpop.f32.mrf.mxu0
  %v1656 = vadd.f32 0.0, %v1655
  %v1657 = vpop.f32.mrf.mxu0
  %1658 = vdwg.mxu0
  %v1659 = vadd.f32 %v1603, %v1617
  %v1660 = vadd.f32 %v1604, %v1630
  %v1661 = vadd.f32 %v1605, %v1643
  %v1662 = vadd.f32 %v1606, %v1656
  %v1663 = vxor.u32 %v1659, 2147483648
  %v1664 = vxor.u32 %v1660, 2147483648
  %v1665 = vxor.u32 %v1661, 2147483648
  %v1666 = vmul.f32 %v1663, 1.442695
  %v1667 = vpow.pop %v1666
  %v1668 = vmul.f32 %v1664, 1.442695
  %v1669 = vpow.pop %v1668
  %v1670 = vmul.f32 %v1665, 1.442695
  %v1671 = vpow.pop %v1670
  %v1672 = vadd.f32 %v1667, 1.0
  %v1673 = vadd.f32 %v1669, 1.0
  %v1674 = vadd.f32 %v1671, 1.0
  %v1675 = vrcp.pop %v1672
  %v1676 = vmul.f32 %v1672, %v1675
  %v1677 = vsub.f32 1.0, %v1676
  %v1678 = vmul.f32 %v1675, %v1677
  %v1679 = vadd.f32 %v1675, %v1678
  %vm1680 = vweird.f32 %v1672
  %vm1681 = vweird.f32 %v1675
  %vm1682 = vmor %vm1680, %vm1681
  %v1683 = vsel %vm1682, %v1675, %v1679
  %v1684 = vand.u32 2147483647, %v1672
  %vm1685 = vcmp.eq.f32.partialorder %v1684, 8.507059e+37
  %v1686 = vand.u32 %v1672, 2147483648
  %v1687 = vor.u32 1.1754944e-38, %v1686
  %v1688 = vsel %vm1685, %v1687, %v1683
  %v1689 = vmul.f32 1.0, %v1688
  %v1690 = vrcp.pop %v1673
  %v1691 = vmul.f32 %v1673, %v1690
  %v1692 = vsub.f32 1.0, %v1691
  %v1693 = vmul.f32 %v1690, %v1692
  %v1694 = vadd.f32 %v1690, %v1693
  %vm1695 = vweird.f32 %v1673
  %vm1696 = vweird.f32 %v1690
  %vm1697 = vmor %vm1695, %vm1696
  %v1698 = vsel %vm1697, %v1690, %v1694
  %v1699 = vand.u32 2147483647, %v1673
  %vm1700 = vcmp.eq.f32.partialorder %v1699, 8.507059e+37
  %v1701 = vand.u32 %v1673, 2147483648
  %v1702 = vor.u32 1.1754944e-38, %v1701
  %v1703 = vsel %vm1700, %v1702, %v1698
  %v1704 = vmul.f32 1.0, %v1703
  %v1705 = vrcp.pop %v1674
  %v1706 = vmul.f32 %v1674, %v1705
  %v1707 = vsub.f32 1.0, %v1706
  %v1708 = vmul.f32 %v1705, %v1707
  %v1709 = vadd.f32 %v1705, %v1708
  %vm1710 = vweird.f32 %v1674
  %vm1711 = vweird.f32 %v1705
  %vm1712 = vmor %vm1710, %vm1711
  %v1713 = vsel %vm1712, %v1705, %v1709
  %v1714 = vand.u32 2147483647, %v1674
  %vm1715 = vcmp.eq.f32.partialorder %v1714, 8.507059e+37
  %v1716 = vand.u32 %v1674, 2147483648
  %v1717 = vor.u32 1.1754944e-38, %v1716
  %v1718 = vsel %vm1715, %v1717, %v1713
  %v1719 = vmul.f32 1.0, %v1718
  %v1720 = vtanh.pop %v1662
  %v1721 = vmul.f32 %v1704, %v1597
  %v1722 = vmul.f32 %v1689, %v1720
  %v1723 = vadd.f32 %v1721, %v1722
  %v1724 = vtanh.pop %v1723
  %v1725 = vmul.f32 %v1719, %v1724
  %v1726 = vmax.f32 %v1725, 0.0
  %1727 = vst [vmem:[#allocation3 + $0x38] sm:$0xff] %v1726
  %v1728 = vpack.c.bf16 %v1725, %v1725
  %v1729 = vld [vmem:[#allocation2 + $0x100] sm:$0xff]
  %v1730 = vld [vmem:[#allocation2 + $0x108] sm:$0xff]
  %v1731 = vld [vmem:[#allocation2 + $0x110] sm:$0xff]
  %v1732 = vld [vmem:[#allocation2 + $0x118] sm:$0xff]
  %1733 = vmatpush.bf16.msra.mxu0 %v689
  %1734 = vmatpush.bf16.msra.mxu0 %v685
  %1735 = vmatpush.bf16.msra.mxu0 %v681
  %1736 = vmatpush.bf16.msra.mxu0 %v677
  %1737 = vmatpush.bf16.msra.mxu0 %v673
  %1738 = vmatpush.bf16.msra.mxu0 %v669
  %1739 = vmatpush.bf16.msra.mxu0 %v665
  %1740 = vmatpush.bf16.msra.mxu0 %v661
  %1741 = vmatmul.bf16.gmra.mxu0 %v1728
  %v1742 = vpop.f32.mrf.mxu0
  %v1743 = vadd.f32 0.0, %v1742
  %v1744 = vpop.f32.mrf.mxu0
  %1745 = vdwg.mxu0
  %1746 = vmatpush.bf16.msra.mxu0 %v690
  %1747 = vmatpush.bf16.msra.mxu0 %v686
  %1748 = vmatpush.bf16.msra.mxu0 %v682
  %1749 = vmatpush.bf16.msra.mxu0 %v678
  %1750 = vmatpush.bf16.msra.mxu0 %v674
  %1751 = vmatpush.bf16.msra.mxu0 %v670
  %1752 = vmatpush.bf16.msra.mxu0 %v666
  %1753 = vmatpush.bf16.msra.mxu0 %v662
  %1754 = vmatmul.bf16.gmra.mxu0 %v1728
  %v1755 = vpop.f32.mrf.mxu0
  %v1756 = vadd.f32 0.0, %v1755
  %v1757 = vpop.f32.mrf.mxu0
  %1758 = vdwg.mxu0
  %1759 = vmatpush.bf16.msra.mxu0 %v691
  %1760 = vmatpush.bf16.msra.mxu0 %v687
  %1761 = vmatpush.bf16.msra.mxu0 %v683
  %1762 = vmatpush.bf16.msra.mxu0 %v679
  %1763 = vmatpush.bf16.msra.mxu0 %v675
  %1764 = vmatpush.bf16.msra.mxu0 %v671
  %1765 = vmatpush.bf16.msra.mxu0 %v667
  %1766 = vmatpush.bf16.msra.mxu0 %v663
  %1767 = vmatmul.bf16.gmra.mxu0 %v1728
  %v1768 = vpop.f32.mrf.mxu0
  %v1769 = vadd.f32 0.0, %v1768
  %v1770 = vpop.f32.mrf.mxu0
  %1771 = vdwg.mxu0
  %1772 = vmatpush.bf16.msra.mxu0 %v692
  %1773 = vmatpush.bf16.msra.mxu0 %v688
  %1774 = vmatpush.bf16.msra.mxu0 %v684
  %1775 = vmatpush.bf16.msra.mxu0 %v680
  %1776 = vmatpush.bf16.msra.mxu0 %v676
  %1777 = vmatpush.bf16.msra.mxu0 %v672
  %1778 = vmatpush.bf16.msra.mxu0 %v668
  %1779 = vmatpush.bf16.msra.mxu0 %v664
  %1780 = vmatmul.bf16.gmra.mxu0 %v1728
  %v1781 = vpop.f32.mrf.mxu0
  %v1782 = vadd.f32 0.0, %v1781
  %v1783 = vpop.f32.mrf.mxu0
  %1784 = vdwg.mxu0
  %v1785 = vadd.f32 %v1729, %v1743
  %v1786 = vadd.f32 %v1730, %v1756
  %v1787 = vadd.f32 %v1731, %v1769
  %v1788 = vadd.f32 %v1732, %v1782
  %v1789 = vxor.u32 %v1785, 2147483648
  %v1790 = vxor.u32 %v1786, 2147483648
  %v1791 = vxor.u32 %v1787, 2147483648
  %v1792 = vmul.f32 %v1789, 1.442695
  %v1793 = vpow.pop %v1792
  %v1794 = vmul.f32 %v1790, 1.442695
  %v1795 = vpow.pop %v1794
  %v1796 = vmul.f32 %v1791, 1.442695
  %v1797 = vpow.pop %v1796
  %v1798 = vadd.f32 %v1793, 1.0
  %v1799 = vadd.f32 %v1795, 1.0
  %v1800 = vadd.f32 %v1797, 1.0
  %v1801 = vrcp.pop %v1798
  %v1802 = vmul.f32 %v1798, %v1801
  %v1803 = vsub.f32 1.0, %v1802
  %v1804 = vmul.f32 %v1801, %v1803
  %v1805 = vadd.f32 %v1801, %v1804
  %vm1806 = vweird.f32 %v1798
  %vm1807 = vweird.f32 %v1801
  %vm1808 = vmor %vm1806, %vm1807
  %v1809 = vsel %vm1808, %v1801, %v1805
  %v1810 = vand.u32 2147483647, %v1798
  %vm1811 = vcmp.eq.f32.partialorder %v1810, 8.507059e+37
  %v1812 = vand.u32 %v1798, 2147483648
  %v1813 = vor.u32 1.1754944e-38, %v1812
  %v1814 = vsel %vm1811, %v1813, %v1809
  %v1815 = vmul.f32 1.0, %v1814
  %v1816 = vrcp.pop %v1799
  %v1817 = vmul.f32 %v1799, %v1816
  %v1818 = vsub.f32 1.0, %v1817
  %v1819 = vmul.f32 %v1816, %v1818
  %v1820 = vadd.f32 %v1816, %v1819
  %vm1821 = vweird.f32 %v1799
  %vm1822 = vweird.f32 %v1816
  %vm1823 = vmor %vm1821, %vm1822
  %v1824 = vsel %vm1823, %v1816, %v1820
  %v1825 = vand.u32 2147483647, %v1799
  %vm1826 = vcmp.eq.f32.partialorder %v1825, 8.507059e+37
  %v1827 = vand.u32 %v1799, 2147483648
  %v1828 = vor.u32 1.1754944e-38, %v1827
  %v1829 = vsel %vm1826, %v1828, %v1824
  %v1830 = vmul.f32 1.0, %v1829
  %v1831 = vrcp.pop %v1800
  %v1832 = vmul.f32 %v1800, %v1831
  %v1833 = vsub.f32 1.0, %v1832
  %v1834 = vmul.f32 %v1831, %v1833
  %v1835 = vadd.f32 %v1831, %v1834
  %vm1836 = vweird.f32 %v1800
  %vm1837 = vweird.f32 %v1831
  %vm1838 = vmor %vm1836, %vm1837
  %v1839 = vsel %vm1838, %v1831, %v1835
  %v1840 = vand.u32 2147483647, %v1800
  %vm1841 = vcmp.eq.f32.partialorder %v1840, 8.507059e+37
  %v1842 = vand.u32 %v1800, 2147483648
  %v1843 = vor.u32 1.1754944e-38, %v1842
  %v1844 = vsel %vm1841, %v1843, %v1839
  %v1845 = vmul.f32 1.0, %v1844
  %v1846 = vtanh.pop %v1788
  %v1847 = vmul.f32 %v1830, %v1723
  %v1848 = vmul.f32 %v1815, %v1846
  %v1849 = vadd.f32 %v1847, %v1848
  %v1850 = vtanh.pop %v1849
  %v1851 = vmul.f32 %v1845, %v1850
  %v1852 = vmax.f32 %v1851, 0.0
  %1853 = vst [vmem:[#allocation3 + $0x40] sm:$0xff] %v1852
  %v1854 = vpack.c.bf16 %v1851, %v1851
  %v1855 = vld [vmem:[#allocation2 + $0x120] sm:$0xff]
  %v1856 = vld [vmem:[#allocation2 + $0x128] sm:$0xff]
  %v1857 = vld [vmem:[#allocation2 + $0x130] sm:$0xff]
  %v1858 = vld [vmem:[#allocation2 + $0x138] sm:$0xff]
  %1859 = vmatpush.bf16.msra.mxu0 %v689
  %1860 = vmatpush.bf16.msra.mxu0 %v685
  %1861 = vmatpush.bf16.msra.mxu0 %v681
  %1862 = vmatpush.bf16.msra.mxu0 %v677
  %1863 = vmatpush.bf16.msra.mxu0 %v673
  %1864 = vmatpush.bf16.msra.mxu0 %v669
  %1865 = vmatpush.bf16.msra.mxu0 %v665
  %1866 = vmatpush.bf16.msra.mxu0 %v661
  %1867 = vmatmul.bf16.gmra.mxu0 %v1854
  %v1868 = vpop.f32.mrf.mxu0
  %v1869 = vadd.f32 0.0, %v1868
  %v1870 = vpop.f32.mrf.mxu0
  %1871 = vdwg.mxu0
  %1872 = vmatpush.bf16.msra.mxu0 %v690
  %1873 = vmatpush.bf16.msra.mxu0 %v686
  %1874 = vmatpush.bf16.msra.mxu0 %v682
  %1875 = vmatpush.bf16.msra.mxu0 %v678
  %1876 = vmatpush.bf16.msra.mxu0 %v674
  %1877 = vmatpush.bf16.msra.mxu0 %v670
  %1878 = vmatpush.bf16.msra.mxu0 %v666
  %1879 = vmatpush.bf16.msra.mxu0 %v662
  %1880 = vmatmul.bf16.gmra.mxu0 %v1854
  %v1881 = vpop.f32.mrf.mxu0
  %v1882 = vadd.f32 0.0, %v1881
  %v1883 = vpop.f32.mrf.mxu0
  %1884 = vdwg.mxu0
  %1885 = vmatpush.bf16.msra.mxu0 %v691
  %1886 = vmatpush.bf16.msra.mxu0 %v687
  %1887 = vmatpush.bf16.msra.mxu0 %v683
  %1888 = vmatpush.bf16.msra.mxu0 %v679
  %1889 = vmatpush.bf16.msra.mxu0 %v675
  %1890 = vmatpush.bf16.msra.mxu0 %v671
  %1891 = vmatpush.bf16.msra.mxu0 %v667
  %1892 = vmatpush.bf16.msra.mxu0 %v663
  %1893 = vmatmul.bf16.gmra.mxu0 %v1854
  %v1894 = vpop.f32.mrf.mxu0
  %v1895 = vadd.f32 0.0, %v1894
  %v1896 = vpop.f32.mrf.mxu0
  %1897 = vdwg.mxu0
  %1898 = vmatpush.bf16.msra.mxu0 %v692
  %1899 = vmatpush.bf16.msra.mxu0 %v688
  %1900 = vmatpush.bf16.msra.mxu0 %v684
  %1901 = vmatpush.bf16.msra.mxu0 %v680
  %1902 = vmatpush.bf16.msra.mxu0 %v676
  %1903 = vmatpush.bf16.msra.mxu0 %v672
  %1904 = vmatpush.bf16.msra.mxu0 %v668
  %1905 = vmatpush.bf16.msra.mxu0 %v664
  %1906 = vmatmul.bf16.gmra.mxu0 %v1854
  %v1907 = vpop.f32.mrf.mxu0
  %v1908 = vadd.f32 0.0, %v1907
  %v1909 = vpop.f32.mrf.mxu0
  %1910 = vdwg.mxu0
  %v1911 = vadd.f32 %v1855, %v1869
  %v1912 = vadd.f32 %v1856, %v1882
  %v1913 = vadd.f32 %v1857, %v1895
  %v1914 = vadd.f32 %v1858, %v1908
  %v1915 = vxor.u32 %v1911, 2147483648
  %v1916 = vxor.u32 %v1912, 2147483648
  %v1917 = vxor.u32 %v1913, 2147483648
  %v1918 = vmul.f32 %v1915, 1.442695
  %v1919 = vpow.pop %v1918
  %v1920 = vmul.f32 %v1916, 1.442695
  %v1921 = vpow.pop %v1920
  %v1922 = vmul.f32 %v1917, 1.442695
  %v1923 = vpow.pop %v1922
  %v1924 = vadd.f32 %v1919, 1.0
  %v1925 = vadd.f32 %v1921, 1.0
  %v1926 = vadd.f32 %v1923, 1.0
  %v1927 = vrcp.pop %v1924
  %v1928 = vmul.f32 %v1924, %v1927
  %v1929 = vsub.f32 1.0, %v1928
  %v1930 = vmul.f32 %v1927, %v1929
  %v1931 = vadd.f32 %v1927, %v1930
  %vm1932 = vweird.f32 %v1924
  %vm1933 = vweird.f32 %v1927
  %vm1934 = vmor %vm1932, %vm1933
  %v1935 = vsel %vm1934, %v1927, %v1931
  %v1936 = vand.u32 2147483647, %v1924
  %vm1937 = vcmp.eq.f32.partialorder %v1936, 8.507059e+37
  %v1938 = vand.u32 %v1924, 2147483648
  %v1939 = vor.u32 1.1754944e-38, %v1938
  %v1940 = vsel %vm1937, %v1939, %v1935
  %v1941 = vmul.f32 1.0, %v1940
  %v1942 = vrcp.pop %v1925
  %v1943 = vmul.f32 %v1925, %v1942
  %v1944 = vsub.f32 1.0, %v1943
  %v1945 = vmul.f32 %v1942, %v1944
  %v1946 = vadd.f32 %v1942, %v1945
  %vm1947 = vweird.f32 %v1925
  %vm1948 = vweird.f32 %v1942
  %vm1949 = vmor %vm1947, %vm1948
  %v1950 = vsel %vm1949, %v1942, %v1946
  %v1951 = vand.u32 2147483647, %v1925
  %vm1952 = vcmp.eq.f32.partialorder %v1951, 8.507059e+37
  %v1953 = vand.u32 %v1925, 2147483648
  %v1954 = vor.u32 1.1754944e-38, %v1953
  %v1955 = vsel %vm1952, %v1954, %v1950
  %v1956 = vmul.f32 1.0, %v1955
  %v1957 = vrcp.pop %v1926
  %v1958 = vmul.f32 %v1926, %v1957
  %v1959 = vsub.f32 1.0, %v1958
  %v1960 = vmul.f32 %v1957, %v1959
  %v1961 = vadd.f32 %v1957, %v1960
  %vm1962 = vweird.f32 %v1926
  %vm1963 = vweird.f32 %v1957
  %vm1964 = vmor %vm1962, %vm1963
  %v1965 = vsel %vm1964, %v1957, %v1961
  %v1966 = vand.u32 2147483647, %v1926
  %vm1967 = vcmp.eq.f32.partialorder %v1966, 8.507059e+37
  %v1968 = vand.u32 %v1926, 2147483648
  %v1969 = vor.u32 1.1754944e-38, %v1968
  %v1970 = vsel %vm1967, %v1969, %v1965
  %v1971 = vmul.f32 1.0, %v1970
  %v1972 = vtanh.pop %v1914
  %v1973 = vmul.f32 %v1956, %v1849
  %v1974 = vmul.f32 %v1941, %v1972
  %v1975 = vadd.f32 %v1973, %v1974
  %v1976 = vtanh.pop %v1975
  %v1977 = vmul.f32 %v1971, %v1976
  %v1978 = vmax.f32 %v1977, 0.0
  %1979 = vst [vmem:[#allocation3 + $0x48] sm:$0xff] %v1978
  %v1980 = vpack.c.bf16 %v1977, %v1977
  %v1981 = vld [vmem:[#allocation2 + $0x140] sm:$0xff]
  %v1982 = vld [vmem:[#allocation2 + $0x148] sm:$0xff]
  %v1983 = vld [vmem:[#allocation2 + $0x150] sm:$0xff]
  %v1984 = vld [vmem:[#allocation2 + $0x158] sm:$0xff]
  %1985 = vmatpush.bf16.msra.mxu0 %v689
  %1986 = vmatpush.bf16.msra.mxu0 %v685
  %1987 = vmatpush.bf16.msra.mxu0 %v681
  %1988 = vmatpush.bf16.msra.mxu0 %v677
  %1989 = vmatpush.bf16.msra.mxu0 %v673
  %1990 = vmatpush.bf16.msra.mxu0 %v669
  %1991 = vmatpush.bf16.msra.mxu0 %v665
  %1992 = vmatpush.bf16.msra.mxu0 %v661
  %1993 = vmatmul.bf16.gmra.mxu0 %v1980
  %v1994 = vpop.f32.mrf.mxu0
  %v1995 = vadd.f32 0.0, %v1994
  %v1996 = vpop.f32.mrf.mxu0
  %1997 = vdwg.mxu0
  %1998 = vmatpush.bf16.msra.mxu0 %v690
  %1999 = vmatpush.bf16.msra.mxu0 %v686
  %2000 = vmatpush.bf16.msra.mxu0 %v682
  %2001 = vmatpush.bf16.msra.mxu0 %v678
  %2002 = vmatpush.bf16.msra.mxu0 %v674
  %2003 = vmatpush.bf16.msra.mxu0 %v670
  %2004 = vmatpush.bf16.msra.mxu0 %v666
  %2005 = vmatpush.bf16.msra.mxu0 %v662
  %2006 = vmatmul.bf16.gmra.mxu0 %v1980
  %v2007 = vpop.f32.mrf.mxu0
  %v2008 = vadd.f32 0.0, %v2007
  %v2009 = vpop.f32.mrf.mxu0
  %2010 = vdwg.mxu0
  %2011 = vmatpush.bf16.msra.mxu0 %v691
  %2012 = vmatpush.bf16.msra.mxu0 %v687
  %2013 = vmatpush.bf16.msra.mxu0 %v683
  %2014 = vmatpush.bf16.msra.mxu0 %v679
  %2015 = vmatpush.bf16.msra.mxu0 %v675
  %2016 = vmatpush.bf16.msra.mxu0 %v671
  %2017 = vmatpush.bf16.msra.mxu0 %v667
  %2018 = vmatpush.bf16.msra.mxu0 %v663
  %2019 = vmatmul.bf16.gmra.mxu0 %v1980
  %v2020 = vpop.f32.mrf.mxu0
  %v2021 = vadd.f32 0.0, %v2020
  %v2022 = vpop.f32.mrf.mxu0
  %2023 = vdwg.mxu0
  %2024 = vmatpush.bf16.msra.mxu0 %v692
  %2025 = vmatpush.bf16.msra.mxu0 %v688
  %2026 = vmatpush.bf16.msra.mxu0 %v684
  %2027 = vmatpush.bf16.msra.mxu0 %v680
  %2028 = vmatpush.bf16.msra.mxu0 %v676
  %2029 = vmatpush.bf16.msra.mxu0 %v672
  %2030 = vmatpush.bf16.msra.mxu0 %v668
  %2031 = vmatpush.bf16.msra.mxu0 %v664
  %2032 = vmatmul.bf16.gmra.mxu0 %v1980
  %v2033 = vpop.f32.mrf.mxu0
  %v2034 = vadd.f32 0.0, %v2033
  %v2035 = vpop.f32.mrf.mxu0
  %2036 = vdwg.mxu0
  %v2037 = vadd.f32 %v1981, %v1995
  %v2038 = vadd.f32 %v1982, %v2008
  %v2039 = vadd.f32 %v1983, %v2021
  %v2040 = vadd.f32 %v1984, %v2034
  %v2041 = vxor.u32 %v2037, 2147483648
  %v2042 = vxor.u32 %v2038, 2147483648
  %v2043 = vxor.u32 %v2039, 2147483648
  %v2044 = vmul.f32 %v2041, 1.442695
  %v2045 = vpow.pop %v2044
  %v2046 = vmul.f32 %v2042, 1.442695
  %v2047 = vpow.pop %v2046
  %v2048 = vmul.f32 %v2043, 1.442695
  %v2049 = vpow.pop %v2048
  %v2050 = vadd.f32 %v2045, 1.0
  %v2051 = vadd.f32 %v2047, 1.0
  %v2052 = vadd.f32 %v2049, 1.0
  %v2053 = vrcp.pop %v2050
  %v2054 = vmul.f32 %v2050, %v2053
  %v2055 = vsub.f32 1.0, %v2054
  %v2056 = vmul.f32 %v2053, %v2055
  %v2057 = vadd.f32 %v2053, %v2056
  %vm2058 = vweird.f32 %v2050
  %vm2059 = vweird.f32 %v2053
  %vm2060 = vmor %vm2058, %vm2059
  %v2061 = vsel %vm2060, %v2053, %v2057
  %v2062 = vand.u32 2147483647, %v2050
  %vm2063 = vcmp.eq.f32.partialorder %v2062, 8.507059e+37
  %v2064 = vand.u32 %v2050, 2147483648
  %v2065 = vor.u32 1.1754944e-38, %v2064
  %v2066 = vsel %vm2063, %v2065, %v2061
  %v2067 = vmul.f32 1.0, %v2066
  %v2068 = vrcp.pop %v2051
  %v2069 = vmul.f32 %v2051, %v2068
  %v2070 = vsub.f32 1.0, %v2069
  %v2071 = vmul.f32 %v2068, %v2070
  %v2072 = vadd.f32 %v2068, %v2071
  %vm2073 = vweird.f32 %v2051
  %vm2074 = vweird.f32 %v2068
  %vm2075 = vmor %vm2073, %vm2074
  %v2076 = vsel %vm2075, %v2068, %v2072
  %v2077 = vand.u32 2147483647, %v2051
  %vm2078 = vcmp.eq.f32.partialorder %v2077, 8.507059e+37
  %v2079 = vand.u32 %v2051, 2147483648
  %v2080 = vor.u32 1.1754944e-38, %v2079
  %v2081 = vsel %vm2078, %v2080, %v2076
  %v2082 = vmul.f32 1.0, %v2081
  %v2083 = vrcp.pop %v2052
  %v2084 = vmul.f32 %v2052, %v2083
  %v2085 = vsub.f32 1.0, %v2084
  %v2086 = vmul.f32 %v2083, %v2085
  %v2087 = vadd.f32 %v2083, %v2086
  %vm2088 = vweird.f32 %v2052
  %vm2089 = vweird.f32 %v2083
  %vm2090 = vmor %vm2088, %vm2089
  %v2091 = vsel %vm2090, %v2083, %v2087
  %v2092 = vand.u32 2147483647, %v2052
  %vm2093 = vcmp.eq.f32.partialorder %v2092, 8.507059e+37
  %v2094 = vand.u32 %v2052, 2147483648
  %v2095 = vor.u32 1.1754944e-38, %v2094
  %v2096 = vsel %vm2093, %v2095, %v2091
  %v2097 = vmul.f32 1.0, %v2096
  %v2098 = vtanh.pop %v2040
  %v2099 = vmul.f32 %v2082, %v1975
  %v2100 = vmul.f32 %v2067, %v2098
  %v2101 = vadd.f32 %v2099, %v2100
  %v2102 = vtanh.pop %v2101
  %v2103 = vmul.f32 %v2097, %v2102
  %v2104 = vmax.f32 %v2103, 0.0
  %2105 = vst [vmem:[#allocation3 + $0x50] sm:$0xff] %v2104
  %v2106 = vpack.c.bf16 %v2103, %v2103
  %v2107 = vld [vmem:[#allocation2 + $0x160] sm:$0xff]
  %v2108 = vld [vmem:[#allocation2 + $0x168] sm:$0xff]
  %v2109 = vld [vmem:[#allocation2 + $0x170] sm:$0xff]
  %v2110 = vld [vmem:[#allocation2 + $0x178] sm:$0xff]
  %2111 = vmatpush.bf16.msra.mxu0 %v689
  %2112 = vmatpush.bf16.msra.mxu0 %v685
  %2113 = vmatpush.bf16.msra.mxu0 %v681
  %2114 = vmatpush.bf16.msra.mxu0 %v677
  %2115 = vmatpush.bf16.msra.mxu0 %v673
  %2116 = vmatpush.bf16.msra.mxu0 %v669
  %2117 = vmatpush.bf16.msra.mxu0 %v665
  %2118 = vmatpush.bf16.msra.mxu0 %v661
  %2119 = vmatmul.bf16.gmra.mxu0 %v2106
  %v2120 = vpop.f32.mrf.mxu0
  %v2121 = vadd.f32 0.0, %v2120
  %v2122 = vpop.f32.mrf.mxu0
  %2123 = vdwg.mxu0
  %2124 = vmatpush.bf16.msra.mxu0 %v690
  %2125 = vmatpush.bf16.msra.mxu0 %v686
  %2126 = vmatpush.bf16.msra.mxu0 %v682
  %2127 = vmatpush.bf16.msra.mxu0 %v678
  %2128 = vmatpush.bf16.msra.mxu0 %v674
  %2129 = vmatpush.bf16.msra.mxu0 %v670
  %2130 = vmatpush.bf16.msra.mxu0 %v666
  %2131 = vmatpush.bf16.msra.mxu0 %v662
  %2132 = vmatmul.bf16.gmra.mxu0 %v2106
  %v2133 = vpop.f32.mrf.mxu0
  %v2134 = vadd.f32 0.0, %v2133
  %v2135 = vpop.f32.mrf.mxu0
  %2136 = vdwg.mxu0
  %2137 = vmatpush.bf16.msra.mxu0 %v691
  %2138 = vmatpush.bf16.msra.mxu0 %v687
  %2139 = vmatpush.bf16.msra.mxu0 %v683
  %2140 = vmatpush.bf16.msra.mxu0 %v679
  %2141 = vmatpush.bf16.msra.mxu0 %v675
  %2142 = vmatpush.bf16.msra.mxu0 %v671
  %2143 = vmatpush.bf16.msra.mxu0 %v667
  %2144 = vmatpush.bf16.msra.mxu0 %v663
  %2145 = vmatmul.bf16.gmra.mxu0 %v2106
  %v2146 = vpop.f32.mrf.mxu0
  %v2147 = vadd.f32 0.0, %v2146
  %v2148 = vpop.f32.mrf.mxu0
  %2149 = vdwg.mxu0
  %2150 = vmatpush.bf16.msra.mxu0 %v692
  %2151 = vmatpush.bf16.msra.mxu0 %v688
  %2152 = vmatpush.bf16.msra.mxu0 %v684
  %2153 = vmatpush.bf16.msra.mxu0 %v680
  %2154 = vmatpush.bf16.msra.mxu0 %v676
  %2155 = vmatpush.bf16.msra.mxu0 %v672
  %2156 = vmatpush.bf16.msra.mxu0 %v668
  %2157 = vmatpush.bf16.msra.mxu0 %v664
  %2158 = vmatmul.bf16.gmra.mxu0 %v2106
  %v2159 = vpop.f32.mrf.mxu0
  %v2160 = vadd.f32 0.0, %v2159
  %v2161 = vpop.f32.mrf.mxu0
  %2162 = vdwg.mxu0
  %v2163 = vadd.f32 %v2107, %v2121
  %v2164 = vadd.f32 %v2108, %v2134
  %v2165 = vadd.f32 %v2109, %v2147
  %v2166 = vadd.f32 %v2110, %v2160
  %v2167 = vxor.u32 %v2163, 2147483648
  %v2168 = vxor.u32 %v2164, 2147483648
  %v2169 = vxor.u32 %v2165, 2147483648
  %v2170 = vmul.f32 %v2167, 1.442695
  %v2171 = vpow.pop %v2170
  %v2172 = vmul.f32 %v2168, 1.442695
  %v2173 = vpow.pop %v2172
  %v2174 = vmul.f32 %v2169, 1.442695
  %v2175 = vpow.pop %v2174
  %v2176 = vadd.f32 %v2171, 1.0
  %v2177 = vadd.f32 %v2173, 1.0
  %v2178 = vadd.f32 %v2175, 1.0
  %v2179 = vrcp.pop %v2176
  %v2180 = vmul.f32 %v2176, %v2179
  %v2181 = vsub.f32 1.0, %v2180
  %v2182 = vmul.f32 %v2179, %v2181
  %v2183 = vadd.f32 %v2179, %v2182
  %vm2184 = vweird.f32 %v2176
  %vm2185 = vweird.f32 %v2179
  %vm2186 = vmor %vm2184, %vm2185
  %v2187 = vsel %vm2186, %v2179, %v2183
  %v2188 = vand.u32 2147483647, %v2176
  %vm2189 = vcmp.eq.f32.partialorder %v2188, 8.507059e+37
  %v2190 = vand.u32 %v2176, 2147483648
  %v2191 = vor.u32 1.1754944e-38, %v2190
  %v2192 = vsel %vm2189, %v2191, %v2187
  %v2193 = vmul.f32 1.0, %v2192
  %v2194 = vrcp.pop %v2177
  %v2195 = vmul.f32 %v2177, %v2194
  %v2196 = vsub.f32 1.0, %v2195
  %v2197 = vmul.f32 %v2194, %v2196
  %v2198 = vadd.f32 %v2194, %v2197
  %vm2199 = vweird.f32 %v2177
  %vm2200 = vweird.f32 %v2194
  %vm2201 = vmor %vm2199, %vm2200
  %v2202 = vsel %vm2201, %v2194, %v2198
  %v2203 = vand.u32 2147483647, %v2177
  %vm2204 = vcmp.eq.f32.partialorder %v2203, 8.507059e+37
  %v2205 = vand.u32 %v2177, 2147483648
  %v2206 = vor.u32 1.1754944e-38, %v2205
  %v2207 = vsel %vm2204, %v2206, %v2202
  %v2208 = vmul.f32 1.0, %v2207
  %v2209 = vrcp.pop %v2178
  %v2210 = vmul.f32 %v2178, %v2209
  %v2211 = vsub.f32 1.0, %v2210
  %v2212 = vmul.f32 %v2209, %v2211
  %v2213 = vadd.f32 %v2209, %v2212
  %vm2214 = vweird.f32 %v2178
  %vm2215 = vweird.f32 %v2209
  %vm2216 = vmor %vm2214, %vm2215
  %v2217 = vsel %vm2216, %v2209, %v2213
  %v2218 = vand.u32 2147483647, %v2178
  %vm2219 = vcmp.eq.f32.partialorder %v2218, 8.507059e+37
  %v2220 = vand.u32 %v2178, 2147483648
  %v2221 = vor.u32 1.1754944e-38, %v2220
  %v2222 = vsel %vm2219, %v2221, %v2217
  %v2223 = vmul.f32 1.0, %v2222
  %v2224 = vtanh.pop %v2166
  %v2225 = vmul.f32 %v2208, %v2101
  %v2226 = vmul.f32 %v2193, %v2224
  %v2227 = vadd.f32 %v2225, %v2226
  %v2228 = vtanh.pop %v2227
  %v2229 = vmul.f32 %v2223, %v2228
  %v2230 = vmax.f32 %v2229, 0.0
  %2231 = vst [vmem:[#allocation3 + $0x58] sm:$0xff] %v2230
  %v2232 = vpack.c.bf16 %v2229, %v2229
  %v2233 = vld [vmem:[#allocation2 + $0x180] sm:$0xff]
  %v2234 = vld [vmem:[#allocation2 + $0x188] sm:$0xff]
  %v2235 = vld [vmem:[#allocation2 + $0x190] sm:$0xff]
  %v2236 = vld [vmem:[#allocation2 + $0x198] sm:$0xff]
  %2237 = vmatpush.bf16.msra.mxu0 %v689
  %2238 = vmatpush.bf16.msra.mxu0 %v685
  %2239 = vmatpush.bf16.msra.mxu0 %v681
  %2240 = vmatpush.bf16.msra.mxu0 %v677
  %2241 = vmatpush.bf16.msra.mxu0 %v673
  %2242 = vmatpush.bf16.msra.mxu0 %v669
  %2243 = vmatpush.bf16.msra.mxu0 %v665
  %2244 = vmatpush.bf16.msra.mxu0 %v661
  %2245 = vmatmul.bf16.gmra.mxu0 %v2232
  %v2246 = vpop.f32.mrf.mxu0
  %v2247 = vadd.f32 0.0, %v2246
  %v2248 = vpop.f32.mrf.mxu0
  %2249 = vdwg.mxu0
  %2250 = vmatpush.bf16.msra.mxu0 %v690
  %2251 = vmatpush.bf16.msra.mxu0 %v686
  %2252 = vmatpush.bf16.msra.mxu0 %v682
  %2253 = vmatpush.bf16.msra.mxu0 %v678
  %2254 = vmatpush.bf16.msra.mxu0 %v674
  %2255 = vmatpush.bf16.msra.mxu0 %v670
  %2256 = vmatpush.bf16.msra.mxu0 %v666
  %2257 = vmatpush.bf16.msra.mxu0 %v662
  %2258 = vmatmul.bf16.gmra.mxu0 %v2232
  %v2259 = vpop.f32.mrf.mxu0
  %v2260 = vadd.f32 0.0, %v2259
  %v2261 = vpop.f32.mrf.mxu0
  %2262 = vdwg.mxu0
  %2263 = vmatpush.bf16.msra.mxu0 %v691
  %2264 = vmatpush.bf16.msra.mxu0 %v687
  %2265 = vmatpush.bf16.msra.mxu0 %v683
  %2266 = vmatpush.bf16.msra.mxu0 %v679
  %2267 = vmatpush.bf16.msra.mxu0 %v675
  %2268 = vmatpush.bf16.msra.mxu0 %v671
  %2269 = vmatpush.bf16.msra.mxu0 %v667
  %2270 = vmatpush.bf16.msra.mxu0 %v663
  %2271 = vmatmul.bf16.gmra.mxu0 %v2232
  %v2272 = vpop.f32.mrf.mxu0
  %v2273 = vadd.f32 0.0, %v2272
  %v2274 = vpop.f32.mrf.mxu0
  %2275 = vdwg.mxu0
  %2276 = vmatpush.bf16.msra.mxu0 %v692
  %2277 = vmatpush.bf16.msra.mxu0 %v688
  %2278 = vmatpush.bf16.msra.mxu0 %v684
  %2279 = vmatpush.bf16.msra.mxu0 %v680
  %2280 = vmatpush.bf16.msra.mxu0 %v676
  %2281 = vmatpush.bf16.msra.mxu0 %v672
  %2282 = vmatpush.bf16.msra.mxu0 %v668
  %2283 = vmatpush.bf16.msra.mxu0 %v664
  %2284 = vmatmul.bf16.gmra.mxu0 %v2232
  %v2285 = vpop.f32.mrf.mxu0
  %v2286 = vadd.f32 0.0, %v2285
  %v2287 = vpop.f32.mrf.mxu0
  %2288 = vdwg.mxu0
  %v2289 = vadd.f32 %v2233, %v2247
  %v2290 = vadd.f32 %v2234, %v2260
  %v2291 = vadd.f32 %v2235, %v2273
  %v2292 = vadd.f32 %v2236, %v2286
  %v2293 = vxor.u32 %v2289, 2147483648
  %v2294 = vxor.u32 %v2290, 2147483648
  %v2295 = vxor.u32 %v2291, 2147483648
  %v2296 = vmul.f32 %v2293, 1.442695
  %v2297 = vpow.pop %v2296
  %v2298 = vmul.f32 %v2294, 1.442695
  %v2299 = vpow.pop %v2298
  %v2300 = vmul.f32 %v2295, 1.442695
  %v2301 = vpow.pop %v2300
  %v2302 = vadd.f32 %v2297, 1.0
  %v2303 = vadd.f32 %v2299, 1.0
  %v2304 = vadd.f32 %v2301, 1.0
  %v2305 = vrcp.pop %v2302
  %v2306 = vmul.f32 %v2302, %v2305
  %v2307 = vsub.f32 1.0, %v2306
  %v2308 = vmul.f32 %v2305, %v2307
  %v2309 = vadd.f32 %v2305, %v2308
  %vm2310 = vweird.f32 %v2302
  %vm2311 = vweird.f32 %v2305
  %vm2312 = vmor %vm2310, %vm2311
  %v2313 = vsel %vm2312, %v2305, %v2309
  %v2314 = vand.u32 2147483647, %v2302
  %vm2315 = vcmp.eq.f32.partialorder %v2314, 8.507059e+37
  %v2316 = vand.u32 %v2302, 2147483648
  %v2317 = vor.u32 1.1754944e-38, %v2316
  %v2318 = vsel %vm2315, %v2317, %v2313
  %v2319 = vmul.f32 1.0, %v2318
  %v2320 = vrcp.pop %v2303
  %v2321 = vmul.f32 %v2303, %v2320
  %v2322 = vsub.f32 1.0, %v2321
  %v2323 = vmul.f32 %v2320, %v2322
  %v2324 = vadd.f32 %v2320, %v2323
  %vm2325 = vweird.f32 %v2303
  %vm2326 = vweird.f32 %v2320
  %vm2327 = vmor %vm2325, %vm2326
  %v2328 = vsel %vm2327, %v2320, %v2324
  %v2329 = vand.u32 2147483647, %v2303
  %vm2330 = vcmp.eq.f32.partialorder %v2329, 8.507059e+37
  %v2331 = vand.u32 %v2303, 2147483648
  %v2332 = vor.u32 1.1754944e-38, %v2331
  %v2333 = vsel %vm2330, %v2332, %v2328
  %v2334 = vmul.f32 1.0, %v2333
  %v2335 = vrcp.pop %v2304
  %v2336 = vmul.f32 %v2304, %v2335
  %v2337 = vsub.f32 1.0, %v2336
  %v2338 = vmul.f32 %v2335, %v2337
  %v2339 = vadd.f32 %v2335, %v2338
  %vm2340 = vweird.f32 %v2304
  %vm2341 = vweird.f32 %v2335
  %vm2342 = vmor %vm2340, %vm2341
  %v2343 = vsel %vm2342, %v2335, %v2339
  %v2344 = vand.u32 2147483647, %v2304
  %vm2345 = vcmp.eq.f32.partialorder %v2344, 8.507059e+37
  %v2346 = vand.u32 %v2304, 2147483648
  %v2347 = vor.u32 1.1754944e-38, %v2346
  %v2348 = vsel %vm2345, %v2347, %v2343
  %v2349 = vmul.f32 1.0, %v2348
  %v2350 = vtanh.pop %v2292
  %v2351 = vmul.f32 %v2334, %v2227
  %v2352 = vmul.f32 %v2319, %v2350
  %v2353 = vadd.f32 %v2351, %v2352
  %v2354 = vtanh.pop %v2353
  %v2355 = vmul.f32 %v2349, %v2354
  %v2356 = vmax.f32 %v2355, 0.0
  %2357 = vst [vmem:[#allocation3 + $0x60] sm:$0xff] %v2356
  %v2358 = vpack.c.bf16 %v2355, %v2355
  %v2359 = vld [vmem:[#allocation2 + $0x1a0] sm:$0xff]
  %v2360 = vld [vmem:[#allocation2 + $0x1a8] sm:$0xff]
  %v2361 = vld [vmem:[#allocation2 + $0x1b0] sm:$0xff]
  %v2362 = vld [vmem:[#allocation2 + $0x1b8] sm:$0xff]
  %2363 = vmatpush.bf16.msra.mxu0 %v689
  %2364 = vmatpush.bf16.msra.mxu0 %v685
  %2365 = vmatpush.bf16.msra.mxu0 %v681
  %2366 = vmatpush.bf16.msra.mxu0 %v677
  %2367 = vmatpush.bf16.msra.mxu0 %v673
  %2368 = vmatpush.bf16.msra.mxu0 %v669
  %2369 = vmatpush.bf16.msra.mxu0 %v665
  %2370 = vmatpush.bf16.msra.mxu0 %v661
  %2371 = vmatmul.bf16.gmra.mxu0 %v2358
  %v2372 = vpop.f32.mrf.mxu0
  %v2373 = vadd.f32 0.0, %v2372
  %v2374 = vpop.f32.mrf.mxu0
  %2375 = vdwg.mxu0
  %2376 = vmatpush.bf16.msra.mxu0 %v690
  %2377 = vmatpush.bf16.msra.mxu0 %v686
  %2378 = vmatpush.bf16.msra.mxu0 %v682
  %2379 = vmatpush.bf16.msra.mxu0 %v678
  %2380 = vmatpush.bf16.msra.mxu0 %v674
  %2381 = vmatpush.bf16.msra.mxu0 %v670
  %2382 = vmatpush.bf16.msra.mxu0 %v666
  %2383 = vmatpush.bf16.msra.mxu0 %v662
  %2384 = vmatmul.bf16.gmra.mxu0 %v2358
  %v2385 = vpop.f32.mrf.mxu0
  %v2386 = vadd.f32 0.0, %v2385
  %v2387 = vpop.f32.mrf.mxu0
  %2388 = vdwg.mxu0
  %2389 = vmatpush.bf16.msra.mxu0 %v691
  %2390 = vmatpush.bf16.msra.mxu0 %v687
  %2391 = vmatpush.bf16.msra.mxu0 %v683
  %2392 = vmatpush.bf16.msra.mxu0 %v679
  %2393 = vmatpush.bf16.msra.mxu0 %v675
  %2394 = vmatpush.bf16.msra.mxu0 %v671
  %2395 = vmatpush.bf16.msra.mxu0 %v667
  %2396 = vmatpush.bf16.msra.mxu0 %v663
  %2397 = vmatmul.bf16.gmra.mxu0 %v2358
  %v2398 = vpop.f32.mrf.mxu0
  %v2399 = vadd.f32 0.0, %v2398
  %v2400 = vpop.f32.mrf.mxu0
  %2401 = vdwg.mxu0
  %2402 = vmatpush.bf16.msra.mxu0 %v692
  %2403 = vmatpush.bf16.msra.mxu0 %v688
  %2404 = vmatpush.bf16.msra.mxu0 %v684
  %2405 = vmatpush.bf16.msra.mxu0 %v680
  %2406 = vmatpush.bf16.msra.mxu0 %v676
  %2407 = vmatpush.bf16.msra.mxu0 %v672
  %2408 = vmatpush.bf16.msra.mxu0 %v668
  %2409 = vmatpush.bf16.msra.mxu0 %v664
  %2410 = vmatmul.bf16.gmra.mxu0 %v2358
  %v2411 = vpop.f32.mrf.mxu0
  %v2412 = vadd.f32 0.0, %v2411
  %v2413 = vpop.f32.mrf.mxu0
  %2414 = vdwg.mxu0
  %v2415 = vadd.f32 %v2359, %v2373
  %v2416 = vadd.f32 %v2360, %v2386
  %v2417 = vadd.f32 %v2361, %v2399
  %v2418 = vadd.f32 %v2362, %v2412
  %v2419 = vxor.u32 %v2415, 2147483648
  %v2420 = vxor.u32 %v2416, 2147483648
  %v2421 = vxor.u32 %v2417, 2147483648
  %v2422 = vmul.f32 %v2419, 1.442695
  %v2423 = vpow.pop %v2422
  %v2424 = vmul.f32 %v2420, 1.442695
  %v2425 = vpow.pop %v2424
  %v2426 = vmul.f32 %v2421, 1.442695
  %v2427 = vpow.pop %v2426
  %v2428 = vadd.f32 %v2423, 1.0
  %v2429 = vadd.f32 %v2425, 1.0
  %v2430 = vadd.f32 %v2427, 1.0
  %v2431 = vrcp.pop %v2428
  %v2432 = vmul.f32 %v2428, %v2431
  %v2433 = vsub.f32 1.0, %v2432
  %v2434 = vmul.f32 %v2431, %v2433
  %v2435 = vadd.f32 %v2431, %v2434
  %vm2436 = vweird.f32 %v2428
  %vm2437 = vweird.f32 %v2431
  %vm2438 = vmor %vm2436, %vm2437
  %v2439 = vsel %vm2438, %v2431, %v2435
  %v2440 = vand.u32 2147483647, %v2428
  %vm2441 = vcmp.eq.f32.partialorder %v2440, 8.507059e+37
  %v2442 = vand.u32 %v2428, 2147483648
  %v2443 = vor.u32 1.1754944e-38, %v2442
  %v2444 = vsel %vm2441, %v2443, %v2439
  %v2445 = vmul.f32 1.0, %v2444
  %v2446 = vrcp.pop %v2429
  %v2447 = vmul.f32 %v2429, %v2446
  %v2448 = vsub.f32 1.0, %v2447
  %v2449 = vmul.f32 %v2446, %v2448
  %v2450 = vadd.f32 %v2446, %v2449
  %vm2451 = vweird.f32 %v2429
  %vm2452 = vweird.f32 %v2446
  %vm2453 = vmor %vm2451, %vm2452
  %v2454 = vsel %vm2453, %v2446, %v2450
  %v2455 = vand.u32 2147483647, %v2429
  %vm2456 = vcmp.eq.f32.partialorder %v2455, 8.507059e+37
  %v2457 = vand.u32 %v2429, 2147483648
  %v2458 = vor.u32 1.1754944e-38, %v2457
  %v2459 = vsel %vm2456, %v2458, %v2454
  %v2460 = vmul.f32 1.0, %v2459
  %v2461 = vrcp.pop %v2430
  %v2462 = vmul.f32 %v2430, %v2461
  %v2463 = vsub.f32 1.0, %v2462
  %v2464 = vmul.f32 %v2461, %v2463
  %v2465 = vadd.f32 %v2461, %v2464
  %vm2466 = vweird.f32 %v2430
  %vm2467 = vweird.f32 %v2461
  %vm2468 = vmor %vm2466, %vm2467
  %v2469 = vsel %vm2468, %v2461, %v2465
  %v2470 = vand.u32 2147483647, %v2430
  %vm2471 = vcmp.eq.f32.partialorder %v2470, 8.507059e+37
  %v2472 = vand.u32 %v2430, 2147483648
  %v2473 = vor.u32 1.1754944e-38, %v2472
  %v2474 = vsel %vm2471, %v2473, %v2469
  %v2475 = vmul.f32 1.0, %v2474
  %v2476 = vtanh.pop %v2418
  %v2477 = vmul.f32 %v2460, %v2353
  %v2478 = vmul.f32 %v2445, %v2476
  %v2479 = vadd.f32 %v2477, %v2478
  %v2480 = vtanh.pop %v2479
  %v2481 = vmul.f32 %v2475, %v2480
  %v2482 = vmax.f32 %v2481, 0.0
  %2483 = vst [vmem:[#allocation3 + $0x68] sm:$0xff] %v2482
  %v2484 = vpack.c.bf16 %v2481, %v2481
  %v2485 = vld [vmem:[#allocation2 + $0x1c0] sm:$0xff]
  %v2486 = vld [vmem:[#allocation2 + $0x1c8] sm:$0xff]
  %v2487 = vld [vmem:[#allocation2 + $0x1d0] sm:$0xff]
  %v2488 = vld [vmem:[#allocation2 + $0x1d8] sm:$0xff]
  %2489 = vmatpush.bf16.msra.mxu0 %v689
  %2490 = vmatpush.bf16.msra.mxu0 %v685
  %2491 = vmatpush.bf16.msra.mxu0 %v681
  %2492 = vmatpush.bf16.msra.mxu0 %v677
  %2493 = vmatpush.bf16.msra.mxu0 %v673
  %2494 = vmatpush.bf16.msra.mxu0 %v669
  %2495 = vmatpush.bf16.msra.mxu0 %v665
  %2496 = vmatpush.bf16.msra.mxu0 %v661
  %2497 = vmatmul.bf16.gmra.mxu0 %v2484
  %v2498 = vpop.f32.mrf.mxu0
  %v2499 = vadd.f32 0.0, %v2498
  %v2500 = vpop.f32.mrf.mxu0
  %2501 = vdwg.mxu0
  %2502 = vmatpush.bf16.msra.mxu0 %v690
  %2503 = vmatpush.bf16.msra.mxu0 %v686
  %2504 = vmatpush.bf16.msra.mxu0 %v682
  %2505 = vmatpush.bf16.msra.mxu0 %v678
  %2506 = vmatpush.bf16.msra.mxu0 %v674
  %2507 = vmatpush.bf16.msra.mxu0 %v670
  %2508 = vmatpush.bf16.msra.mxu0 %v666
  %2509 = vmatpush.bf16.msra.mxu0 %v662
  %2510 = vmatmul.bf16.gmra.mxu0 %v2484
  %v2511 = vpop.f32.mrf.mxu0
  %v2512 = vadd.f32 0.0, %v2511
  %v2513 = vpop.f32.mrf.mxu0
  %2514 = vdwg.mxu0
  %2515 = vmatpush.bf16.msra.mxu0 %v691
  %2516 = vmatpush.bf16.msra.mxu0 %v687
  %2517 = vmatpush.bf16.msra.mxu0 %v683
  %2518 = vmatpush.bf16.msra.mxu0 %v679
  %2519 = vmatpush.bf16.msra.mxu0 %v675
  %2520 = vmatpush.bf16.msra.mxu0 %v671
  %2521 = vmatpush.bf16.msra.mxu0 %v667
  %2522 = vmatpush.bf16.msra.mxu0 %v663
  %2523 = vmatmul.bf16.gmra.mxu0 %v2484
  %v2524 = vpop.f32.mrf.mxu0
  %v2525 = vadd.f32 0.0, %v2524
  %v2526 = vpop.f32.mrf.mxu0
  %2527 = vdwg.mxu0
  %2528 = vmatpush.bf16.msra.mxu0 %v692
  %2529 = vmatpush.bf16.msra.mxu0 %v688
  %2530 = vmatpush.bf16.msra.mxu0 %v684
  %2531 = vmatpush.bf16.msra.mxu0 %v680
  %2532 = vmatpush.bf16.msra.mxu0 %v676
  %2533 = vmatpush.bf16.msra.mxu0 %v672
  %2534 = vmatpush.bf16.msra.mxu0 %v668
  %2535 = vmatpush.bf16.msra.mxu0 %v664
  %2536 = vmatmul.bf16.gmra.mxu0 %v2484
  %v2537 = vpop.f32.mrf.mxu0
  %v2538 = vadd.f32 0.0, %v2537
  %v2539 = vpop.f32.mrf.mxu0
  %2540 = vdwg.mxu0
  %v2541 = vadd.f32 %v2485, %v2499
  %v2542 = vadd.f32 %v2486, %v2512
  %v2543 = vadd.f32 %v2487, %v2525
  %v2544 = vadd.f32 %v2488, %v2538
  %v2545 = vxor.u32 %v2541, 2147483648
  %v2546 = vxor.u32 %v2542, 2147483648
  %v2547 = vxor.u32 %v2543, 2147483648
  %v2548 = vmul.f32 %v2545, 1.442695
  %v2549 = vpow.pop %v2548
  %v2550 = vmul.f32 %v2546, 1.442695
  %v2551 = vpow.pop %v2550
  %v2552 = vmul.f32 %v2547, 1.442695
  %v2553 = vpow.pop %v2552
  %v2554 = vadd.f32 %v2549, 1.0
  %v2555 = vadd.f32 %v2551, 1.0
  %v2556 = vadd.f32 %v2553, 1.0
  %v2557 = vrcp.pop %v2554
  %v2558 = vmul.f32 %v2554, %v2557
  %v2559 = vsub.f32 1.0, %v2558
  %v2560 = vmul.f32 %v2557, %v2559
  %v2561 = vadd.f32 %v2557, %v2560
  %vm2562 = vweird.f32 %v2554
  %vm2563 = vweird.f32 %v2557
  %vm2564 = vmor %vm2562, %vm2563
  %v2565 = vsel %vm2564, %v2557, %v2561
  %v2566 = vand.u32 2147483647, %v2554
  %vm2567 = vcmp.eq.f32.partialorder %v2566, 8.507059e+37
  %v2568 = vand.u32 %v2554, 2147483648
  %v2569 = vor.u32 1.1754944e-38, %v2568
  %v2570 = vsel %vm2567, %v2569, %v2565
  %v2571 = vmul.f32 1.0, %v2570
  %v2572 = vrcp.pop %v2555
  %v2573 = vmul.f32 %v2555, %v2572
  %v2574 = vsub.f32 1.0, %v2573
  %v2575 = vmul.f32 %v2572, %v2574
  %v2576 = vadd.f32 %v2572, %v2575
  %vm2577 = vweird.f32 %v2555
  %vm2578 = vweird.f32 %v2572
  %vm2579 = vmor %vm2577, %vm2578
  %v2580 = vsel %vm2579, %v2572, %v2576
  %v2581 = vand.u32 2147483647, %v2555
  %vm2582 = vcmp.eq.f32.partialorder %v2581, 8.507059e+37
  %v2583 = vand.u32 %v2555, 2147483648
  %v2584 = vor.u32 1.1754944e-38, %v2583
  %v2585 = vsel %vm2582, %v2584, %v2580
  %v2586 = vmul.f32 1.0, %v2585
  %v2587 = vrcp.pop %v2556
  %v2588 = vmul.f32 %v2556, %v2587
  %v2589 = vsub.f32 1.0, %v2588
  %v2590 = vmul.f32 %v2587, %v2589
  %v2591 = vadd.f32 %v2587, %v2590
  %vm2592 = vweird.f32 %v2556
  %vm2593 = vweird.f32 %v2587
  %vm2594 = vmor %vm2592, %vm2593
  %v2595 = vsel %vm2594, %v2587, %v2591
  %v2596 = vand.u32 2147483647, %v2556
  %vm2597 = vcmp.eq.f32.partialorder %v2596, 8.507059e+37
  %v2598 = vand.u32 %v2556, 2147483648
  %v2599 = vor.u32 1.1754944e-38, %v2598
  %v2600 = vsel %vm2597, %v2599, %v2595
  %v2601 = vmul.f32 1.0, %v2600
  %v2602 = vtanh.pop %v2544
  %v2603 = vmul.f32 %v2586, %v2479
  %v2604 = vmul.f32 %v2571, %v2602
  %v2605 = vadd.f32 %v2603, %v2604
  %v2606 = vtanh.pop %v2605
  %v2607 = vmul.f32 %v2601, %v2606
  %v2608 = vmax.f32 %v2607, 0.0
  %2609 = vst [vmem:[#allocation3 + $0x70] sm:$0xff] %v2608
  %v2610 = vpack.c.bf16 %v2607, %v2607
  %v2611 = vld [vmem:[#allocation2 + $0x1e0] sm:$0xff]
  %v2612 = vld [vmem:[#allocation2 + $0x1e8] sm:$0xff]
  %v2613 = vld [vmem:[#allocation2 + $0x1f0] sm:$0xff]
  %v2614 = vld [vmem:[#allocation2 + $0x1f8] sm:$0xff]
  %2615 = vmatpush.bf16.msra.mxu0 %v689
  %2616 = vmatpush.bf16.msra.mxu0 %v685
  %2617 = vmatpush.bf16.msra.mxu0 %v681
  %2618 = vmatpush.bf16.msra.mxu0 %v677
  %2619 = vmatpush.bf16.msra.mxu0 %v673
  %2620 = vmatpush.bf16.msra.mxu0 %v669
  %2621 = vmatpush.bf16.msra.mxu0 %v665
  %2622 = vmatpush.bf16.msra.mxu0 %v661
  %2623 = vmatmul.bf16.gmra.mxu0 %v2610
  %v2624 = vpop.f32.mrf.mxu0
  %v2625 = vadd.f32 0.0, %v2624
  %v2626 = vpop.f32.mrf.mxu0
  %2627 = vdwg.mxu0
  %2628 = vmatpush.bf16.msra.mxu0 %v690
  %2629 = vmatpush.bf16.msra.mxu0 %v686
  %2630 = vmatpush.bf16.msra.mxu0 %v682
  %2631 = vmatpush.bf16.msra.mxu0 %v678
  %2632 = vmatpush.bf16.msra.mxu0 %v674
  %2633 = vmatpush.bf16.msra.mxu0 %v670
  %2634 = vmatpush.bf16.msra.mxu0 %v666
  %2635 = vmatpush.bf16.msra.mxu0 %v662
  %2636 = vmatmul.bf16.gmra.mxu0 %v2610
  %v2637 = vpop.f32.mrf.mxu0
  %v2638 = vadd.f32 0.0, %v2637
  %v2639 = vpop.f32.mrf.mxu0
  %2640 = vdwg.mxu0
  %2641 = vmatpush.bf16.msra.mxu0 %v691
  %2642 = vmatpush.bf16.msra.mxu0 %v687
  %2643 = vmatpush.bf16.msra.mxu0 %v683
  %2644 = vmatpush.bf16.msra.mxu0 %v679
  %2645 = vmatpush.bf16.msra.mxu0 %v675
  %2646 = vmatpush.bf16.msra.mxu0 %v671
  %2647 = vmatpush.bf16.msra.mxu0 %v667
  %2648 = vmatpush.bf16.msra.mxu0 %v663
  %2649 = vmatmul.bf16.gmra.mxu0 %v2610
  %v2650 = vpop.f32.mrf.mxu0
  %v2651 = vadd.f32 0.0, %v2650
  %v2652 = vpop.f32.mrf.mxu0
  %2653 = vdwg.mxu0
  %2654 = vmatpush.bf16.msra.mxu0 %v692
  %2655 = vmatpush.bf16.msra.mxu0 %v688
  %2656 = vmatpush.bf16.msra.mxu0 %v684
  %2657 = vmatpush.bf16.msra.mxu0 %v680
  %2658 = vmatpush.bf16.msra.mxu0 %v676
  %2659 = vmatpush.bf16.msra.mxu0 %v672
  %2660 = vmatpush.bf16.msra.mxu0 %v668
  %2661 = vmatpush.bf16.msra.mxu0 %v664
  %2662 = vmatmul.bf16.gmra.mxu0 %v2610
  %v2663 = vpop.f32.mrf.mxu0
  %v2664 = vadd.f32 0.0, %v2663
  %v2665 = vpop.f32.mrf.mxu0
  %2666 = vdwg.mxu0
  %v2667 = vadd.f32 %v2611, %v2625
  %v2668 = vadd.f32 %v2612, %v2638
  %v2669 = vadd.f32 %v2613, %v2651
  %v2670 = vadd.f32 %v2614, %v2664
  %v2671 = vxor.u32 %v2667, 2147483648
  %v2672 = vxor.u32 %v2668, 2147483648
  %v2673 = vxor.u32 %v2669, 2147483648
  %v2674 = vmul.f32 %v2671, 1.442695
  %v2675 = vpow.pop %v2674
  %v2676 = vmul.f32 %v2672, 1.442695
  %v2677 = vpow.pop %v2676
  %v2678 = vmul.f32 %v2673, 1.442695
  %v2679 = vpow.pop %v2678
  %v2680 = vadd.f32 %v2675, 1.0
  %v2681 = vadd.f32 %v2677, 1.0
  %v2682 = vadd.f32 %v2679, 1.0
  %v2683 = vrcp.pop %v2680
  %v2684 = vmul.f32 %v2680, %v2683
  %v2685 = vsub.f32 1.0, %v2684
  %v2686 = vmul.f32 %v2683, %v2685
  %v2687 = vadd.f32 %v2683, %v2686
  %vm2688 = vweird.f32 %v2680
  %vm2689 = vweird.f32 %v2683
  %vm2690 = vmor %vm2688, %vm2689
  %v2691 = vsel %vm2690, %v2683, %v2687
  %v2692 = vand.u32 2147483647, %v2680
  %vm2693 = vcmp.eq.f32.partialorder %v2692, 8.507059e+37
  %v2694 = vand.u32 %v2680, 2147483648
  %v2695 = vor.u32 1.1754944e-38, %v2694
  %v2696 = vsel %vm2693, %v2695, %v2691
  %v2697 = vmul.f32 1.0, %v2696
  %v2698 = vrcp.pop %v2681
  %v2699 = vmul.f32 %v2681, %v2698
  %v2700 = vsub.f32 1.0, %v2699
  %v2701 = vmul.f32 %v2698, %v2700
  %v2702 = vadd.f32 %v2698, %v2701
  %vm2703 = vweird.f32 %v2681
  %vm2704 = vweird.f32 %v2698
  %vm2705 = vmor %vm2703, %vm2704
  %v2706 = vsel %vm2705, %v2698, %v2702
  %v2707 = vand.u32 2147483647, %v2681
  %vm2708 = vcmp.eq.f32.partialorder %v2707, 8.507059e+37
  %v2709 = vand.u32 %v2681, 2147483648
  %v2710 = vor.u32 1.1754944e-38, %v2709
  %v2711 = vsel %vm2708, %v2710, %v2706
  %v2712 = vmul.f32 1.0, %v2711
  %v2713 = vrcp.pop %v2682
  %v2714 = vmul.f32 %v2682, %v2713
  %v2715 = vsub.f32 1.0, %v2714
  %v2716 = vmul.f32 %v2713, %v2715
  %v2717 = vadd.f32 %v2713, %v2716
  %vm2718 = vweird.f32 %v2682
  %vm2719 = vweird.f32 %v2713
  %vm2720 = vmor %vm2718, %vm2719
  %v2721 = vsel %vm2720, %v2713, %v2717
  %v2722 = vand.u32 2147483647, %v2682
  %vm2723 = vcmp.eq.f32.partialorder %v2722, 8.507059e+37
  %v2724 = vand.u32 %v2682, 2147483648
  %v2725 = vor.u32 1.1754944e-38, %v2724
  %v2726 = vsel %vm2723, %v2725, %v2721
  %v2727 = vmul.f32 1.0, %v2726
  %v2728 = vtanh.pop %v2670
  %v2729 = vmul.f32 %v2712, %v2605
  %v2730 = vmul.f32 %v2697, %v2728
  %v2731 = vadd.f32 %v2729, %v2730
  %v2732 = vtanh.pop %v2731
  %v2733 = vmul.f32 %v2727, %v2732
  %v2734 = vmax.f32 %v2733, 0.0
  %2735 = vst [vmem:[#allocation3 + $0x78] sm:$0xff] %v2734
  %v2736 = vpack.c.bf16 %v2733, %v2733
  %v2737 = vld [vmem:[#allocation2 + $0x200] sm:$0xff]
  %v2738 = vld [vmem:[#allocation2 + $0x208] sm:$0xff]
  %v2739 = vld [vmem:[#allocation2 + $0x210] sm:$0xff]
  %v2740 = vld [vmem:[#allocation2 + $0x218] sm:$0xff]
  %2741 = vmatpush.bf16.msra.mxu0 %v689
  %2742 = vmatpush.bf16.msra.mxu0 %v685
  %2743 = vmatpush.bf16.msra.mxu0 %v681
  %2744 = vmatpush.bf16.msra.mxu0 %v677
  %2745 = vmatpush.bf16.msra.mxu0 %v673
  %2746 = vmatpush.bf16.msra.mxu0 %v669
  %2747 = vmatpush.bf16.msra.mxu0 %v665
  %2748 = vmatpush.bf16.msra.mxu0 %v661
  %2749 = vmatmul.bf16.gmra.mxu0 %v2736
  %v2750 = vpop.f32.mrf.mxu0
  %v2751 = vadd.f32 0.0, %v2750
  %v2752 = vpop.f32.mrf.mxu0
  %2753 = vdwg.mxu0
  %2754 = vmatpush.bf16.msra.mxu0 %v690
  %2755 = vmatpush.bf16.msra.mxu0 %v686
  %2756 = vmatpush.bf16.msra.mxu0 %v682
  %2757 = vmatpush.bf16.msra.mxu0 %v678
  %2758 = vmatpush.bf16.msra.mxu0 %v674
  %2759 = vmatpush.bf16.msra.mxu0 %v670
  %2760 = vmatpush.bf16.msra.mxu0 %v666
  %2761 = vmatpush.bf16.msra.mxu0 %v662
  %2762 = vmatmul.bf16.gmra.mxu0 %v2736
  %v2763 = vpop.f32.mrf.mxu0
  %v2764 = vadd.f32 0.0, %v2763
  %v2765 = vpop.f32.mrf.mxu0
  %2766 = vdwg.mxu0
  %2767 = vmatpush.bf16.msra.mxu0 %v691
  %2768 = vmatpush.bf16.msra.mxu0 %v687
  %2769 = vmatpush.bf16.msra.mxu0 %v683
  %2770 = vmatpush.bf16.msra.mxu0 %v679
  %2771 = vmatpush.bf16.msra.mxu0 %v675
  %2772 = vmatpush.bf16.msra.mxu0 %v671
  %2773 = vmatpush.bf16.msra.mxu0 %v667
  %2774 = vmatpush.bf16.msra.mxu0 %v663
  %2775 = vmatmul.bf16.gmra.mxu0 %v2736
  %v2776 = vpop.f32.mrf.mxu0
  %v2777 = vadd.f32 0.0, %v2776
  %v2778 = vpop.f32.mrf.mxu0
  %2779 = vdwg.mxu0
  %2780 = vmatpush.bf16.msra.mxu0 %v692
  %2781 = vmatpush.bf16.msra.mxu0 %v688
  %2782 = vmatpush.bf16.msra.mxu0 %v684
  %2783 = vmatpush.bf16.msra.mxu0 %v680
  %2784 = vmatpush.bf16.msra.mxu0 %v676
  %2785 = vmatpush.bf16.msra.mxu0 %v672
  %2786 = vmatpush.bf16.msra.mxu0 %v668
  %2787 = vmatpush.bf16.msra.mxu0 %v664
  %2788 = vmatmul.bf16.gmra.mxu0 %v2736
  %v2789 = vpop.f32.mrf.mxu0
  %v2790 = vadd.f32 0.0, %v2789
  %v2791 = vpop.f32.mrf.mxu0
  %2792 = vdwg.mxu0
  %v2793 = vadd.f32 %v2737, %v2751
  %v2794 = vadd.f32 %v2738, %v2764
  %v2795 = vadd.f32 %v2739, %v2777
  %v2796 = vadd.f32 %v2740, %v2790
  %v2797 = vxor.u32 %v2793, 2147483648
  %v2798 = vxor.u32 %v2794, 2147483648
  %v2799 = vxor.u32 %v2795, 2147483648
  %v2800 = vmul.f32 %v2797, 1.442695
  %v2801 = vpow.pop %v2800
  %v2802 = vmul.f32 %v2798, 1.442695
  %v2803 = vpow.pop %v2802
  %v2804 = vmul.f32 %v2799, 1.442695
  %v2805 = vpow.pop %v2804
  %v2806 = vadd.f32 %v2801, 1.0
  %v2807 = vadd.f32 %v2803, 1.0
  %v2808 = vadd.f32 %v2805, 1.0
  %v2809 = vrcp.pop %v2806
  %v2810 = vmul.f32 %v2806, %v2809
  %v2811 = vsub.f32 1.0, %v2810
  %v2812 = vmul.f32 %v2809, %v2811
  %v2813 = vadd.f32 %v2809, %v2812
  %vm2814 = vweird.f32 %v2806
  %vm2815 = vweird.f32 %v2809
  %vm2816 = vmor %vm2814, %vm2815
  %v2817 = vsel %vm2816, %v2809, %v2813
  %v2818 = vand.u32 2147483647, %v2806
  %vm2819 = vcmp.eq.f32.partialorder %v2818, 8.507059e+37
  %v2820 = vand.u32 %v2806, 2147483648
  %v2821 = vor.u32 1.1754944e-38, %v2820
  %v2822 = vsel %vm2819, %v2821, %v2817
  %v2823 = vmul.f32 1.0, %v2822
  %v2824 = vrcp.pop %v2807
  %v2825 = vmul.f32 %v2807, %v2824
  %v2826 = vsub.f32 1.0, %v2825
  %v2827 = vmul.f32 %v2824, %v2826
  %v2828 = vadd.f32 %v2824, %v2827
  %vm2829 = vweird.f32 %v2807
  %vm2830 = vweird.f32 %v2824
  %vm2831 = vmor %vm2829, %vm2830
  %v2832 = vsel %vm2831, %v2824, %v2828
  %v2833 = vand.u32 2147483647, %v2807
  %vm2834 = vcmp.eq.f32.partialorder %v2833, 8.507059e+37
  %v2835 = vand.u32 %v2807, 2147483648
  %v2836 = vor.u32 1.1754944e-38, %v2835
  %v2837 = vsel %vm2834, %v2836, %v2832
  %v2838 = vmul.f32 1.0, %v2837
  %v2839 = vrcp.pop %v2808
  %v2840 = vmul.f32 %v2808, %v2839
  %v2841 = vsub.f32 1.0, %v2840
  %v2842 = vmul.f32 %v2839, %v2841
  %v2843 = vadd.f32 %v2839, %v2842
  %vm2844 = vweird.f32 %v2808
  %vm2845 = vweird.f32 %v2839
  %vm2846 = vmor %vm2844, %vm2845
  %v2847 = vsel %vm2846, %v2839, %v2843
  %v2848 = vand.u32 2147483647, %v2808
  %vm2849 = vcmp.eq.f32.partialorder %v2848, 8.507059e+37
  %v2850 = vand.u32 %v2808, 2147483648
  %v2851 = vor.u32 1.1754944e-38, %v2850
  %v2852 = vsel %vm2849, %v2851, %v2847
  %v2853 = vmul.f32 1.0, %v2852
  %v2854 = vtanh.pop %v2796
  %v2855 = vmul.f32 %v2838, %v2731
  %v2856 = vmul.f32 %v2823, %v2854
  %v2857 = vadd.f32 %v2855, %v2856
  %v2858 = vtanh.pop %v2857
  %v2859 = vmul.f32 %v2853, %v2858
  %v2860 = vmax.f32 %v2859, 0.0
  %2861 = vst [vmem:[#allocation3 + $0x80] sm:$0xff] %v2860
  %v2862 = vpack.c.bf16 %v2859, %v2859
  %v2863 = vld [vmem:[#allocation2 + $0x220] sm:$0xff]
  %v2864 = vld [vmem:[#allocation2 + $0x228] sm:$0xff]
  %v2865 = vld [vmem:[#allocation2 + $0x230] sm:$0xff]
  %v2866 = vld [vmem:[#allocation2 + $0x238] sm:$0xff]
  %2867 = vmatpush.bf16.msra.mxu0 %v689
  %2868 = vmatpush.bf16.msra.mxu0 %v685
  %2869 = vmatpush.bf16.msra.mxu0 %v681
  %2870 = vmatpush.bf16.msra.mxu0 %v677
  %2871 = vmatpush.bf16.msra.mxu0 %v673
  %2872 = vmatpush.bf16.msra.mxu0 %v669
  %2873 = vmatpush.bf16.msra.mxu0 %v665
  %2874 = vmatpush.bf16.msra.mxu0 %v661
  %2875 = vmatmul.bf16.gmra.mxu0 %v2862
  %v2876 = vpop.f32.mrf.mxu0
  %v2877 = vadd.f32 0.0, %v2876
  %v2878 = vpop.f32.mrf.mxu0
  %2879 = vdwg.mxu0
  %2880 = vmatpush.bf16.msra.mxu0 %v690
  %2881 = vmatpush.bf16.msra.mxu0 %v686
  %2882 = vmatpush.bf16.msra.mxu0 %v682
  %2883 = vmatpush.bf16.msra.mxu0 %v678
  %2884 = vmatpush.bf16.msra.mxu0 %v674
  %2885 = vmatpush.bf16.msra.mxu0 %v670
  %2886 = vmatpush.bf16.msra.mxu0 %v666
  %2887 = vmatpush.bf16.msra.mxu0 %v662
  %2888 = vmatmul.bf16.gmra.mxu0 %v2862
  %v2889 = vpop.f32.mrf.mxu0
  %v2890 = vadd.f32 0.0, %v2889
  %v2891 = vpop.f32.mrf.mxu0
  %2892 = vdwg.mxu0
  %2893 = vmatpush.bf16.msra.mxu0 %v691
  %2894 = vmatpush.bf16.msra.mxu0 %v687
  %2895 = vmatpush.bf16.msra.mxu0 %v683
  %2896 = vmatpush.bf16.msra.mxu0 %v679
  %2897 = vmatpush.bf16.msra.mxu0 %v675
  %2898 = vmatpush.bf16.msra.mxu0 %v671
  %2899 = vmatpush.bf16.msra.mxu0 %v667
  %2900 = vmatpush.bf16.msra.mxu0 %v663
  %2901 = vmatmul.bf16.gmra.mxu0 %v2862
  %v2902 = vpop.f32.mrf.mxu0
  %v2903 = vadd.f32 0.0, %v2902
  %v2904 = vpop.f32.mrf.mxu0
  %2905 = vdwg.mxu0
  %2906 = vmatpush.bf16.msra.mxu0 %v692
  %2907 = vmatpush.bf16.msra.mxu0 %v688
  %2908 = vmatpush.bf16.msra.mxu0 %v684
  %2909 = vmatpush.bf16.msra.mxu0 %v680
  %2910 = vmatpush.bf16.msra.mxu0 %v676
  %2911 = vmatpush.bf16.msra.mxu0 %v672
  %2912 = vmatpush.bf16.msra.mxu0 %v668
  %2913 = vmatpush.bf16.msra.mxu0 %v664
  %2914 = vmatmul.bf16.gmra.mxu0 %v2862
  %v2915 = vpop.f32.mrf.mxu0
  %v2916 = vadd.f32 0.0, %v2915
  %v2917 = vpop.f32.mrf.mxu0
  %2918 = vdwg.mxu0
  %v2919 = vadd.f32 %v2863, %v2877
  %v2920 = vadd.f32 %v2864, %v2890
  %v2921 = vadd.f32 %v2865, %v2903
  %v2922 = vadd.f32 %v2866, %v2916
  %v2923 = vxor.u32 %v2919, 2147483648
  %v2924 = vxor.u32 %v2920, 2147483648
  %v2925 = vxor.u32 %v2921, 2147483648
  %v2926 = vmul.f32 %v2923, 1.442695
  %v2927 = vpow.pop %v2926
  %v2928 = vmul.f32 %v2924, 1.442695
  %v2929 = vpow.pop %v2928
  %v2930 = vmul.f32 %v2925, 1.442695
  %v2931 = vpow.pop %v2930
  %v2932 = vadd.f32 %v2927, 1.0
  %v2933 = vadd.f32 %v2929, 1.0
  %v2934 = vadd.f32 %v2931, 1.0
  %v2935 = vrcp.pop %v2932
  %v2936 = vmul.f32 %v2932, %v2935
  %v2937 = vsub.f32 1.0, %v2936
  %v2938 = vmul.f32 %v2935, %v2937
  %v2939 = vadd.f32 %v2935, %v2938
  %vm2940 = vweird.f32 %v2932
  %vm2941 = vweird.f32 %v2935
  %vm2942 = vmor %vm2940, %vm2941
  %v2943 = vsel %vm2942, %v2935, %v2939
  %v2944 = vand.u32 2147483647, %v2932
  %vm2945 = vcmp.eq.f32.partialorder %v2944, 8.507059e+37
  %v2946 = vand.u32 %v2932, 2147483648
  %v2947 = vor.u32 1.1754944e-38, %v2946
  %v2948 = vsel %vm2945, %v2947, %v2943
  %v2949 = vmul.f32 1.0, %v2948
  %v2950 = vrcp.pop %v2933
  %v2951 = vmul.f32 %v2933, %v2950
  %v2952 = vsub.f32 1.0, %v2951
  %v2953 = vmul.f32 %v2950, %v2952
  %v2954 = vadd.f32 %v2950, %v2953
  %vm2955 = vweird.f32 %v2933
  %vm2956 = vweird.f32 %v2950
  %vm2957 = vmor %vm2955, %vm2956
  %v2958 = vsel %vm2957, %v2950, %v2954
  %v2959 = vand.u32 2147483647, %v2933
  %vm2960 = vcmp.eq.f32.partialorder %v2959, 8.507059e+37
  %v2961 = vand.u32 %v2933, 2147483648
  %v2962 = vor.u32 1.1754944e-38, %v2961
  %v2963 = vsel %vm2960, %v2962, %v2958
  %v2964 = vmul.f32 1.0, %v2963
  %v2965 = vrcp.pop %v2934
  %v2966 = vmul.f32 %v2934, %v2965
  %v2967 = vsub.f32 1.0, %v2966
  %v2968 = vmul.f32 %v2965, %v2967
  %v2969 = vadd.f32 %v2965, %v2968
  %vm2970 = vweird.f32 %v2934
  %vm2971 = vweird.f32 %v2965
  %vm2972 = vmor %vm2970, %vm2971
  %v2973 = vsel %vm2972, %v2965, %v2969
  %v2974 = vand.u32 2147483647, %v2934
  %vm2975 = vcmp.eq.f32.partialorder %v2974, 8.507059e+37
  %v2976 = vand.u32 %v2934, 2147483648
  %v2977 = vor.u32 1.1754944e-38, %v2976
  %v2978 = vsel %vm2975, %v2977, %v2973
  %v2979 = vmul.f32 1.0, %v2978
  %v2980 = vtanh.pop %v2922
  %v2981 = vmul.f32 %v2964, %v2857
  %v2982 = vmul.f32 %v2949, %v2980
  %v2983 = vadd.f32 %v2981, %v2982
  %v2984 = vtanh.pop %v2983
  %v2985 = vmul.f32 %v2979, %v2984
  %v2986 = vmax.f32 %v2985, 0.0
  %2987 = vst [vmem:[#allocation3 + $0x88] sm:$0xff] %v2986
  %v2988 = vpack.c.bf16 %v2985, %v2985
  %v2989 = vld [vmem:[#allocation2 + $0x240] sm:$0xff]
  %v2990 = vld [vmem:[#allocation2 + $0x248] sm:$0xff]
  %v2991 = vld [vmem:[#allocation2 + $0x250] sm:$0xff]
  %v2992 = vld [vmem:[#allocation2 + $0x258] sm:$0xff]
  %2993 = vmatpush.bf16.msra.mxu0 %v689
  %2994 = vmatpush.bf16.msra.mxu0 %v685
  %2995 = vmatpush.bf16.msra.mxu0 %v681
  %2996 = vmatpush.bf16.msra.mxu0 %v677
  %2997 = vmatpush.bf16.msra.mxu0 %v673
  %2998 = vmatpush.bf16.msra.mxu0 %v669
  %2999 = vmatpush.bf16.msra.mxu0 %v665
  %3000 = vmatpush.bf16.msra.mxu0 %v661
  %3001 = vmatmul.bf16.gmra.mxu0 %v2988
  %v3002 = vpop.f32.mrf.mxu0
  %v3003 = vadd.f32 0.0, %v3002
  %v3004 = vpop.f32.mrf.mxu0
  %3005 = vdwg.mxu0
  %3006 = vmatpush.bf16.msra.mxu0 %v690
  %3007 = vmatpush.bf16.msra.mxu0 %v686
  %3008 = vmatpush.bf16.msra.mxu0 %v682
  %3009 = vmatpush.bf16.msra.mxu0 %v678
  %3010 = vmatpush.bf16.msra.mxu0 %v674
  %3011 = vmatpush.bf16.msra.mxu0 %v670
  %3012 = vmatpush.bf16.msra.mxu0 %v666
  %3013 = vmatpush.bf16.msra.mxu0 %v662
  %3014 = vmatmul.bf16.gmra.mxu0 %v2988
  %v3015 = vpop.f32.mrf.mxu0
  %v3016 = vadd.f32 0.0, %v3015
  %v3017 = vpop.f32.mrf.mxu0
  %3018 = vdwg.mxu0
  %3019 = vmatpush.bf16.msra.mxu0 %v691
  %3020 = vmatpush.bf16.msra.mxu0 %v687
  %3021 = vmatpush.bf16.msra.mxu0 %v683
  %3022 = vmatpush.bf16.msra.mxu0 %v679
  %3023 = vmatpush.bf16.msra.mxu0 %v675
  %3024 = vmatpush.bf16.msra.mxu0 %v671
  %3025 = vmatpush.bf16.msra.mxu0 %v667
  %3026 = vmatpush.bf16.msra.mxu0 %v663
  %3027 = vmatmul.bf16.gmra.mxu0 %v2988
  %v3028 = vpop.f32.mrf.mxu0
  %v3029 = vadd.f32 0.0, %v3028
  %v3030 = vpop.f32.mrf.mxu0
  %3031 = vdwg.mxu0
  %3032 = vmatpush.bf16.msra.mxu0 %v692
  %3033 = vmatpush.bf16.msra.mxu0 %v688
  %3034 = vmatpush.bf16.msra.mxu0 %v684
  %3035 = vmatpush.bf16.msra.mxu0 %v680
  %3036 = vmatpush.bf16.msra.mxu0 %v676
  %3037 = vmatpush.bf16.msra.mxu0 %v672
  %3038 = vmatpush.bf16.msra.mxu0 %v668
  %3039 = vmatpush.bf16.msra.mxu0 %v664
  %3040 = vmatmul.bf16.gmra.mxu0 %v2988
  %v3041 = vpop.f32.mrf.mxu0
  %v3042 = vadd.f32 0.0, %v3041
  %v3043 = vpop.f32.mrf.mxu0
  %3044 = vdwg.mxu0
  %v3045 = vadd.f32 %v2989, %v3003
  %v3046 = vadd.f32 %v2990, %v3016
  %v3047 = vadd.f32 %v2991, %v3029
  %v3048 = vadd.f32 %v2992, %v3042
  %v3049 = vxor.u32 %v3045, 2147483648
  %v3050 = vxor.u32 %v3046, 2147483648
  %v3051 = vxor.u32 %v3047, 2147483648
  %v3052 = vmul.f32 %v3049, 1.442695
  %v3053 = vpow.pop %v3052
  %v3054 = vmul.f32 %v3050, 1.442695
  %v3055 = vpow.pop %v3054
  %v3056 = vmul.f32 %v3051, 1.442695
  %v3057 = vpow.pop %v3056
  %v3058 = vadd.f32 %v3053, 1.0
  %v3059 = vadd.f32 %v3055, 1.0
  %v3060 = vadd.f32 %v3057, 1.0
  %v3061 = vrcp.pop %v3058
  %v3062 = vmul.f32 %v3058, %v3061
  %v3063 = vsub.f32 1.0, %v3062
  %v3064 = vmul.f32 %v3061, %v3063
  %v3065 = vadd.f32 %v3061, %v3064
  %vm3066 = vweird.f32 %v3058
  %vm3067 = vweird.f32 %v3061
  %vm3068 = vmor %vm3066, %vm3067
  %v3069 = vsel %vm3068, %v3061, %v3065
  %v3070 = vand.u32 2147483647, %v3058
  %vm3071 = vcmp.eq.f32.partialorder %v3070, 8.507059e+37
  %v3072 = vand.u32 %v3058, 2147483648
  %v3073 = vor.u32 1.1754944e-38, %v3072
  %v3074 = vsel %vm3071, %v3073, %v3069
  %v3075 = vmul.f32 1.0, %v3074
  %v3076 = vrcp.pop %v3059
  %v3077 = vmul.f32 %v3059, %v3076
  %v3078 = vsub.f32 1.0, %v3077
  %v3079 = vmul.f32 %v3076, %v3078
  %v3080 = vadd.f32 %v3076, %v3079
  %vm3081 = vweird.f32 %v3059
  %vm3082 = vweird.f32 %v3076
  %vm3083 = vmor %vm3081, %vm3082
  %v3084 = vsel %vm3083, %v3076, %v3080
  %v3085 = vand.u32 2147483647, %v3059
  %vm3086 = vcmp.eq.f32.partialorder %v3085, 8.507059e+37
  %v3087 = vand.u32 %v3059, 2147483648
  %v3088 = vor.u32 1.1754944e-38, %v3087
  %v3089 = vsel %vm3086, %v3088, %v3084
  %v3090 = vmul.f32 1.0, %v3089
  %v3091 = vrcp.pop %v3060
  %v3092 = vmul.f32 %v3060, %v3091
  %v3093 = vsub.f32 1.0, %v3092
  %v3094 = vmul.f32 %v3091, %v3093
  %v3095 = vadd.f32 %v3091, %v3094
  %vm3096 = vweird.f32 %v3060
  %vm3097 = vweird.f32 %v3091
  %vm3098 = vmor %vm3096, %vm3097
  %v3099 = vsel %vm3098, %v3091, %v3095
  %v3100 = vand.u32 2147483647, %v3060
  %vm3101 = vcmp.eq.f32.partialorder %v3100, 8.507059e+37
  %v3102 = vand.u32 %v3060, 2147483648
  %v3103 = vor.u32 1.1754944e-38, %v3102
  %v3104 = vsel %vm3101, %v3103, %v3099
  %v3105 = vmul.f32 1.0, %v3104
  %v3106 = vtanh.pop %v3048
  %v3107 = vmul.f32 %v3090, %v2983
  %v3108 = vmul.f32 %v3075, %v3106
  %v3109 = vadd.f32 %v3107, %v3108
  %v3110 = vtanh.pop %v3109
  %v3111 = vmul.f32 %v3105, %v3110
  %v3112 = vmax.f32 %v3111, 0.0
  %3113 = vst [vmem:[#allocation3 + $0x90] sm:$0xff] %v3112
  %v3114 = vpack.c.bf16 %v3111, %v3111
  %v3115 = vld [vmem:[#allocation2 + $0x260] sm:$0xff]
  %v3116 = vld [vmem:[#allocation2 + $0x268] sm:$0xff]
  %v3117 = vld [vmem:[#allocation2 + $0x270] sm:$0xff]
  %v3118 = vld [vmem:[#allocation2 + $0x278] sm:$0xff]
  %3119 = vmatpush.bf16.msra.mxu0 %v689
  %3120 = vmatpush.bf16.msra.mxu0 %v685
  %3121 = vmatpush.bf16.msra.mxu0 %v681
  %3122 = vmatpush.bf16.msra.mxu0 %v677
  %3123 = vmatpush.bf16.msra.mxu0 %v673
  %3124 = vmatpush.bf16.msra.mxu0 %v669
  %3125 = vmatpush.bf16.msra.mxu0 %v665
  %3126 = vmatpush.bf16.msra.mxu0 %v661
  %3127 = vmatmul.bf16.gmra.mxu0 %v3114
  %v3128 = vpop.f32.mrf.mxu0
  %v3129 = vadd.f32 0.0, %v3128
  %v3130 = vpop.f32.mrf.mxu0
  %3131 = vdwg.mxu0
  %3132 = vmatpush.bf16.msra.mxu0 %v690
  %3133 = vmatpush.bf16.msra.mxu0 %v686
  %3134 = vmatpush.bf16.msra.mxu0 %v682
  %3135 = vmatpush.bf16.msra.mxu0 %v678
  %3136 = vmatpush.bf16.msra.mxu0 %v674
  %3137 = vmatpush.bf16.msra.mxu0 %v670
  %3138 = vmatpush.bf16.msra.mxu0 %v666
  %3139 = vmatpush.bf16.msra.mxu0 %v662
  %3140 = vmatmul.bf16.gmra.mxu0 %v3114
  %v3141 = vpop.f32.mrf.mxu0
  %v3142 = vadd.f32 0.0, %v3141
  %v3143 = vpop.f32.mrf.mxu0
  %3144 = vdwg.mxu0
  %3145 = vmatpush.bf16.msra.mxu0 %v691
  %3146 = vmatpush.bf16.msra.mxu0 %v687
  %3147 = vmatpush.bf16.msra.mxu0 %v683
  %3148 = vmatpush.bf16.msra.mxu0 %v679
  %3149 = vmatpush.bf16.msra.mxu0 %v675
  %3150 = vmatpush.bf16.msra.mxu0 %v671
  %3151 = vmatpush.bf16.msra.mxu0 %v667
  %3152 = vmatpush.bf16.msra.mxu0 %v663
  %3153 = vmatmul.bf16.gmra.mxu0 %v3114
  %v3154 = vpop.f32.mrf.mxu0
  %v3155 = vadd.f32 0.0, %v3154
  %v3156 = vpop.f32.mrf.mxu0
  %3157 = vdwg.mxu0
  %3158 = vmatpush.bf16.msra.mxu0 %v692
  %3159 = vmatpush.bf16.msra.mxu0 %v688
  %3160 = vmatpush.bf16.msra.mxu0 %v684
  %3161 = vmatpush.bf16.msra.mxu0 %v680
  %3162 = vmatpush.bf16.msra.mxu0 %v676
  %3163 = vmatpush.bf16.msra.mxu0 %v672
  %3164 = vmatpush.bf16.msra.mxu0 %v668
  %3165 = vmatpush.bf16.msra.mxu0 %v664
  %3166 = vmatmul.bf16.gmra.mxu0 %v3114
  %v3167 = vpop.f32.mrf.mxu0
  %v3168 = vadd.f32 0.0, %v3167
  %v3169 = vpop.f32.mrf.mxu0
  %3170 = vdwg.mxu0
  %v3171 = vadd.f32 %v3115, %v3129
  %v3172 = vadd.f32 %v3116, %v3142
  %v3173 = vadd.f32 %v3117, %v3155
  %v3174 = vadd.f32 %v3118, %v3168
  %v3175 = vxor.u32 %v3171, 2147483648
  %v3176 = vxor.u32 %v3172, 2147483648
  %v3177 = vxor.u32 %v3173, 2147483648
  %v3178 = vmul.f32 %v3175, 1.442695
  %v3179 = vpow.pop %v3178
  %v3180 = vmul.f32 %v3176, 1.442695
  %v3181 = vpow.pop %v3180
  %v3182 = vmul.f32 %v3177, 1.442695
  %v3183 = vpow.pop %v3182
  %v3184 = vadd.f32 %v3179, 1.0
  %v3185 = vadd.f32 %v3181, 1.0
  %v3186 = vadd.f32 %v3183, 1.0
  %v3187 = vrcp.pop %v3184
  %v3188 = vmul.f32 %v3184, %v3187
  %v3189 = vsub.f32 1.0, %v3188
  %v3190 = vmul.f32 %v3187, %v3189
  %v3191 = vadd.f32 %v3187, %v3190
  %vm3192 = vweird.f32 %v3184
  %vm3193 = vweird.f32 %v3187
  %vm3194 = vmor %vm3192, %vm3193
  %v3195 = vsel %vm3194, %v3187, %v3191
  %v3196 = vand.u32 2147483647, %v3184
  %vm3197 = vcmp.eq.f32.partialorder %v3196, 8.507059e+37
  %v3198 = vand.u32 %v3184, 2147483648
  %v3199 = vor.u32 1.1754944e-38, %v3198
  %v3200 = vsel %vm3197, %v3199, %v3195
  %v3201 = vmul.f32 1.0, %v3200
  %v3202 = vrcp.pop %v3185
  %v3203 = vmul.f32 %v3185, %v3202
  %v3204 = vsub.f32 1.0, %v3203
  %v3205 = vmul.f32 %v3202, %v3204
  %v3206 = vadd.f32 %v3202, %v3205
  %vm3207 = vweird.f32 %v3185
  %vm3208 = vweird.f32 %v3202
  %vm3209 = vmor %vm3207, %vm3208
  %v3210 = vsel %vm3209, %v3202, %v3206
  %v3211 = vand.u32 2147483647, %v3185
  %vm3212 = vcmp.eq.f32.partialorder %v3211, 8.507059e+37
  %v3213 = vand.u32 %v3185, 2147483648
  %v3214 = vor.u32 1.1754944e-38, %v3213
  %v3215 = vsel %vm3212, %v3214, %v3210
  %v3216 = vmul.f32 1.0, %v3215
  %v3217 = vrcp.pop %v3186
  %v3218 = vmul.f32 %v3186, %v3217
  %v3219 = vsub.f32 1.0, %v3218
  %v3220 = vmul.f32 %v3217, %v3219
  %v3221 = vadd.f32 %v3217, %v3220
  %vm3222 = vweird.f32 %v3186
  %vm3223 = vweird.f32 %v3217
  %vm3224 = vmor %vm3222, %vm3223
  %v3225 = vsel %vm3224, %v3217, %v3221
  %v3226 = vand.u32 2147483647, %v3186
  %vm3227 = vcmp.eq.f32.partialorder %v3226, 8.507059e+37
  %v3228 = vand.u32 %v3186, 2147483648
  %v3229 = vor.u32 1.1754944e-38, %v3228
  %v3230 = vsel %vm3227, %v3229, %v3225
  %v3231 = vmul.f32 1.0, %v3230
  %v3232 = vtanh.pop %v3174
  %v3233 = vmul.f32 %v3216, %v3109
  %v3234 = vmul.f32 %v3201, %v3232
  %v3235 = vadd.f32 %v3233, %v3234
  %v3236 = vtanh.pop %v3235
  %v3237 = vmul.f32 %v3231, %v3236
  %v3238 = vmax.f32 %v3237, 0.0
  %3239 = vst [vmem:[#allocation3 + $0x98] sm:$0xff] %v3238
  %v3240 = vpack.c.bf16 %v3237, %v3237
  %v3241 = vld [vmem:[#allocation2 + $0x280] sm:$0xff]
  %v3242 = vld [vmem:[#allocation2 + $0x288] sm:$0xff]
  %v3243 = vld [vmem:[#allocation2 + $0x290] sm:$0xff]
  %v3244 = vld [vmem:[#allocation2 + $0x298] sm:$0xff]
  %3245 = vmatpush.bf16.msra.mxu0 %v689
  %3246 = vmatpush.bf16.msra.mxu0 %v685
  %3247 = vmatpush.bf16.msra.mxu0 %v681
  %3248 = vmatpush.bf16.msra.mxu0 %v677
  %3249 = vmatpush.bf16.msra.mxu0 %v673
  %3250 = vmatpush.bf16.msra.mxu0 %v669
  %3251 = vmatpush.bf16.msra.mxu0 %v665
  %3252 = vmatpush.bf16.msra.mxu0 %v661
  %3253 = vmatmul.bf16.gmra.mxu0 %v3240
  %v3254 = vpop.f32.mrf.mxu0
  %v3255 = vadd.f32 0.0, %v3254
  %v3256 = vpop.f32.mrf.mxu0
  %3257 = vdwg.mxu0
  %3258 = vmatpush.bf16.msra.mxu0 %v690
  %3259 = vmatpush.bf16.msra.mxu0 %v686
  %3260 = vmatpush.bf16.msra.mxu0 %v682
  %3261 = vmatpush.bf16.msra.mxu0 %v678
  %3262 = vmatpush.bf16.msra.mxu0 %v674
  %3263 = vmatpush.bf16.msra.mxu0 %v670
  %3264 = vmatpush.bf16.msra.mxu0 %v666
  %3265 = vmatpush.bf16.msra.mxu0 %v662
  %3266 = vmatmul.bf16.gmra.mxu0 %v3240
  %v3267 = vpop.f32.mrf.mxu0
  %v3268 = vadd.f32 0.0, %v3267
  %v3269 = vpop.f32.mrf.mxu0
  %3270 = vdwg.mxu0
  %3271 = vmatpush.bf16.msra.mxu0 %v691
  %3272 = vmatpush.bf16.msra.mxu0 %v687
  %3273 = vmatpush.bf16.msra.mxu0 %v683
  %3274 = vmatpush.bf16.msra.mxu0 %v679
  %3275 = vmatpush.bf16.msra.mxu0 %v675
  %3276 = vmatpush.bf16.msra.mxu0 %v671
  %3277 = vmatpush.bf16.msra.mxu0 %v667
  %3278 = vmatpush.bf16.msra.mxu0 %v663
  %3279 = vmatmul.bf16.gmra.mxu0 %v3240
  %v3280 = vpop.f32.mrf.mxu0
  %v3281 = vadd.f32 0.0, %v3280
  %v3282 = vpop.f32.mrf.mxu0
  %3283 = vdwg.mxu0
  %3284 = vmatpush.bf16.msra.mxu0 %v692
  %3285 = vmatpush.bf16.msra.mxu0 %v688
  %3286 = vmatpush.bf16.msra.mxu0 %v684
  %3287 = vmatpush.bf16.msra.mxu0 %v680
  %3288 = vmatpush.bf16.msra.mxu0 %v676
  %3289 = vmatpush.bf16.msra.mxu0 %v672
  %3290 = vmatpush.bf16.msra.mxu0 %v668
  %3291 = vmatpush.bf16.msra.mxu0 %v664
  %3292 = vmatmul.bf16.gmra.mxu0 %v3240
  %v3293 = vpop.f32.mrf.mxu0
  %v3294 = vadd.f32 0.0, %v3293
  %v3295 = vpop.f32.mrf.mxu0
  %3296 = vdwg.mxu0
  %v3297 = vadd.f32 %v3241, %v3255
  %v3298 = vadd.f32 %v3242, %v3268
  %v3299 = vadd.f32 %v3243, %v3281
  %v3300 = vadd.f32 %v3244, %v3294
  %v3301 = vxor.u32 %v3297, 2147483648
  %v3302 = vxor.u32 %v3298, 2147483648
  %v3303 = vxor.u32 %v3299, 2147483648
  %v3304 = vmul.f32 %v3301, 1.442695
  %v3305 = vpow.pop %v3304
  %v3306 = vmul.f32 %v3302, 1.442695
  %v3307 = vpow.pop %v3306
  %v3308 = vmul.f32 %v3303, 1.442695
  %v3309 = vpow.pop %v3308
  %v3310 = vadd.f32 %v3305, 1.0
  %v3311 = vadd.f32 %v3307, 1.0
  %v3312 = vadd.f32 %v3309, 1.0
  %v3313 = vrcp.pop %v3310
  %v3314 = vmul.f32 %v3310, %v3313
  %v3315 = vsub.f32 1.0, %v3314
  %v3316 = vmul.f32 %v3313, %v3315
  %v3317 = vadd.f32 %v3313, %v3316
  %vm3318 = vweird.f32 %v3310
  %vm3319 = vweird.f32 %v3313
  %vm3320 = vmor %vm3318, %vm3319
  %v3321 = vsel %vm3320, %v3313, %v3317
  %v3322 = vand.u32 2147483647, %v3310
  %vm3323 = vcmp.eq.f32.partialorder %v3322, 8.507059e+37
  %v3324 = vand.u32 %v3310, 2147483648
  %v3325 = vor.u32 1.1754944e-38, %v3324
  %v3326 = vsel %vm3323, %v3325, %v3321
  %v3327 = vmul.f32 1.0, %v3326
  %v3328 = vrcp.pop %v3311
  %v3329 = vmul.f32 %v3311, %v3328
  %v3330 = vsub.f32 1.0, %v3329
  %v3331 = vmul.f32 %v3328, %v3330
  %v3332 = vadd.f32 %v3328, %v3331
  %vm3333 = vweird.f32 %v3311
  %vm3334 = vweird.f32 %v3328
  %vm3335 = vmor %vm3333, %vm3334
  %v3336 = vsel %vm3335, %v3328, %v3332
  %v3337 = vand.u32 2147483647, %v3311
  %vm3338 = vcmp.eq.f32.partialorder %v3337, 8.507059e+37
  %v3339 = vand.u32 %v3311, 2147483648
  %v3340 = vor.u32 1.1754944e-38, %v3339
  %v3341 = vsel %vm3338, %v3340, %v3336
  %v3342 = vmul.f32 1.0, %v3341
  %v3343 = vrcp.pop %v3312
  %v3344 = vmul.f32 %v3312, %v3343
  %v3345 = vsub.f32 1.0, %v3344
  %v3346 = vmul.f32 %v3343, %v3345
  %v3347 = vadd.f32 %v3343, %v3346
  %vm3348 = vweird.f32 %v3312
  %vm3349 = vweird.f32 %v3343
  %vm3350 = vmor %vm3348, %vm3349
  %v3351 = vsel %vm3350, %v3343, %v3347
  %v3352 = vand.u32 2147483647, %v3312
  %vm3353 = vcmp.eq.f32.partialorder %v3352, 8.507059e+37
  %v3354 = vand.u32 %v3312, 2147483648
  %v3355 = vor.u32 1.1754944e-38, %v3354
  %v3356 = vsel %vm3353, %v3355, %v3351
  %v3357 = vmul.f32 1.0, %v3356
  %v3358 = vtanh.pop %v3300
  %v3359 = vmul.f32 %v3342, %v3235
  %v3360 = vmul.f32 %v3327, %v3358
  %v3361 = vadd.f32 %v3359, %v3360
  %v3362 = vtanh.pop %v3361
  %v3363 = vmul.f32 %v3357, %v3362
  %v3364 = vmax.f32 %v3363, 0.0
  %3365 = vst [vmem:[#allocation3 + $0xa0] sm:$0xff] %v3364
  %v3366 = vpack.c.bf16 %v3363, %v3363
  %v3367 = vld [vmem:[#allocation2 + $0x2a0] sm:$0xff]
  %v3368 = vld [vmem:[#allocation2 + $0x2a8] sm:$0xff]
  %v3369 = vld [vmem:[#allocation2 + $0x2b0] sm:$0xff]
  %v3370 = vld [vmem:[#allocation2 + $0x2b8] sm:$0xff]
  %3371 = vmatpush.bf16.msra.mxu0 %v689
  %3372 = vmatpush.bf16.msra.mxu0 %v685
  %3373 = vmatpush.bf16.msra.mxu0 %v681
  %3374 = vmatpush.bf16.msra.mxu0 %v677
  %3375 = vmatpush.bf16.msra.mxu0 %v673
  %3376 = vmatpush.bf16.msra.mxu0 %v669
  %3377 = vmatpush.bf16.msra.mxu0 %v665
  %3378 = vmatpush.bf16.msra.mxu0 %v661
  %3379 = vmatmul.bf16.gmra.mxu0 %v3366
  %v3380 = vpop.f32.mrf.mxu0
  %v3381 = vadd.f32 0.0, %v3380
  %v3382 = vpop.f32.mrf.mxu0
  %3383 = vdwg.mxu0
  %3384 = vmatpush.bf16.msra.mxu0 %v690
  %3385 = vmatpush.bf16.msra.mxu0 %v686
  %3386 = vmatpush.bf16.msra.mxu0 %v682
  %3387 = vmatpush.bf16.msra.mxu0 %v678
  %3388 = vmatpush.bf16.msra.mxu0 %v674
  %3389 = vmatpush.bf16.msra.mxu0 %v670
  %3390 = vmatpush.bf16.msra.mxu0 %v666
  %3391 = vmatpush.bf16.msra.mxu0 %v662
  %3392 = vmatmul.bf16.gmra.mxu0 %v3366
  %v3393 = vpop.f32.mrf.mxu0
  %v3394 = vadd.f32 0.0, %v3393
  %v3395 = vpop.f32.mrf.mxu0
  %3396 = vdwg.mxu0
  %3397 = vmatpush.bf16.msra.mxu0 %v691
  %3398 = vmatpush.bf16.msra.mxu0 %v687
  %3399 = vmatpush.bf16.msra.mxu0 %v683
  %3400 = vmatpush.bf16.msra.mxu0 %v679
  %3401 = vmatpush.bf16.msra.mxu0 %v675
  %3402 = vmatpush.bf16.msra.mxu0 %v671
  %3403 = vmatpush.bf16.msra.mxu0 %v667
  %3404 = vmatpush.bf16.msra.mxu0 %v663
  %3405 = vmatmul.bf16.gmra.mxu0 %v3366
  %v3406 = vpop.f32.mrf.mxu0
  %v3407 = vadd.f32 0.0, %v3406
  %v3408 = vpop.f32.mrf.mxu0
  %3409 = vdwg.mxu0
  %3410 = vmatpush.bf16.msra.mxu0 %v692
  %3411 = vmatpush.bf16.msra.mxu0 %v688
  %3412 = vmatpush.bf16.msra.mxu0 %v684
  %3413 = vmatpush.bf16.msra.mxu0 %v680
  %3414 = vmatpush.bf16.msra.mxu0 %v676
  %3415 = vmatpush.bf16.msra.mxu0 %v672
  %3416 = vmatpush.bf16.msra.mxu0 %v668
  %3417 = vmatpush.bf16.msra.mxu0 %v664
  %3418 = vmatmul.bf16.gmra.mxu0 %v3366
  %v3419 = vpop.f32.mrf.mxu0
  %v3420 = vadd.f32 0.0, %v3419
  %v3421 = vpop.f32.mrf.mxu0
  %3422 = vdwg.mxu0
  %v3423 = vadd.f32 %v3367, %v3381
  %v3424 = vadd.f32 %v3368, %v3394
  %v3425 = vadd.f32 %v3369, %v3407
  %v3426 = vadd.f32 %v3370, %v3420
  %v3427 = vxor.u32 %v3423, 2147483648
  %v3428 = vxor.u32 %v3424, 2147483648
  %v3429 = vxor.u32 %v3425, 2147483648
  %v3430 = vmul.f32 %v3427, 1.442695
  %v3431 = vpow.pop %v3430
  %v3432 = vmul.f32 %v3428, 1.442695
  %v3433 = vpow.pop %v3432
  %v3434 = vmul.f32 %v3429, 1.442695
  %v3435 = vpow.pop %v3434
  %v3436 = vadd.f32 %v3431, 1.0
  %v3437 = vadd.f32 %v3433, 1.0
  %v3438 = vadd.f32 %v3435, 1.0
  %v3439 = vrcp.pop %v3436
  %v3440 = vmul.f32 %v3436, %v3439
  %v3441 = vsub.f32 1.0, %v3440
  %v3442 = vmul.f32 %v3439, %v3441
  %v3443 = vadd.f32 %v3439, %v3442
  %vm3444 = vweird.f32 %v3436
  %vm3445 = vweird.f32 %v3439
  %vm3446 = vmor %vm3444, %vm3445
  %v3447 = vsel %vm3446, %v3439, %v3443
  %v3448 = vand.u32 2147483647, %v3436
  %vm3449 = vcmp.eq.f32.partialorder %v3448, 8.507059e+37
  %v3450 = vand.u32 %v3436, 2147483648
  %v3451 = vor.u32 1.1754944e-38, %v3450
  %v3452 = vsel %vm3449, %v3451, %v3447
  %v3453 = vmul.f32 1.0, %v3452
  %v3454 = vrcp.pop %v3437
  %v3455 = vmul.f32 %v3437, %v3454
  %v3456 = vsub.f32 1.0, %v3455
  %v3457 = vmul.f32 %v3454, %v3456
  %v3458 = vadd.f32 %v3454, %v3457
  %vm3459 = vweird.f32 %v3437
  %vm3460 = vweird.f32 %v3454
  %vm3461 = vmor %vm3459, %vm3460
  %v3462 = vsel %vm3461, %v3454, %v3458
  %v3463 = vand.u32 2147483647, %v3437
  %vm3464 = vcmp.eq.f32.partialorder %v3463, 8.507059e+37
  %v3465 = vand.u32 %v3437, 2147483648
  %v3466 = vor.u32 1.1754944e-38, %v3465
  %v3467 = vsel %vm3464, %v3466, %v3462
  %v3468 = vmul.f32 1.0, %v3467
  %v3469 = vrcp.pop %v3438
  %v3470 = vmul.f32 %v3438, %v3469
  %v3471 = vsub.f32 1.0, %v3470
  %v3472 = vmul.f32 %v3469, %v3471
  %v3473 = vadd.f32 %v3469, %v3472
  %vm3474 = vweird.f32 %v3438
  %vm3475 = vweird.f32 %v3469
  %vm3476 = vmor %vm3474, %vm3475
  %v3477 = vsel %vm3476, %v3469, %v3473
  %v3478 = vand.u32 2147483647, %v3438
  %vm3479 = vcmp.eq.f32.partialorder %v3478, 8.507059e+37
  %v3480 = vand.u32 %v3438, 2147483648
  %v3481 = vor.u32 1.1754944e-38, %v3480
  %v3482 = vsel %vm3479, %v3481, %v3477
  %v3483 = vmul.f32 1.0, %v3482
  %v3484 = vtanh.pop %v3426
  %v3485 = vmul.f32 %v3468, %v3361
  %v3486 = vmul.f32 %v3453, %v3484
  %v3487 = vadd.f32 %v3485, %v3486
  %v3488 = vtanh.pop %v3487
  %v3489 = vmul.f32 %v3483, %v3488
  %v3490 = vmax.f32 %v3489, 0.0
  %3491 = vst [vmem:[#allocation3 + $0xa8] sm:$0xff] %v3490
  %v3492 = vpack.c.bf16 %v3489, %v3489
  %v3493 = vld [vmem:[#allocation2 + $0x2c0] sm:$0xff]
  %v3494 = vld [vmem:[#allocation2 + $0x2c8] sm:$0xff]
  %v3495 = vld [vmem:[#allocation2 + $0x2d0] sm:$0xff]
  %v3496 = vld [vmem:[#allocation2 + $0x2d8] sm:$0xff]
  %3497 = vmatpush.bf16.msra.mxu0 %v689
  %3498 = vmatpush.bf16.msra.mxu0 %v685
  %3499 = vmatpush.bf16.msra.mxu0 %v681
  %3500 = vmatpush.bf16.msra.mxu0 %v677
  %3501 = vmatpush.bf16.msra.mxu0 %v673
  %3502 = vmatpush.bf16.msra.mxu0 %v669
  %3503 = vmatpush.bf16.msra.mxu0 %v665
  %3504 = vmatpush.bf16.msra.mxu0 %v661
  %3505 = vmatmul.bf16.gmra.mxu0 %v3492
  %v3506 = vpop.f32.mrf.mxu0
  %v3507 = vadd.f32 0.0, %v3506
  %v3508 = vpop.f32.mrf.mxu0
  %3509 = vdwg.mxu0
  %3510 = vmatpush.bf16.msra.mxu0 %v690
  %3511 = vmatpush.bf16.msra.mxu0 %v686
  %3512 = vmatpush.bf16.msra.mxu0 %v682
  %3513 = vmatpush.bf16.msra.mxu0 %v678
  %3514 = vmatpush.bf16.msra.mxu0 %v674
  %3515 = vmatpush.bf16.msra.mxu0 %v670
  %3516 = vmatpush.bf16.msra.mxu0 %v666
  %3517 = vmatpush.bf16.msra.mxu0 %v662
  %3518 = vmatmul.bf16.gmra.mxu0 %v3492
  %v3519 = vpop.f32.mrf.mxu0
  %v3520 = vadd.f32 0.0, %v3519
  %v3521 = vpop.f32.mrf.mxu0
  %3522 = vdwg.mxu0
  %3523 = vmatpush.bf16.msra.mxu0 %v691
  %3524 = vmatpush.bf16.msra.mxu0 %v687
  %3525 = vmatpush.bf16.msra.mxu0 %v683
  %3526 = vmatpush.bf16.msra.mxu0 %v679
  %3527 = vmatpush.bf16.msra.mxu0 %v675
  %3528 = vmatpush.bf16.msra.mxu0 %v671
  %3529 = vmatpush.bf16.msra.mxu0 %v667
  %3530 = vmatpush.bf16.msra.mxu0 %v663
  %3531 = vmatmul.bf16.gmra.mxu0 %v3492
  %v3532 = vpop.f32.mrf.mxu0
  %v3533 = vadd.f32 0.0, %v3532
  %v3534 = vpop.f32.mrf.mxu0
  %3535 = vdwg.mxu0
  %3536 = vmatpush.bf16.msra.mxu0 %v692
  %3537 = vmatpush.bf16.msra.mxu0 %v688
  %3538 = vmatpush.bf16.msra.mxu0 %v684
  %3539 = vmatpush.bf16.msra.mxu0 %v680
  %3540 = vmatpush.bf16.msra.mxu0 %v676
  %3541 = vmatpush.bf16.msra.mxu0 %v672
  %3542 = vmatpush.bf16.msra.mxu0 %v668
  %3543 = vmatpush.bf16.msra.mxu0 %v664
  %3544 = vmatmul.bf16.gmra.mxu0 %v3492
  %v3545 = vpop.f32.mrf.mxu0
  %v3546 = vadd.f32 0.0, %v3545
  %v3547 = vpop.f32.mrf.mxu0
  %3548 = vdwg.mxu0
  %v3549 = vadd.f32 %v3493, %v3507
  %v3550 = vadd.f32 %v3494, %v3520
  %v3551 = vadd.f32 %v3495, %v3533
  %v3552 = vadd.f32 %v3496, %v3546
  %v3553 = vxor.u32 %v3549, 2147483648
  %v3554 = vxor.u32 %v3550, 2147483648
  %v3555 = vxor.u32 %v3551, 2147483648
  %v3556 = vmul.f32 %v3553, 1.442695
  %v3557 = vpow.pop %v3556
  %v3558 = vmul.f32 %v3554, 1.442695
  %v3559 = vpow.pop %v3558
  %v3560 = vmul.f32 %v3555, 1.442695
  %v3561 = vpow.pop %v3560
  %v3562 = vadd.f32 %v3557, 1.0
  %v3563 = vadd.f32 %v3559, 1.0
  %v3564 = vadd.f32 %v3561, 1.0
  %v3565 = vrcp.pop %v3562
  %v3566 = vmul.f32 %v3562, %v3565
  %v3567 = vsub.f32 1.0, %v3566
  %v3568 = vmul.f32 %v3565, %v3567
  %v3569 = vadd.f32 %v3565, %v3568
  %vm3570 = vweird.f32 %v3562
  %vm3571 = vweird.f32 %v3565
  %vm3572 = vmor %vm3570, %vm3571
  %v3573 = vsel %vm3572, %v3565, %v3569
  %v3574 = vand.u32 2147483647, %v3562
  %vm3575 = vcmp.eq.f32.partialorder %v3574, 8.507059e+37
  %v3576 = vand.u32 %v3562, 2147483648
  %v3577 = vor.u32 1.1754944e-38, %v3576
  %v3578 = vsel %vm3575, %v3577, %v3573
  %v3579 = vmul.f32 1.0, %v3578
  %v3580 = vrcp.pop %v3563
  %v3581 = vmul.f32 %v3563, %v3580
  %v3582 = vsub.f32 1.0, %v3581
  %v3583 = vmul.f32 %v3580, %v3582
  %v3584 = vadd.f32 %v3580, %v3583
  %vm3585 = vweird.f32 %v3563
  %vm3586 = vweird.f32 %v3580
  %vm3587 = vmor %vm3585, %vm3586
  %v3588 = vsel %vm3587, %v3580, %v3584
  %v3589 = vand.u32 2147483647, %v3563
  %vm3590 = vcmp.eq.f32.partialorder %v3589, 8.507059e+37
  %v3591 = vand.u32 %v3563, 2147483648
  %v3592 = vor.u32 1.1754944e-38, %v3591
  %v3593 = vsel %vm3590, %v3592, %v3588
  %v3594 = vmul.f32 1.0, %v3593
  %v3595 = vrcp.pop %v3564
  %v3596 = vmul.f32 %v3564, %v3595
  %v3597 = vsub.f32 1.0, %v3596
  %v3598 = vmul.f32 %v3595, %v3597
  %v3599 = vadd.f32 %v3595, %v3598
  %vm3600 = vweird.f32 %v3564
  %vm3601 = vweird.f32 %v3595
  %vm3602 = vmor %vm3600, %vm3601
  %v3603 = vsel %vm3602, %v3595, %v3599
  %v3604 = vand.u32 2147483647, %v3564
  %vm3605 = vcmp.eq.f32.partialorder %v3604, 8.507059e+37
  %v3606 = vand.u32 %v3564, 2147483648
  %v3607 = vor.u32 1.1754944e-38, %v3606
  %v3608 = vsel %vm3605, %v3607, %v3603
  %v3609 = vmul.f32 1.0, %v3608
  %v3610 = vtanh.pop %v3552
  %v3611 = vmul.f32 %v3594, %v3487
  %v3612 = vmul.f32 %v3579, %v3610
  %v3613 = vadd.f32 %v3611, %v3612
  %v3614 = vtanh.pop %v3613
  %v3615 = vmul.f32 %v3609, %v3614
  %v3616 = vmax.f32 %v3615, 0.0
  %3617 = vst [vmem:[#allocation3 + $0xb0] sm:$0xff] %v3616
  %v3618 = vpack.c.bf16 %v3615, %v3615
  %v3619 = vld [vmem:[#allocation2 + $0x2e0] sm:$0xff]
  %v3620 = vld [vmem:[#allocation2 + $0x2e8] sm:$0xff]
  %v3621 = vld [vmem:[#allocation2 + $0x2f0] sm:$0xff]
  %v3622 = vld [vmem:[#allocation2 + $0x2f8] sm:$0xff]
  %3623 = vmatpush.bf16.msra.mxu0 %v689
  %3624 = vmatpush.bf16.msra.mxu0 %v685
  %3625 = vmatpush.bf16.msra.mxu0 %v681
  %3626 = vmatpush.bf16.msra.mxu0 %v677
  %3627 = vmatpush.bf16.msra.mxu0 %v673
  %3628 = vmatpush.bf16.msra.mxu0 %v669
  %3629 = vmatpush.bf16.msra.mxu0 %v665
  %3630 = vmatpush.bf16.msra.mxu0 %v661
  %3631 = vmatmul.bf16.gmra.mxu0 %v3618
  %v3632 = vpop.f32.mrf.mxu0
  %v3633 = vadd.f32 0.0, %v3632
  %v3634 = vpop.f32.mrf.mxu0
  %3635 = vdwg.mxu0
  %3636 = vmatpush.bf16.msra.mxu0 %v690
  %3637 = vmatpush.bf16.msra.mxu0 %v686
  %3638 = vmatpush.bf16.msra.mxu0 %v682
  %3639 = vmatpush.bf16.msra.mxu0 %v678
  %3640 = vmatpush.bf16.msra.mxu0 %v674
  %3641 = vmatpush.bf16.msra.mxu0 %v670
  %3642 = vmatpush.bf16.msra.mxu0 %v666
  %3643 = vmatpush.bf16.msra.mxu0 %v662
  %3644 = vmatmul.bf16.gmra.mxu0 %v3618
  %v3645 = vpop.f32.mrf.mxu0
  %v3646 = vadd.f32 0.0, %v3645
  %v3647 = vpop.f32.mrf.mxu0
  %3648 = vdwg.mxu0
  %3649 = vmatpush.bf16.msra.mxu0 %v691
  %3650 = vmatpush.bf16.msra.mxu0 %v687
  %3651 = vmatpush.bf16.msra.mxu0 %v683
  %3652 = vmatpush.bf16.msra.mxu0 %v679
  %3653 = vmatpush.bf16.msra.mxu0 %v675
  %3654 = vmatpush.bf16.msra.mxu0 %v671
  %3655 = vmatpush.bf16.msra.mxu0 %v667
  %3656 = vmatpush.bf16.msra.mxu0 %v663
  %3657 = vmatmul.bf16.gmra.mxu0 %v3618
  %v3658 = vpop.f32.mrf.mxu0
  %v3659 = vadd.f32 0.0, %v3658
  %v3660 = vpop.f32.mrf.mxu0
  %3661 = vdwg.mxu0
  %3662 = vmatpush.bf16.msra.mxu0 %v692
  %3663 = vmatpush.bf16.msra.mxu0 %v688
  %3664 = vmatpush.bf16.msra.mxu0 %v684
  %3665 = vmatpush.bf16.msra.mxu0 %v680
  %3666 = vmatpush.bf16.msra.mxu0 %v676
  %3667 = vmatpush.bf16.msra.mxu0 %v672
  %3668 = vmatpush.bf16.msra.mxu0 %v668
  %3669 = vmatpush.bf16.msra.mxu0 %v664
  %3670 = vmatmul.bf16.gmra.mxu0 %v3618
  %v3671 = vpop.f32.mrf.mxu0
  %v3672 = vadd.f32 0.0, %v3671
  %v3673 = vpop.f32.mrf.mxu0
  %3674 = vdwg.mxu0
  %v3675 = vadd.f32 %v3619, %v3633
  %v3676 = vadd.f32 %v3620, %v3646
  %v3677 = vadd.f32 %v3621, %v3659
  %v3678 = vadd.f32 %v3622, %v3672
  %v3679 = vxor.u32 %v3675, 2147483648
  %v3680 = vxor.u32 %v3676, 2147483648
  %v3681 = vxor.u32 %v3677, 2147483648
  %v3682 = vmul.f32 %v3679, 1.442695
  %v3683 = vpow.pop %v3682
  %v3684 = vmul.f32 %v3680, 1.442695
  %v3685 = vpow.pop %v3684
  %v3686 = vmul.f32 %v3681, 1.442695
  %v3687 = vpow.pop %v3686
  %v3688 = vadd.f32 %v3683, 1.0
  %v3689 = vadd.f32 %v3685, 1.0
  %v3690 = vadd.f32 %v3687, 1.0
  %v3691 = vrcp.pop %v3688
  %v3692 = vmul.f32 %v3688, %v3691
  %v3693 = vsub.f32 1.0, %v3692
  %v3694 = vmul.f32 %v3691, %v3693
  %v3695 = vadd.f32 %v3691, %v3694
  %vm3696 = vweird.f32 %v3688
  %vm3697 = vweird.f32 %v3691
  %vm3698 = vmor %vm3696, %vm3697
  %v3699 = vsel %vm3698, %v3691, %v3695
  %v3700 = vand.u32 2147483647, %v3688
  %vm3701 = vcmp.eq.f32.partialorder %v3700, 8.507059e+37
  %v3702 = vand.u32 %v3688, 2147483648
  %v3703 = vor.u32 1.1754944e-38, %v3702
  %v3704 = vsel %vm3701, %v3703, %v3699
  %v3705 = vmul.f32 1.0, %v3704
  %v3706 = vrcp.pop %v3689
  %v3707 = vmul.f32 %v3689, %v3706
  %v3708 = vsub.f32 1.0, %v3707
  %v3709 = vmul.f32 %v3706, %v3708
  %v3710 = vadd.f32 %v3706, %v3709
  %vm3711 = vweird.f32 %v3689
  %vm3712 = vweird.f32 %v3706
  %vm3713 = vmor %vm3711, %vm3712
  %v3714 = vsel %vm3713, %v3706, %v3710
  %v3715 = vand.u32 2147483647, %v3689
  %vm3716 = vcmp.eq.f32.partialorder %v3715, 8.507059e+37
  %v3717 = vand.u32 %v3689, 2147483648
  %v3718 = vor.u32 1.1754944e-38, %v3717
  %v3719 = vsel %vm3716, %v3718, %v3714
  %v3720 = vmul.f32 1.0, %v3719
  %v3721 = vrcp.pop %v3690
  %v3722 = vmul.f32 %v3690, %v3721
  %v3723 = vsub.f32 1.0, %v3722
  %v3724 = vmul.f32 %v3721, %v3723
  %v3725 = vadd.f32 %v3721, %v3724
  %vm3726 = vweird.f32 %v3690
  %vm3727 = vweird.f32 %v3721
  %vm3728 = vmor %vm3726, %vm3727
  %v3729 = vsel %vm3728, %v3721, %v3725
  %v3730 = vand.u32 2147483647, %v3690
  %vm3731 = vcmp.eq.f32.partialorder %v3730, 8.507059e+37
  %v3732 = vand.u32 %v3690, 2147483648
  %v3733 = vor.u32 1.1754944e-38, %v3732
  %v3734 = vsel %vm3731, %v3733, %v3729
  %v3735 = vmul.f32 1.0, %v3734
  %v3736 = vtanh.pop %v3678
  %v3737 = vmul.f32 %v3720, %v3613
  %v3738 = vmul.f32 %v3705, %v3736
  %v3739 = vadd.f32 %v3737, %v3738
  %v3740 = vtanh.pop %v3739
  %v3741 = vmul.f32 %v3735, %v3740
  %v3742 = vmax.f32 %v3741, 0.0
  %3743 = vst [vmem:[#allocation3 + $0xb8] sm:$0xff] %v3742
  %v3744 = vpack.c.bf16 %v3741, %v3741
  %v3745 = vld [vmem:[#allocation2 + $0x300] sm:$0xff]
  %v3746 = vld [vmem:[#allocation2 + $0x308] sm:$0xff]
  %v3747 = vld [vmem:[#allocation2 + $0x310] sm:$0xff]
  %v3748 = vld [vmem:[#allocation2 + $0x318] sm:$0xff]
  %3749 = vmatpush.bf16.msra.mxu0 %v689
  %3750 = vmatpush.bf16.msra.mxu0 %v685
  %3751 = vmatpush.bf16.msra.mxu0 %v681
  %3752 = vmatpush.bf16.msra.mxu0 %v677
  %3753 = vmatpush.bf16.msra.mxu0 %v673
  %3754 = vmatpush.bf16.msra.mxu0 %v669
  %3755 = vmatpush.bf16.msra.mxu0 %v665
  %3756 = vmatpush.bf16.msra.mxu0 %v661
  %3757 = vmatmul.bf16.gmra.mxu0 %v3744
  %v3758 = vpop.f32.mrf.mxu0
  %v3759 = vadd.f32 0.0, %v3758
  %v3760 = vpop.f32.mrf.mxu0
  %3761 = vdwg.mxu0
  %3762 = vmatpush.bf16.msra.mxu0 %v690
  %3763 = vmatpush.bf16.msra.mxu0 %v686
  %3764 = vmatpush.bf16.msra.mxu0 %v682
  %3765 = vmatpush.bf16.msra.mxu0 %v678
  %3766 = vmatpush.bf16.msra.mxu0 %v674
  %3767 = vmatpush.bf16.msra.mxu0 %v670
  %3768 = vmatpush.bf16.msra.mxu0 %v666
  %3769 = vmatpush.bf16.msra.mxu0 %v662
  %3770 = vmatmul.bf16.gmra.mxu0 %v3744
  %v3771 = vpop.f32.mrf.mxu0
  %v3772 = vadd.f32 0.0, %v3771
  %v3773 = vpop.f32.mrf.mxu0
  %3774 = vdwg.mxu0
  %3775 = vmatpush.bf16.msra.mxu0 %v691
  %3776 = vmatpush.bf16.msra.mxu0 %v687
  %3777 = vmatpush.bf16.msra.mxu0 %v683
  %3778 = vmatpush.bf16.msra.mxu0 %v679
  %3779 = vmatpush.bf16.msra.mxu0 %v675
  %3780 = vmatpush.bf16.msra.mxu0 %v671
  %3781 = vmatpush.bf16.msra.mxu0 %v667
  %3782 = vmatpush.bf16.msra.mxu0 %v663
  %3783 = vmatmul.bf16.gmra.mxu0 %v3744
  %v3784 = vpop.f32.mrf.mxu0
  %v3785 = vadd.f32 0.0, %v3784
  %v3786 = vpop.f32.mrf.mxu0
  %3787 = vdwg.mxu0
  %3788 = vmatpush.bf16.msra.mxu0 %v692
  %3789 = vmatpush.bf16.msra.mxu0 %v688
  %3790 = vmatpush.bf16.msra.mxu0 %v684
  %3791 = vmatpush.bf16.msra.mxu0 %v680
  %3792 = vmatpush.bf16.msra.mxu0 %v676
  %3793 = vmatpush.bf16.msra.mxu0 %v672
  %3794 = vmatpush.bf16.msra.mxu0 %v668
  %3795 = vmatpush.bf16.msra.mxu0 %v664
  %3796 = vmatmul.bf16.gmra.mxu0 %v3744
  %v3797 = vpop.f32.mrf.mxu0
  %v3798 = vadd.f32 0.0, %v3797
  %v3799 = vpop.f32.mrf.mxu0
  %3800 = vdwg.mxu0
  %v3801 = vadd.f32 %v3745, %v3759
  %v3802 = vadd.f32 %v3746, %v3772
  %v3803 = vadd.f32 %v3747, %v3785
  %v3804 = vadd.f32 %v3748, %v3798
  %v3805 = vxor.u32 %v3801, 2147483648
  %v3806 = vxor.u32 %v3802, 2147483648
  %v3807 = vxor.u32 %v3803, 2147483648
  %v3808 = vmul.f32 %v3805, 1.442695
  %v3809 = vpow.pop %v3808
  %v3810 = vmul.f32 %v3806, 1.442695
  %v3811 = vpow.pop %v3810
  %v3812 = vmul.f32 %v3807, 1.442695
  %v3813 = vpow.pop %v3812
  %v3814 = vadd.f32 %v3809, 1.0
  %v3815 = vadd.f32 %v3811, 1.0
  %v3816 = vadd.f32 %v3813, 1.0
  %v3817 = vrcp.pop %v3814
  %v3818 = vmul.f32 %v3814, %v3817
  %v3819 = vsub.f32 1.0, %v3818
  %v3820 = vmul.f32 %v3817, %v3819
  %v3821 = vadd.f32 %v3817, %v3820
  %vm3822 = vweird.f32 %v3814
  %vm3823 = vweird.f32 %v3817
  %vm3824 = vmor %vm3822, %vm3823
  %v3825 = vsel %vm3824, %v3817, %v3821
  %v3826 = vand.u32 2147483647, %v3814
  %vm3827 = vcmp.eq.f32.partialorder %v3826, 8.507059e+37
  %v3828 = vand.u32 %v3814, 2147483648
  %v3829 = vor.u32 1.1754944e-38, %v3828
  %v3830 = vsel %vm3827, %v3829, %v3825
  %v3831 = vmul.f32 1.0, %v3830
  %v3832 = vrcp.pop %v3815
  %v3833 = vmul.f32 %v3815, %v3832
  %v3834 = vsub.f32 1.0, %v3833
  %v3835 = vmul.f32 %v3832, %v3834
  %v3836 = vadd.f32 %v3832, %v3835
  %vm3837 = vweird.f32 %v3815
  %vm3838 = vweird.f32 %v3832
  %vm3839 = vmor %vm3837, %vm3838
  %v3840 = vsel %vm3839, %v3832, %v3836
  %v3841 = vand.u32 2147483647, %v3815
  %vm3842 = vcmp.eq.f32.partialorder %v3841, 8.507059e+37
  %v3843 = vand.u32 %v3815, 2147483648
  %v3844 = vor.u32 1.1754944e-38, %v3843
  %v3845 = vsel %vm3842, %v3844, %v3840
  %v3846 = vmul.f32 1.0, %v3845
  %v3847 = vrcp.pop %v3816
  %v3848 = vmul.f32 %v3816, %v3847
  %v3849 = vsub.f32 1.0, %v3848
  %v3850 = vmul.f32 %v3847, %v3849
  %v3851 = vadd.f32 %v3847, %v3850
  %vm3852 = vweird.f32 %v3816
  %vm3853 = vweird.f32 %v3847
  %vm3854 = vmor %vm3852, %vm3853
  %v3855 = vsel %vm3854, %v3847, %v3851
  %v3856 = vand.u32 2147483647, %v3816
  %vm3857 = vcmp.eq.f32.partialorder %v3856, 8.507059e+37
  %v3858 = vand.u32 %v3816, 2147483648
  %v3859 = vor.u32 1.1754944e-38, %v3858
  %v3860 = vsel %vm3857, %v3859, %v3855
  %v3861 = vmul.f32 1.0, %v3860
  %v3862 = vtanh.pop %v3804
  %v3863 = vmul.f32 %v3846, %v3739
  %v3864 = vmul.f32 %v3831, %v3862
  %v3865 = vadd.f32 %v3863, %v3864
  %v3866 = vtanh.pop %v3865
  %v3867 = vmul.f32 %v3861, %v3866
  %v3868 = vmax.f32 %v3867, 0.0
  %3869 = vst [vmem:[#allocation3 + $0xc0] sm:$0xff] %v3868
  %v3870 = vld [vmem:[#allocation3] sm:$0xff]
  %v3871 = vld [vmem:[#allocation3 + $0x8] sm:$0xff]
  %v3872 = vld [vmem:[#allocation3 + $0x10] sm:$0xff]
  %v3873 = vld [vmem:[#allocation3 + $0x18] sm:$0xff]
  %v3874 = vld [vmem:[#allocation3 + $0x20] sm:$0xff]
  %v3875 = vld [vmem:[#allocation3 + $0x28] sm:$0xff]
  %v3876 = vld [vmem:[#allocation3 + $0x30] sm:$0xff]
  %v3877 = vld [vmem:[#allocation3 + $0x38] sm:$0xff]
  %v3878 = vld [vmem:[#allocation3 + $0x40] sm:$0xff]
  %v3879 = vld [vmem:[#allocation3 + $0x48] sm:$0xff]
  %v3880 = vld [vmem:[#allocation3 + $0x50] sm:$0xff]
  %v3881 = vld [vmem:[#allocation3 + $0x58] sm:$0xff]
  %v3882 = vld [vmem:[#allocation3 + $0x60] sm:$0xff]
  %v3883 = vld [vmem:[#allocation3 + $0x68] sm:$0xff]
  %v3884 = vld [vmem:[#allocation3 + $0x70] sm:$0xff]
  %v3885 = vld [vmem:[#allocation3 + $0x78] sm:$0xff]
  %v3886 = vld [vmem:[#allocation3 + $0x80] sm:$0xff]
  %v3887 = vld [vmem:[#allocation3 + $0x88] sm:$0xff]
  %v3888 = vld [vmem:[#allocation3 + $0x90] sm:$0xff]
  %v3889 = vld [vmem:[#allocation3 + $0x98] sm:$0xff]
  %v3890 = vld [vmem:[#allocation3 + $0xa0] sm:$0xff]
  %v3891 = vld [vmem:[#allocation3 + $0xa8] sm:$0xff]
  %v3892 = vld [vmem:[#allocation3 + $0xb0] sm:$0xff]
  %v3893 = vld [vmem:[#allocation3 + $0xb8] sm:$0xff]
  %v3894 = vld [vmem:[#allocation3 + $0xc0] sm:$0xff]
  %v3895 = vld [vmem:[%s8] sm:$0xff]
  %3897 = vset.pattern.permute.xlu0 0
  %3898 = vperm.xlu0 %3897, %v3895
  %v3899 = vpop.permute.xlu0 %3898
  %v3901 = vmul.f32 %v3870, %v3899
  %v3902 = vmul.f32 %v3871, %v3899
  %v3903 = vmul.f32 %v3872, %v3899
  %v3904 = vmul.f32 %v3873, %v3899
  %v3905 = vmul.f32 %v3874, %v3899
  %v3906 = vmul.f32 %v3875, %v3899
  %v3907 = vmul.f32 %v3876, %v3899
  %v3908 = vmul.f32 %v3877, %v3899
  %v3909 = vmul.f32 %v3878, %v3899
  %v3910 = vmul.f32 %v3879, %v3899
  %v3911 = vmul.f32 %v3880, %v3899
  %v3912 = vmul.f32 %v3881, %v3899
  %v3913 = vmul.f32 %v3882, %v3899
  %v3914 = vmul.f32 %v3883, %v3899
  %v3915 = vmul.f32 %v3884, %v3899
  %v3916 = vmul.f32 %v3885, %v3899
  %v3917 = vmul.f32 %v3886, %v3899
  %v3918 = vmul.f32 %v3887, %v3899
  %v3919 = vmul.f32 %v3888, %v3899
  %v3920 = vmul.f32 %v3889, %v3899
  %v3921 = vmul.f32 %v3890, %v3899
  %v3922 = vmul.f32 %v3891, %v3899
  %v3923 = vmul.f32 %v3892, %v3899
  %v3924 = vmul.f32 %v3893, %v3899
  %v3925 = vmul.f32 %v3894, %v3899
  %v3926 = vrot.slane %v3901, 4
  %v3927 = vadd.f32 %v3901, %v3926
  %v3928 = vrot.slane %v3927, 2
  %v3929 = vadd.f32 %v3927, %v3928
  %v3930 = vrot.slane %v3929, 1
  %v3931 = vadd.f32 %v3929, %v3930
  %v3932 = vrot.slane %v3902, 4
  %v3933 = vadd.f32 %v3902, %v3932
  %v3934 = vrot.slane %v3933, 2
  %v3935 = vadd.f32 %v3933, %v3934
  %v3936 = vrot.slane %v3935, 1
  %v3937 = vadd.f32 %v3935, %v3936
  %v3938 = vrot.slane %v3903, 4
  %v3939 = vadd.f32 %v3903, %v3938
  %v3940 = vrot.slane %v3939, 2
  %v3941 = vadd.f32 %v3939, %v3940
  %v3942 = vrot.slane %v3941, 1
  %v3943 = vadd.f32 %v3941, %v3942
  %v3944 = vrot.slane %v3904, 4
  %v3945 = vadd.f32 %v3904, %v3944
  %v3946 = vrot.slane %v3945, 2
  %v3947 = vadd.f32 %v3945, %v3946
  %v3948 = vrot.slane %v3947, 1
  %v3949 = vadd.f32 %v3947, %v3948
  %v3950 = vrot.slane %v3905, 4
  %v3951 = vadd.f32 %v3905, %v3950
  %v3952 = vrot.slane %v3951, 2
  %v3953 = vadd.f32 %v3951, %v3952
  %v3954 = vrot.slane %v3953, 1
  %v3955 = vadd.f32 %v3953, %v3954
  %v3956 = vrot.slane %v3906, 4
  %v3957 = vadd.f32 %v3906, %v3956
  %v3958 = vrot.slane %v3957, 2
  %v3959 = vadd.f32 %v3957, %v3958
  %v3960 = vrot.slane %v3959, 1
  %v3961 = vadd.f32 %v3959, %v3960
  %v3962 = vrot.slane %v3907, 4
  %v3963 = vadd.f32 %v3907, %v3962
  %v3964 = vrot.slane %v3963, 2
  %v3965 = vadd.f32 %v3963, %v3964
  %v3966 = vrot.slane %v3965, 1
  %v3967 = vadd.f32 %v3965, %v3966
  %v3968 = vrot.slane %v3908, 4
  %v3969 = vadd.f32 %v3908, %v3968
  %v3970 = vrot.slane %v3969, 2
  %v3971 = vadd.f32 %v3969, %v3970
  %v3972 = vrot.slane %v3971, 1
  %v3973 = vadd.f32 %v3971, %v3972
  %v3974 = vrot.slane %v3909, 4
  %v3975 = vadd.f32 %v3909, %v3974
  %v3976 = vrot.slane %v3975, 2
  %v3977 = vadd.f32 %v3975, %v3976
  %v3978 = vrot.slane %v3977, 1
  %v3979 = vadd.f32 %v3977, %v3978
  %v3980 = vrot.slane %v3910, 4
  %v3981 = vadd.f32 %v3910, %v3980
  %v3982 = vrot.slane %v3981, 2
  %v3983 = vadd.f32 %v3981, %v3982
  %v3984 = vrot.slane %v3983, 1
  %v3985 = vadd.f32 %v3983, %v3984
  %v3986 = vrot.slane %v3911, 4
  %v3987 = vadd.f32 %v3911, %v3986
  %v3988 = vrot.slane %v3987, 2
  %v3989 = vadd.f32 %v3987, %v3988
  %v3990 = vrot.slane %v3989, 1
  %v3991 = vadd.f32 %v3989, %v3990
  %v3992 = vrot.slane %v3912, 4
  %v3993 = vadd.f32 %v3912, %v3992
  %v3994 = vrot.slane %v3993, 2
  %v3995 = vadd.f32 %v3993, %v3994
  %v3996 = vrot.slane %v3995, 1
  %v3997 = vadd.f32 %v3995, %v3996
  %v3998 = vrot.slane %v3913, 4
  %v3999 = vadd.f32 %v3913, %v3998
  %v4000 = vrot.slane %v3999, 2
  %v4001 = vadd.f32 %v3999, %v4000
  %v4002 = vrot.slane %v4001, 1
  %v4003 = vadd.f32 %v4001, %v4002
  %v4004 = vrot.slane %v3914, 4
  %v4005 = vadd.f32 %v3914, %v4004
  %v4006 = vrot.slane %v4005, 2
  %v4007 = vadd.f32 %v4005, %v4006
  %v4008 = vrot.slane %v4007, 1
  %v4009 = vadd.f32 %v4007, %v4008
  %v4010 = vrot.slane %v3915, 4
  %v4011 = vadd.f32 %v3915, %v4010
  %v4012 = vrot.slane %v4011, 2
  %v4013 = vadd.f32 %v4011, %v4012
  %v4014 = vrot.slane %v4013, 1
  %v4015 = vadd.f32 %v4013, %v4014
  %v4016 = vrot.slane %v3916, 4
  %v4017 = vadd.f32 %v3916, %v4016
  %v4018 = vrot.slane %v4017, 2
  %v4019 = vadd.f32 %v4017, %v4018
  %v4020 = vrot.slane %v4019, 1
  %v4021 = vadd.f32 %v4019, %v4020
  %v4022 = vrot.slane %v3917, 4
  %v4023 = vadd.f32 %v3917, %v4022
  %v4024 = vrot.slane %v4023, 2
  %v4025 = vadd.f32 %v4023, %v4024
  %v4026 = vrot.slane %v4025, 1
  %v4027 = vadd.f32 %v4025, %v4026
  %v4028 = vrot.slane %v3918, 4
  %v4029 = vadd.f32 %v3918, %v4028
  %v4030 = vrot.slane %v4029, 2
  %v4031 = vadd.f32 %v4029, %v4030
  %v4032 = vrot.slane %v4031, 1
  %v4033 = vadd.f32 %v4031, %v4032
  %v4034 = vrot.slane %v3919, 4
  %v4035 = vadd.f32 %v3919, %v4034
  %v4036 = vrot.slane %v4035, 2
  %v4037 = vadd.f32 %v4035, %v4036
  %v4038 = vrot.slane %v4037, 1
  %v4039 = vadd.f32 %v4037, %v4038
  %v4040 = vrot.slane %v3920, 4
  %v4041 = vadd.f32 %v3920, %v4040
  %v4042 = vrot.slane %v4041, 2
  %v4043 = vadd.f32 %v4041, %v4042
  %v4044 = vrot.slane %v4043, 1
  %v4045 = vadd.f32 %v4043, %v4044
  %v4046 = vrot.slane %v3921, 4
  %v4047 = vadd.f32 %v3921, %v4046
  %v4048 = vrot.slane %v4047, 2
  %v4049 = vadd.f32 %v4047, %v4048
  %v4050 = vrot.slane %v4049, 1
  %v4051 = vadd.f32 %v4049, %v4050
  %v4052 = vrot.slane %v3922, 4
  %v4053 = vadd.f32 %v3922, %v4052
  %v4054 = vrot.slane %v4053, 2
  %v4055 = vadd.f32 %v4053, %v4054
  %v4056 = vrot.slane %v4055, 1
  %v4057 = vadd.f32 %v4055, %v4056
  %v4058 = vrot.slane %v3923, 4
  %v4059 = vadd.f32 %v3923, %v4058
  %v4060 = vrot.slane %v4059, 2
  %v4061 = vadd.f32 %v4059, %v4060
  %v4062 = vrot.slane %v4061, 1
  %v4063 = vadd.f32 %v4061, %v4062
  %v4064 = vrot.slane %v3924, 4
  %v4065 = vadd.f32 %v3924, %v4064
  %v4066 = vrot.slane %v4065, 2
  %v4067 = vadd.f32 %v4065, %v4066
  %v4068 = vrot.slane %v4067, 1
  %v4069 = vadd.f32 %v4067, %v4068
  %v4070 = vrot.slane %v3925, 4
  %v4071 = vadd.f32 %v3925, %v4070
  %v4072 = vrot.slane %v4071, 2
  %v4073 = vadd.f32 %v4071, %v4072
  %v4074 = vrot.slane %v4073, 1
  %v4075 = vadd.f32 %v4073, %v4074
  %v4076 = vmul.f32 %v3931, 0.5
  %v4077 = vmul.f32 %v3937, 0.5
  %v4078 = vmul.f32 %v3943, 0.5
  %v4079 = vmul.f32 %v3949, 0.5
  %v4080 = vmul.f32 %v3955, 0.5
  %v4081 = vmul.f32 %v3961, 0.5
  %v4082 = vmul.f32 %v3967, 0.5
  %v4083 = vmul.f32 %v3973, 0.5
  %v4084 = vmul.f32 %v3979, 0.5
  %v4085 = vmul.f32 %v3985, 0.5
  %v4086 = vmul.f32 %v3991, 0.5
  %v4087 = vmul.f32 %v3997, 0.5
  %v4088 = vmul.f32 %v4003, 0.5
  %v4089 = vmul.f32 %v4009, 0.5
  %v4090 = vmul.f32 %v4015, 0.5
  %v4091 = vmul.f32 %v4021, 0.5
  %v4092 = vmul.f32 %v4027, 0.5
  %v4093 = vmul.f32 %v4033, 0.5
  %v4094 = vmul.f32 %v4039, 0.5
  %v4095 = vmul.f32 %v4045, 0.5
  %v4096 = vmul.f32 %v4051, 0.5
  %v4097 = vmul.f32 %v4057, 0.5
  %v4098 = vmul.f32 %v4063, 0.5
  %v4099 = vmul.f32 %v4069, 0.5
  %v4100 = vmul.f32 %v4075, 0.5
  %v4101 = vsub.f32 %v3870, %v4076
  %v4102 = vsub.f32 %v3871, %v4077
  %v4103 = vsub.f32 %v3872, %v4078
  %v4104 = vsub.f32 %v3873, %v4079
  %v4105 = vsub.f32 %v3874, %v4080
  %v4106 = vsub.f32 %v3875, %v4081
  %v4107 = vsub.f32 %v3876, %v4082
  %v4108 = vsub.f32 %v3877, %v4083
  %v4109 = vsub.f32 %v3878, %v4084
  %v4110 = vsub.f32 %v3879, %v4085
  %v4111 = vsub.f32 %v3880, %v4086
  %v4112 = vsub.f32 %v3881, %v4087
  %v4113 = vsub.f32 %v3882, %v4088
  %v4114 = vsub.f32 %v3883, %v4089
  %v4115 = vsub.f32 %v3884, %v4090
  %v4116 = vsub.f32 %v3885, %v4091
  %v4117 = vsub.f32 %v3886, %v4092
  %v4118 = vsub.f32 %v3887, %v4093
  %v4119 = vsub.f32 %v3888, %v4094
  %v4120 = vsub.f32 %v3889, %v4095
  %v4121 = vsub.f32 %v3890, %v4096
  %v4122 = vsub.f32 %v3891, %v4097
  %v4123 = vsub.f32 %v3892, %v4098
  %v4124 = vsub.f32 %v3893, %v4099
  %v4125 = vsub.f32 %v3894, %v4100
  %v4126 = vmul.f32 %v4101, %v3899
  %v4127 = vmul.f32 %v4102, %v3899
  %v4128 = vmul.f32 %v4103, %v3899
  %v4129 = vmul.f32 %v4104, %v3899
  %v4130 = vmul.f32 %v4105, %v3899
  %v4131 = vmul.f32 %v4106, %v3899
  %v4132 = vmul.f32 %v4107, %v3899
  %v4133 = vmul.f32 %v4108, %v3899
  %v4134 = vmul.f32 %v4109, %v3899
  %v4135 = vmul.f32 %v4110, %v3899
  %v4136 = vmul.f32 %v4111, %v3899
  %v4137 = vmul.f32 %v4112, %v3899
  %v4138 = vmul.f32 %v4113, %v3899
  %v4139 = vmul.f32 %v4114, %v3899
  %v4140 = vmul.f32 %v4115, %v3899
  %v4141 = vmul.f32 %v4116, %v3899
  %v4142 = vmul.f32 %v4117, %v3899
  %v4143 = vmul.f32 %v4118, %v3899
  %v4144 = vmul.f32 %v4119, %v3899
  %v4145 = vmul.f32 %v4120, %v3899
  %v4146 = vmul.f32 %v4121, %v3899
  %v4147 = vmul.f32 %v4122, %v3899
  %v4148 = vmul.f32 %v4123, %v3899
  %v4149 = vmul.f32 %v4124, %v3899
  %v4150 = vmul.f32 %v4125, %v3899
  %v4151 = vmul.f32 %v4126, %v4126
  %v4152 = vmul.f32 %v4127, %v4127
  %v4153 = vmul.f32 %v4128, %v4128
  %v4154 = vmul.f32 %v4129, %v4129
  %v4155 = vmul.f32 %v4130, %v4130
  %v4156 = vmul.f32 %v4131, %v4131
  %v4157 = vmul.f32 %v4132, %v4132
  %v4158 = vmul.f32 %v4133, %v4133
  %v4159 = vmul.f32 %v4134, %v4134
  %v4160 = vmul.f32 %v4135, %v4135
  %v4161 = vmul.f32 %v4136, %v4136
  %v4162 = vmul.f32 %v4137, %v4137
  %v4163 = vmul.f32 %v4138, %v4138
  %v4164 = vmul.f32 %v4139, %v4139
  %v4165 = vmul.f32 %v4140, %v4140
  %v4166 = vmul.f32 %v4141, %v4141
  %v4167 = vmul.f32 %v4142, %v4142
  %v4168 = vmul.f32 %v4143, %v4143
  %v4169 = vmul.f32 %v4144, %v4144
  %v4170 = vmul.f32 %v4145, %v4145
  %v4171 = vmul.f32 %v4146, %v4146
  %v4172 = vmul.f32 %v4147, %v4147
  %v4173 = vmul.f32 %v4148, %v4148
  %v4174 = vmul.f32 %v4149, %v4149
  %v4175 = vmul.f32 %v4150, %v4150
  %v4176 = vrot.slane %v4151, 4
  %v4177 = vadd.f32 %v4151, %v4176
  %v4178 = vrot.slane %v4177, 2
  %v4179 = vadd.f32 %v4177, %v4178
  %v4180 = vrot.slane %v4179, 1
  %v4181 = vadd.f32 %v4179, %v4180
  %v4182 = vrot.slane %v4152, 4
  %v4183 = vadd.f32 %v4152, %v4182
  %v4184 = vrot.slane %v4183, 2
  %v4185 = vadd.f32 %v4183, %v4184
  %v4186 = vrot.slane %v4185, 1
  %v4187 = vadd.f32 %v4185, %v4186
  %v4188 = vrot.slane %v4153, 4
  %v4189 = vadd.f32 %v4153, %v4188
  %v4190 = vrot.slane %v4189, 2
  %v4191 = vadd.f32 %v4189, %v4190
  %v4192 = vrot.slane %v4191, 1
  %v4193 = vadd.f32 %v4191, %v4192
  %v4194 = vrot.slane %v4154, 4
  %v4195 = vadd.f32 %v4154, %v4194
  %v4196 = vrot.slane %v4195, 2
  %v4197 = vadd.f32 %v4195, %v4196
  %v4198 = vrot.slane %v4197, 1
  %v4199 = vadd.f32 %v4197, %v4198
  %v4200 = vrot.slane %v4155, 4
  %v4201 = vadd.f32 %v4155, %v4200
  %v4202 = vrot.slane %v4201, 2
  %v4203 = vadd.f32 %v4201, %v4202
  %v4204 = vrot.slane %v4203, 1
  %v4205 = vadd.f32 %v4203, %v4204
  %v4206 = vrot.slane %v4156, 4
  %v4207 = vadd.f32 %v4156, %v4206
  %v4208 = vrot.slane %v4207, 2
  %v4209 = vadd.f32 %v4207, %v4208
  %v4210 = vrot.slane %v4209, 1
  %v4211 = vadd.f32 %v4209, %v4210
  %v4212 = vrot.slane %v4157, 4
  %v4213 = vadd.f32 %v4157, %v4212
  %v4214 = vrot.slane %v4213, 2
  %v4215 = vadd.f32 %v4213, %v4214
  %v4216 = vrot.slane %v4215, 1
  %v4217 = vadd.f32 %v4215, %v4216
  %v4218 = vrot.slane %v4158, 4
  %v4219 = vadd.f32 %v4158, %v4218
  %v4220 = vrot.slane %v4219, 2
  %v4221 = vadd.f32 %v4219, %v4220
  %v4222 = vrot.slane %v4221, 1
  %v4223 = vadd.f32 %v4221, %v4222
  %v4224 = vrot.slane %v4159, 4
  %v4225 = vadd.f32 %v4159, %v4224
  %v4226 = vrot.slane %v4225, 2
  %v4227 = vadd.f32 %v4225, %v4226
  %v4228 = vrot.slane %v4227, 1
  %v4229 = vadd.f32 %v4227, %v4228
  %v4230 = vrot.slane %v4160, 4
  %v4231 = vadd.f32 %v4160, %v4230
  %v4232 = vrot.slane %v4231, 2
  %v4233 = vadd.f32 %v4231, %v4232
  %v4234 = vrot.slane %v4233, 1
  %v4235 = vadd.f32 %v4233, %v4234
  %v4236 = vrot.slane %v4161, 4
  %v4237 = vadd.f32 %v4161, %v4236
  %v4238 = vrot.slane %v4237, 2
  %v4239 = vadd.f32 %v4237, %v4238
  %v4240 = vrot.slane %v4239, 1
  %v4241 = vadd.f32 %v4239, %v4240
  %v4242 = vrot.slane %v4162, 4
  %v4243 = vadd.f32 %v4162, %v4242
  %v4244 = vrot.slane %v4243, 2
  %v4245 = vadd.f32 %v4243, %v4244
  %v4246 = vrot.slane %v4245, 1
  %v4247 = vadd.f32 %v4245, %v4246
  %v4248 = vrot.slane %v4163, 4
  %v4249 = vadd.f32 %v4163, %v4248
  %v4250 = vrot.slane %v4249, 2
  %v4251 = vadd.f32 %v4249, %v4250
  %v4252 = vrot.slane %v4251, 1
  %v4253 = vadd.f32 %v4251, %v4252
  %v4254 = vrot.slane %v4164, 4
  %v4255 = vadd.f32 %v4164, %v4254
  %v4256 = vrot.slane %v4255, 2
  %v4257 = vadd.f32 %v4255, %v4256
  %v4258 = vrot.slane %v4257, 1
  %v4259 = vadd.f32 %v4257, %v4258
  %v4260 = vrot.slane %v4165, 4
  %v4261 = vadd.f32 %v4165, %v4260
  %v4262 = vrot.slane %v4261, 2
  %v4263 = vadd.f32 %v4261, %v4262
  %v4264 = vrot.slane %v4263, 1
  %v4265 = vadd.f32 %v4263, %v4264
  %v4266 = vrot.slane %v4166, 4
  %v4267 = vadd.f32 %v4166, %v4266
  %v4268 = vrot.slane %v4267, 2
  %v4269 = vadd.f32 %v4267, %v4268
  %v4270 = vrot.slane %v4269, 1
  %v4271 = vadd.f32 %v4269, %v4270
  %v4272 = vrot.slane %v4167, 4
  %v4273 = vadd.f32 %v4167, %v4272
  %v4274 = vrot.slane %v4273, 2
  %v4275 = vadd.f32 %v4273, %v4274
  %v4276 = vrot.slane %v4275, 1
  %v4277 = vadd.f32 %v4275, %v4276
  %v4278 = vrot.slane %v4168, 4
  %v4279 = vadd.f32 %v4168, %v4278
  %v4280 = vrot.slane %v4279, 2
  %v4281 = vadd.f32 %v4279, %v4280
  %v4282 = vrot.slane %v4281, 1
  %v4283 = vadd.f32 %v4281, %v4282
  %v4284 = vrot.slane %v4169, 4
  %v4285 = vadd.f32 %v4169, %v4284
  %v4286 = vrot.slane %v4285, 2
  %v4287 = vadd.f32 %v4285, %v4286
  %v4288 = vrot.slane %v4287, 1
  %v4289 = vadd.f32 %v4287, %v4288
  %v4290 = vrot.slane %v4170, 4
  %v4291 = vadd.f32 %v4170, %v4290
  %v4292 = vrot.slane %v4291, 2
  %v4293 = vadd.f32 %v4291, %v4292
  %v4294 = vrot.slane %v4293, 1
  %v4295 = vadd.f32 %v4293, %v4294
  %v4296 = vrot.slane %v4171, 4
  %v4297 = vadd.f32 %v4171, %v4296
  %v4298 = vrot.slane %v4297, 2
  %v4299 = vadd.f32 %v4297, %v4298
  %v4300 = vrot.slane %v4299, 1
  %v4301 = vadd.f32 %v4299, %v4300
  %v4302 = vrot.slane %v4172, 4
  %v4303 = vadd.f32 %v4172, %v4302
  %v4304 = vrot.slane %v4303, 2
  %v4305 = vadd.f32 %v4303, %v4304
  %v4306 = vrot.slane %v4305, 1
  %v4307 = vadd.f32 %v4305, %v4306
  %v4308 = vrot.slane %v4173, 4
  %v4309 = vadd.f32 %v4173, %v4308
  %v4310 = vrot.slane %v4309, 2
  %v4311 = vadd.f32 %v4309, %v4310
  %v4312 = vrot.slane %v4311, 1
  %v4313 = vadd.f32 %v4311, %v4312
  %v4314 = vrot.slane %v4174, 4
  %v4315 = vadd.f32 %v4174, %v4314
  %v4316 = vrot.slane %v4315, 2
  %v4317 = vadd.f32 %v4315, %v4316
  %v4318 = vrot.slane %v4317, 1
  %v4319 = vadd.f32 %v4317, %v4318
  %v4320 = vrot.slane %v4175, 4
  %v4321 = vadd.f32 %v4175, %v4320
  %v4322 = vrot.slane %v4321, 2
  %v4323 = vadd.f32 %v4321, %v4322
  %v4324 = vrot.slane %v4323, 1
  %v4325 = vadd.f32 %v4323, %v4324
  %v4326 = vmul.f32 %v4181, 0.5
  %v4327 = vmul.f32 %v4187, 0.5
  %v4328 = vmul.f32 %v4193, 0.5
  %v4329 = vmul.f32 %v4199, 0.5
  %v4330 = vmul.f32 %v4205, 0.5
  %v4331 = vmul.f32 %v4211, 0.5
  %v4332 = vmul.f32 %v4217, 0.5
  %v4333 = vmul.f32 %v4223, 0.5
  %v4334 = vmul.f32 %v4229, 0.5
  %v4335 = vmul.f32 %v4235, 0.5
  %v4336 = vmul.f32 %v4241, 0.5
  %v4337 = vmul.f32 %v4247, 0.5
  %v4338 = vmul.f32 %v4253, 0.5
  %v4339 = vmul.f32 %v4259, 0.5
  %v4340 = vmul.f32 %v4265, 0.5
  %v4341 = vmul.f32 %v4271, 0.5
  %v4342 = vmul.f32 %v4277, 0.5
  %v4343 = vmul.f32 %v4283, 0.5
  %v4344 = vmul.f32 %v4289, 0.5
  %v4345 = vmul.f32 %v4295, 0.5
  %v4346 = vmul.f32 %v4301, 0.5
  %v4347 = vmul.f32 %v4307, 0.5
  %v4348 = vmul.f32 %v4313, 0.5
  %v4349 = vmul.f32 %v4319, 0.5
  %v4350 = vmul.f32 %v4325, 0.5
  %v4351 = vadd.f32 %v4326, 1e-05
  %v4352 = vadd.f32 %v4327, 1e-05
  %v4353 = vadd.f32 %v4328, 1e-05
  %v4354 = vadd.f32 %v4329, 1e-05
  %v4355 = vadd.f32 %v4330, 1e-05
  %v4356 = vadd.f32 %v4331, 1e-05
  %v4357 = vadd.f32 %v4332, 1e-05
  %v4358 = vadd.f32 %v4333, 1e-05
  %v4359 = vadd.f32 %v4334, 1e-05
  %v4360 = vadd.f32 %v4335, 1e-05
  %v4361 = vadd.f32 %v4336, 1e-05
  %v4362 = vadd.f32 %v4337, 1e-05
  %v4363 = vadd.f32 %v4338, 1e-05
  %v4364 = vadd.f32 %v4339, 1e-05
  %v4365 = vadd.f32 %v4340, 1e-05
  %v4366 = vadd.f32 %v4341, 1e-05
  %v4367 = vadd.f32 %v4342, 1e-05
  %v4368 = vadd.f32 %v4343, 1e-05
  %v4369 = vadd.f32 %v4344, 1e-05
  %v4370 = vadd.f32 %v4345, 1e-05
  %v4371 = vadd.f32 %v4346, 1e-05
  %v4372 = vadd.f32 %v4347, 1e-05
  %v4373 = vadd.f32 %v4348, 1e-05
  %v4374 = vadd.f32 %v4349, 1e-05
  %v4375 = vadd.f32 %v4350, 1e-05
  %v4376 = vrsqrt.pop %v4351
  %v4377 = vmul.f32 %v4376, %v4351
  %v4378 = vmul.f32 %v4377, %v4376
  %v4379 = vmul.f32 0.5, %v4378
  %v4380 = vsub.f32 1.5, %v4379
  %v4381 = vmul.f32 %v4376, %v4380
  %vm4382 = vweird.f32 %v4351
  %vm4383 = vweird.f32 %v4376
  %vm4384 = vmor %vm4382, %vm4383
  %v4385 = vsel %vm4384, %v4376, %v4381
  %v4386 = vrsqrt.pop %v4352
  %v4387 = vmul.f32 %v4386, %v4352
  %v4388 = vmul.f32 %v4387, %v4386
  %v4389 = vmul.f32 0.5, %v4388
  %v4390 = vsub.f32 1.5, %v4389
  %v4391 = vmul.f32 %v4386, %v4390
  %vm4392 = vweird.f32 %v4352
  %vm4393 = vweird.f32 %v4386
  %vm4394 = vmor %vm4392, %vm4393
  %v4395 = vsel %vm4394, %v4386, %v4391
  %v4396 = vrsqrt.pop %v4353
  %v4397 = vmul.f32 %v4396, %v4353
  %v4398 = vmul.f32 %v4397, %v4396
  %v4399 = vmul.f32 0.5, %v4398
  %v4400 = vsub.f32 1.5, %v4399
  %v4401 = vmul.f32 %v4396, %v4400
  %vm4402 = vweird.f32 %v4353
  %vm4403 = vweird.f32 %v4396
  %vm4404 = vmor %vm4402, %vm4403
  %v4405 = vsel %vm4404, %v4396, %v4401
  %v4406 = vrsqrt.pop %v4354
  %v4407 = vmul.f32 %v4406, %v4354
  %v4408 = vmul.f32 %v4407, %v4406
  %v4409 = vmul.f32 0.5, %v4408
  %v4410 = vsub.f32 1.5, %v4409
  %v4411 = vmul.f32 %v4406, %v4410
  %vm4412 = vweird.f32 %v4354
  %vm4413 = vweird.f32 %v4406
  %vm4414 = vmor %vm4412, %vm4413
  %v4415 = vsel %vm4414, %v4406, %v4411
  %v4416 = vrsqrt.pop %v4355
  %v4417 = vmul.f32 %v4416, %v4355
  %v4418 = vmul.f32 %v4417, %v4416
  %v4419 = vmul.f32 0.5, %v4418
  %v4420 = vsub.f32 1.5, %v4419
  %v4421 = vmul.f32 %v4416, %v4420
  %vm4422 = vweird.f32 %v4355
  %vm4423 = vweird.f32 %v4416
  %vm4424 = vmor %vm4422, %vm4423
  %v4425 = vsel %vm4424, %v4416, %v4421
  %v4426 = vrsqrt.pop %v4356
  %v4427 = vmul.f32 %v4426, %v4356
  %v4428 = vmul.f32 %v4427, %v4426
  %v4429 = vmul.f32 0.5, %v4428
  %v4430 = vsub.f32 1.5, %v4429
  %v4431 = vmul.f32 %v4426, %v4430
  %vm4432 = vweird.f32 %v4356
  %vm4433 = vweird.f32 %v4426
  %vm4434 = vmor %vm4432, %vm4433
  %v4435 = vsel %vm4434, %v4426, %v4431
  %v4436 = vrsqrt.pop %v4357
  %v4437 = vmul.f32 %v4436, %v4357
  %v4438 = vmul.f32 %v4437, %v4436
  %v4439 = vmul.f32 0.5, %v4438
  %v4440 = vsub.f32 1.5, %v4439
  %v4441 = vmul.f32 %v4436, %v4440
  %vm4442 = vweird.f32 %v4357
  %vm4443 = vweird.f32 %v4436
  %vm4444 = vmor %vm4442, %vm4443
  %v4445 = vsel %vm4444, %v4436, %v4441
  %v4446 = vrsqrt.pop %v4358
  %v4447 = vmul.f32 %v4446, %v4358
  %v4448 = vmul.f32 %v4447, %v4446
  %v4449 = vmul.f32 0.5, %v4448
  %v4450 = vsub.f32 1.5, %v4449
  %v4451 = vmul.f32 %v4446, %v4450
  %vm4452 = vweird.f32 %v4358
  %vm4453 = vweird.f32 %v4446
  %vm4454 = vmor %vm4452, %vm4453
  %v4455 = vsel %vm4454, %v4446, %v4451
  %v4456 = vrsqrt.pop %v4359
  %v4457 = vmul.f32 %v4456, %v4359
  %v4458 = vmul.f32 %v4457, %v4456
  %v4459 = vmul.f32 0.5, %v4458
  %v4460 = vsub.f32 1.5, %v4459
  %v4461 = vmul.f32 %v4456, %v4460
  %vm4462 = vweird.f32 %v4359
  %vm4463 = vweird.f32 %v4456
  %vm4464 = vmor %vm4462, %vm4463
  %v4465 = vsel %vm4464, %v4456, %v4461
  %v4466 = vrsqrt.pop %v4360
  %v4467 = vmul.f32 %v4466, %v4360
  %v4468 = vmul.f32 %v4467, %v4466
  %v4469 = vmul.f32 0.5, %v4468
  %v4470 = vsub.f32 1.5, %v4469
  %v4471 = vmul.f32 %v4466, %v4470
  %vm4472 = vweird.f32 %v4360
  %vm4473 = vweird.f32 %v4466
  %vm4474 = vmor %vm4472, %vm4473
  %v4475 = vsel %vm4474, %v4466, %v4471
  %v4476 = vrsqrt.pop %v4361
  %v4477 = vmul.f32 %v4476, %v4361
  %v4478 = vmul.f32 %v4477, %v4476
  %v4479 = vmul.f32 0.5, %v4478
  %v4480 = vsub.f32 1.5, %v4479
  %v4481 = vmul.f32 %v4476, %v4480
  %vm4482 = vweird.f32 %v4361
  %vm4483 = vweird.f32 %v4476
  %vm4484 = vmor %vm4482, %vm4483
  %v4485 = vsel %vm4484, %v4476, %v4481
  %v4486 = vrsqrt.pop %v4362
  %v4487 = vmul.f32 %v4486, %v4362
  %v4488 = vmul.f32 %v4487, %v4486
  %v4489 = vmul.f32 0.5, %v4488
  %v4490 = vsub.f32 1.5, %v4489
  %v4491 = vmul.f32 %v4486, %v4490
  %vm4492 = vweird.f32 %v4362
  %vm4493 = vweird.f32 %v4486
  %vm4494 = vmor %vm4492, %vm4493
  %v4495 = vsel %vm4494, %v4486, %v4491
  %v4496 = vrsqrt.pop %v4363
  %v4497 = vmul.f32 %v4496, %v4363
  %v4498 = vmul.f32 %v4497, %v4496
  %v4499 = vmul.f32 0.5, %v4498
  %v4500 = vsub.f32 1.5, %v4499
  %v4501 = vmul.f32 %v4496, %v4500
  %vm4502 = vweird.f32 %v4363
  %vm4503 = vweird.f32 %v4496
  %vm4504 = vmor %vm4502, %vm4503
  %v4505 = vsel %vm4504, %v4496, %v4501
  %v4506 = vrsqrt.pop %v4364
  %v4507 = vmul.f32 %v4506, %v4364
  %v4508 = vmul.f32 %v4507, %v4506
  %v4509 = vmul.f32 0.5, %v4508
  %v4510 = vsub.f32 1.5, %v4509
  %v4511 = vmul.f32 %v4506, %v4510
  %vm4512 = vweird.f32 %v4364
  %vm4513 = vweird.f32 %v4506
  %vm4514 = vmor %vm4512, %vm4513
  %v4515 = vsel %vm4514, %v4506, %v4511
  %v4516 = vrsqrt.pop %v4365
  %v4517 = vmul.f32 %v4516, %v4365
  %v4518 = vmul.f32 %v4517, %v4516
  %v4519 = vmul.f32 0.5, %v4518
  %v4520 = vsub.f32 1.5, %v4519
  %v4521 = vmul.f32 %v4516, %v4520
  %vm4522 = vweird.f32 %v4365
  %vm4523 = vweird.f32 %v4516
  %vm4524 = vmor %vm4522, %vm4523
  %v4525 = vsel %vm4524, %v4516, %v4521
  %v4526 = vrsqrt.pop %v4366
  %v4527 = vmul.f32 %v4526, %v4366
  %v4528 = vmul.f32 %v4527, %v4526
  %v4529 = vmul.f32 0.5, %v4528
  %v4530 = vsub.f32 1.5, %v4529
  %v4531 = vmul.f32 %v4526, %v4530
  %vm4532 = vweird.f32 %v4366
  %vm4533 = vweird.f32 %v4526
  %vm4534 = vmor %vm4532, %vm4533
  %v4535 = vsel %vm4534, %v4526, %v4531
  %v4536 = vrsqrt.pop %v4367
  %v4537 = vmul.f32 %v4536, %v4367
  %v4538 = vmul.f32 %v4537, %v4536
  %v4539 = vmul.f32 0.5, %v4538
  %v4540 = vsub.f32 1.5, %v4539
  %v4541 = vmul.f32 %v4536, %v4540
  %vm4542 = vweird.f32 %v4367
  %vm4543 = vweird.f32 %v4536
  %vm4544 = vmor %vm4542, %vm4543
  %v4545 = vsel %vm4544, %v4536, %v4541
  %v4546 = vrsqrt.pop %v4368
  %v4547 = vmul.f32 %v4546, %v4368
  %v4548 = vmul.f32 %v4547, %v4546
  %v4549 = vmul.f32 0.5, %v4548
  %v4550 = vsub.f32 1.5, %v4549
  %v4551 = vmul.f32 %v4546, %v4550
  %vm4552 = vweird.f32 %v4368
  %vm4553 = vweird.f32 %v4546
  %vm4554 = vmor %vm4552, %vm4553
  %v4555 = vsel %vm4554, %v4546, %v4551
  %v4556 = vrsqrt.pop %v4369
  %v4557 = vmul.f32 %v4556, %v4369
  %v4558 = vmul.f32 %v4557, %v4556
  %v4559 = vmul.f32 0.5, %v4558
  %v4560 = vsub.f32 1.5, %v4559
  %v4561 = vmul.f32 %v4556, %v4560
  %vm4562 = vweird.f32 %v4369
  %vm4563 = vweird.f32 %v4556
  %vm4564 = vmor %vm4562, %vm4563
  %v4565 = vsel %vm4564, %v4556, %v4561
  %v4566 = vrsqrt.pop %v4370
  %v4567 = vmul.f32 %v4566, %v4370
  %v4568 = vmul.f32 %v4567, %v4566
  %v4569 = vmul.f32 0.5, %v4568
  %v4570 = vsub.f32 1.5, %v4569
  %v4571 = vmul.f32 %v4566, %v4570
  %vm4572 = vweird.f32 %v4370
  %vm4573 = vweird.f32 %v4566
  %vm4574 = vmor %vm4572, %vm4573
  %v4575 = vsel %vm4574, %v4566, %v4571
  %v4576 = vrsqrt.pop %v4371
  %v4577 = vmul.f32 %v4576, %v4371
  %v4578 = vmul.f32 %v4577, %v4576
  %v4579 = vmul.f32 0.5, %v4578
  %v4580 = vsub.f32 1.5, %v4579
  %v4581 = vmul.f32 %v4576, %v4580
  %vm4582 = vweird.f32 %v4371
  %vm4583 = vweird.f32 %v4576
  %vm4584 = vmor %vm4582, %vm4583
  %v4585 = vsel %vm4584, %v4576, %v4581
  %v4586 = vrsqrt.pop %v4372
  %v4587 = vmul.f32 %v4586, %v4372
  %v4588 = vmul.f32 %v4587, %v4586
  %v4589 = vmul.f32 0.5, %v4588
  %v4590 = vsub.f32 1.5, %v4589
  %v4591 = vmul.f32 %v4586, %v4590
  %vm4592 = vweird.f32 %v4372
  %vm4593 = vweird.f32 %v4586
  %vm4594 = vmor %vm4592, %vm4593
  %v4595 = vsel %vm4594, %v4586, %v4591
  %v4596 = vrsqrt.pop %v4373
  %v4597 = vmul.f32 %v4596, %v4373
  %v4598 = vmul.f32 %v4597, %v4596
  %v4599 = vmul.f32 0.5, %v4598
  %v4600 = vsub.f32 1.5, %v4599
  %v4601 = vmul.f32 %v4596, %v4600
  %vm4602 = vweird.f32 %v4373
  %vm4603 = vweird.f32 %v4596
  %vm4604 = vmor %vm4602, %vm4603
  %v4605 = vsel %vm4604, %v4596, %v4601
  %v4606 = vrsqrt.pop %v4374
  %v4607 = vmul.f32 %v4606, %v4374
  %v4608 = vmul.f32 %v4607, %v4606
  %v4609 = vmul.f32 0.5, %v4608
  %v4610 = vsub.f32 1.5, %v4609
  %v4611 = vmul.f32 %v4606, %v4610
  %vm4612 = vweird.f32 %v4374
  %vm4613 = vweird.f32 %v4606
  %vm4614 = vmor %vm4612, %vm4613
  %v4615 = vsel %vm4614, %v4606, %v4611
  %v4616 = vrsqrt.pop %v4375
  %v4617 = vmul.f32 %v4616, %v4375
  %v4618 = vmul.f32 %v4617, %v4616
  %v4619 = vmul.f32 0.5, %v4618
  %v4620 = vsub.f32 1.5, %v4619
  %v4621 = vmul.f32 %v4616, %v4620
  %vm4622 = vweird.f32 %v4375
  %vm4623 = vweird.f32 %v4616
  %vm4624 = vmor %vm4622, %vm4623
  %v4625 = vsel %vm4624, %v4616, %v4621
  %v4626 = vmul.f32 %v4101, %v4385
  %v4627 = vmul.f32 %v4102, %v4395
  %v4628 = vmul.f32 %v4103, %v4405
  %v4629 = vmul.f32 %v4104, %v4415
  %v4630 = vmul.f32 %v4105, %v4425
  %v4631 = vmul.f32 %v4106, %v4435
  %v4632 = vmul.f32 %v4107, %v4445
  %v4633 = vmul.f32 %v4108, %v4455
  %v4634 = vmul.f32 %v4109, %v4465
  %v4635 = vmul.f32 %v4110, %v4475
  %v4636 = vmul.f32 %v4111, %v4485
  %v4637 = vmul.f32 %v4112, %v4495
  %v4638 = vmul.f32 %v4113, %v4505
  %v4639 = vmul.f32 %v4114, %v4515
  %v4640 = vmul.f32 %v4115, %v4525
  %v4641 = vmul.f32 %v4116, %v4535
  %v4642 = vmul.f32 %v4117, %v4545
  %v4643 = vmul.f32 %v4118, %v4555
  %v4644 = vmul.f32 %v4119, %v4565
  %v4645 = vmul.f32 %v4120, %v4575
  %v4646 = vmul.f32 %v4121, %v4585
  %v4647 = vmul.f32 %v4122, %v4595
  %v4648 = vmul.f32 %v4123, %v4605
  %v4649 = vmul.f32 %v4124, %v4615
  %v4650 = vmul.f32 %v4125, %v4625
  %v4651 = vld [vmem:[%s4] sm:$0xff]
  %v4652 = vld [vmem:[%s4 + $0x8] sm:$0xff]
  %v4653 = vld [vmem:[%s4 + $0x10] sm:$0xff]
  %v4654 = vld [vmem:[%s4 + $0x18] sm:$0x1]
  %v4659 = vperm.slane %v4651, 0
  %v4660 = vperm.slane %v4651, 1
  %v4661 = vperm.slane %v4651, 2
  %v4662 = vperm.slane %v4651, 3
  %v4663 = vperm.slane %v4651, 4
  %v4664 = vperm.slane %v4651, 5
  %v4665 = vperm.slane %v4651, 6
  %v4666 = vperm.slane %v4651, 7
  %v4667 = vperm.slane %v4652, 0
  %v4668 = vperm.slane %v4652, 1
  %v4669 = vperm.slane %v4652, 2
  %v4670 = vperm.slane %v4652, 3
  %v4671 = vperm.slane %v4652, 4
  %v4672 = vperm.slane %v4652, 5
  %v4673 = vperm.slane %v4652, 6
  %v4674 = vperm.slane %v4652, 7
  %v4675 = vperm.slane %v4653, 0
  %v4676 = vperm.slane %v4653, 1
  %v4677 = vperm.slane %v4653, 2
  %v4678 = vperm.slane %v4653, 3
  %v4679 = vperm.slane %v4653, 4
  %v4680 = vperm.slane %v4653, 5
  %v4681 = vperm.slane %v4653, 6
  %v4682 = vperm.slane %v4653, 7
  %v4683 = vperm.slane %v4654, 0
  %v4709 = vmul.f32 %v4626, %v4659
  %v4710 = vmul.f32 %v4627, %v4660
  %v4711 = vmul.f32 %v4628, %v4661
  %v4712 = vmul.f32 %v4629, %v4662
  %v4713 = vmul.f32 %v4630, %v4663
  %v4714 = vmul.f32 %v4631, %v4664
  %v4715 = vmul.f32 %v4632, %v4665
  %v4716 = vmul.f32 %v4633, %v4666
  %v4717 = vmul.f32 %v4634, %v4667
  %v4718 = vmul.f32 %v4635, %v4668
  %v4719 = vmul.f32 %v4636, %v4669
  %v4720 = vmul.f32 %v4637, %v4670
  %v4721 = vmul.f32 %v4638, %v4671
  %v4722 = vmul.f32 %v4639, %v4672
  %v4723 = vmul.f32 %v4640, %v4673
  %v4724 = vmul.f32 %v4641, %v4674
  %v4725 = vmul.f32 %v4642, %v4675
  %v4726 = vmul.f32 %v4643, %v4676
  %v4727 = vmul.f32 %v4644, %v4677
  %v4728 = vmul.f32 %v4645, %v4678
  %v4729 = vmul.f32 %v4646, %v4679
  %v4730 = vmul.f32 %v4647, %v4680
  %v4731 = vmul.f32 %v4648, %v4681
  %v4732 = vmul.f32 %v4649, %v4682
  %v4733 = vmul.f32 %v4650, %v4683
  %v4734 = vld [vmem:[%s5] sm:$0xff]
  %v4735 = vld [vmem:[%s5 + $0x8] sm:$0xff]
  %v4736 = vld [vmem:[%s5 + $0x10] sm:$0xff]
  %v4737 = vld [vmem:[%s5 + $0x18] sm:$0x1]
  %v4742 = vperm.slane %v4734, 0
  %v4743 = vperm.slane %v4734, 1
  %v4744 = vperm.slane %v4734, 2
  %v4745 = vperm.slane %v4734, 3
  %v4746 = vperm.slane %v4734, 4
  %v4747 = vperm.slane %v4734, 5
  %v4748 = vperm.slane %v4734, 6
  %v4749 = vperm.slane %v4734, 7
  %v4750 = vperm.slane %v4735, 0
  %v4751 = vperm.slane %v4735, 1
  %v4752 = vperm.slane %v4735, 2
  %v4753 = vperm.slane %v4735, 3
  %v4754 = vperm.slane %v4735, 4
  %v4755 = vperm.slane %v4735, 5
  %v4756 = vperm.slane %v4735, 6
  %v4757 = vperm.slane %v4735, 7
  %v4758 = vperm.slane %v4736, 0
  %v4759 = vperm.slane %v4736, 1
  %v4760 = vperm.slane %v4736, 2
  %v4761 = vperm.slane %v4736, 3
  %v4762 = vperm.slane %v4736, 4
  %v4763 = vperm.slane %v4736, 5
  %v4764 = vperm.slane %v4736, 6
  %v4765 = vperm.slane %v4736, 7
  %v4766 = vperm.slane %v4737, 0
  %v4792 = vadd.f32 %v4709, %v4742
  %v4793 = vadd.f32 %v4710, %v4743
  %v4794 = vadd.f32 %v4711, %v4744
  %v4795 = vadd.f32 %v4712, %v4745
  %v4796 = vadd.f32 %v4713, %v4746
  %v4797 = vadd.f32 %v4714, %v4747
  %v4798 = vadd.f32 %v4715, %v4748
  %v4799 = vadd.f32 %v4716, %v4749
  %v4800 = vadd.f32 %v4717, %v4750
  %v4801 = vadd.f32 %v4718, %v4751
  %v4802 = vadd.f32 %v4719, %v4752
  %v4803 = vadd.f32 %v4720, %v4753
  %v4804 = vadd.f32 %v4721, %v4754
  %v4805 = vadd.f32 %v4722, %v4755
  %v4806 = vadd.f32 %v4723, %v4756
  %v4807 = vadd.f32 %v4724, %v4757
  %v4808 = vadd.f32 %v4725, %v4758
  %v4809 = vadd.f32 %v4726, %v4759
  %v4810 = vadd.f32 %v4727, %v4760
  %v4811 = vadd.f32 %v4728, %v4761
  %v4812 = vadd.f32 %v4729, %v4762
  %v4813 = vadd.f32 %v4730, %v4763
  %v4814 = vadd.f32 %v4731, %v4764
  %v4815 = vadd.f32 %v4732, %v4765
  %v4816 = vadd.f32 %v4733, %v4766
  %v4817 = vmax.f32 %v4792, 0.0
  %v4818 = vmax.f32 %v4793, 0.0
  %v4819 = vmax.f32 %v4794, 0.0
  %v4820 = vmax.f32 %v4795, 0.0
  %v4821 = vmax.f32 %v4796, 0.0
  %v4822 = vmax.f32 %v4797, 0.0
  %v4823 = vmax.f32 %v4798, 0.0
  %v4824 = vmax.f32 %v4799, 0.0
  %v4825 = vmax.f32 %v4800, 0.0
  %v4826 = vmax.f32 %v4801, 0.0
  %v4827 = vmax.f32 %v4802, 0.0
  %v4828 = vmax.f32 %v4803, 0.0
  %v4829 = vmax.f32 %v4804, 0.0
  %v4830 = vmax.f32 %v4805, 0.0
  %v4831 = vmax.f32 %v4806, 0.0
  %v4832 = vmax.f32 %v4807, 0.0
  %v4833 = vmax.f32 %v4808, 0.0
  %v4834 = vmax.f32 %v4809, 0.0
  %v4835 = vmax.f32 %v4810, 0.0
  %v4836 = vmax.f32 %v4811, 0.0
  %v4837 = vmax.f32 %v4812, 0.0
  %v4838 = vmax.f32 %v4813, 0.0
  %v4839 = vmax.f32 %v4814, 0.0
  %v4840 = vmax.f32 %v4815, 0.0
  %v4841 = vmax.f32 %v4816, 0.0
  %v4842 = vld [vmem:[%s6] sm:$0xff]
  %v4843 = vld [vmem:[%s6 + $0x8] sm:$0xff]
  %v4844 = vld [vmem:[%s6 + $0x10] sm:$0xff]
  %v4845 = vld [vmem:[%s6 + $0x18] sm:$0xff]
  %v4846 = vld [vmem:[%s6 + $0x20] sm:$0xff]
  %v4847 = vld [vmem:[%s6 + $0x28] sm:$0xff]
  %v4848 = vld [vmem:[%s6 + $0x30] sm:$0xff]
  %v4849 = vld [vmem:[%s6 + $0x38] sm:$0xff]
  %v4850 = vld [vmem:[%s6 + $0x40] sm:$0xff]
  %v4851 = vld [vmem:[%s6 + $0x48] sm:$0xff]
  %v4852 = vld [vmem:[%s6 + $0x50] sm:$0xff]
  %v4853 = vld [vmem:[%s6 + $0x58] sm:$0xff]
  %v4854 = vld [vmem:[%s6 + $0x60] sm:$0xff]
  %v4855 = vld [vmem:[%s6 + $0x68] sm:$0xff]
  %v4856 = vld [vmem:[%s6 + $0x70] sm:$0xff]
  %v4857 = vld [vmem:[%s6 + $0x78] sm:$0xff]
  %v4858 = vld [vmem:[%s6 + $0x80] sm:$0xff]
  %v4859 = vld [vmem:[%s6 + $0x88] sm:$0xff]
  %v4860 = vld [vmem:[%s6 + $0x90] sm:$0xff]
  %v4861 = vld [vmem:[%s6 + $0x98] sm:$0xff]
  %v4862 = vld [vmem:[%s6 + $0xa0] sm:$0xff]
  %v4863 = vld [vmem:[%s6 + $0xa8] sm:$0xff]
  %v4864 = vld [vmem:[%s6 + $0xb0] sm:$0xff]
  %v4865 = vld [vmem:[%s6 + $0xb8] sm:$0xff]
  %v4866 = vld [vmem:[%s6 + $0xc0] sm:$0xff]
  %v4867 = vld [vmem:[%s6 + $0xc8] sm:$0xff]
  %v4868 = vld [vmem:[%s6 + $0xd0] sm:$0xff]
  %v4869 = vld [vmem:[%s6 + $0xd8] sm:$0xff]
  %v4870 = vld [vmem:[%s6 + $0xe0] sm:$0xff]
  %v4871 = vld [vmem:[%s6 + $0xe8] sm:$0xff]
  %v4872 = vld [vmem:[%s6 + $0xf0] sm:$0xff]
  %v4873 = vld [vmem:[%s6 + $0xf8] sm:$0xff]
  %v4874 = vld [vmem:[%s6 + $0x100] sm:$0xff]
  %v4875 = vld [vmem:[%s6 + $0x108] sm:$0xff]
  %v4876 = vld [vmem:[%s6 + $0x110] sm:$0xff]
  %v4877 = vld [vmem:[%s6 + $0x118] sm:$0xff]
  %v4878 = vld [vmem:[%s6 + $0x120] sm:$0xff]
  %v4879 = vld [vmem:[%s6 + $0x128] sm:$0xff]
  %v4880 = vld [vmem:[%s6 + $0x130] sm:$0xff]
  %v4881 = vld [vmem:[%s6 + $0x138] sm:$0xff]
  %v4882 = vld [vmem:[%s6 + $0x140] sm:$0xff]
  %v4883 = vld [vmem:[%s6 + $0x148] sm:$0xff]
  %v4884 = vld [vmem:[%s6 + $0x150] sm:$0xff]
  %v4885 = vld [vmem:[%s6 + $0x158] sm:$0xff]
  %v4886 = vld [vmem:[%s6 + $0x160] sm:$0xff]
  %v4887 = vld [vmem:[%s6 + $0x168] sm:$0xff]
  %v4888 = vld [vmem:[%s6 + $0x170] sm:$0xff]
  %v4889 = vld [vmem:[%s6 + $0x178] sm:$0xff]
  %v4890 = vld [vmem:[%s6 + $0x180] sm:$0xff]
  %v4891 = vld [vmem:[%s6 + $0x188] sm:$0xff]
  %v4892 = vld [vmem:[%s6 + $0x190] sm:$0xff]
  %v4893 = vld [vmem:[%s6 + $0x198] sm:$0xff]
  %v4894 = vld [vmem:[%s6 + $0x1a0] sm:$0xff]
  %v4895 = vld [vmem:[%s6 + $0x1a8] sm:$0xff]
  %v4896 = vld [vmem:[%s6 + $0x1b0] sm:$0xff]
  %v4897 = vld [vmem:[%s6 + $0x1b8] sm:$0xff]
  %v4898 = vld [vmem:[%s6 + $0x1c0] sm:$0xff]
  %v4899 = vld [vmem:[%s6 + $0x1c8] sm:$0xff]
  %v4900 = vld [vmem:[%s6 + $0x1d0] sm:$0xff]
  %v4901 = vld [vmem:[%s6 + $0x1d8] sm:$0xff]
  %v4902 = vld [vmem:[%s6 + $0x1e0] sm:$0xff]
  %v4903 = vld [vmem:[%s6 + $0x1e8] sm:$0xff]
  %v4904 = vld [vmem:[%s6 + $0x1f0] sm:$0xff]
  %v4905 = vld [vmem:[%s6 + $0x1f8] sm:$0xff]
  %v4906 = vld [vmem:[%s6 + $0x200] sm:$0xff]
  %v4907 = vld [vmem:[%s6 + $0x208] sm:$0xff]
  %v4908 = vld [vmem:[%s6 + $0x210] sm:$0xff]
  %v4909 = vld [vmem:[%s6 + $0x218] sm:$0xff]
  %v4910 = vld [vmem:[%s6 + $0x220] sm:$0xff]
  %v4911 = vld [vmem:[%s6 + $0x228] sm:$0xff]
  %v4912 = vld [vmem:[%s6 + $0x230] sm:$0xff]
  %v4913 = vld [vmem:[%s6 + $0x238] sm:$0xff]
  %v4914 = vld [vmem:[%s6 + $0x240] sm:$0xff]
  %v4915 = vld [vmem:[%s6 + $0x248] sm:$0xff]
  %v4916 = vld [vmem:[%s6 + $0x250] sm:$0xff]
  %v4917 = vld [vmem:[%s6 + $0x258] sm:$0xff]
  %v4918 = vld [vmem:[%s6 + $0x260] sm:$0xff]
  %v4919 = vld [vmem:[%s6 + $0x268] sm:$0xff]
  %v4920 = vld [vmem:[%s6 + $0x270] sm:$0xff]
  %v4921 = vld [vmem:[%s6 + $0x278] sm:$0xff]
  %v4922 = vld [vmem:[%s6 + $0x280] sm:$0xff]
  %v4923 = vld [vmem:[%s6 + $0x288] sm:$0xff]
  %v4924 = vld [vmem:[%s6 + $0x290] sm:$0xff]
  %v4925 = vld [vmem:[%s6 + $0x298] sm:$0xff]
  %v4926 = vld [vmem:[%s6 + $0x2a0] sm:$0xff]
  %v4927 = vld [vmem:[%s6 + $0x2a8] sm:$0xff]
  %v4928 = vld [vmem:[%s6 + $0x2b0] sm:$0xff]
  %v4929 = vld [vmem:[%s6 + $0x2b8] sm:$0xff]
  %v4930 = vld [vmem:[%s6 + $0x2c0] sm:$0xff]
  %v4931 = vld [vmem:[%s6 + $0x2c8] sm:$0xff]
  %v4932 = vld [vmem:[%s6 + $0x2d0] sm:$0xff]
  %v4933 = vld [vmem:[%s6 + $0x2d8] sm:$0xff]
  %v4934 = vld [vmem:[%s6 + $0x2e0] sm:$0xff]
  %v4935 = vld [vmem:[%s6 + $0x2e8] sm:$0xff]
  %v4936 = vld [vmem:[%s6 + $0x2f0] sm:$0xff]
  %v4937 = vld [vmem:[%s6 + $0x2f8] sm:$0xff]
  %v4938 = vld [vmem:[%s6 + $0x300] sm:$0xff]
  %v4939 = vld [vmem:[%s6 + $0x308] sm:$0xff]
  %v4940 = vld [vmem:[%s6 + $0x310] sm:$0xff]
  %v4941 = vld [vmem:[%s6 + $0x318] sm:$0xff]
  %v4942 = vld [vmem:[%s6 + $0x320] sm:$0xff]
  %v4943 = vld [vmem:[%s6 + $0x328] sm:$0xff]
  %v4944 = vld [vmem:[%s6 + $0x330] sm:$0xff]
  %v4945 = vld [vmem:[%s6 + $0x338] sm:$0xff]
  %v4946 = vld [vmem:[%s6 + $0x340] sm:$0xff]
  %v4947 = vld [vmem:[%s6 + $0x348] sm:$0xff]
  %v4948 = vld [vmem:[%s6 + $0x350] sm:$0xff]
  %v4949 = vld [vmem:[%s6 + $0x358] sm:$0xff]
  %v4950 = vld [vmem:[%s6 + $0x360] sm:$0xff]
  %v4951 = vld [vmem:[%s6 + $0x368] sm:$0xff]
  %v4952 = vld [vmem:[%s6 + $0x370] sm:$0xff]
  %v4953 = vld [vmem:[%s6 + $0x378] sm:$0xff]
  %v4954 = vld [vmem:[%s6 + $0x380] sm:$0xff]
  %v4955 = vld [vmem:[%s6 + $0x388] sm:$0xff]
  %v4956 = vld [vmem:[%s6 + $0x390] sm:$0xff]
  %v4957 = vld [vmem:[%s6 + $0x398] sm:$0xff]
  %v4958 = vld [vmem:[%s6 + $0x3a0] sm:$0xff]
  %v4959 = vld [vmem:[%s6 + $0x3a8] sm:$0xff]
  %v4960 = vld [vmem:[%s6 + $0x3b0] sm:$0xff]
  %v4961 = vld [vmem:[%s6 + $0x3b8] sm:$0xff]
  %v4962 = vld [vmem:[%s6 + $0x3c0] sm:$0xff]
  %v4963 = vld [vmem:[%s6 + $0x3c8] sm:$0xff]
  %v4964 = vld [vmem:[%s6 + $0x3d0] sm:$0xff]
  %v4965 = vld [vmem:[%s6 + $0x3d8] sm:$0xff]
  %v4966 = vld [vmem:[%s6 + $0x3e0] sm:$0xff]
  %v4967 = vld [vmem:[%s6 + $0x3e8] sm:$0xff]
  %v4968 = vld [vmem:[%s6 + $0x3f0] sm:$0xff]
  %v4969 = vld [vmem:[%s6 + $0x3f8] sm:$0xff]
  %v4970 = vld [vmem:[%s6 + $0x400] sm:$0xff]
  %v4971 = vld [vmem:[%s6 + $0x408] sm:$0xff]
  %v4972 = vld [vmem:[%s6 + $0x410] sm:$0xff]
  %v4973 = vld [vmem:[%s6 + $0x418] sm:$0xff]
  %v4974 = vld [vmem:[%s6 + $0x420] sm:$0xff]
  %v4975 = vld [vmem:[%s6 + $0x428] sm:$0xff]
  %v4976 = vld [vmem:[%s6 + $0x430] sm:$0xff]
  %v4977 = vld [vmem:[%s6 + $0x438] sm:$0xff]
  %v4978 = vld [vmem:[%s6 + $0x440] sm:$0xff]
  %v4979 = vld [vmem:[%s6 + $0x448] sm:$0xff]
  %v4980 = vld [vmem:[%s6 + $0x450] sm:$0xff]
  %v4981 = vld [vmem:[%s6 + $0x458] sm:$0xff]
  %v4982 = vld [vmem:[%s6 + $0x460] sm:$0xff]
  %v4983 = vld [vmem:[%s6 + $0x468] sm:$0xff]
  %v4984 = vld [vmem:[%s6 + $0x470] sm:$0xff]
  %v4985 = vld [vmem:[%s6 + $0x478] sm:$0xff]
  %v4986 = vld [vmem:[%s6 + $0x480] sm:$0xff]
  %v4987 = vld [vmem:[%s6 + $0x488] sm:$0xff]
  %v4988 = vld [vmem:[%s6 + $0x490] sm:$0xff]
  %v4989 = vld [vmem:[%s6 + $0x498] sm:$0xff]
  %v4990 = vld [vmem:[%s6 + $0x4a0] sm:$0xff]
  %v4991 = vld [vmem:[%s6 + $0x4a8] sm:$0xff]
  %v4992 = vld [vmem:[%s6 + $0x4b0] sm:$0xff]
  %v4993 = vld [vmem:[%s6 + $0x4b8] sm:$0xff]
  %v4994 = vld [vmem:[%s6 + $0x4c0] sm:$0xff]
  %v4995 = vld [vmem:[%s6 + $0x4c8] sm:$0xff]
  %v4996 = vld [vmem:[%s6 + $0x4d0] sm:$0xff]
  %v4997 = vld [vmem:[%s6 + $0x4d8] sm:$0xff]
  %v4998 = vld [vmem:[%s6 + $0x4e0] sm:$0xff]
  %v4999 = vld [vmem:[%s6 + $0x4e8] sm:$0xff]
  %v5000 = vld [vmem:[%s6 + $0x4f0] sm:$0xff]
  %v5001 = vld [vmem:[%s6 + $0x4f8] sm:$0xff]
  %v5002 = vld [vmem:[%s6 + $0x500] sm:$0xff]
  %v5003 = vld [vmem:[%s6 + $0x508] sm:$0xff]
  %v5004 = vld [vmem:[%s6 + $0x510] sm:$0xff]
  %v5005 = vld [vmem:[%s6 + $0x518] sm:$0xff]
  %v5006 = vld [vmem:[%s6 + $0x520] sm:$0xff]
  %v5007 = vld [vmem:[%s6 + $0x528] sm:$0xff]
  %v5008 = vld [vmem:[%s6 + $0x530] sm:$0xff]
  %v5009 = vld [vmem:[%s6 + $0x538] sm:$0xff]
  %v5010 = vld [vmem:[%s6 + $0x540] sm:$0xff]
  %v5011 = vld [vmem:[%s6 + $0x548] sm:$0xff]
  %v5012 = vld [vmem:[%s6 + $0x550] sm:$0xff]
  %v5013 = vld [vmem:[%s6 + $0x558] sm:$0xff]
  %v5014 = vld [vmem:[%s6 + $0x560] sm:$0xff]
  %v5015 = vld [vmem:[%s6 + $0x568] sm:$0xff]
  %v5016 = vld [vmem:[%s6 + $0x570] sm:$0xff]
  %v5017 = vld [vmem:[%s6 + $0x578] sm:$0xff]
  %v5018 = vld [vmem:[%s6 + $0x580] sm:$0xff]
  %v5019 = vld [vmem:[%s6 + $0x588] sm:$0xff]
  %v5020 = vld [vmem:[%s6 + $0x590] sm:$0xff]
  %v5021 = vld [vmem:[%s6 + $0x598] sm:$0xff]
  %v5022 = vld [vmem:[%s6 + $0x5a0] sm:$0xff]
  %v5023 = vld [vmem:[%s6 + $0x5a8] sm:$0xff]
  %v5024 = vld [vmem:[%s6 + $0x5b0] sm:$0xff]
  %v5025 = vld [vmem:[%s6 + $0x5b8] sm:$0xff]
  %v5026 = vld [vmem:[%s6 + $0x5c0] sm:$0xff]
  %v5027 = vld [vmem:[%s6 + $0x5c8] sm:$0xff]
  %v5028 = vld [vmem:[%s6 + $0x5d0] sm:$0xff]
  %v5029 = vld [vmem:[%s6 + $0x5d8] sm:$0xff]
  %v5030 = vld [vmem:[%s6 + $0x5e0] sm:$0xff]
  %v5031 = vld [vmem:[%s6 + $0x5e8] sm:$0xff]
  %v5032 = vld [vmem:[%s6 + $0x5f0] sm:$0xff]
  %v5033 = vld [vmem:[%s6 + $0x5f8] sm:$0xff]
  %v5034 = vld [vmem:[%s6 + $0x600] sm:$0xff]
  %v5035 = vld [vmem:[%s6 + $0x608] sm:$0xff]
  %v5036 = vld [vmem:[%s6 + $0x610] sm:$0xff]
  %v5037 = vld [vmem:[%s6 + $0x618] sm:$0xff]
  %v5038 = vld [vmem:[%s6 + $0x620] sm:$0xff]
  %v5039 = vld [vmem:[%s6 + $0x628] sm:$0xff]
  %v5040 = vld [vmem:[%s6 + $0x630] sm:$0xff]
  %v5041 = vld [vmem:[%s6 + $0x638] sm:$0xff]
  %v5042 = vld [vmem:[%s6 + $0x640] sm:$0xff]
  %v5043 = vld [vmem:[%s6 + $0x648] sm:$0xff]
  %v5044 = vld [vmem:[%s6 + $0x650] sm:$0xff]
  %v5045 = vld [vmem:[%s6 + $0x658] sm:$0xff]
  %v5046 = vld [vmem:[%s6 + $0x660] sm:$0xff]
  %v5047 = vld [vmem:[%s6 + $0x668] sm:$0xff]
  %v5048 = vld [vmem:[%s6 + $0x670] sm:$0xff]
  %v5049 = vld [vmem:[%s6 + $0x678] sm:$0xff]
  %v5050 = vld [vmem:[%s6 + $0x680] sm:$0xff]
  %v5051 = vld [vmem:[%s6 + $0x688] sm:$0xff]
  %v5052 = vld [vmem:[%s6 + $0x690] sm:$0xff]
  %v5053 = vld [vmem:[%s6 + $0x698] sm:$0xff]
  %v5054 = vld [vmem:[%s6 + $0x6a0] sm:$0xff]
  %v5055 = vld [vmem:[%s6 + $0x6a8] sm:$0xff]
  %v5056 = vld [vmem:[%s6 + $0x6b0] sm:$0xff]
  %v5057 = vld [vmem:[%s6 + $0x6b8] sm:$0xff]
  %v5058 = vld [vmem:[%s6 + $0x6c0] sm:$0xff]
  %v5059 = vld [vmem:[%s6 + $0x6c8] sm:$0xff]
  %v5060 = vld [vmem:[%s6 + $0x6d0] sm:$0xff]
  %v5061 = vld [vmem:[%s6 + $0x6d8] sm:$0xff]
  %v5062 = vld [vmem:[%s6 + $0x6e0] sm:$0xff]
  %v5063 = vld [vmem:[%s6 + $0x6e8] sm:$0xff]
  %v5064 = vld [vmem:[%s6 + $0x6f0] sm:$0xff]
  %v5065 = vld [vmem:[%s6 + $0x6f8] sm:$0xff]
  %v5066 = vld [vmem:[%s6 + $0x700] sm:$0xff]
  %v5067 = vld [vmem:[%s6 + $0x708] sm:$0xff]
  %v5068 = vld [vmem:[%s6 + $0x710] sm:$0xff]
  %v5069 = vld [vmem:[%s6 + $0x718] sm:$0xff]
  %v5070 = vld [vmem:[%s6 + $0x720] sm:$0xff]
  %v5071 = vld [vmem:[%s6 + $0x728] sm:$0xff]
  %v5072 = vld [vmem:[%s6 + $0x730] sm:$0xff]
  %v5073 = vld [vmem:[%s6 + $0x738] sm:$0xff]
  %v5074 = vld [vmem:[%s6 + $0x740] sm:$0xff]
  %v5075 = vld [vmem:[%s6 + $0x748] sm:$0xff]
  %v5076 = vld [vmem:[%s6 + $0x750] sm:$0xff]
  %v5077 = vld [vmem:[%s6 + $0x758] sm:$0xff]
  %v5078 = vld [vmem:[%s6 + $0x760] sm:$0xff]
  %v5079 = vld [vmem:[%s6 + $0x768] sm:$0xff]
  %v5080 = vld [vmem:[%s6 + $0x770] sm:$0xff]
  %v5081 = vld [vmem:[%s6 + $0x778] sm:$0xff]
  %v5082 = vld [vmem:[%s6 + $0x780] sm:$0xff]
  %v5083 = vld [vmem:[%s6 + $0x788] sm:$0xff]
  %v5084 = vld [vmem:[%s6 + $0x790] sm:$0xff]
  %v5085 = vld [vmem:[%s6 + $0x798] sm:$0xff]
  %v5086 = vld [vmem:[%s6 + $0x7a0] sm:$0xff]
  %v5087 = vld [vmem:[%s6 + $0x7a8] sm:$0xff]
  %v5088 = vld [vmem:[%s6 + $0x7b0] sm:$0xff]
  %v5089 = vld [vmem:[%s6 + $0x7b8] sm:$0xff]
  %v5090 = vld [vmem:[%s6 + $0x7c0] sm:$0xff]
  %v5091 = vld [vmem:[%s6 + $0x7c8] sm:$0xff]
  %v5092 = vld [vmem:[%s6 + $0x7d0] sm:$0xff]
  %v5093 = vld [vmem:[%s6 + $0x7d8] sm:$0xff]
  %v5094 = vld [vmem:[%s6 + $0x7e0] sm:$0xff]
  %v5095 = vld [vmem:[%s6 + $0x7e8] sm:$0xff]
  %v5096 = vld [vmem:[%s6 + $0x7f0] sm:$0xff]
  %v5097 = vld [vmem:[%s6 + $0x7f8] sm:$0xff]
  %v5098 = vld [vmem:[%s6 + $0x800] sm:$0xff]
  %v5099 = vld [vmem:[%s6 + $0x808] sm:$0xff]
  %v5100 = vld [vmem:[%s6 + $0x810] sm:$0xff]
  %v5101 = vld [vmem:[%s6 + $0x818] sm:$0xff]
  %v5102 = vld [vmem:[%s6 + $0x820] sm:$0xff]
  %v5103 = vld [vmem:[%s6 + $0x828] sm:$0xff]
  %v5104 = vld [vmem:[%s6 + $0x830] sm:$0xff]
  %v5105 = vld [vmem:[%s6 + $0x838] sm:$0xff]
  %v5106 = vld [vmem:[%s6 + $0x840] sm:$0xff]
  %v5107 = vld [vmem:[%s6 + $0x848] sm:$0xff]
  %v5108 = vld [vmem:[%s6 + $0x850] sm:$0xff]
  %v5109 = vld [vmem:[%s6 + $0x858] sm:$0xff]
  %v5110 = vld [vmem:[%s6 + $0x860] sm:$0xff]
  %v5111 = vld [vmem:[%s6 + $0x868] sm:$0xff]
  %v5112 = vld [vmem:[%s6 + $0x870] sm:$0xff]
  %v5113 = vld [vmem:[%s6 + $0x878] sm:$0xff]
  %v5114 = vld [vmem:[%s6 + $0x880] sm:$0xff]
  %v5115 = vld [vmem:[%s6 + $0x888] sm:$0xff]
  %v5116 = vld [vmem:[%s6 + $0x890] sm:$0xff]
  %v5117 = vld [vmem:[%s6 + $0x898] sm:$0xff]
  %v5118 = vld [vmem:[%s6 + $0x8a0] sm:$0xff]
  %v5119 = vld [vmem:[%s6 + $0x8a8] sm:$0xff]
  %v5120 = vld [vmem:[%s6 + $0x8b0] sm:$0xff]
  %v5121 = vld [vmem:[%s6 + $0x8b8] sm:$0xff]
  %v5122 = vld [vmem:[%s6 + $0x8c0] sm:$0xff]
  %v5123 = vld [vmem:[%s6 + $0x8c8] sm:$0xff]
  %v5124 = vld [vmem:[%s6 + $0x8d0] sm:$0xff]
  %v5125 = vld [vmem:[%s6 + $0x8d8] sm:$0xff]
  %v5126 = vld [vmem:[%s6 + $0x8e0] sm:$0xff]
  %v5127 = vld [vmem:[%s6 + $0x8e8] sm:$0xff]
  %v5128 = vld [vmem:[%s6 + $0x8f0] sm:$0xff]
  %v5129 = vld [vmem:[%s6 + $0x8f8] sm:$0xff]
  %v5130 = vld [vmem:[%s6 + $0x900] sm:$0xff]
  %v5131 = vld [vmem:[%s6 + $0x908] sm:$0xff]
  %v5132 = vld [vmem:[%s6 + $0x910] sm:$0xff]
  %v5133 = vld [vmem:[%s6 + $0x918] sm:$0xff]
  %v5134 = vld [vmem:[%s6 + $0x920] sm:$0xff]
  %v5135 = vld [vmem:[%s6 + $0x928] sm:$0xff]
  %v5136 = vld [vmem:[%s6 + $0x930] sm:$0xff]
  %v5137 = vld [vmem:[%s6 + $0x938] sm:$0xff]
  %v5138 = vld [vmem:[%s6 + $0x940] sm:$0xff]
  %v5139 = vld [vmem:[%s6 + $0x948] sm:$0xff]
  %v5140 = vld [vmem:[%s6 + $0x950] sm:$0xff]
  %v5141 = vld [vmem:[%s6 + $0x958] sm:$0xff]
  %v5142 = vld [vmem:[%s6 + $0x960] sm:$0xff]
  %v5143 = vld [vmem:[%s6 + $0x968] sm:$0xff]
  %v5144 = vld [vmem:[%s6 + $0x970] sm:$0xff]
  %v5145 = vld [vmem:[%s6 + $0x978] sm:$0xff]
  %v5146 = vld [vmem:[%s6 + $0x980] sm:$0xff]
  %v5147 = vld [vmem:[%s6 + $0x988] sm:$0xff]
  %v5148 = vld [vmem:[%s6 + $0x990] sm:$0xff]
  %v5149 = vld [vmem:[%s6 + $0x998] sm:$0xff]
  %v5150 = vld [vmem:[%s6 + $0x9a0] sm:$0xff]
  %v5151 = vld [vmem:[%s6 + $0x9a8] sm:$0xff]
  %v5152 = vld [vmem:[%s6 + $0x9b0] sm:$0xff]
  %v5153 = vld [vmem:[%s6 + $0x9b8] sm:$0xff]
  %v5154 = vld [vmem:[%s6 + $0x9c0] sm:$0xff]
  %v5155 = vld [vmem:[%s6 + $0x9c8] sm:$0xff]
  %v5156 = vld [vmem:[%s6 + $0x9d0] sm:$0xff]
  %v5157 = vld [vmem:[%s6 + $0x9d8] sm:$0xff]
  %v5158 = vld [vmem:[%s6 + $0x9e0] sm:$0xff]
  %v5159 = vld [vmem:[%s6 + $0x9e8] sm:$0xff]
  %v5160 = vld [vmem:[%s6 + $0x9f0] sm:$0xff]
  %v5161 = vld [vmem:[%s6 + $0x9f8] sm:$0xff]
  %v5162 = vld [vmem:[%s6 + $0xa00] sm:$0xff]
  %v5163 = vld [vmem:[%s6 + $0xa08] sm:$0xff]
  %v5164 = vld [vmem:[%s6 + $0xa10] sm:$0xff]
  %v5165 = vld [vmem:[%s6 + $0xa18] sm:$0xff]
  %v5166 = vld [vmem:[%s6 + $0xa20] sm:$0xff]
  %v5167 = vld [vmem:[%s6 + $0xa28] sm:$0xff]
  %v5168 = vld [vmem:[%s6 + $0xa30] sm:$0xff]
  %v5169 = vld [vmem:[%s6 + $0xa38] sm:$0xff]
  %v5170 = vld [vmem:[%s6 + $0xa40] sm:$0xff]
  %v5171 = vld [vmem:[%s6 + $0xa48] sm:$0xff]
  %v5172 = vld [vmem:[%s6 + $0xa50] sm:$0xff]
  %v5173 = vld [vmem:[%s6 + $0xa58] sm:$0xff]
  %v5174 = vld [vmem:[%s6 + $0xa60] sm:$0xff]
  %v5175 = vld [vmem:[%s6 + $0xa68] sm:$0xff]
  %v5176 = vld [vmem:[%s6 + $0xa70] sm:$0xff]
  %v5177 = vld [vmem:[%s6 + $0xa78] sm:$0xff]
  %v5178 = vld [vmem:[%s6 + $0xa80] sm:$0xff]
  %v5179 = vld [vmem:[%s6 + $0xa88] sm:$0xff]
  %v5180 = vld [vmem:[%s6 + $0xa90] sm:$0xff]
  %v5181 = vld [vmem:[%s6 + $0xa98] sm:$0xff]
  %v5182 = vld [vmem:[%s6 + $0xaa0] sm:$0xff]
  %v5183 = vld [vmem:[%s6 + $0xaa8] sm:$0xff]
  %v5184 = vld [vmem:[%s6 + $0xab0] sm:$0xff]
  %v5185 = vld [vmem:[%s6 + $0xab8] sm:$0xff]
  %v5186 = vld [vmem:[%s6 + $0xac0] sm:$0xff]
  %v5187 = vld [vmem:[%s6 + $0xac8] sm:$0xff]
  %v5188 = vld [vmem:[%s6 + $0xad0] sm:$0xff]
  %v5189 = vld [vmem:[%s6 + $0xad8] sm:$0xff]
  %v5190 = vld [vmem:[%s6 + $0xae0] sm:$0xff]
  %v5191 = vld [vmem:[%s6 + $0xae8] sm:$0xff]
  %v5192 = vld [vmem:[%s6 + $0xaf0] sm:$0xff]
  %v5193 = vld [vmem:[%s6 + $0xaf8] sm:$0xff]
  %v5194 = vld [vmem:[%s6 + $0xb00] sm:$0xff]
  %v5195 = vld [vmem:[%s6 + $0xb08] sm:$0xff]
  %v5196 = vld [vmem:[%s6 + $0xb10] sm:$0xff]
  %v5197 = vld [vmem:[%s6 + $0xb18] sm:$0xff]
  %v5198 = vld [vmem:[%s6 + $0xb20] sm:$0xff]
  %v5199 = vld [vmem:[%s6 + $0xb28] sm:$0xff]
  %v5200 = vld [vmem:[%s6 + $0xb30] sm:$0xff]
  %v5201 = vld [vmem:[%s6 + $0xb38] sm:$0xff]
  %v5202 = vld [vmem:[%s6 + $0xb40] sm:$0xff]
  %v5203 = vld [vmem:[%s6 + $0xb48] sm:$0xff]
  %v5204 = vld [vmem:[%s6 + $0xb50] sm:$0xff]
  %v5205 = vld [vmem:[%s6 + $0xb58] sm:$0xff]
  %v5206 = vld [vmem:[%s6 + $0xb60] sm:$0xff]
  %v5207 = vld [vmem:[%s6 + $0xb68] sm:$0xff]
  %v5208 = vld [vmem:[%s6 + $0xb70] sm:$0xff]
  %v5209 = vld [vmem:[%s6 + $0xb78] sm:$0xff]
  %v5210 = vld [vmem:[%s6 + $0xb80] sm:$0xff]
  %v5211 = vld [vmem:[%s6 + $0xb88] sm:$0xff]
  %v5212 = vld [vmem:[%s6 + $0xb90] sm:$0xff]
  %v5213 = vld [vmem:[%s6 + $0xb98] sm:$0xff]
  %v5214 = vld [vmem:[%s6 + $0xba0] sm:$0xff]
  %v5215 = vld [vmem:[%s6 + $0xba8] sm:$0xff]
  %v5216 = vld [vmem:[%s6 + $0xbb0] sm:$0xff]
  %v5217 = vld [vmem:[%s6 + $0xbb8] sm:$0xff]
  %v5218 = vld [vmem:[%s6 + $0xbc0] sm:$0xff]
  %v5219 = vld [vmem:[%s6 + $0xbc8] sm:$0xff]
  %v5220 = vld [vmem:[%s6 + $0xbd0] sm:$0xff]
  %v5221 = vld [vmem:[%s6 + $0xbd8] sm:$0xff]
  %v5222 = vld [vmem:[%s6 + $0xbe0] sm:$0xff]
  %v5223 = vld [vmem:[%s6 + $0xbe8] sm:$0xff]
  %v5224 = vld [vmem:[%s6 + $0xbf0] sm:$0xff]
  %v5225 = vld [vmem:[%s6 + $0xbf8] sm:$0xff]
  %v5226 = vld [vmem:[%s6 + $0xc00] sm:$0xff]
  %v5227 = vld [vmem:[%s6 + $0xc08] sm:$0xff]
  %v5228 = vld [vmem:[%s6 + $0xc10] sm:$0xff]
  %v5229 = vld [vmem:[%s6 + $0xc18] sm:$0xff]
  %v5230 = vld [vmem:[%s6 + $0xc20] sm:$0xff]
  %v5231 = vld [vmem:[%s6 + $0xc28] sm:$0xff]
  %v5232 = vld [vmem:[%s6 + $0xc30] sm:$0xff]
  %v5233 = vld [vmem:[%s6 + $0xc38] sm:$0xff]
  %v5234 = vld [vmem:[%s6 + $0xc40] sm:$0xff]
  %v5235 = vld [vmem:[%s6 + $0xc48] sm:$0xff]
  %v5236 = vld [vmem:[%s6 + $0xc50] sm:$0xff]
  %v5237 = vld [vmem:[%s6 + $0xc58] sm:$0xff]
  %v5238 = vld [vmem:[%s6 + $0xc60] sm:$0xff]
  %v5239 = vld [vmem:[%s6 + $0xc68] sm:$0xff]
  %v5240 = vld [vmem:[%s6 + $0xc70] sm:$0xff]
  %v5241 = vld [vmem:[%s6 + $0xc78] sm:$0xff]
  %v5242 = vld [vmem:[%s7] sm:$0x1]
  %v5244 = vperm.slane %v5242, 0
  %5246 = vmatpush.msra.mxu0 %v4857
  %5247 = vmatpush.msra.mxu0 %v4856
  %5248 = vmatpush.msra.mxu0 %v4855
  %5249 = vmatpush.msra.mxu0 %v4854
  %5250 = vmatpush.msra.mxu0 %v4853
  %5251 = vmatpush.msra.mxu0 %v4852
  %5252 = vmatpush.msra.mxu0 %v4851
  %5253 = vmatpush.msra.mxu0 %v4850
  %5254 = vmatpush.msra.mxu0 %v4849
  %5255 = vmatpush.msra.mxu0 %v4848
  %5256 = vmatpush.msra.mxu0 %v4847
  %5257 = vmatpush.msra.mxu0 %v4846
  %5258 = vmatpush.msra.mxu0 %v4845
  %5259 = vmatpush.msra.mxu0 %v4844
  %5260 = vmatpush.msra.mxu0 %v4843
  %5261 = vmatpush.msra.mxu0 %v4842
  %5262 = vmatmul.f32.gmra.mxu0 %v4817
  %v5263 = vpop.f32.mrf.mxu0
  %v5264 = vadd.f32 %v5244, %v5263
  %5265 = vdwg.mxu0
  %5266 = vmatpush.msra.mxu0 %v4873
  %5267 = vmatpush.msra.mxu0 %v4872
  %5268 = vmatpush.msra.mxu0 %v4871
  %5269 = vmatpush.msra.mxu0 %v4870
  %5270 = vmatpush.msra.mxu0 %v4869
  %5271 = vmatpush.msra.mxu0 %v4868
  %5272 = vmatpush.msra.mxu0 %v4867
  %5273 = vmatpush.msra.mxu0 %v4866
  %5274 = vmatpush.msra.mxu0 %v4865
  %5275 = vmatpush.msra.mxu0 %v4864
  %5276 = vmatpush.msra.mxu0 %v4863
  %5277 = vmatpush.msra.mxu0 %v4862
  %5278 = vmatpush.msra.mxu0 %v4861
  %5279 = vmatpush.msra.mxu0 %v4860
  %5280 = vmatpush.msra.mxu0 %v4859
  %5281 = vmatpush.msra.mxu0 %v4858
  %5282 = vmatmul.f32.gmra.mxu0 %v4818
  %v5283 = vpop.f32.mrf.mxu0
  %v5284 = vadd.f32 %v5264, %v5283
  %5285 = vdwg.mxu0
  %5286 = vmatpush.msra.mxu0 %v4889
  %5287 = vmatpush.msra.mxu0 %v4888
  %5288 = vmatpush.msra.mxu0 %v4887
  %5289 = vmatpush.msra.mxu0 %v4886
  %5290 = vmatpush.msra.mxu0 %v4885
  %5291 = vmatpush.msra.mxu0 %v4884
  %5292 = vmatpush.msra.mxu0 %v4883
  %5293 = vmatpush.msra.mxu0 %v4882
  %5294 = vmatpush.msra.mxu0 %v4881
  %5295 = vmatpush.msra.mxu0 %v4880
  %5296 = vmatpush.msra.mxu0 %v4879
  %5297 = vmatpush.msra.mxu0 %v4878
  %5298 = vmatpush.msra.mxu0 %v4877
  %5299 = vmatpush.msra.mxu0 %v4876
  %5300 = vmatpush.msra.mxu0 %v4875
  %5301 = vmatpush.msra.mxu0 %v4874
  %5302 = vmatmul.f32.gmra.mxu0 %v4819
  %v5303 = vpop.f32.mrf.mxu0
  %v5304 = vadd.f32 %v5284, %v5303
  %5305 = vdwg.mxu0
  %5306 = vmatpush.msra.mxu0 %v4905
  %5307 = vmatpush.msra.mxu0 %v4904
  %5308 = vmatpush.msra.mxu0 %v4903
  %5309 = vmatpush.msra.mxu0 %v4902
  %5310 = vmatpush.msra.mxu0 %v4901
  %5311 = vmatpush.msra.mxu0 %v4900
  %5312 = vmatpush.msra.mxu0 %v4899
  %5313 = vmatpush.msra.mxu0 %v4898
  %5314 = vmatpush.msra.mxu0 %v4897
  %5315 = vmatpush.msra.mxu0 %v4896
  %5316 = vmatpush.msra.mxu0 %v4895
  %5317 = vmatpush.msra.mxu0 %v4894
  %5318 = vmatpush.msra.mxu0 %v4893
  %5319 = vmatpush.msra.mxu0 %v4892
  %5320 = vmatpush.msra.mxu0 %v4891
  %5321 = vmatpush.msra.mxu0 %v4890
  %5322 = vmatmul.f32.gmra.mxu0 %v4820
  %v5323 = vpop.f32.mrf.mxu0
  %v5324 = vadd.f32 %v5304, %v5323
  %5325 = vdwg.mxu0
  %5326 = vmatpush.msra.mxu0 %v4921
  %5327 = vmatpush.msra.mxu0 %v4920
  %5328 = vmatpush.msra.mxu0 %v4919
  %5329 = vmatpush.msra.mxu0 %v4918
  %5330 = vmatpush.msra.mxu0 %v4917
  %5331 = vmatpush.msra.mxu0 %v4916
  %5332 = vmatpush.msra.mxu0 %v4915
  %5333 = vmatpush.msra.mxu0 %v4914
  %5334 = vmatpush.msra.mxu0 %v4913
  %5335 = vmatpush.msra.mxu0 %v4912
  %5336 = vmatpush.msra.mxu0 %v4911
  %5337 = vmatpush.msra.mxu0 %v4910
  %5338 = vmatpush.msra.mxu0 %v4909
  %5339 = vmatpush.msra.mxu0 %v4908
  %5340 = vmatpush.msra.mxu0 %v4907
  %5341 = vmatpush.msra.mxu0 %v4906
  %5342 = vmatmul.f32.gmra.mxu0 %v4821
  %v5343 = vpop.f32.mrf.mxu0
  %v5344 = vadd.f32 %v5324, %v5343
  %5345 = vdwg.mxu0
  %5346 = vmatpush.msra.mxu0 %v4937
  %5347 = vmatpush.msra.mxu0 %v4936
  %5348 = vmatpush.msra.mxu0 %v4935
  %5349 = vmatpush.msra.mxu0 %v4934
  %5350 = vmatpush.msra.mxu0 %v4933
  %5351 = vmatpush.msra.mxu0 %v4932
  %5352 = vmatpush.msra.mxu0 %v4931
  %5353 = vmatpush.msra.mxu0 %v4930
  %5354 = vmatpush.msra.mxu0 %v4929
  %5355 = vmatpush.msra.mxu0 %v4928
  %5356 = vmatpush.msra.mxu0 %v4927
  %5357 = vmatpush.msra.mxu0 %v4926
  %5358 = vmatpush.msra.mxu0 %v4925
  %5359 = vmatpush.msra.mxu0 %v4924
  %5360 = vmatpush.msra.mxu0 %v4923
  %5361 = vmatpush.msra.mxu0 %v4922
  %5362 = vmatmul.f32.gmra.mxu0 %v4822
  %v5363 = vpop.f32.mrf.mxu0
  %v5364 = vadd.f32 %v5344, %v5363
  %5365 = vdwg.mxu0
  %5366 = vmatpush.msra.mxu0 %v4953
  %5367 = vmatpush.msra.mxu0 %v4952
  %5368 = vmatpush.msra.mxu0 %v4951
  %5369 = vmatpush.msra.mxu0 %v4950
  %5370 = vmatpush.msra.mxu0 %v4949
  %5371 = vmatpush.msra.mxu0 %v4948
  %5372 = vmatpush.msra.mxu0 %v4947
  %5373 = vmatpush.msra.mxu0 %v4946
  %5374 = vmatpush.msra.mxu0 %v4945
  %5375 = vmatpush.msra.mxu0 %v4944
  %5376 = vmatpush.msra.mxu0 %v4943
  %5377 = vmatpush.msra.mxu0 %v4942
  %5378 = vmatpush.msra.mxu0 %v4941
  %5379 = vmatpush.msra.mxu0 %v4940
  %5380 = vmatpush.msra.mxu0 %v4939
  %5381 = vmatpush.msra.mxu0 %v4938
  %5382 = vmatmul.f32.gmra.mxu0 %v4823
  %v5383 = vpop.f32.mrf.mxu0
  %v5384 = vadd.f32 %v5364, %v5383
  %5385 = vdwg.mxu0
  %5386 = vmatpush.msra.mxu0 %v4969
  %5387 = vmatpush.msra.mxu0 %v4968
  %5388 = vmatpush.msra.mxu0 %v4967
  %5389 = vmatpush.msra.mxu0 %v4966
  %5390 = vmatpush.msra.mxu0 %v4965
  %5391 = vmatpush.msra.mxu0 %v4964
  %5392 = vmatpush.msra.mxu0 %v4963
  %5393 = vmatpush.msra.mxu0 %v4962
  %5394 = vmatpush.msra.mxu0 %v4961
  %5395 = vmatpush.msra.mxu0 %v4960
  %5396 = vmatpush.msra.mxu0 %v4959
  %5397 = vmatpush.msra.mxu0 %v4958
  %5398 = vmatpush.msra.mxu0 %v4957
  %5399 = vmatpush.msra.mxu0 %v4956
  %5400 = vmatpush.msra.mxu0 %v4955
  %5401 = vmatpush.msra.mxu0 %v4954
  %5402 = vmatmul.f32.gmra.mxu0 %v4824
  %v5403 = vpop.f32.mrf.mxu0
  %v5404 = vadd.f32 %v5384, %v5403
  %5405 = vdwg.mxu0
  %5406 = vmatpush.msra.mxu0 %v4985
  %5407 = vmatpush.msra.mxu0 %v4984
  %5408 = vmatpush.msra.mxu0 %v4983
  %5409 = vmatpush.msra.mxu0 %v4982
  %5410 = vmatpush.msra.mxu0 %v4981
  %5411 = vmatpush.msra.mxu0 %v4980
  %5412 = vmatpush.msra.mxu0 %v4979
  %5413 = vmatpush.msra.mxu0 %v4978
  %5414 = vmatpush.msra.mxu0 %v4977
  %5415 = vmatpush.msra.mxu0 %v4976
  %5416 = vmatpush.msra.mxu0 %v4975
  %5417 = vmatpush.msra.mxu0 %v4974
  %5418 = vmatpush.msra.mxu0 %v4973
  %5419 = vmatpush.msra.mxu0 %v4972
  %5420 = vmatpush.msra.mxu0 %v4971
  %5421 = vmatpush.msra.mxu0 %v4970
  %5422 = vmatmul.f32.gmra.mxu0 %v4825
  %v5423 = vpop.f32.mrf.mxu0
  %v5424 = vadd.f32 %v5404, %v5423
  %5425 = vdwg.mxu0
  %5426 = vmatpush.msra.mxu0 %v5001
  %5427 = vmatpush.msra.mxu0 %v5000
  %5428 = vmatpush.msra.mxu0 %v4999
  %5429 = vmatpush.msra.mxu0 %v4998
  %5430 = vmatpush.msra.mxu0 %v4997
  %5431 = vmatpush.msra.mxu0 %v4996
  %5432 = vmatpush.msra.mxu0 %v4995
  %5433 = vmatpush.msra.mxu0 %v4994
  %5434 = vmatpush.msra.mxu0 %v4993
  %5435 = vmatpush.msra.mxu0 %v4992
  %5436 = vmatpush.msra.mxu0 %v4991
  %5437 = vmatpush.msra.mxu0 %v4990
  %5438 = vmatpush.msra.mxu0 %v4989
  %5439 = vmatpush.msra.mxu0 %v4988
  %5440 = vmatpush.msra.mxu0 %v4987
  %5441 = vmatpush.msra.mxu0 %v4986
  %5442 = vmatmul.f32.gmra.mxu0 %v4826
  %v5443 = vpop.f32.mrf.mxu0
  %v5444 = vadd.f32 %v5424, %v5443
  %5445 = vdwg.mxu0
  %5446 = vmatpush.msra.mxu0 %v5017
  %5447 = vmatpush.msra.mxu0 %v5016
  %5448 = vmatpush.msra.mxu0 %v5015
  %5449 = vmatpush.msra.mxu0 %v5014
  %5450 = vmatpush.msra.mxu0 %v5013
  %5451 = vmatpush.msra.mxu0 %v5012
  %5452 = vmatpush.msra.mxu0 %v5011
  %5453 = vmatpush.msra.mxu0 %v5010
  %5454 = vmatpush.msra.mxu0 %v5009
  %5455 = vmatpush.msra.mxu0 %v5008
  %5456 = vmatpush.msra.mxu0 %v5007
  %5457 = vmatpush.msra.mxu0 %v5006
  %5458 = vmatpush.msra.mxu0 %v5005
  %5459 = vmatpush.msra.mxu0 %v5004
  %5460 = vmatpush.msra.mxu0 %v5003
  %5461 = vmatpush.msra.mxu0 %v5002
  %5462 = vmatmul.f32.gmra.mxu0 %v4827
  %v5463 = vpop.f32.mrf.mxu0
  %v5464 = vadd.f32 %v5444, %v5463
  %5465 = vdwg.mxu0
  %5466 = vmatpush.msra.mxu0 %v5033
  %5467 = vmatpush.msra.mxu0 %v5032
  %5468 = vmatpush.msra.mxu0 %v5031
  %5469 = vmatpush.msra.mxu0 %v5030
  %5470 = vmatpush.msra.mxu0 %v5029
  %5471 = vmatpush.msra.mxu0 %v5028
  %5472 = vmatpush.msra.mxu0 %v5027
  %5473 = vmatpush.msra.mxu0 %v5026
  %5474 = vmatpush.msra.mxu0 %v5025
  %5475 = vmatpush.msra.mxu0 %v5024
  %5476 = vmatpush.msra.mxu0 %v5023
  %5477 = vmatpush.msra.mxu0 %v5022
  %5478 = vmatpush.msra.mxu0 %v5021
  %5479 = vmatpush.msra.mxu0 %v5020
  %5480 = vmatpush.msra.mxu0 %v5019
  %5481 = vmatpush.msra.mxu0 %v5018
  %5482 = vmatmul.f32.gmra.mxu0 %v4828
  %v5483 = vpop.f32.mrf.mxu0
  %v5484 = vadd.f32 %v5464, %v5483
  %5485 = vdwg.mxu0
  %5486 = vmatpush.msra.mxu0 %v5049
  %5487 = vmatpush.msra.mxu0 %v5048
  %5488 = vmatpush.msra.mxu0 %v5047
  %5489 = vmatpush.msra.mxu0 %v5046
  %5490 = vmatpush.msra.mxu0 %v5045
  %5491 = vmatpush.msra.mxu0 %v5044
  %5492 = vmatpush.msra.mxu0 %v5043
  %5493 = vmatpush.msra.mxu0 %v5042
  %5494 = vmatpush.msra.mxu0 %v5041
  %5495 = vmatpush.msra.mxu0 %v5040
  %5496 = vmatpush.msra.mxu0 %v5039
  %5497 = vmatpush.msra.mxu0 %v5038
  %5498 = vmatpush.msra.mxu0 %v5037
  %5499 = vmatpush.msra.mxu0 %v5036
  %5500 = vmatpush.msra.mxu0 %v5035
  %5501 = vmatpush.msra.mxu0 %v5034
  %5502 = vmatmul.f32.gmra.mxu0 %v4829
  %v5503 = vpop.f32.mrf.mxu0
  %v5504 = vadd.f32 %v5484, %v5503
  %5505 = vdwg.mxu0
  %5506 = vmatpush.msra.mxu0 %v5065
  %5507 = vmatpush.msra.mxu0 %v5064
  %5508 = vmatpush.msra.mxu0 %v5063
  %5509 = vmatpush.msra.mxu0 %v5062
  %5510 = vmatpush.msra.mxu0 %v5061
  %5511 = vmatpush.msra.mxu0 %v5060
  %5512 = vmatpush.msra.mxu0 %v5059
  %5513 = vmatpush.msra.mxu0 %v5058
  %5514 = vmatpush.msra.mxu0 %v5057
  %5515 = vmatpush.msra.mxu0 %v5056
  %5516 = vmatpush.msra.mxu0 %v5055
  %5517 = vmatpush.msra.mxu0 %v5054
  %5518 = vmatpush.msra.mxu0 %v5053
  %5519 = vmatpush.msra.mxu0 %v5052
  %5520 = vmatpush.msra.mxu0 %v5051
  %5521 = vmatpush.msra.mxu0 %v5050
  %5522 = vmatmul.f32.gmra.mxu0 %v4830
  %v5523 = vpop.f32.mrf.mxu0
  %v5524 = vadd.f32 %v5504, %v5523
  %5525 = vdwg.mxu0
  %5526 = vmatpush.msra.mxu0 %v5081
  %5527 = vmatpush.msra.mxu0 %v5080
  %5528 = vmatpush.msra.mxu0 %v5079
  %5529 = vmatpush.msra.mxu0 %v5078
  %5530 = vmatpush.msra.mxu0 %v5077
  %5531 = vmatpush.msra.mxu0 %v5076
  %5532 = vmatpush.msra.mxu0 %v5075
  %5533 = vmatpush.msra.mxu0 %v5074
  %5534 = vmatpush.msra.mxu0 %v5073
  %5535 = vmatpush.msra.mxu0 %v5072
  %5536 = vmatpush.msra.mxu0 %v5071
  %5537 = vmatpush.msra.mxu0 %v5070
  %5538 = vmatpush.msra.mxu0 %v5069
  %5539 = vmatpush.msra.mxu0 %v5068
  %5540 = vmatpush.msra.mxu0 %v5067
  %5541 = vmatpush.msra.mxu0 %v5066
  %5542 = vmatmul.f32.gmra.mxu0 %v4831
  %v5543 = vpop.f32.mrf.mxu0
  %v5544 = vadd.f32 %v5524, %v5543
  %5545 = vdwg.mxu0
  %5546 = vmatpush.msra.mxu0 %v5097
  %5547 = vmatpush.msra.mxu0 %v5096
  %5548 = vmatpush.msra.mxu0 %v5095
  %5549 = vmatpush.msra.mxu0 %v5094
  %5550 = vmatpush.msra.mxu0 %v5093
  %5551 = vmatpush.msra.mxu0 %v5092
  %5552 = vmatpush.msra.mxu0 %v5091
  %5553 = vmatpush.msra.mxu0 %v5090
  %5554 = vmatpush.msra.mxu0 %v5089
  %5555 = vmatpush.msra.mxu0 %v5088
  %5556 = vmatpush.msra.mxu0 %v5087
  %5557 = vmatpush.msra.mxu0 %v5086
  %5558 = vmatpush.msra.mxu0 %v5085
  %5559 = vmatpush.msra.mxu0 %v5084
  %5560 = vmatpush.msra.mxu0 %v5083
  %5561 = vmatpush.msra.mxu0 %v5082
  %5562 = vmatmul.f32.gmra.mxu0 %v4832
  %v5563 = vpop.f32.mrf.mxu0
  %v5564 = vadd.f32 %v5544, %v5563
  %5565 = vdwg.mxu0
  %5566 = vmatpush.msra.mxu0 %v5113
  %5567 = vmatpush.msra.mxu0 %v5112
  %5568 = vmatpush.msra.mxu0 %v5111
  %5569 = vmatpush.msra.mxu0 %v5110
  %5570 = vmatpush.msra.mxu0 %v5109
  %5571 = vmatpush.msra.mxu0 %v5108
  %5572 = vmatpush.msra.mxu0 %v5107
  %5573 = vmatpush.msra.mxu0 %v5106
  %5574 = vmatpush.msra.mxu0 %v5105
  %5575 = vmatpush.msra.mxu0 %v5104
  %5576 = vmatpush.msra.mxu0 %v5103
  %5577 = vmatpush.msra.mxu0 %v5102
  %5578 = vmatpush.msra.mxu0 %v5101
  %5579 = vmatpush.msra.mxu0 %v5100
  %5580 = vmatpush.msra.mxu0 %v5099
  %5581 = vmatpush.msra.mxu0 %v5098
  %5582 = vmatmul.f32.gmra.mxu0 %v4833
  %v5583 = vpop.f32.mrf.mxu0
  %v5584 = vadd.f32 %v5564, %v5583
  %5585 = vdwg.mxu0
  %5586 = vmatpush.msra.mxu0 %v5129
  %5587 = vmatpush.msra.mxu0 %v5128
  %5588 = vmatpush.msra.mxu0 %v5127
  %5589 = vmatpush.msra.mxu0 %v5126
  %5590 = vmatpush.msra.mxu0 %v5125
  %5591 = vmatpush.msra.mxu0 %v5124
  %5592 = vmatpush.msra.mxu0 %v5123
  %5593 = vmatpush.msra.mxu0 %v5122
  %5594 = vmatpush.msra.mxu0 %v5121
  %5595 = vmatpush.msra.mxu0 %v5120
  %5596 = vmatpush.msra.mxu0 %v5119
  %5597 = vmatpush.msra.mxu0 %v5118
  %5598 = vmatpush.msra.mxu0 %v5117
  %5599 = vmatpush.msra.mxu0 %v5116
  %5600 = vmatpush.msra.mxu0 %v5115
  %5601 = vmatpush.msra.mxu0 %v5114
  %5602 = vmatmul.f32.gmra.mxu0 %v4834
  %v5603 = vpop.f32.mrf.mxu0
  %v5604 = vadd.f32 %v5584, %v5603
  %5605 = vdwg.mxu0
  %5606 = vmatpush.msra.mxu0 %v5145
  %5607 = vmatpush.msra.mxu0 %v5144
  %5608 = vmatpush.msra.mxu0 %v5143
  %5609 = vmatpush.msra.mxu0 %v5142
  %5610 = vmatpush.msra.mxu0 %v5141
  %5611 = vmatpush.msra.mxu0 %v5140
  %5612 = vmatpush.msra.mxu0 %v5139
  %5613 = vmatpush.msra.mxu0 %v5138
  %5614 = vmatpush.msra.mxu0 %v5137
  %5615 = vmatpush.msra.mxu0 %v5136
  %5616 = vmatpush.msra.mxu0 %v5135
  %5617 = vmatpush.msra.mxu0 %v5134
  %5618 = vmatpush.msra.mxu0 %v5133
  %5619 = vmatpush.msra.mxu0 %v5132
  %5620 = vmatpush.msra.mxu0 %v5131
  %5621 = vmatpush.msra.mxu0 %v5130
  %5622 = vmatmul.f32.gmra.mxu0 %v4835
  %v5623 = vpop.f32.mrf.mxu0
  %v5624 = vadd.f32 %v5604, %v5623
  %5625 = vdwg.mxu0
  %5626 = vmatpush.msra.mxu0 %v5161
  %5627 = vmatpush.msra.mxu0 %v5160
  %5628 = vmatpush.msra.mxu0 %v5159
  %5629 = vmatpush.msra.mxu0 %v5158
  %5630 = vmatpush.msra.mxu0 %v5157
  %5631 = vmatpush.msra.mxu0 %v5156
  %5632 = vmatpush.msra.mxu0 %v5155
  %5633 = vmatpush.msra.mxu0 %v5154
  %5634 = vmatpush.msra.mxu0 %v5153
  %5635 = vmatpush.msra.mxu0 %v5152
  %5636 = vmatpush.msra.mxu0 %v5151
  %5637 = vmatpush.msra.mxu0 %v5150
  %5638 = vmatpush.msra.mxu0 %v5149
  %5639 = vmatpush.msra.mxu0 %v5148
  %5640 = vmatpush.msra.mxu0 %v5147
  %5641 = vmatpush.msra.mxu0 %v5146
  %5642 = vmatmul.f32.gmra.mxu0 %v4836
  %v5643 = vpop.f32.mrf.mxu0
  %v5644 = vadd.f32 %v5624, %v5643
  %5645 = vdwg.mxu0
  %5646 = vmatpush.msra.mxu0 %v5177
  %5647 = vmatpush.msra.mxu0 %v5176
  %5648 = vmatpush.msra.mxu0 %v5175
  %5649 = vmatpush.msra.mxu0 %v5174
  %5650 = vmatpush.msra.mxu0 %v5173
  %5651 = vmatpush.msra.mxu0 %v5172
  %5652 = vmatpush.msra.mxu0 %v5171
  %5653 = vmatpush.msra.mxu0 %v5170
  %5654 = vmatpush.msra.mxu0 %v5169
  %5655 = vmatpush.msra.mxu0 %v5168
  %5656 = vmatpush.msra.mxu0 %v5167
  %5657 = vmatpush.msra.mxu0 %v5166
  %5658 = vmatpush.msra.mxu0 %v5165
  %5659 = vmatpush.msra.mxu0 %v5164
  %5660 = vmatpush.msra.mxu0 %v5163
  %5661 = vmatpush.msra.mxu0 %v5162
  %5662 = vmatmul.f32.gmra.mxu0 %v4837
  %v5663 = vpop.f32.mrf.mxu0
  %v5664 = vadd.f32 %v5644, %v5663
  %5665 = vdwg.mxu0
  %5666 = vmatpush.msra.mxu0 %v5193
  %5667 = vmatpush.msra.mxu0 %v5192
  %5668 = vmatpush.msra.mxu0 %v5191
  %5669 = vmatpush.msra.mxu0 %v5190
  %5670 = vmatpush.msra.mxu0 %v5189
  %5671 = vmatpush.msra.mxu0 %v5188
  %5672 = vmatpush.msra.mxu0 %v5187
  %5673 = vmatpush.msra.mxu0 %v5186
  %5674 = vmatpush.msra.mxu0 %v5185
  %5675 = vmatpush.msra.mxu0 %v5184
  %5676 = vmatpush.msra.mxu0 %v5183
  %5677 = vmatpush.msra.mxu0 %v5182
  %5678 = vmatpush.msra.mxu0 %v5181
  %5679 = vmatpush.msra.mxu0 %v5180
  %5680 = vmatpush.msra.mxu0 %v5179
  %5681 = vmatpush.msra.mxu0 %v5178
  %5682 = vmatmul.f32.gmra.mxu0 %v4838
  %v5683 = vpop.f32.mrf.mxu0
  %v5684 = vadd.f32 %v5664, %v5683
  %5685 = vdwg.mxu0
  %5686 = vmatpush.msra.mxu0 %v5209
  %5687 = vmatpush.msra.mxu0 %v5208
  %5688 = vmatpush.msra.mxu0 %v5207
  %5689 = vmatpush.msra.mxu0 %v5206
  %5690 = vmatpush.msra.mxu0 %v5205
  %5691 = vmatpush.msra.mxu0 %v5204
  %5692 = vmatpush.msra.mxu0 %v5203
  %5693 = vmatpush.msra.mxu0 %v5202
  %5694 = vmatpush.msra.mxu0 %v5201
  %5695 = vmatpush.msra.mxu0 %v5200
  %5696 = vmatpush.msra.mxu0 %v5199
  %5697 = vmatpush.msra.mxu0 %v5198
  %5698 = vmatpush.msra.mxu0 %v5197
  %5699 = vmatpush.msra.mxu0 %v5196
  %5700 = vmatpush.msra.mxu0 %v5195
  %5701 = vmatpush.msra.mxu0 %v5194
  %5702 = vmatmul.f32.gmra.mxu0 %v4839
  %v5703 = vpop.f32.mrf.mxu0
  %v5704 = vadd.f32 %v5684, %v5703
  %5705 = vdwg.mxu0
  %5706 = vmatpush.msra.mxu0 %v5225
  %5707 = vmatpush.msra.mxu0 %v5224
  %5708 = vmatpush.msra.mxu0 %v5223
  %5709 = vmatpush.msra.mxu0 %v5222
  %5710 = vmatpush.msra.mxu0 %v5221
  %5711 = vmatpush.msra.mxu0 %v5220
  %5712 = vmatpush.msra.mxu0 %v5219
  %5713 = vmatpush.msra.mxu0 %v5218
  %5714 = vmatpush.msra.mxu0 %v5217
  %5715 = vmatpush.msra.mxu0 %v5216
  %5716 = vmatpush.msra.mxu0 %v5215
  %5717 = vmatpush.msra.mxu0 %v5214
  %5718 = vmatpush.msra.mxu0 %v5213
  %5719 = vmatpush.msra.mxu0 %v5212
  %5720 = vmatpush.msra.mxu0 %v5211
  %5721 = vmatpush.msra.mxu0 %v5210
  %5722 = vmatmul.f32.gmra.mxu0 %v4840
  %v5723 = vpop.f32.mrf.mxu0
  %v5724 = vadd.f32 %v5704, %v5723
  %5725 = vdwg.mxu0
  %5726 = vmatpush.msra.mxu0 %v5241
  %5727 = vmatpush.msra.mxu0 %v5240
  %5728 = vmatpush.msra.mxu0 %v5239
  %5729 = vmatpush.msra.mxu0 %v5238
  %5730 = vmatpush.msra.mxu0 %v5237
  %5731 = vmatpush.msra.mxu0 %v5236
  %5732 = vmatpush.msra.mxu0 %v5235
  %5733 = vmatpush.msra.mxu0 %v5234
  %5734 = vmatpush.msra.mxu0 %v5233
  %5735 = vmatpush.msra.mxu0 %v5232
  %5736 = vmatpush.msra.mxu0 %v5231
  %5737 = vmatpush.msra.mxu0 %v5230
  %5738 = vmatpush.msra.mxu0 %v5229
  %5739 = vmatpush.msra.mxu0 %v5228
  %5740 = vmatpush.msra.mxu0 %v5227
  %5741 = vmatpush.msra.mxu0 %v5226
  %5742 = vmatmul.f32.gmra.mxu0 %v4841
  %v5743 = vpop.f32.mrf.mxu0
  %v5744 = vadd.f32 %v5724, %v5743
  %5745 = vdwg.mxu0
  %vm5746 = vcmask 80896
  %5747 = vst.msk [vmem:[%s9] sm:$0xff] %vm5746, %v5744
  // Predicated region
  $region38: #{four_d_rnn_forward.1} parent=0 // pred_check
    _
  $region39: #{four_d_rnn_forward.1} parent=0 // pred_check_branch
    %5749 = sbr.rel (0) target = $region41
  $region40: #{four_d_rnn_forward.1} parent=0 // pred_region
    _
  $region41: #{four_d_rnn_forward.1} parent=0 // pred_fallthru
    _
  // Predicated region
  $region42: #{four_d_rnn_forward.1} parent=0 // pred_check
    _
  $region43: #{four_d_rnn_forward.1} parent=0 // pred_check_branch
    %5751 = sbr.rel (0) target = $region45
  $region44: #{four_d_rnn_forward.1} parent=0 // pred_region
    _
  $region45: #{four_d_rnn_forward.1} parent=0 // pred_fallthru
    _

</llo_original>
